<compile_context>
chip_gen: v7x
topology: tpu7x:2x2x1
jax: 0.10.0
libtpu: 0.0.40
codegen_flags: <defaults>
</compile_context>

<pallas_src>
import functools
import math

import jax
import jax.numpy as jnp
from jax.experimental import pallas as pl
from jax.experimental.pallas import tpu as pltpu

# ---------------------------------------------------------------- tiling ----

TM_TARGET = 512          # output-row tile
TN_TARGET = 256          # output-channel tile (lanes)
TK_TARGET = 512          # reduction tile
VMEM_LIMIT = 32 * 1024 * 1024   # explicit; blocks sized for v7x's 64 MiB VMEM w/ headroom


def _round_up(x, m):
    return ((x + m - 1) // m) * m


def _m_tiling(m):
    """Row tile (multiple of 16, <= TM_TARGET) and padded row count."""
    tm = min(TM_TARGET, _round_up(m, 16))
    return tm, _round_up(m, tm)


def _lane_tile(total, target):
    """Largest multiple of 128 that divides `total` (a multiple of 128) and is <= target."""
    t = min(target, total)
    t -= t % 128
    while total % t:
        t -= 128
    return t


def _pad2d(a, rows, cols):
    r, c = a.shape
    if r == rows and c == cols:
        return a
    return jnp.pad(a, ((0, rows - r), (0, cols - c)))


# --------------------------------------------------------------- kernels ----

def _matmul_bias_act_kernel(p_ref, w_ref, b_ref, o_ref, acc_ref, *, neg_slope):
    # Tiled conv matmul (bf16 x bf16 -> f32 acc) + bias (+ optional LeakyReLU).
    k = pl.program_id(2)

    @pl.when(k == 0)
    def _():
        acc_ref[...] = jnp.zeros_like(acc_ref)

    acc_ref[...] += jnp.dot(p_ref[...], w_ref[...],
                            preferred_element_type=jnp.float32)

    @pl.when(k == pl.num_programs(2) - 1)
    def _():
        y = acc_ref[...] + b_ref[...]
        if neg_slope is not None:
            y = jnp.where(y >= 0, y, neg_slope * y)
        o_ref[...] = y.astype(o_ref.dtype)


def _matmul_stats_kernel(p_ref, w_ref, y_ref, sum_ref, ssq_ref, acc_ref):
    # Tiled conv matmul + per-(M-tile, C-tile) partial sum / sum-of-squares,
    # emitted at the final K step.  Partial sums keep the M/N grid axes
    # "parallel" (no resident cross-tile accumulator) for v7x megacore.
    k = pl.program_id(2)

    @pl.when(k == 0)
    def _():
        acc_ref[...] = jnp.zeros_like(acc_ref)

    acc_ref[...] += jnp.dot(p_ref[...], w_ref[...],
                            preferred_element_type=jnp.float32)

    @pl.when(k == pl.num_programs(2) - 1)
    def _():
        acc = acc_ref[...]
        y_ref[...] = acc.astype(y_ref.dtype)
        sum_ref[...] = jnp.sum(acc, axis=0, keepdims=True).reshape(sum_ref.shape)
        ssq_ref[...] = jnp.sum(acc * acc, axis=0, keepdims=True).reshape(ssq_ref.shape)


def _scale_shift_lrelu_kernel(y_ref, s_ref, b_ref, o_ref, *, neg_slope):
    y = y_ref[...] * s_ref[...] + b_ref[...]
    o_ref[...] = jnp.where(y >= 0, y, neg_slope * y).astype(o_ref.dtype)


# ----------------------------------------------------------- pallas glue ----

def _conv_matmul_bias_act(patches, w_flat, bias, neg_slope, out_dtype):
    """patches [M,K] bf16 @ w_flat [K,C] bf16 + bias -> [M,C] out_dtype."""
    M, K = patches.shape
    C = w_flat.shape[1]
    Kp, Cp = _round_up(K, 128), _round_up(C, 128)
    tm, Mp = _m_tiling(M)
    tk = _lane_tile(Kp, TK_TARGET)
    tn = _lane_tile(Cp, TN_TARGET)

    p = _pad2d(patches, Mp, Kp)
    w = _pad2d(w_flat, Kp, Cp)
    b = _pad2d(bias.reshape(1, C).astype(jnp.float32), 1, Cp)

    out = pl.pallas_call(
        functools.partial(_matmul_bias_act_kernel, neg_slope=neg_slope),
        out_shape=jax.ShapeDtypeStruct((Mp, Cp), out_dtype),
        grid_spec=pltpu.PrefetchScalarGridSpec(
            num_scalar_prefetch=0,
            grid=(Mp // tm, Cp // tn, Kp // tk),
            in_specs=[
                pl.BlockSpec((tm, tk), lambda i, j, k: (i, k)),
                pl.BlockSpec((tk, tn), lambda i, j, k: (k, j)),
                pl.BlockSpec((1, tn), lambda i, j, k: (0, j)),
            ],
            out_specs=pl.BlockSpec((tm, tn), lambda i, j, k: (i, j)),
            scratch_shapes=[pltpu.VMEM((tm, tn), jnp.float32)],
        ),
        compiler_params=pltpu.CompilerParams(
            dimension_semantics=("parallel", "parallel", "arbitrary"),
            vmem_limit_bytes=VMEM_LIMIT,
        ),
    )(p, w, b)
    return out[:M, :C]


def _conv_matmul_stats(patches, w_flat):
    """Conv matmul plus per-channel sum / sum-of-squares (partial, per M tile)."""
    M, K = patches.shape
    C = w_flat.shape[1]
    Kp, Cp = _round_up(K, 128), _round_up(C, 128)
    tm, Mp = _m_tiling(M)
    tk = _lane_tile(Kp, TK_TARGET)
    tn = _lane_tile(Cp, TN_TARGET)
    nm = Mp // tm

    p = _pad2d(patches, Mp, Kp)    # zero rows/cols contribute 0 to sums
    w = _pad2d(w_flat, Kp, Cp)

    y, psum, pssq = pl.pallas_call(
        _matmul_stats_kernel,
        out_shape=(
            jax.ShapeDtypeStruct((Mp, Cp), jnp.float32),
            jax.ShapeDtypeStruct((nm, 1, Cp), jnp.float32),
            jax.ShapeDtypeStruct((nm, 1, Cp), jnp.float32),
        ),
        grid_spec=pltpu.PrefetchScalarGridSpec(
            num_scalar_prefetch=0,
            grid=(nm, Cp // tn, Kp // tk),
            in_specs=[
                pl.BlockSpec((tm, tk), lambda i, j, k: (i, k)),
                pl.BlockSpec((tk, tn), lambda i, j, k: (k, j)),
            ],
            out_specs=(
                pl.BlockSpec((tm, tn), lambda i, j, k: (i, j)),
                pl.BlockSpec((1, 1, tn), lambda i, j, k: (i, 0, j)),
                pl.BlockSpec((1, 1, tn), lambda i, j, k: (i, 0, j)),
            ),
            scratch_shapes=[pltpu.VMEM((tm, tn), jnp.float32)],
        ),
        compiler_params=pltpu.CompilerParams(
            dimension_semantics=("parallel", "parallel", "arbitrary"),
            vmem_limit_bytes=VMEM_LIMIT,
        ),
    )(p, w)

    # Tiny cross-M-tile reduction finishes in JAX (keeps the grid fully parallel).
    s = jnp.sum(psum[:, 0, :C], axis=0)
    ssq = jnp.sum(pssq[:, 0, :C], axis=0)
    return y, s, ssq, (Mp, Cp, tm)


def _scale_shift_lrelu(y_pad, scale, shift, neg_slope, M, C, tm):
    """Per-channel affine + LeakyReLU on the padded (Mp, Cp) conv output -> bf16."""
    Mp, Cp = y_pad.shape
    s = _pad2d(scale.reshape(1, C).astype(jnp.float32), 1, Cp)
    b = _pad2d(shift.reshape(1, C).astype(jnp.float32), 1, Cp)
    out = pl.pallas_call(
        functools.partial(_scale_shift_lrelu_kernel, neg_slope=neg_slope),
        out_shape=jax.ShapeDtypeStruct((Mp, Cp), jnp.bfloat16),
        grid_spec=pltpu.PrefetchScalarGridSpec(
            num_scalar_prefetch=0,
            grid=(Mp // tm,),
            in_specs=[
                pl.BlockSpec((tm, Cp), lambda i: (i, 0)),
                pl.BlockSpec((1, Cp), lambda i: (0, 0)),
                pl.BlockSpec((1, Cp), lambda i: (0, 0)),
            ],
            out_specs=pl.BlockSpec((tm, Cp), lambda i: (i, 0)),
        ),
        compiler_params=pltpu.CompilerParams(
            dimension_semantics=("parallel",),
            vmem_limit_bytes=VMEM_LIMIT,
        ),
    )(y_pad, s, b)
    return out[:M, :C]


# -------------------------------------------------------- conv-layer glue ---

def _im2col(x, kh, kw, stride, pad):
    # x: [N, H, W, C] (bf16)  ->  patches [N*Ho*Wo, kh*kw*C]
    # TODO(synk): generate (TM, K) patch tiles inside the kernel via manual DMA over the
    # NHWC activation instead of materializing the ~4x-amplified im2col in HBM.
    N, H, W, C = x.shape
    xp = jnp.pad(x, ((0, 0), (pad, pad), (pad, pad), (0, 0)))
    Ho = (H + 2 * pad - kh) // stride + 1
    Wo = (W + 2 * pad - kw) // stride + 1
    cols = []
    for i in range(kh):
        for j in range(kw):
            cols.append(xp[:, i:i + (Ho - 1) * stride + 1:stride,
                              j:j + (Wo - 1) * stride + 1:stride, :])
    patches = jnp.concatenate(cols, axis=-1)          # [N, Ho, Wo, kh*kw*C]
    return patches.reshape(N * Ho * Wo, kh * kw * C), (N, Ho, Wo)


def _flatten_weight(w):
    # torch layout [C_out, C_in, KH, KW] -> [KH*KW*C_in, C_out] (matches im2col order), bf16
    co, ci, kh, kw = w.shape
    return jnp.transpose(w, (2, 3, 1, 0)).reshape(kh * kw * ci, co).astype(jnp.bfloat16)


def _conv_layer_bias_act(x, w, b, *, stride, pad, neg_slope, out_dtype):
    patches, (N, Ho, Wo) = _im2col(x.astype(jnp.bfloat16),
                                   w.shape[2], w.shape[3], stride, pad)
    y = _conv_matmul_bias_act(patches, _flatten_weight(w), b, neg_slope, out_dtype)
    return y.reshape(N, Ho, Wo, w.shape[0])


def _conv_bn_lrelu_layer(x, w, gamma, beta, *, eps=1e-5, neg_slope=0.2):
    patches, (N, Ho, Wo) = _im2col(x.astype(jnp.bfloat16), w.shape[2], w.shape[3], 2, 1)
    C = w.shape[0]
    M = patches.shape[0]
    y_pad, s, ssq, (Mp, Cp, tm) = _conv_matmul_stats(patches, _flatten_weight(w))
    mean = s / M
    var = jnp.maximum(ssq / M - mean * mean, 0.0)     # clamp: E[x^2]-m^2 can dip below 0
    inv = gamma / jnp.sqrt(var + eps)
    # TODO(synk): fold this affine + LeakyReLU into the next conv's patch prologue
    # (per-channel pad values for the im2col halo) to save one HBM round-trip.
    z = _scale_shift_lrelu(y_pad, inv, beta - mean * inv, neg_slope, M, C, tm)
    return z.reshape(N, Ho, Wo, C)


# -------------------------------------------------------------- parameters --

def init_params(key, input_channels=3, dim=64, n_downsamplings=4):
    def conv_w(k, co, ci):
        bnd = 1.0 / math.sqrt(ci * 4 * 4)
        return jax.random.uniform(k, (co, ci, 4, 4), jnp.float32, -bnd, bnd)

    params = {}
    d = dim
    key, k1, k2 = jax.random.split(key, 3)
    bnd = 1.0 / math.sqrt(input_channels * 16)
    params["head"] = (conv_w(k1, d, input_channels),
                      jax.random.uniform(k2, (d,), jnp.float32, -bnd, bnd))
    mid = []
    for i in range(n_downsamplings - 1):
        d_last, d = d, min(dim * 2 ** (i + 1), dim * 8)
        key, kw = jax.random.split(key)
        mid.append((conv_w(kw, d, d_last),
                    jnp.ones((d,), jnp.float32),      # BN gamma
                    jnp.zeros((d,), jnp.float32)))    # BN beta
    params["mid"] = mid
    key, k1, k2 = jax.random.split(key, 3)
    bnd = 1.0 / math.sqrt(d * 16)
    params["tail"] = (conv_w(k1, d, d),
                      jax.random.uniform(k2, (d,), jnp.float32, -bnd, bnd))
    return params


def discriminator_forward(params, x_nchw, *, neg_slope=0.2, eps=1e-5):
    x = jnp.transpose(x_nchw, (0, 2, 3, 1))          # NCHW -> NHWC
    w0, b0 = params["head"]
    x = _conv_layer_bias_act(x, w0, b0, stride=2, pad=1, neg_slope=neg_slope,
                             out_dtype=jnp.bfloat16)
    for (w, gamma, beta) in params["mid"]:
        x = _conv_bn_lrelu_layer(x, w, gamma, beta, eps=eps, neg_slope=neg_slope)
    wt, bt = params["tail"]
    y = _conv_layer_bias_act(x, wt, bt, stride=1, pad=0, neg_slope=None,
                             out_dtype=jnp.float32)
    return jnp.transpose(y, (0, 3, 1, 2))            # NHWC -> NCHW


# ---------------------------------------------------- pure-JAX reference ----

def _conv_ref(x, w, b, stride, pad):
    y = jax.lax.conv_general_dilated(
        x, jnp.transpose(w, (2, 3, 1, 0)), (stride, stride),
        ((pad, pad), (pad, pad)), dimension_numbers=("NHWC", "HWIO", "NHWC"))
    return y if b is None else y + b


def reference_forward(params, x_nchw, *, neg_slope=0.2, eps=1e-5):
    lrelu = lambda v: jnp.where(v >= 0, v, neg_slope * v)
    x = jnp.transpose(x_nchw, (0, 2, 3, 1))
    w0, b0 = params["head"]
    x = lrelu(_conv_ref(x, w0, b0, 2, 1))
    for (w, gamma, beta) in params["mid"]:
        y = _conv_ref(x, w, None, 2, 1)
        mean = jnp.mean(y, axis=(0, 1, 2))
        var = jnp.var(y, axis=(0, 1, 2))
        x = lrelu((y - mean) / jnp.sqrt(var + eps) * gamma + beta)
    wt, bt = params["tail"]
    y = _conv_ref(x, wt, bt, 1, 0)
    return jnp.transpose(y, (0, 3, 1, 2))


# -------------------------------------------------------------------- main --

if __name__ == "__main__":
    N, C_IN, H, W = 2, 3, 64, 64
    DIM, N_DOWN = 8, 4                                # small, shape-consistent config

    key = jax.random.PRNGKey(0)
    key, kx = jax.random.split(key)
    x = jax.random.normal(kx, (N, C_IN, H, W), jnp.float32)   # NCHW, like PyTorch
    params = init_params(key, C_IN, DIM, N_DOWN)

    fwd = jax.jit(discriminator_forward)
    y = jax.block_until_ready(fwd(params, x))

    d_out = min(DIM * 2 ** (N_DOWN - 1), DIM * 8)
    assert y.shape == (N, d_out, 1, 1), y.shape

    # f32 reference; tolerance accounts for deliberate bf16 MXU inputs/activations.
    y_ref = reference_forward(params, x)
    max_err = float(jnp.max(jnp.abs(y - y_ref)))
    mean_err = float(jnp.mean(jnp.abs(y - y_ref)))
    assert max_err < 1e-1 and mean_err < 2.5e-2, \
        f"mismatch vs reference: max={max_err}, mean={mean_err}"

    print("KERNEL_OK")
</pallas_src>

<mosaic_0001>
module attributes {stable_mosaic.version = 11 : i64} {
  func.func @_matmul_bias_act_kernel(%arg0: i32, %arg1: i32, %arg2: i32, %arg3: memref<512x128xbf16, #tpu.memory_space<vmem>>, %arg4: memref<128x128xbf16, #tpu.memory_space<vmem>>, %arg5: memref<1x128xf32, #tpu.memory_space<vmem>>, %arg6: memref<512x128xbf16, #tpu.memory_space<vmem>>, %arg7: memref<512x128xf32, #tpu.memory_space<vmem>>) attributes {dimension_semantics = [#tpu.dimension_semantics<parallel>, #tpu.dimension_semantics<parallel>, #tpu.dimension_semantics<arbitrary>], iteration_bounds = array<i64: 4, 1, 1>, scalar_prefetch = 0 : i64, scratch_operands = 1 : i64, tpu.core_type = #tpu.core_type<tc>, window_params = [{transform_indices = @transform_0, window_bounds = array<i64: 512, 128>}, {transform_indices = @transform_1, window_bounds = array<i64: 128, 128>}, {transform_indices = @transform_2, window_bounds = array<i64: 1, 128>}, {transform_indices = @transform_3, window_bounds = array<i64: 512, 128>}]} {
    %c0_i32 = arith.constant 0 : i32
    %0 = arith.cmpi eq, %arg2, %c0_i32 : i32
    %1 = arith.extui %0 : i1 to i32
    %c0_i32_0 = arith.constant 0 : i32
    %2 = arith.cmpi ne, %1, %c0_i32_0 : i32
    scf.if %2 {
      %cst_10 = arith.constant 0.000000e+00 : f32
      %12 = vector.broadcast %cst_10 : f32 to vector<512x128xf32>
      %c0_11 = arith.constant 0 : index
      %c0_12 = arith.constant 0 : index
      %13 = vector.load %arg7[%c0_11, %c0_12] : memref<512x128xf32, #tpu.memory_space<vmem>>, vector<512x128xf32>
      tpu.vector_store %arg7[%c0_11, %c0_12], %12 {strides = array<i32>} : memref<512x128xf32, #tpu.memory_space<vmem>>, vector<512x128xf32>,
    } else {
    }
    %c0 = arith.constant 0 : index
    %c0_1 = arith.constant 0 : index
    %3 = vector.load %arg7[%c0, %c0_1] : memref<512x128xf32, #tpu.memory_space<vmem>>, vector<512x128xf32>
    %c0_2 = arith.constant 0 : index
    %c0_3 = arith.constant 0 : index
    %4 = vector.load %arg3[%c0_2, %c0_3] : memref<512x128xbf16, #tpu.memory_space<vmem>>, vector<512x128xbf16>
    %c0_4 = arith.constant 0 : index
    %c0_5 = arith.constant 0 : index
    %5 = vector.load %arg4[%c0_4, %c0_5] : memref<128x128xbf16, #tpu.memory_space<vmem>>, vector<128x128xbf16>
    %cst = arith.constant dense<0.000000e+00> : vector<512x128xf32>
    %6 = tpu.matmul %4, %5, %cst {dimension_numbers = #tpu.dot_dimension_numbers<[1], [0], [0], [1], [0, 0, 1, 1], [], []>} : vector<512x128xbf16>, vector<128x128xbf16>, vector<512x128xf32> -> vector<512x128xf32>
    %7 = arith.addf %3, %6 : vector<512x128xf32>
    %c0_6 = arith.constant 0 : index
    %c0_7 = arith.constant 0 : index
    %8 = vector.load %arg7[%c0_6, %c0_7] : memref<512x128xf32, #tpu.memory_space<vmem>>, vector<512x128xf32>
    tpu.vector_store %arg7[%c0_6, %c0_7], %7 {strides = array<i32>} : memref<512x128xf32, #tpu.memory_space<vmem>>, vector<512x128xf32>,
    %c0_i32_8 = arith.constant 0 : i32
    %9 = arith.cmpi eq, %arg2, %c0_i32_8 : i32
    %10 = arith.extui %9 : i1 to i32
    %c0_i32_9 = arith.constant 0 : i32
    %11 = arith.cmpi ne, %10, %c0_i32_9 : i32
    scf.if %11 {
      %c0_10 = arith.constant 0 : index
      %c0_11 = arith.constant 0 : index
      %12 = vector.load %arg7[%c0_10, %c0_11] : memref<512x128xf32, #tpu.memory_space<vmem>>, vector<512x128xf32>
      %c0_12 = arith.constant 0 : index
      %c0_13 = arith.constant 0 : index
      %13 = vector.load %arg5[%c0_12, %c0_13] : memref<1x128xf32, #tpu.memory_space<vmem>>, vector<1x128xf32>
      %14 = vector.broadcast %13 : vector<1x128xf32> to vector<512x128xf32>
      %15 = arith.addf %12, %14 : vector<512x128xf32>
      %cst_14 = arith.constant 0.000000e+00 : f32
      %16 = vector.broadcast %cst_14 : f32 to vector<512x128xf32>
      %17 = arith.cmpf oge, %15, %16 : vector<512x128xf32>
      %cst_15 = arith.constant 2.000000e-01 : f32
      %18 = vector.broadcast %cst_15 : f32 to vector<512x128xf32>
      %19 = arith.mulf %18, %15 : vector<512x128xf32>
      %20 = arith.select %17, %15, %19 : vector<512x128xi1>, vector<512x128xf32>
      %21 = arith.truncf %20 : vector<512x128xf32> to vector<512x128xbf16>
      %c0_16 = arith.constant 0 : index
      %c0_17 = arith.constant 0 : index
      %22 = vector.load %arg6[%c0_16, %c0_17] : memref<512x128xbf16, #tpu.memory_space<vmem>>, vector<512x128xbf16>
      tpu.vector_store %arg6[%c0_16, %c0_17], %21 {strides = array<i32>} : memref<512x128xbf16, #tpu.memory_space<vmem>>, vector<512x128xbf16>,
    } else {
    }
    return
  }
  func.func @transform_0(%arg0: i32, %arg1: i32, %arg2: i32) -> (i32, i32) {
    %c0_i32 = arith.constant 0 : i32
    return %arg0, %arg2 : i32, i32
  }
  func.func @transform_1(%arg0: i32, %arg1: i32, %arg2: i32) -> (i32, i32) {
    %c0_i32 = arith.constant 0 : i32
    return %arg2, %arg1 : i32, i32
  }
  func.func @transform_2(%arg0: i32, %arg1: i32, %arg2: i32) -> (i32, i32) {
    %c0_i32 = arith.constant 0 : i32
    %c0_i32_0 = arith.constant 0 : i32
    return %c0_i32, %arg1 : i32, i32
  }
  func.func @transform_3(%arg0: i32, %arg1: i32, %arg2: i32) -> (i32, i32) {
    %c0_i32 = arith.constant 0 : i32
    return %arg0, %arg1 : i32, i32
  }
}

module attributes {stable_mosaic.version = 11 : i64} {
  func.func @_matmul_stats_kernel(%arg0: i32, %arg1: i32, %arg2: i32, %arg3: memref<512x128xbf16, #tpu.memory_space<vmem>>, %arg4: memref<128x128xbf16, #tpu.memory_space<vmem>>, %arg5: memref<512x128xf32, #tpu.memory_space<vmem>>, %arg6: memref<1x1x128xf32, #tpu.memory_space<vmem>>, %arg7: memref<1x1x128xf32, #tpu.memory_space<vmem>>, %arg8: memref<512x128xf32, #tpu.memory_space<vmem>>) attributes {dimension_semantics = [#tpu.dimension_semantics<parallel>, #tpu.dimension_semantics<parallel>, #tpu.dimension_semantics<arbitrary>], iteration_bounds = array<i64: 1, 1, 1>, scalar_prefetch = 0 : i64, scratch_operands = 1 : i64, tpu.core_type = #tpu.core_type<tc>, window_params = [{transform_indices = @transform_0, window_bounds = array<i64: 512, 128>}, {transform_indices = @transform_1, window_bounds = array<i64: 128, 128>}, {transform_indices = @transform_2, window_bounds = array<i64: 512, 128>}, {transform_indices = @transform_3, window_bounds = array<i64: 1, 1, 128>}, {transform_indices = @transform_4, window_bounds = array<i64: 1, 1, 128>}]} {
    %c0_i32 = arith.constant 0 : i32
    %0 = arith.cmpi eq, %arg2, %c0_i32 : i32
    %1 = arith.extui %0 : i1 to i32
    %c0_i32_0 = arith.constant 0 : i32
    %2 = arith.cmpi ne, %1, %c0_i32_0 : i32
    scf.if %2 {
      %cst_10 = arith.constant 0.000000e+00 : f32
      %12 = vector.broadcast %cst_10 : f32 to vector<512x128xf32>
      %c0_11 = arith.constant 0 : index
      %c0_12 = arith.constant 0 : index
      %13 = vector.load %arg8[%c0_11, %c0_12] : memref<512x128xf32, #tpu.memory_space<vmem>>, vector<512x128xf32>
      tpu.vector_store %arg8[%c0_11, %c0_12], %12 {strides = array<i32>} : memref<512x128xf32, #tpu.memory_space<vmem>>, vector<512x128xf32>,
    } else {
    }
    %c0 = arith.constant 0 : index
    %c0_1 = arith.constant 0 : index
    %3 = vector.load %arg8[%c0, %c0_1] : memref<512x128xf32, #tpu.memory_space<vmem>>, vector<512x128xf32>
    %c0_2 = arith.constant 0 : index
    %c0_3 = arith.constant 0 : index
    %4 = vector.load %arg3[%c0_2, %c0_3] : memref<512x128xbf16, #tpu.memory_space<vmem>>, vector<512x128xbf16>
    %c0_4 = arith.constant 0 : index
    %c0_5 = arith.constant 0 : index
    %5 = vector.load %arg4[%c0_4, %c0_5] : memref<128x128xbf16, #tpu.memory_space<vmem>>, vector<128x128xbf16>
    %cst = arith.constant dense<0.000000e+00> : vector<512x128xf32>
    %6 = tpu.matmul %4, %5, %cst {dimension_numbers = #tpu.dot_dimension_numbers<[1], [0], [0], [1], [0, 0, 1, 1], [], []>} : vector<512x128xbf16>, vector<128x128xbf16>, vector<512x128xf32> -> vector<512x128xf32>
    %7 = arith.addf %3, %6 : vector<512x128xf32>
    %c0_6 = arith.constant 0 : index
    %c0_7 = arith.constant 0 : index
    %8 = vector.load %arg8[%c0_6, %c0_7] : memref<512x128xf32, #tpu.memory_space<vmem>>, vector<512x128xf32>
    tpu.vector_store %arg8[%c0_6, %c0_7], %7 {strides = array<i32>} : memref<512x128xf32, #tpu.memory_space<vmem>>, vector<512x128xf32>,
    %c0_i32_8 = arith.constant 0 : i32
    %9 = arith.cmpi eq, %arg2, %c0_i32_8 : i32
    %10 = arith.extui %9 : i1 to i32
    %c0_i32_9 = arith.constant 0 : i32
    %11 = arith.cmpi ne, %10, %c0_i32_9 : i32
    scf.if %11 {
      %c0_10 = arith.constant 0 : index
      %c0_11 = arith.constant 0 : index
      %12 = vector.load %arg8[%c0_10, %c0_11] : memref<512x128xf32, #tpu.memory_space<vmem>>, vector<512x128xf32>
      %c0_12 = arith.constant 0 : index
      %c0_13 = arith.constant 0 : index
      %13 = vector.load %arg5[%c0_12, %c0_13] : memref<512x128xf32, #tpu.memory_space<vmem>>, vector<512x128xf32>
      tpu.vector_store %arg5[%c0_12, %c0_13], %12 {strides = array<i32>} : memref<512x128xf32, #tpu.memory_space<vmem>>, vector<512x128xf32>,
      %cst_14 = arith.constant dense<0.000000e+00> : vector<128xf32>
      %14 = vector.multi_reduction <add>, %12, %cst_14 [0] : vector<512x128xf32> to vector<128xf32>
      %15 = vector.shape_cast %14 : vector<128xf32> to vector<1x128xf32>
      %16 = vector.shape_cast %15 : vector<1x128xf32> to vector<1x1x128xf32>
      %c0_15 = arith.constant 0 : index
      %c0_16 = arith.constant 0 : index
      %c0_17 = arith.constant 0 : index
      %17 = vector.load %arg6[%c0_15, %c0_16, %c0_17] : memref<1x1x128xf32, #tpu.memory_space<vmem>>, vector<1x1x128xf32>
      tpu.vector_store %arg6[%c0_15, %c0_16, %c0_17], %16 {strides = array<i32>} : memref<1x1x128xf32, #tpu.memory_space<vmem>>, vector<1x1x128xf32>,
      %18 = arith.mulf %12, %12 : vector<512x128xf32>
      %cst_18 = arith.constant dense<0.000000e+00> : vector<128xf32>
      %19 = vector.multi_reduction <add>, %18, %cst_18 [0] : vector<512x128xf32> to vector<128xf32>
      %20 = vector.shape_cast %19 : vector<128xf32> to vector<1x128xf32>
      %21 = vector.shape_cast %20 : vector<1x128xf32> to vector<1x1x128xf32>
      %c0_19 = arith.constant 0 : index
      %c0_20 = arith.constant 0 : index
      %c0_21 = arith.constant 0 : index
      %22 = vector.load %arg7[%c0_19, %c0_20, %c0_21] : memref<1x1x128xf32, #tpu.memory_space<vmem>>, vector<1x1x128xf32>
      tpu.vector_store %arg7[%c0_19, %c0_20, %c0_21], %21 {strides = array<i32>} : memref<1x1x128xf32, #tpu.memory_space<vmem>>, vector<1x1x128xf32>,
    } else {
    }
    return
  }
  func.func @transform_0(%arg0: i32, %arg1: i32, %arg2: i32) -> (i32, i32) {
    %c0_i32 = arith.constant 0 : i32
    return %arg0, %arg2 : i32, i32
  }
  func.func @transform_1(%arg0: i32, %arg1: i32, %arg2: i32) -> (i32, i32) {
    %c0_i32 = arith.constant 0 : i32
    return %arg2, %arg1 : i32, i32
  }
  func.func @transform_2(%arg0: i32, %arg1: i32, %arg2: i32) -> (i32, i32) {
    %c0_i32 = arith.constant 0 : i32
    return %arg0, %arg1 : i32, i32
  }
  func.func @transform_3(%arg0: i32, %arg1: i32, %arg2: i32) -> (i32, i32, i32) {
    %c0_i32 = arith.constant 0 : i32
    %c0_i32_0 = arith.constant 0 : i32
    return %arg0, %c0_i32, %arg1 : i32, i32, i32
  }
  func.func @transform_4(%arg0: i32, %arg1: i32, %arg2: i32) -> (i32, i32, i32) {
    %c0_i32 = arith.constant 0 : i32
    %c0_i32_0 = arith.constant 0 : i32
    return %arg0, %c0_i32, %arg1 : i32, i32, i32
  }
}

module attributes {stable_mosaic.version = 11 : i64} {
  func.func @_scale_shift_lrelu_kernel(%arg0: i32, %arg1: memref<512x128xf32, #tpu.memory_space<vmem>>, %arg2: memref<1x128xf32, #tpu.memory_space<vmem>>, %arg3: memref<1x128xf32, #tpu.memory_space<vmem>>, %arg4: memref<512x128xbf16, #tpu.memory_space<vmem>>) attributes {dimension_semantics = [#tpu.dimension_semantics<parallel>], iteration_bounds = array<i64: 1>, scalar_prefetch = 0 : i64, scratch_operands = 0 : i64, tpu.core_type = #tpu.core_type<tc>, window_params = [{transform_indices = @transform_0, window_bounds = array<i64: 512, 128>}, {pipeline_mode = #tpu.pipeline_mode<synchronous>, transform_indices = @transform_1, window_bounds = array<i64: 1, 128>}, {pipeline_mode = #tpu.pipeline_mode<synchronous>, transform_indices = @transform_2, window_bounds = array<i64: 1, 128>}, {transform_indices = @transform_3, window_bounds = array<i64: 512, 128>}]} {
    %c0 = arith.constant 0 : index
    %c0_0 = arith.constant 0 : index
    %0 = vector.load %arg1[%c0, %c0_0] : memref<512x128xf32, #tpu.memory_space<vmem>>, vector<512x128xf32>
    %c0_1 = arith.constant 0 : index
    %c0_2 = arith.constant 0 : index
    %1 = vector.load %arg2[%c0_1, %c0_2] : memref<1x128xf32, #tpu.memory_space<vmem>>, vector<1x128xf32>
    %2 = vector.broadcast %1 : vector<1x128xf32> to vector<512x128xf32>
    %3 = arith.mulf %0, %2 : vector<512x128xf32>
    %c0_3 = arith.constant 0 : index
    %c0_4 = arith.constant 0 : index
    %4 = vector.load %arg3[%c0_3, %c0_4] : memref<1x128xf32, #tpu.memory_space<vmem>>, vector<1x128xf32>
    %5 = vector.broadcast %4 : vector<1x128xf32> to vector<512x128xf32>
    %6 = arith.addf %3, %5 : vector<512x128xf32>
    %cst = arith.constant 0.000000e+00 : f32
    %7 = vector.broadcast %cst : f32 to vector<512x128xf32>
    %8 = arith.cmpf oge, %6, %7 : vector<512x128xf32>
    %cst_5 = arith.constant 2.000000e-01 : f32
    %9 = vector.broadcast %cst_5 : f32 to vector<512x128xf32>
    %10 = arith.mulf %9, %6 : vector<512x128xf32>
    %11 = arith.select %8, %6, %10 : vector<512x128xi1>, vector<512x128xf32>
    %12 = arith.truncf %11 : vector<512x128xf32> to vector<512x128xbf16>
    %c0_6 = arith.constant 0 : index
    %c0_7 = arith.constant 0 : index
    %13 = vector.load %arg4[%c0_6, %c0_7] : memref<512x128xbf16, #tpu.memory_space<vmem>>, vector<512x128xbf16>
    tpu.vector_store %arg4[%c0_6, %c0_7], %12 {strides = array<i32>} : memref<512x128xbf16, #tpu.memory_space<vmem>>, vector<512x128xbf16>,
    return
  }
  func.func @transform_0(%arg0: i32) -> (i32, i32) {
    %c0_i32 = arith.constant 0 : i32
    %c0_i32_0 = arith.constant 0 : i32
    return %arg0, %c0_i32 : i32, i32
  }
  func.func @transform_1(%arg0: i32) -> (i32, i32) {
    %c0_i32 = arith.constant 0 : i32
    %c0_i32_0 = arith.constant 0 : i32
    %c0_i32_1 = arith.constant 0 : i32
    return %c0_i32, %c0_i32_0 : i32, i32
  }
  func.func @transform_2(%arg0: i32) -> (i32, i32) {
    %c0_i32 = arith.constant 0 : i32
    %c0_i32_0 = arith.constant 0 : i32
    %c0_i32_1 = arith.constant 0 : i32
    return %c0_i32, %c0_i32_0 : i32, i32
  }
  func.func @transform_3(%arg0: i32) -> (i32, i32) {
    %c0_i32 = arith.constant 0 : i32
    %c0_i32_0 = arith.constant 0 : i32
    return %arg0, %c0_i32 : i32, i32
  }
}

module attributes {stable_mosaic.version = 11 : i64} {
  func.func @_matmul_stats_kernel(%arg0: i32, %arg1: i32, %arg2: i32, %arg3: memref<128x256xbf16, #tpu.memory_space<vmem>>, %arg4: memref<256x128xbf16, #tpu.memory_space<vmem>>, %arg5: memref<128x128xf32, #tpu.memory_space<vmem>>, %arg6: memref<1x1x128xf32, #tpu.memory_space<vmem>>, %arg7: memref<1x1x128xf32, #tpu.memory_space<vmem>>, %arg8: memref<128x128xf32, #tpu.memory_space<vmem>>) attributes {dimension_semantics = [#tpu.dimension_semantics<parallel>, #tpu.dimension_semantics<parallel>, #tpu.dimension_semantics<arbitrary>], iteration_bounds = array<i64: 1, 1, 1>, scalar_prefetch = 0 : i64, scratch_operands = 1 : i64, tpu.core_type = #tpu.core_type<tc>, window_params = [{transform_indices = @transform_0, window_bounds = array<i64: 128, 256>}, {transform_indices = @transform_1, window_bounds = array<i64: 256, 128>}, {transform_indices = @transform_2, window_bounds = array<i64: 128, 128>}, {transform_indices = @transform_3, window_bounds = array<i64: 1, 1, 128>}, {transform_indices = @transform_4, window_bounds = array<i64: 1, 1, 128>}]} {
    %c0_i32 = arith.constant 0 : i32
    %0 = arith.cmpi eq, %arg2, %c0_i32 : i32
    %1 = arith.extui %0 : i1 to i32
    %c0_i32_0 = arith.constant 0 : i32
    %2 = arith.cmpi ne, %1, %c0_i32_0 : i32
    scf.if %2 {
      %cst_10 = arith.constant 0.000000e+00 : f32
      %12 = vector.broadcast %cst_10 : f32 to vector<128x128xf32>
      %c0_11 = arith.constant 0 : index
      %c0_12 = arith.constant 0 : index
      %13 = vector.load %arg8[%c0_11, %c0_12] : memref<128x128xf32, #tpu.memory_space<vmem>>, vector<128x128xf32>
      tpu.vector_store %arg8[%c0_11, %c0_12], %12 {strides = array<i32>} : memref<128x128xf32, #tpu.memory_space<vmem>>, vector<128x128xf32>,
    } else {
    }
    %c0 = arith.constant 0 : index
    %c0_1 = arith.constant 0 : index
    %3 = vector.load %arg8[%c0, %c0_1] : memref<128x128xf32, #tpu.memory_space<vmem>>, vector<128x128xf32>
    %c0_2 = arith.constant 0 : index
    %c0_3 = arith.constant 0 : index
    %4 = vector.load %arg3[%c0_2, %c0_3] : memref<128x256xbf16, #tpu.memory_space<vmem>>, vector<128x256xbf16>
    %c0_4 = arith.constant 0 : index
    %c0_5 = arith.constant 0 : index
    %5 = vector.load %arg4[%c0_4, %c0_5] : memref<256x128xbf16, #tpu.memory_space<vmem>>, vector<256x128xbf16>
    %cst = arith.constant dense<0.000000e+00> : vector<128x128xf32>
    %6 = tpu.matmul %4, %5, %cst {dimension_numbers = #tpu.dot_dimension_numbers<[1], [0], [0], [1], [0, 0, 1, 1], [], []>} : vector<128x256xbf16>, vector<256x128xbf16>, vector<128x128xf32> -> vector<128x128xf32>
    %7 = arith.addf %3, %6 : vector<128x128xf32>
    %c0_6 = arith.constant 0 : index
    %c0_7 = arith.constant 0 : index
    %8 = vector.load %arg8[%c0_6, %c0_7] : memref<128x128xf32, #tpu.memory_space<vmem>>, vector<128x128xf32>
    tpu.vector_store %arg8[%c0_6, %c0_7], %7 {strides = array<i32>} : memref<128x128xf32, #tpu.memory_space<vmem>>, vector<128x128xf32>,
    %c0_i32_8 = arith.constant 0 : i32
    %9 = arith.cmpi eq, %arg2, %c0_i32_8 : i32
    %10 = arith.extui %9 : i1 to i32
    %c0_i32_9 = arith.constant 0 : i32
    %11 = arith.cmpi ne, %10, %c0_i32_9 : i32
    scf.if %11 {
      %c0_10 = arith.constant 0 : index
      %c0_11 = arith.constant 0 : index
      %12 = vector.load %arg8[%c0_10, %c0_11] : memref<128x128xf32, #tpu.memory_space<vmem>>, vector<128x128xf32>
      %c0_12 = arith.constant 0 : index
      %c0_13 = arith.constant 0 : index
      %13 = vector.load %arg5[%c0_12, %c0_13] : memref<128x128xf32, #tpu.memory_space<vmem>>, vector<128x128xf32>
      tpu.vector_store %arg5[%c0_12, %c0_13], %12 {strides = array<i32>} : memref<128x128xf32, #tpu.memory_space<vmem>>, vector<128x128xf32>,
      %cst_14 = arith.constant dense<0.000000e+00> : vector<128xf32>
      %14 = vector.multi_reduction <add>, %12, %cst_14 [0] : vector<128x128xf32> to vector<128xf32>
      %15 = vector.shape_cast %14 : vector<128xf32> to vector<1x128xf32>
      %16 = vector.shape_cast %15 : vector<1x128xf32> to vector<1x1x128xf32>
      %c0_15 = arith.constant 0 : index
      %c0_16 = arith.constant 0 : index
      %c0_17 = arith.constant 0 : index
      %17 = vector.load %arg6[%c0_15, %c0_16, %c0_17] : memref<1x1x128xf32, #tpu.memory_space<vmem>>, vector<1x1x128xf32>
      tpu.vector_store %arg6[%c0_15, %c0_16, %c0_17], %16 {strides = array<i32>} : memref<1x1x128xf32, #tpu.memory_space<vmem>>, vector<1x1x128xf32>,
      %18 = arith.mulf %12, %12 : vector<128x128xf32>
      %cst_18 = arith.constant dense<0.000000e+00> : vector<128xf32>
      %19 = vector.multi_reduction <add>, %18, %cst_18 [0] : vector<128x128xf32> to vector<128xf32>
      %20 = vector.shape_cast %19 : vector<128xf32> to vector<1x128xf32>
      %21 = vector.shape_cast %20 : vector<1x128xf32> to vector<1x1x128xf32>
      %c0_19 = arith.constant 0 : index
      %c0_20 = arith.constant 0 : index
      %c0_21 = arith.constant 0 : index
      %22 = vector.load %arg7[%c0_19, %c0_20, %c0_21] : memref<1x1x128xf32, #tpu.memory_space<vmem>>, vector<1x1x128xf32>
      tpu.vector_store %arg7[%c0_19, %c0_20, %c0_21], %21 {strides = array<i32>} : memref<1x1x128xf32, #tpu.memory_space<vmem>>, vector<1x1x128xf32>,
    } else {
    }
    return
  }
  func.func @transform_0(%arg0: i32, %arg1: i32, %arg2: i32) -> (i32, i32) {
    %c0_i32 = arith.constant 0 : i32
    return %arg0, %arg2 : i32, i32
  }
  func.func @transform_1(%arg0: i32, %arg1: i32, %arg2: i32) -> (i32, i32) {
    %c0_i32 = arith.constant 0 : i32
    return %arg2, %arg1 : i32, i32
  }
  func.func @transform_2(%arg0: i32, %arg1: i32, %arg2: i32) -> (i32, i32) {
    %c0_i32 = arith.constant 0 : i32
    return %arg0, %arg1 : i32, i32
  }
  func.func @transform_3(%arg0: i32, %arg1: i32, %arg2: i32) -> (i32, i32, i32) {
    %c0_i32 = arith.constant 0 : i32
    %c0_i32_0 = arith.constant 0 : i32
    return %arg0, %c0_i32, %arg1 : i32, i32, i32
  }
  func.func @transform_4(%arg0: i32, %arg1: i32, %arg2: i32) -> (i32, i32, i32) {
    %c0_i32 = arith.constant 0 : i32
    %c0_i32_0 = arith.constant 0 : i32
    return %arg0, %c0_i32, %arg1 : i32, i32, i32
  }
}

module attributes {stable_mosaic.version = 11 : i64} {
  func.func @_scale_shift_lrelu_kernel(%arg0: i32, %arg1: memref<128x128xf32, #tpu.memory_space<vmem>>, %arg2: memref<1x128xf32, #tpu.memory_space<vmem>>, %arg3: memref<1x128xf32, #tpu.memory_space<vmem>>, %arg4: memref<128x128xbf16, #tpu.memory_space<vmem>>) attributes {dimension_semantics = [#tpu.dimension_semantics<parallel>], iteration_bounds = array<i64: 1>, scalar_prefetch = 0 : i64, scratch_operands = 0 : i64, tpu.core_type = #tpu.core_type<tc>, window_params = [{transform_indices = @transform_0, window_bounds = array<i64: 128, 128>}, {pipeline_mode = #tpu.pipeline_mode<synchronous>, transform_indices = @transform_1, window_bounds = array<i64: 1, 128>}, {pipeline_mode = #tpu.pipeline_mode<synchronous>, transform_indices = @transform_2, window_bounds = array<i64: 1, 128>}, {transform_indices = @transform_3, window_bounds = array<i64: 128, 128>}]} {
    %c0 = arith.constant 0 : index
    %c0_0 = arith.constant 0 : index
    %0 = vector.load %arg1[%c0, %c0_0] : memref<128x128xf32, #tpu.memory_space<vmem>>, vector<128x128xf32>
    %c0_1 = arith.constant 0 : index
    %c0_2 = arith.constant 0 : index
    %1 = vector.load %arg2[%c0_1, %c0_2] : memref<1x128xf32, #tpu.memory_space<vmem>>, vector<1x128xf32>
    %2 = vector.broadcast %1 : vector<1x128xf32> to vector<128x128xf32>
    %3 = arith.mulf %0, %2 : vector<128x128xf32>
    %c0_3 = arith.constant 0 : index
    %c0_4 = arith.constant 0 : index
    %4 = vector.load %arg3[%c0_3, %c0_4] : memref<1x128xf32, #tpu.memory_space<vmem>>, vector<1x128xf32>
    %5 = vector.broadcast %4 : vector<1x128xf32> to vector<128x128xf32>
    %6 = arith.addf %3, %5 : vector<128x128xf32>
    %cst = arith.constant 0.000000e+00 : f32
    %7 = vector.broadcast %cst : f32 to vector<128x128xf32>
    %8 = arith.cmpf oge, %6, %7 : vector<128x128xf32>
    %cst_5 = arith.constant 2.000000e-01 : f32
    %9 = vector.broadcast %cst_5 : f32 to vector<128x128xf32>
    %10 = arith.mulf %9, %6 : vector<128x128xf32>
    %11 = arith.select %8, %6, %10 : vector<128x128xi1>, vector<128x128xf32>
    %12 = arith.truncf %11 : vector<128x128xf32> to vector<128x128xbf16>
    %c0_6 = arith.constant 0 : index
    %c0_7 = arith.constant 0 : index
    %13 = vector.load %arg4[%c0_6, %c0_7] : memref<128x128xbf16, #tpu.memory_space<vmem>>, vector<128x128xbf16>
    tpu.vector_store %arg4[%c0_6, %c0_7], %12 {strides = array<i32>} : memref<128x128xbf16, #tpu.memory_space<vmem>>, vector<128x128xbf16>,
    return
  }
  func.func @transform_0(%arg0: i32) -> (i32, i32) {
    %c0_i32 = arith.constant 0 : i32
    %c0_i32_0 = arith.constant 0 : i32
    return %arg0, %c0_i32 : i32, i32
  }
  func.func @transform_1(%arg0: i32) -> (i32, i32) {
    %c0_i32 = arith.constant 0 : i32
    %c0_i32_0 = arith.constant 0 : i32
    %c0_i32_1 = arith.constant 0 : i32
    return %c0_i32, %c0_i32_0 : i32, i32
  }
  func.func @transform_2(%arg0: i32) -> (i32, i32) {
    %c0_i32 = arith.constant 0 : i32
    %c0_i32_0 = arith.constant 0 : i32
    %c0_i32_1 = arith.constant 0 : i32
    return %c0_i32, %c0_i32_0 : i32, i32
  }
  func.func @transform_3(%arg0: i32) -> (i32, i32) {
    %c0_i32 = arith.constant 0 : i32
    %c0_i32_0 = arith.constant 0 : i32
    return %arg0, %c0_i32 : i32, i32
  }
}

module attributes {stable_mosaic.version = 11 : i64} {
  func.func @_matmul_stats_kernel(%arg0: i32, %arg1: i32, %arg2: i32, %arg3: memref<32x512xbf16, #tpu.memory_space<vmem>>, %arg4: memref<512x128xbf16, #tpu.memory_space<vmem>>, %arg5: memref<32x128xf32, #tpu.memory_space<vmem>>, %arg6: memref<1x1x128xf32, #tpu.memory_space<vmem>>, %arg7: memref<1x1x128xf32, #tpu.memory_space<vmem>>, %arg8: memref<32x128xf32, #tpu.memory_space<vmem>>) attributes {dimension_semantics = [#tpu.dimension_semantics<parallel>, #tpu.dimension_semantics<parallel>, #tpu.dimension_semantics<arbitrary>], iteration_bounds = array<i64: 1, 1, 1>, scalar_prefetch = 0 : i64, scratch_operands = 1 : i64, tpu.core_type = #tpu.core_type<tc>, window_params = [{transform_indices = @transform_0, window_bounds = array<i64: 32, 512>}, {transform_indices = @transform_1, window_bounds = array<i64: 512, 128>}, {transform_indices = @transform_2, window_bounds = array<i64: 32, 128>}, {transform_indices = @transform_3, window_bounds = array<i64: 1, 1, 128>}, {transform_indices = @transform_4, window_bounds = array<i64: 1, 1, 128>}]} {
    %c0_i32 = arith.constant 0 : i32
    %0 = arith.cmpi eq, %arg2, %c0_i32 : i32
    %1 = arith.extui %0 : i1 to i32
    %c0_i32_0 = arith.constant 0 : i32
    %2 = arith.cmpi ne, %1, %c0_i32_0 : i32
    scf.if %2 {
      %cst_10 = arith.constant 0.000000e+00 : f32
      %12 = vector.broadcast %cst_10 : f32 to vector<32x128xf32>
      %c0_11 = arith.constant 0 : index
      %c0_12 = arith.constant 0 : index
      %13 = vector.load %arg8[%c0_11, %c0_12] : memref<32x128xf32, #tpu.memory_space<vmem>>, vector<32x128xf32>
      tpu.vector_store %arg8[%c0_11, %c0_12], %12 {strides = array<i32>} : memref<32x128xf32, #tpu.memory_space<vmem>>, vector<32x128xf32>,
    } else {
    }
    %c0 = arith.constant 0 : index
    %c0_1 = arith.constant 0 : index
    %3 = vector.load %arg8[%c0, %c0_1] : memref<32x128xf32, #tpu.memory_space<vmem>>, vector<32x128xf32>
    %c0_2 = arith.constant 0 : index
    %c0_3 = arith.constant 0 : index
    %4 = vector.load %arg3[%c0_2, %c0_3] : memref<32x512xbf16, #tpu.memory_space<vmem>>, vector<32x512xbf16>
    %c0_4 = arith.constant 0 : index
    %c0_5 = arith.constant 0 : index
    %5 = vector.load %arg4[%c0_4, %c0_5] : memref<512x128xbf16, #tpu.memory_space<vmem>>, vector<512x128xbf16>
    %cst = arith.constant dense<0.000000e+00> : vector<32x128xf32>
    %6 = tpu.matmul %4, %5, %cst {dimension_numbers = #tpu.dot_dimension_numbers<[1], [0], [0], [1], [0, 0, 1, 1], [], []>} : vector<32x512xbf16>, vector<512x128xbf16>, vector<32x128xf32> -> vector<32x128xf32>
    %7 = arith.addf %3, %6 : vector<32x128xf32>
    %c0_6 = arith.constant 0 : index
    %c0_7 = arith.constant 0 : index
    %8 = vector.load %arg8[%c0_6, %c0_7] : memref<32x128xf32, #tpu.memory_space<vmem>>, vector<32x128xf32>
    tpu.vector_store %arg8[%c0_6, %c0_7], %7 {strides = array<i32>} : memref<32x128xf32, #tpu.memory_space<vmem>>, vector<32x128xf32>,
    %c0_i32_8 = arith.constant 0 : i32
    %9 = arith.cmpi eq, %arg2, %c0_i32_8 : i32
    %10 = arith.extui %9 : i1 to i32
    %c0_i32_9 = arith.constant 0 : i32
    %11 = arith.cmpi ne, %10, %c0_i32_9 : i32
    scf.if %11 {
      %c0_10 = arith.constant 0 : index
      %c0_11 = arith.constant 0 : index
      %12 = vector.load %arg8[%c0_10, %c0_11] : memref<32x128xf32, #tpu.memory_space<vmem>>, vector<32x128xf32>
      %c0_12 = arith.constant 0 : index
      %c0_13 = arith.constant 0 : index
      %13 = vector.load %arg5[%c0_12, %c0_13] : memref<32x128xf32, #tpu.memory_space<vmem>>, vector<32x128xf32>
      tpu.vector_store %arg5[%c0_12, %c0_13], %12 {strides = array<i32>} : memref<32x128xf32, #tpu.memory_space<vmem>>, vector<32x128xf32>,
      %cst_14 = arith.constant dense<0.000000e+00> : vector<128xf32>
      %14 = vector.multi_reduction <add>, %12, %cst_14 [0] : vector<32x128xf32> to vector<128xf32>
      %15 = vector.shape_cast %14 : vector<128xf32> to vector<1x128xf32>
      %16 = vector.shape_cast %15 : vector<1x128xf32> to vector<1x1x128xf32>
      %c0_15 = arith.constant 0 : index
      %c0_16 = arith.constant 0 : index
      %c0_17 = arith.constant 0 : index
      %17 = vector.load %arg6[%c0_15, %c0_16, %c0_17] : memref<1x1x128xf32, #tpu.memory_space<vmem>>, vector<1x1x128xf32>
      tpu.vector_store %arg6[%c0_15, %c0_16, %c0_17], %16 {strides = array<i32>} : memref<1x1x128xf32, #tpu.memory_space<vmem>>, vector<1x1x128xf32>,
      %18 = arith.mulf %12, %12 : vector<32x128xf32>
      %cst_18 = arith.constant dense<0.000000e+00> : vector<128xf32>
      %19 = vector.multi_reduction <add>, %18, %cst_18 [0] : vector<32x128xf32> to vector<128xf32>
      %20 = vector.shape_cast %19 : vector<128xf32> to vector<1x128xf32>
      %21 = vector.shape_cast %20 : vector<1x128xf32> to vector<1x1x128xf32>
      %c0_19 = arith.constant 0 : index
      %c0_20 = arith.constant 0 : index
      %c0_21 = arith.constant 0 : index
      %22 = vector.load %arg7[%c0_19, %c0_20, %c0_21] : memref<1x1x128xf32, #tpu.memory_space<vmem>>, vector<1x1x128xf32>
      tpu.vector_store %arg7[%c0_19, %c0_20, %c0_21], %21 {strides = array<i32>} : memref<1x1x128xf32, #tpu.memory_space<vmem>>, vector<1x1x128xf32>,
    } else {
    }
    return
  }
  func.func @transform_0(%arg0: i32, %arg1: i32, %arg2: i32) -> (i32, i32) {
    %c0_i32 = arith.constant 0 : i32
    return %arg0, %arg2 : i32, i32
  }
  func.func @transform_1(%arg0: i32, %arg1: i32, %arg2: i32) -> (i32, i32) {
    %c0_i32 = arith.constant 0 : i32
    return %arg2, %arg1 : i32, i32
  }
  func.func @transform_2(%arg0: i32, %arg1: i32, %arg2: i32) -> (i32, i32) {
    %c0_i32 = arith.constant 0 : i32
    return %arg0, %arg1 : i32, i32
  }
  func.func @transform_3(%arg0: i32, %arg1: i32, %arg2: i32) -> (i32, i32, i32) {
    %c0_i32 = arith.constant 0 : i32
    %c0_i32_0 = arith.constant 0 : i32
    return %arg0, %c0_i32, %arg1 : i32, i32, i32
  }
  func.func @transform_4(%arg0: i32, %arg1: i32, %arg2: i32) -> (i32, i32, i32) {
    %c0_i32 = arith.constant 0 : i32
    %c0_i32_0 = arith.constant 0 : i32
    return %arg0, %c0_i32, %arg1 : i32, i32, i32
  }
}

module attributes {stable_mosaic.version = 11 : i64} {
  func.func @_scale_shift_lrelu_kernel(%arg0: i32, %arg1: memref<32x128xf32, #tpu.memory_space<vmem>>, %arg2: memref<1x128xf32, #tpu.memory_space<vmem>>, %arg3: memref<1x128xf32, #tpu.memory_space<vmem>>, %arg4: memref<32x128xbf16, #tpu.memory_space<vmem>>) attributes {dimension_semantics = [#tpu.dimension_semantics<parallel>], iteration_bounds = array<i64: 1>, scalar_prefetch = 0 : i64, scratch_operands = 0 : i64, tpu.core_type = #tpu.core_type<tc>, window_params = [{transform_indices = @transform_0, window_bounds = array<i64: 32, 128>}, {pipeline_mode = #tpu.pipeline_mode<synchronous>, transform_indices = @transform_1, window_bounds = array<i64: 1, 128>}, {pipeline_mode = #tpu.pipeline_mode<synchronous>, transform_indices = @transform_2, window_bounds = array<i64: 1, 128>}, {transform_indices = @transform_3, window_bounds = array<i64: 32, 128>}]} {
    %c0 = arith.constant 0 : index
    %c0_0 = arith.constant 0 : index
    %0 = vector.load %arg1[%c0, %c0_0] : memref<32x128xf32, #tpu.memory_space<vmem>>, vector<32x128xf32>
    %c0_1 = arith.constant 0 : index
    %c0_2 = arith.constant 0 : index
    %1 = vector.load %arg2[%c0_1, %c0_2] : memref<1x128xf32, #tpu.memory_space<vmem>>, vector<1x128xf32>
    %2 = vector.broadcast %1 : vector<1x128xf32> to vector<32x128xf32>
    %3 = arith.mulf %0, %2 : vector<32x128xf32>
    %c0_3 = arith.constant 0 : index
    %c0_4 = arith.constant 0 : index
    %4 = vector.load %arg3[%c0_3, %c0_4] : memref<1x128xf32, #tpu.memory_space<vmem>>, vector<1x128xf32>
    %5 = vector.broadcast %4 : vector<1x128xf32> to vector<32x128xf32>
    %6 = arith.addf %3, %5 : vector<32x128xf32>
    %cst = arith.constant 0.000000e+00 : f32
    %7 = vector.broadcast %cst : f32 to vector<32x128xf32>
    %8 = arith.cmpf oge, %6, %7 : vector<32x128xf32>
    %cst_5 = arith.constant 2.000000e-01 : f32
    %9 = vector.broadcast %cst_5 : f32 to vector<32x128xf32>
    %10 = arith.mulf %9, %6 : vector<32x128xf32>
    %11 = arith.select %8, %6, %10 : vector<32x128xi1>, vector<32x128xf32>
    %12 = arith.truncf %11 : vector<32x128xf32> to vector<32x128xbf16>
    %c0_6 = arith.constant 0 : index
    %c0_7 = arith.constant 0 : index
    %13 = vector.load %arg4[%c0_6, %c0_7] : memref<32x128xbf16, #tpu.memory_space<vmem>>, vector<32x128xbf16>
    tpu.vector_store %arg4[%c0_6, %c0_7], %12 {strides = array<i32>} : memref<32x128xbf16, #tpu.memory_space<vmem>>, vector<32x128xbf16>,
    return
  }
  func.func @transform_0(%arg0: i32) -> (i32, i32) {
    %c0_i32 = arith.constant 0 : i32
    %c0_i32_0 = arith.constant 0 : i32
    return %arg0, %c0_i32 : i32, i32
  }
  func.func @transform_1(%arg0: i32) -> (i32, i32) {
    %c0_i32 = arith.constant 0 : i32
    %c0_i32_0 = arith.constant 0 : i32
    %c0_i32_1 = arith.constant 0 : i32
    return %c0_i32, %c0_i32_0 : i32, i32
  }
  func.func @transform_2(%arg0: i32) -> (i32, i32) {
    %c0_i32 = arith.constant 0 : i32
    %c0_i32_0 = arith.constant 0 : i32
    %c0_i32_1 = arith.constant 0 : i32
    return %c0_i32, %c0_i32_0 : i32, i32
  }
  func.func @transform_3(%arg0: i32) -> (i32, i32) {
    %c0_i32 = arith.constant 0 : i32
    %c0_i32_0 = arith.constant 0 : i32
    return %arg0, %c0_i32 : i32, i32
  }
}

module attributes {stable_mosaic.version = 11 : i64} {
  func.func @_matmul_bias_act_kernel(%arg0: i32, %arg1: i32, %arg2: i32, %arg3: memref<16x512xbf16, #tpu.memory_space<vmem>>, %arg4: memref<512x128xbf16, #tpu.memory_space<vmem>>, %arg5: memref<1x128xf32, #tpu.memory_space<vmem>>, %arg6: memref<16x128xf32, #tpu.memory_space<vmem>>, %arg7: memref<16x128xf32, #tpu.memory_space<vmem>>) attributes {dimension_semantics = [#tpu.dimension_semantics<parallel>, #tpu.dimension_semantics<parallel>, #tpu.dimension_semantics<arbitrary>], iteration_bounds = array<i64: 1, 1, 2>, scalar_prefetch = 0 : i64, scratch_operands = 1 : i64, tpu.core_type = #tpu.core_type<tc>, window_params = [{transform_indices = @transform_0, window_bounds = array<i64: 16, 512>}, {transform_indices = @transform_1, window_bounds = array<i64: 512, 128>}, {transform_indices = @transform_2, window_bounds = array<i64: 1, 128>}, {transform_indices = @transform_3, window_bounds = array<i64: 16, 128>}]} {
    %c0_i32 = arith.constant 0 : i32
    %0 = arith.cmpi eq, %arg2, %c0_i32 : i32
    %1 = arith.extui %0 : i1 to i32
    %c0_i32_0 = arith.constant 0 : i32
    %2 = arith.cmpi ne, %1, %c0_i32_0 : i32
    scf.if %2 {
      %cst_9 = arith.constant 0.000000e+00 : f32
      %12 = vector.broadcast %cst_9 : f32 to vector<16x128xf32>
      %c0_10 = arith.constant 0 : index
      %c0_11 = arith.constant 0 : index
      %13 = vector.load %arg7[%c0_10, %c0_11] : memref<16x128xf32, #tpu.memory_space<vmem>>, vector<16x128xf32>
      tpu.vector_store %arg7[%c0_10, %c0_11], %12 {strides = array<i32>} : memref<16x128xf32, #tpu.memory_space<vmem>>, vector<16x128xf32>,
    } else {
    }
    %c0 = arith.constant 0 : index
    %c0_1 = arith.constant 0 : index
    %3 = vector.load %arg7[%c0, %c0_1] : memref<16x128xf32, #tpu.memory_space<vmem>>, vector<16x128xf32>
    %c0_2 = arith.constant 0 : index
    %c0_3 = arith.constant 0 : index
    %4 = vector.load %arg3[%c0_2, %c0_3] : memref<16x512xbf16, #tpu.memory_space<vmem>>, vector<16x512xbf16>
    %c0_4 = arith.constant 0 : index
    %c0_5 = arith.constant 0 : index
    %5 = vector.load %arg4[%c0_4, %c0_5] : memref<512x128xbf16, #tpu.memory_space<vmem>>, vector<512x128xbf16>
    %cst = arith.constant dense<0.000000e+00> : vector<16x128xf32>
    %6 = tpu.matmul %4, %5, %cst {dimension_numbers = #tpu.dot_dimension_numbers<[1], [0], [0], [1], [0, 0, 1, 1], [], []>} : vector<16x512xbf16>, vector<512x128xbf16>, vector<16x128xf32> -> vector<16x128xf32>
    %7 = arith.addf %3, %6 : vector<16x128xf32>
    %c0_6 = arith.constant 0 : index
    %c0_7 = arith.constant 0 : index
    %8 = vector.load %arg7[%c0_6, %c0_7] : memref<16x128xf32, #tpu.memory_space<vmem>>, vector<16x128xf32>
    tpu.vector_store %arg7[%c0_6, %c0_7], %7 {strides = array<i32>} : memref<16x128xf32, #tpu.memory_space<vmem>>, vector<16x128xf32>,
    %c1_i32 = arith.constant 1 : i32
    %9 = arith.cmpi eq, %arg2, %c1_i32 : i32
    %10 = arith.extui %9 : i1 to i32
    %c0_i32_8 = arith.constant 0 : i32
    %11 = arith.cmpi ne, %10, %c0_i32_8 : i32
    scf.if %11 {
      %c0_9 = arith.constant 0 : index
      %c0_10 = arith.constant 0 : index
      %12 = vector.load %arg7[%c0_9, %c0_10] : memref<16x128xf32, #tpu.memory_space<vmem>>, vector<16x128xf32>
      %c0_11 = arith.constant 0 : index
      %c0_12 = arith.constant 0 : index
      %13 = vector.load %arg5[%c0_11, %c0_12] : memref<1x128xf32, #tpu.memory_space<vmem>>, vector<1x128xf32>
      %14 = vector.broadcast %13 : vector<1x128xf32> to vector<16x128xf32>
      %15 = arith.addf %12, %14 : vector<16x128xf32>
      %c0_13 = arith.constant 0 : index
      %c0_14 = arith.constant 0 : index
      %16 = vector.load %arg6[%c0_13, %c0_14] : memref<16x128xf32, #tpu.memory_space<vmem>>, vector<16x128xf32>
      tpu.vector_store %arg6[%c0_13, %c0_14], %15 {strides = array<i32>} : memref<16x128xf32, #tpu.memory_space<vmem>>, vector<16x128xf32>,
    } else {
    }
    return
  }
  func.func @transform_0(%arg0: i32, %arg1: i32, %arg2: i32) -> (i32, i32) {
    %c0_i32 = arith.constant 0 : i32
    return %arg0, %arg2 : i32, i32
  }
  func.func @transform_1(%arg0: i32, %arg1: i32, %arg2: i32) -> (i32, i32) {
    %c0_i32 = arith.constant 0 : i32
    return %arg2, %arg1 : i32, i32
  }
  func.func @transform_2(%arg0: i32, %arg1: i32, %arg2: i32) -> (i32, i32) {
    %c0_i32 = arith.constant 0 : i32
    %c0_i32_0 = arith.constant 0 : i32
    return %c0_i32, %arg1 : i32, i32
  }
  func.func @transform_3(%arg0: i32, %arg1: i32, %arg2: i32) -> (i32, i32) {
    %c0_i32 = arith.constant 0 : i32
    return %arg0, %arg1 : i32, i32
  }
}

</mosaic_0001>

<llo_original>
// kernel: discriminator_forward.8
$region0: #{discriminator_forward.8}
  #allocation0 [shape = 'u32[]', space=smem, size = 0x4, offset = 0x4, fixed_abs, tag = 'smem constant byte address 0x4 - core index']
  #allocation1 [shape = 'u32[144,128]{1,0:T(1,128)}', space=vmem, size = 0x12000, scoped, tag = 'internal scratch']
  #allocation2 [shape = 'f32[512,128]{1,0:T(8,128)}', space=vmem, size = 0x40000, scoped, tag = 'scratch operand']
  %s0 = inlined_call_operand.vmem [shape: bf16[2048,128], index: 0, kind: input, shape index: {}]
  %s1 = inlined_call_operand.vmem [shape: bf16[128,128], index: 1, kind: input, shape index: {}]
  %s2 = inlined_call_operand.vmem [shape: f32[1,128], index: 2, kind: input, shape index: {}]
  %s3 = inlined_call_operand.vmem [shape: bf16[2048,128], index: 3, kind: output, shape index: {}]
  %s4 = sld [smem:[#allocation0]]
  $region53: #{discriminator_forward.8} parent=0
    _
  %s6 = ssub.s32 1, %s4
  %s7 = scalar_select 0, %s6, %s4
  loop: start=0, step=1, limit=6
  $region2: #{discriminator_forward.8} parent=0 // loop_pre_header
    _
  $region3: #{discriminator_forward.8} parent=0 // loop_header
    %s9 = sphi 0, %s13
    %p10 = scmp.ge.s32.totalorder %s9, 6
    %s16 = sphi 0, %s35
    %s17 = sphi 0, %s31
    %s18 = sphi 0, %s27
    %s19 = sphi 0, %s16
    %s20 = sphi 0, %s17
    %s21 = sphi 0, %s18
    %s22 = sphi 0, %s19
    %s23 = sphi 0, %s20
    %s24 = sphi 0, %s21
    %s40 = sphi 0, %s42
    %s43 = sphi 0, %s40
    %s44 = sphi 0, %s43
    %s60 = sphi 0, %s44
    %s68 = sphi 0, %s70
    %s71 = sphi 0, %s68
    %s72 = sphi 0, %s71
    %s88 = sphi 0, %s72
    %s94 = sphi 0, %s96
    %s97 = sphi 0, %s94
    %s98 = sphi 0, %s97
    %s114 = sphi 0, %s98
    %s122 = sphi 0, %s124
    %s125 = sphi 0, %s122
    %s126 = sphi 0, %s125
    %s142 = sphi 0, %s126
  $region4: #{discriminator_forward.8} parent=0 // loop_header_branch
    %12 = sbr.rel (%p10) target = $region8
  $region5: #{discriminator_forward.8} parent=0 // loop_body
    %s14 = ssub.s32 %s9, 1
    %s15 = ssub.s32 %s9, 2
    %s25 = sadd.s32 1, %s18
    %p26 = scmp.ge.s32.totalorder %s25, 1
    %s27 = scalar_select %p26, 0, %s25
    %s28 = sadd.s32 1, %s17
    %s29 = scalar_select %p26, %s28, %s17
    %p30 = scmp.ge.s32.totalorder %s29, 1
    %s31 = scalar_select %p30, 0, %s29
    %s32 = sadd.s32 1, %s16
    %s33 = scalar_select %p30, %s32, %s16
    %p34 = scmp.ge.s32.totalorder %s33, 4
    %s35 = scalar_select %p34, 0, %s33
    %s36 = ssub.s32 %s16, %s35
    %s37 = ssub.s32 %s18, %s27
    %s38 = sor.u32 %s36, %s37
    %p39 = scmp.eq.s32.totalorder %s38, 0
    %s41 = sadd.s32 %s40, 1
    %s42 = scalar_select %p39, %s40, %s41
    %p45 = pneg %p39
    %p46 = scmp.eq.s32.totalorder %s9, 3
    %p47 = por %p45, %p46
    %p48 = scmp.ne.s32.totalorder %s40, %s43
    %p49 = scmp.eq.s32.totalorder %s9, 0
    %p50 = por %p48, %p49
    %p51 = scmp.ne.s32.totalorder %s40, %s43
    %p52 = scmp.eq.s32.totalorder %s14, 3
    %p53 = por %p51, %p52
    %p54 = scmp.ne.s32.totalorder %s43, %s44
    %p55 = scmp.eq.s32.totalorder %s14, 0
    %p56 = por %p54, %p55
    %p57 = scmp.ne.s32.totalorder %s43, %s44
    %p58 = scmp.eq.s32.totalorder %s15, 3
    %p59 = por %p57, %p58
    %p61 = scmp.ne.s32.totalorder %s44, %s60
    %p62 = scmp.eq.s32.totalorder %s15, 0
    %p63 = por %p61, %p62
    %s64 = ssub.s32 %s18, %s27
    %s65 = ssub.s32 %s17, %s31
    %s66 = sor.u32 %s64, %s65
    %p67 = scmp.eq.s32.totalorder %s66, 0
    %s69 = sadd.s32 %s68, 1
    %s70 = scalar_select %p67, %s68, %s69
    %p73 = pneg %p67
    %p74 = scmp.eq.s32.totalorder %s9, 3
    %p75 = por %p73, %p74
    %p76 = scmp.ne.s32.totalorder %s68, %s71
    %p77 = scmp.eq.s32.totalorder %s9, 0
    %p78 = por %p76, %p77
    %p79 = scmp.ne.s32.totalorder %s68, %s71
    %p80 = scmp.eq.s32.totalorder %s14, 3
    %p81 = por %p79, %p80
    %p82 = scmp.ne.s32.totalorder %s71, %s72
    %p83 = scmp.eq.s32.totalorder %s14, 0
    %p84 = por %p82, %p83
    %p85 = scmp.ne.s32.totalorder %s71, %s72
    %p86 = scmp.eq.s32.totalorder %s15, 3
    %p87 = por %p85, %p86
    %p89 = scmp.ne.s32.totalorder %s72, %s88
    %p90 = scmp.eq.s32.totalorder %s15, 0
    %p91 = por %p89, %p90
    %s92 = ssub.s32 %s17, %s31
    %p93 = scmp.eq.s32.totalorder %s92, 0
    %s95 = sadd.s32 %s94, 1
    %s96 = scalar_select %p93, %s94, %s95
    %p99 = pneg %p93
    %p100 = scmp.eq.s32.totalorder %s9, 3
    %p101 = por %p99, %p100
    %p102 = scmp.ne.s32.totalorder %s94, %s97
    %p103 = scmp.eq.s32.totalorder %s9, 0
    %p104 = por %p102, %p103
    %p105 = scmp.ne.s32.totalorder %s94, %s97
    %p106 = scmp.eq.s32.totalorder %s14, 3
    %p107 = por %p105, %p106
    %p108 = scmp.ne.s32.totalorder %s97, %s98
    %p109 = scmp.eq.s32.totalorder %s14, 0
    %p110 = por %p108, %p109
    %p111 = scmp.ne.s32.totalorder %s97, %s98
    %p112 = scmp.eq.s32.totalorder %s15, 3
    %p113 = por %p111, %p112
    %p115 = scmp.ne.s32.totalorder %s98, %s114
    %p116 = scmp.eq.s32.totalorder %s15, 0
    %p117 = por %p115, %p116
    %s118 = ssub.s32 %s16, %s35
    %s119 = ssub.s32 %s17, %s31
    %s120 = sor.u32 %s118, %s119
    %p121 = scmp.eq.s32.totalorder %s120, 0
    %s123 = sadd.s32 %s122, 1
    %s124 = scalar_select %p121, %s122, %s123
    %p127 = pneg %p121
    %p128 = scmp.eq.s32.totalorder %s9, 3
    %p129 = por %p127, %p128
    %p130 = scmp.ne.s32.totalorder %s122, %s125
    %p131 = scmp.eq.s32.totalorder %s9, 0
    %p132 = por %p130, %p131
    %p133 = scmp.ne.s32.totalorder %s122, %s125
    %p134 = scmp.eq.s32.totalorder %s14, 3
    %p135 = por %p133, %p134
    %p136 = scmp.ne.s32.totalorder %s125, %s126
    %p137 = scmp.eq.s32.totalorder %s14, 0
    %p138 = por %p136, %p137
    %p139 = scmp.ne.s32.totalorder %s125, %s126
    %p140 = scmp.eq.s32.totalorder %s15, 3
    %p141 = por %p139, %p140
    %p143 = scmp.ne.s32.totalorder %s126, %s142
    %p144 = scmp.eq.s32.totalorder %s15, 0
    %p145 = por %p143, %p144
    %p146 = scmp.le.s32.totalorder 1, %s9
    %p147 = scmp.lt.s32.totalorder %s9, 5
    %p148 = pnand %p146, %p147
    %p149 = pneg %p148
    // Predicated region
    $region9: #{discriminator_forward.8} parent=5 // pred_check
      _
    $region10: #{discriminator_forward.8} parent=5 // pred_check_branch
      %151 = sbr.rel (%p148) target = $region12
    $region11: #{discriminator_forward.8} parent=5 // pred_region
      %s152 = ssub.s32 %s9, 1
      // Predicated region
      $region13: #{discriminator_forward.8} parent=11 // pred_check
        %p153 = pneg %p84
      $region14: #{discriminator_forward.8} parent=11 // pred_check_branch
        %155 = sbr.rel (%p153) target = $region16
      $region15: #{discriminator_forward.8} parent=11 // pred_region
        %s156 = smul.u32 16, %s21
        %p157 = scmp.lt.s32.totalorder %s156, 15
        %s158 = scalar_select %p157, %s156, 15
        %p159 = scmp.lt.s32.totalorder %s20, 0
        %s160 = scalar_select %p159, %s20, 0
        %s161 = sadd.s32 %s160, %s158
        %s162 = smul.addr %s161, 4
        %s163 = scalar_lea.vmem %s1, %s162
        %s164 = smul.u32 16, %s21
      $region16: #{discriminator_forward.8} parent=11 // pred_fallthru
        _
      // Predicated region
      $region17: #{discriminator_forward.8} parent=11 // pred_check
        %p165 = pneg %p110
      $region18: #{discriminator_forward.8} parent=11 // pred_check_branch
        %167 = sbr.rel (%p165) target = $region20
      $region19: #{discriminator_forward.8} parent=11 // pred_region
        %p168 = scmp.lt.s32.totalorder %s20, 0
        %s169 = scalar_select %p168, %s20, 0
        %s170 = scalar_lea.vmem %s2, %s169
      $region20: #{discriminator_forward.8} parent=11 // pred_fallthru
        _
    $region12: #{discriminator_forward.8} parent=5 // pred_fallthru
      _
    %p171 = scmp.lt.s32.totalorder %s9, 4
    // Predicated region
    $region21: #{discriminator_forward.8} parent=5 // pred_check
      %p172 = pneg %p171
    $region22: #{discriminator_forward.8} parent=5 // pred_check_branch
      %174 = sbr.rel (%p172) target = $region24
    $region23: #{discriminator_forward.8} parent=5 // pred_region
      // Predicated region
      $region25: #{discriminator_forward.8} parent=23 // pred_check
        %p175 = pneg %p50
      $region26: #{discriminator_forward.8} parent=23 // pred_check_branch
        %177 = sbr.rel (%p175) target = $region28
      $region27: #{discriminator_forward.8} parent=23 // pred_region
        %s178 = smul.u32 64, %s16
        %p179 = scmp.lt.s32.totalorder %s178, 255
        %s180 = scalar_select %p179, %s178, 255
        %p181 = scmp.lt.s32.totalorder %s18, 0
        %s182 = scalar_select %p181, %s18, 0
        %s183 = sadd.s32 %s182, %s180
        %s184 = smul.addr %s183, 4
        %s185 = scalar_lea.vmem %s0, %s184
        %s186 = smul.u32 64, %s16
      $region28: #{discriminator_forward.8} parent=23 // pred_fallthru
        _
    $region24: #{discriminator_forward.8} parent=5 // pred_fallthru
      _
    %p187 = scmp.le.s32.totalorder 1, %s9
    %p188 = scmp.lt.s32.totalorder %s9, 5
    %p189 = pnand %p187, %p188
    %p190 = pneg %p189
    // Predicated region
    $region29: #{discriminator_forward.8} parent=5 // pred_check
      _
    $region30: #{discriminator_forward.8} parent=5 // pred_check_branch
      %192 = sbr.rel (%p189) target = $region32
    $region31: #{discriminator_forward.8} parent=5 // pred_region
      %s193 = ssub.s32 %s9, 1
      %s194 = smul.u32 64, %s19
      %p195 = scmp.lt.s32.totalorder %s194, 255
      %s196 = scalar_select %p195, %s194, 255
      %p197 = scmp.lt.s32.totalorder %s21, 0
      %s198 = scalar_select %p197, %s21, 0
      %s199 = sadd.s32 %s198, %s196
      %s200 = smul.addr %s199, 4
      %s201 = scalar_lea.vmem %s0, %s200
      %p202 = pneg %p56
      %p203 = pneg %p53
      %s204 = smul.u32 16, %s21
      %p205 = scmp.lt.s32.totalorder %s204, 15
      %s206 = scalar_select %p205, %s204, 15
      %p207 = scmp.lt.s32.totalorder %s20, 0
      %s208 = scalar_select %p207, %s20, 0
      %s209 = sadd.s32 %s208, %s206
      %s210 = smul.addr %s209, 4
      %s211 = scalar_lea.vmem %s1, %s210
      %p212 = pneg %p84
      %p213 = pneg %p81
      %p214 = scmp.lt.s32.totalorder %s20, 0
      %s215 = scalar_select %p214, %s20, 0
      %s216 = scalar_lea.vmem %s2, %s215
      %p217 = pneg %p110
      %p218 = pneg %p107
      %p219 = pneg %p138
      %p220 = pneg %p135
      %s221 = smul.u32 64, %s19
      %p222 = scmp.lt.s32.totalorder %s221, 255
      %s223 = scalar_select %p222, %s221, 255
      %p224 = scmp.lt.s32.totalorder %s20, 0
      %s225 = scalar_select %p224, %s20, 0
      %s226 = sadd.s32 %s225, %s223
      %s227 = smul.addr %s226, 4
      %s228 = scalar_lea.vmem %s3, %s227
      %s229 = smul.u32 64, %s19
      %p230 = scmp.lt.s32.totalorder %s229, 255
      %s231 = scalar_select %p230, %s229, 255
      %p232 = scmp.lt.s32.totalorder %s21, 0
      %s233 = scalar_select %p232, %s21, 0
      %s234 = sadd.s32 %s233, %s231
      %s235 = smul.addr %s234, 4
      %s236 = scalar_lea.vmem %s0, %s235
      %s237 = smul.u32 64, %s19
      %s238 = smul.u32 16, %s21
      %p239 = scmp.lt.s32.totalorder %s238, 15
      %s240 = scalar_select %p239, %s238, 15
      %p241 = scmp.lt.s32.totalorder %s20, 0
      %s242 = scalar_select %p241, %s20, 0
      %s243 = sadd.s32 %s242, %s240
      %s244 = smul.addr %s243, 4
      %s245 = scalar_lea.vmem %s1, %s244
      %s246 = smul.u32 16, %s21
      %p247 = scmp.lt.s32.totalorder %s20, 0
      %s248 = scalar_select %p247, %s20, 0
      %s249 = scalar_lea.vmem %s2, %s248
      %s250 = smul.u32 64, %s19
      %p251 = scmp.lt.s32.totalorder %s250, 255
      %s252 = scalar_select %p251, %s250, 255
      %p253 = scmp.lt.s32.totalorder %s20, 0
      %s254 = scalar_select %p253, %s20, 0
      %s255 = sadd.s32 %s254, %s252
      %s256 = smul.addr %s255, 4
      %s257 = scalar_lea.vmem %s3, %s256
      %s258 = smul.u32 64, %s19
      %p260 = scmp.eq.s32.totalorder %s21, 0
      // Predicated region
      $region33: #{discriminator_forward.8} parent=31 // pred_check
        %p261 = pneg %p260
      $region34: #{discriminator_forward.8} parent=31 // pred_check_branch
        %263 = sbr.rel (%p261) target = $region36
      $region35: #{discriminator_forward.8} parent=31 // pred_region
        %264 = vst [vmem:[#allocation2] sm:$0xff] 0.0
        %265 = vst [vmem:[#allocation2 + $0x8] sm:$0xff] 0.0
        %266 = vst [vmem:[#allocation2 + $0x10] sm:$0xff] 0.0
        %267 = vst [vmem:[#allocation2 + $0x18] sm:$0xff] 0.0
        %268 = vst [vmem:[#allocation2 + $0x20] sm:$0xff] 0.0
        %269 = vst [vmem:[#allocation2 + $0x28] sm:$0xff] 0.0
        %270 = vst [vmem:[#allocation2 + $0x30] sm:$0xff] 0.0
        %271 = vst [vmem:[#allocation2 + $0x38] sm:$0xff] 0.0
        %272 = vst [vmem:[#allocation2 + $0x40] sm:$0xff] 0.0
        %273 = vst [vmem:[#allocation2 + $0x48] sm:$0xff] 0.0
        %274 = vst [vmem:[#allocation2 + $0x50] sm:$0xff] 0.0
        %275 = vst [vmem:[#allocation2 + $0x58] sm:$0xff] 0.0
        %276 = vst [vmem:[#allocation2 + $0x60] sm:$0xff] 0.0
        %277 = vst [vmem:[#allocation2 + $0x68] sm:$0xff] 0.0
        %278 = vst [vmem:[#allocation2 + $0x70] sm:$0xff] 0.0
        %279 = vst [vmem:[#allocation2 + $0x78] sm:$0xff] 0.0
        %280 = vst [vmem:[#allocation2 + $0x80] sm:$0xff] 0.0
        %281 = vst [vmem:[#allocation2 + $0x88] sm:$0xff] 0.0
        %282 = vst [vmem:[#allocation2 + $0x90] sm:$0xff] 0.0
        %283 = vst [vmem:[#allocation2 + $0x98] sm:$0xff] 0.0
        %284 = vst [vmem:[#allocation2 + $0xa0] sm:$0xff] 0.0
        %285 = vst [vmem:[#allocation2 + $0xa8] sm:$0xff] 0.0
        %286 = vst [vmem:[#allocation2 + $0xb0] sm:$0xff] 0.0
        %287 = vst [vmem:[#allocation2 + $0xb8] sm:$0xff] 0.0
        %288 = vst [vmem:[#allocation2 + $0xc0] sm:$0xff] 0.0
        %289 = vst [vmem:[#allocation2 + $0xc8] sm:$0xff] 0.0
        %290 = vst [vmem:[#allocation2 + $0xd0] sm:$0xff] 0.0
        %291 = vst [vmem:[#allocation2 + $0xd8] sm:$0xff] 0.0
        %292 = vst [vmem:[#allocation2 + $0xe0] sm:$0xff] 0.0
        %293 = vst [vmem:[#allocation2 + $0xe8] sm:$0xff] 0.0
        %294 = vst [vmem:[#allocation2 + $0xf0] sm:$0xff] 0.0
        %295 = vst [vmem:[#allocation2 + $0xf8] sm:$0xff] 0.0
        %296 = vst [vmem:[#allocation2 + $0x100] sm:$0xff] 0.0
        %297 = vst [vmem:[#allocation2 + $0x108] sm:$0xff] 0.0
        %298 = vst [vmem:[#allocation2 + $0x110] sm:$0xff] 0.0
        %299 = vst [vmem:[#allocation2 + $0x118] sm:$0xff] 0.0
        %300 = vst [vmem:[#allocation2 + $0x120] sm:$0xff] 0.0
        %301 = vst [vmem:[#allocation2 + $0x128] sm:$0xff] 0.0
        %302 = vst [vmem:[#allocation2 + $0x130] sm:$0xff] 0.0
        %303 = vst [vmem:[#allocation2 + $0x138] sm:$0xff] 0.0
        %304 = vst [vmem:[#allocation2 + $0x140] sm:$0xff] 0.0
        %305 = vst [vmem:[#allocation2 + $0x148] sm:$0xff] 0.0
        %306 = vst [vmem:[#allocation2 + $0x150] sm:$0xff] 0.0
        %307 = vst [vmem:[#allocation2 + $0x158] sm:$0xff] 0.0
        %308 = vst [vmem:[#allocation2 + $0x160] sm:$0xff] 0.0
        %309 = vst [vmem:[#allocation2 + $0x168] sm:$0xff] 0.0
        %310 = vst [vmem:[#allocation2 + $0x170] sm:$0xff] 0.0
        %311 = vst [vmem:[#allocation2 + $0x178] sm:$0xff] 0.0
        %312 = vst [vmem:[#allocation2 + $0x180] sm:$0xff] 0.0
        %313 = vst [vmem:[#allocation2 + $0x188] sm:$0xff] 0.0
        %314 = vst [vmem:[#allocation2 + $0x190] sm:$0xff] 0.0
        %315 = vst [vmem:[#allocation2 + $0x198] sm:$0xff] 0.0
        %316 = vst [vmem:[#allocation2 + $0x1a0] sm:$0xff] 0.0
        %317 = vst [vmem:[#allocation2 + $0x1a8] sm:$0xff] 0.0
        %318 = vst [vmem:[#allocation2 + $0x1b0] sm:$0xff] 0.0
        %319 = vst [vmem:[#allocation2 + $0x1b8] sm:$0xff] 0.0
        %320 = vst [vmem:[#allocation2 + $0x1c0] sm:$0xff] 0.0
        %321 = vst [vmem:[#allocation2 + $0x1c8] sm:$0xff] 0.0
        %322 = vst [vmem:[#allocation2 + $0x1d0] sm:$0xff] 0.0
        %323 = vst [vmem:[#allocation2 + $0x1d8] sm:$0xff] 0.0
        %324 = vst [vmem:[#allocation2 + $0x1e0] sm:$0xff] 0.0
        %325 = vst [vmem:[#allocation2 + $0x1e8] sm:$0xff] 0.0
        %326 = vst [vmem:[#allocation2 + $0x1f0] sm:$0xff] 0.0
        %327 = vst [vmem:[#allocation2 + $0x1f8] sm:$0xff] 0.0
      $region36: #{discriminator_forward.8} parent=31 // pred_fallthru
        _
      %v328 = vld [vmem:[#allocation2] sm:$0xff]
      %v329 = vld [vmem:[#allocation2 + $0x8] sm:$0xff]
      %v330 = vld [vmem:[#allocation2 + $0x10] sm:$0xff]
      %v331 = vld [vmem:[#allocation2 + $0x18] sm:$0xff]
      %v332 = vld [vmem:[#allocation2 + $0x20] sm:$0xff]
      %v333 = vld [vmem:[#allocation2 + $0x28] sm:$0xff]
      %v334 = vld [vmem:[#allocation2 + $0x30] sm:$0xff]
      %v335 = vld [vmem:[#allocation2 + $0x38] sm:$0xff]
      %v336 = vld [vmem:[#allocation2 + $0x40] sm:$0xff]
      %v337 = vld [vmem:[#allocation2 + $0x48] sm:$0xff]
      %v338 = vld [vmem:[#allocation2 + $0x50] sm:$0xff]
      %v339 = vld [vmem:[#allocation2 + $0x58] sm:$0xff]
      %v340 = vld [vmem:[#allocation2 + $0x60] sm:$0xff]
      %v341 = vld [vmem:[#allocation2 + $0x68] sm:$0xff]
      %v342 = vld [vmem:[#allocation2 + $0x70] sm:$0xff]
      %v343 = vld [vmem:[#allocation2 + $0x78] sm:$0xff]
      %v344 = vld [vmem:[#allocation2 + $0x80] sm:$0xff]
      %v345 = vld [vmem:[#allocation2 + $0x88] sm:$0xff]
      %v346 = vld [vmem:[#allocation2 + $0x90] sm:$0xff]
      %v347 = vld [vmem:[#allocation2 + $0x98] sm:$0xff]
      %v348 = vld [vmem:[#allocation2 + $0xa0] sm:$0xff]
      %v349 = vld [vmem:[#allocation2 + $0xa8] sm:$0xff]
      %v350 = vld [vmem:[#allocation2 + $0xb0] sm:$0xff]
      %v351 = vld [vmem:[#allocation2 + $0xb8] sm:$0xff]
      %v352 = vld [vmem:[#allocation2 + $0xc0] sm:$0xff]
      %v353 = vld [vmem:[#allocation2 + $0xc8] sm:$0xff]
      %v354 = vld [vmem:[#allocation2 + $0xd0] sm:$0xff]
      %v355 = vld [vmem:[#allocation2 + $0xd8] sm:$0xff]
      %v356 = vld [vmem:[#allocation2 + $0xe0] sm:$0xff]
      %v357 = vld [vmem:[#allocation2 + $0xe8] sm:$0xff]
      %v358 = vld [vmem:[#allocation2 + $0xf0] sm:$0xff]
      %v359 = vld [vmem:[#allocation2 + $0xf8] sm:$0xff]
      %v360 = vld [vmem:[#allocation2 + $0x100] sm:$0xff]
      %v361 = vld [vmem:[#allocation2 + $0x108] sm:$0xff]
      %v362 = vld [vmem:[#allocation2 + $0x110] sm:$0xff]
      %v363 = vld [vmem:[#allocation2 + $0x118] sm:$0xff]
      %v364 = vld [vmem:[#allocation2 + $0x120] sm:$0xff]
      %v365 = vld [vmem:[#allocation2 + $0x128] sm:$0xff]
      %v366 = vld [vmem:[#allocation2 + $0x130] sm:$0xff]
      %v367 = vld [vmem:[#allocation2 + $0x138] sm:$0xff]
      %v368 = vld [vmem:[#allocation2 + $0x140] sm:$0xff]
      %v369 = vld [vmem:[#allocation2 + $0x148] sm:$0xff]
      %v370 = vld [vmem:[#allocation2 + $0x150] sm:$0xff]
      %v371 = vld [vmem:[#allocation2 + $0x158] sm:$0xff]
      %v372 = vld [vmem:[#allocation2 + $0x160] sm:$0xff]
      %v373 = vld [vmem:[#allocation2 + $0x168] sm:$0xff]
      %v374 = vld [vmem:[#allocation2 + $0x170] sm:$0xff]
      %v375 = vld [vmem:[#allocation2 + $0x178] sm:$0xff]
      %v376 = vld [vmem:[#allocation2 + $0x180] sm:$0xff]
      %v377 = vld [vmem:[#allocation2 + $0x188] sm:$0xff]
      %v378 = vld [vmem:[#allocation2 + $0x190] sm:$0xff]
      %v379 = vld [vmem:[#allocation2 + $0x198] sm:$0xff]
      %v380 = vld [vmem:[#allocation2 + $0x1a0] sm:$0xff]
      %v381 = vld [vmem:[#allocation2 + $0x1a8] sm:$0xff]
      %v382 = vld [vmem:[#allocation2 + $0x1b0] sm:$0xff]
      %v383 = vld [vmem:[#allocation2 + $0x1b8] sm:$0xff]
      %v384 = vld [vmem:[#allocation2 + $0x1c0] sm:$0xff]
      %v385 = vld [vmem:[#allocation2 + $0x1c8] sm:$0xff]
      %v386 = vld [vmem:[#allocation2 + $0x1d0] sm:$0xff]
      %v387 = vld [vmem:[#allocation2 + $0x1d8] sm:$0xff]
      %v388 = vld [vmem:[#allocation2 + $0x1e0] sm:$0xff]
      %v389 = vld [vmem:[#allocation2 + $0x1e8] sm:$0xff]
      %v390 = vld [vmem:[#allocation2 + $0x1f0] sm:$0xff]
      %v391 = vld [vmem:[#allocation2 + $0x1f8] sm:$0xff]
      %v392 = vld [vmem:[%s236] sm:$0xf]
      %v393 = vld [vmem:[%s236 + $0x4] sm:$0xf]
      %v394 = vld [vmem:[%s236 + $0x8] sm:$0xf]
      %v395 = vld [vmem:[%s236 + $0xc] sm:$0xf]
      %v396 = vld [vmem:[%s236 + $0x10] sm:$0xf]
      %v397 = vld [vmem:[%s236 + $0x14] sm:$0xf]
      %v398 = vld [vmem:[%s236 + $0x18] sm:$0xf]
      %v399 = vld [vmem:[%s236 + $0x1c] sm:$0xf]
      %v400 = vld [vmem:[%s236 + $0x20] sm:$0xf]
      %v401 = vld [vmem:[%s236 + $0x24] sm:$0xf]
      %v402 = vld [vmem:[%s236 + $0x28] sm:$0xf]
      %v403 = vld [vmem:[%s236 + $0x2c] sm:$0xf]
      %v404 = vld [vmem:[%s236 + $0x30] sm:$0xf]
      %v405 = vld [vmem:[%s236 + $0x34] sm:$0xf]
      %v406 = vld [vmem:[%s236 + $0x38] sm:$0xf]
      %v407 = vld [vmem:[%s236 + $0x3c] sm:$0xf]
      %v408 = vld [vmem:[%s236 + $0x40] sm:$0xf]
      %v409 = vld [vmem:[%s236 + $0x44] sm:$0xf]
      %v410 = vld [vmem:[%s236 + $0x48] sm:$0xf]
      %v411 = vld [vmem:[%s236 + $0x4c] sm:$0xf]
      %v412 = vld [vmem:[%s236 + $0x50] sm:$0xf]
      %v413 = vld [vmem:[%s236 + $0x54] sm:$0xf]
      %v414 = vld [vmem:[%s236 + $0x58] sm:$0xf]
      %v415 = vld [vmem:[%s236 + $0x5c] sm:$0xf]
      %v416 = vld [vmem:[%s236 + $0x60] sm:$0xf]
      %v417 = vld [vmem:[%s236 + $0x64] sm:$0xf]
      %v418 = vld [vmem:[%s236 + $0x68] sm:$0xf]
      %v419 = vld [vmem:[%s236 + $0x6c] sm:$0xf]
      %v420 = vld [vmem:[%s236 + $0x70] sm:$0xf]
      %v421 = vld [vmem:[%s236 + $0x74] sm:$0xf]
      %v422 = vld [vmem:[%s236 + $0x78] sm:$0xf]
      %v423 = vld [vmem:[%s236 + $0x7c] sm:$0xf]
      %v424 = vld [vmem:[%s236 + $0x80] sm:$0xf]
      %v425 = vld [vmem:[%s236 + $0x84] sm:$0xf]
      %v426 = vld [vmem:[%s236 + $0x88] sm:$0xf]
      %v427 = vld [vmem:[%s236 + $0x8c] sm:$0xf]
      %v428 = vld [vmem:[%s236 + $0x90] sm:$0xf]
      %v429 = vld [vmem:[%s236 + $0x94] sm:$0xf]
      %v430 = vld [vmem:[%s236 + $0x98] sm:$0xf]
      %v431 = vld [vmem:[%s236 + $0x9c] sm:$0xf]
      %v432 = vld [vmem:[%s236 + $0xa0] sm:$0xf]
      %v433 = vld [vmem:[%s236 + $0xa4] sm:$0xf]
      %v434 = vld [vmem:[%s236 + $0xa8] sm:$0xf]
      %v435 = vld [vmem:[%s236 + $0xac] sm:$0xf]
      %v436 = vld [vmem:[%s236 + $0xb0] sm:$0xf]
      %v437 = vld [vmem:[%s236 + $0xb4] sm:$0xf]
      %v438 = vld [vmem:[%s236 + $0xb8] sm:$0xf]
      %v439 = vld [vmem:[%s236 + $0xbc] sm:$0xf]
      %v440 = vld [vmem:[%s236 + $0xc0] sm:$0xf]
      %v441 = vld [vmem:[%s236 + $0xc4] sm:$0xf]
      %v442 = vld [vmem:[%s236 + $0xc8] sm:$0xf]
      %v443 = vld [vmem:[%s236 + $0xcc] sm:$0xf]
      %v444 = vld [vmem:[%s236 + $0xd0] sm:$0xf]
      %v445 = vld [vmem:[%s236 + $0xd4] sm:$0xf]
      %v446 = vld [vmem:[%s236 + $0xd8] sm:$0xf]
      %v447 = vld [vmem:[%s236 + $0xdc] sm:$0xf]
      %v448 = vld [vmem:[%s236 + $0xe0] sm:$0xf]
      %v449 = vld [vmem:[%s236 + $0xe4] sm:$0xf]
      %v450 = vld [vmem:[%s236 + $0xe8] sm:$0xf]
      %v451 = vld [vmem:[%s236 + $0xec] sm:$0xf]
      %v452 = vld [vmem:[%s236 + $0xf0] sm:$0xf]
      %v453 = vld [vmem:[%s236 + $0xf4] sm:$0xf]
      %v454 = vld [vmem:[%s236 + $0xf8] sm:$0xf]
      %v455 = vld [vmem:[%s236 + $0xfc] sm:$0xf]
      %v456 = vld [vmem:[%s245] sm:$0xf]
      %v457 = vld [vmem:[%s245 + $0x4] sm:$0xf]
      %v458 = vld [vmem:[%s245 + $0x8] sm:$0xf]
      %v459 = vld [vmem:[%s245 + $0xc] sm:$0xf]
      %v460 = vld [vmem:[%s245 + $0x10] sm:$0xf]
      %v461 = vld [vmem:[%s245 + $0x14] sm:$0xf]
      %v462 = vld [vmem:[%s245 + $0x18] sm:$0xf]
      %v463 = vld [vmem:[%s245 + $0x1c] sm:$0xf]
      %v464 = vld [vmem:[%s245 + $0x20] sm:$0xf]
      %v465 = vld [vmem:[%s245 + $0x24] sm:$0xf]
      %v466 = vld [vmem:[%s245 + $0x28] sm:$0xf]
      %v467 = vld [vmem:[%s245 + $0x2c] sm:$0xf]
      %v468 = vld [vmem:[%s245 + $0x30] sm:$0xf]
      %v469 = vld [vmem:[%s245 + $0x34] sm:$0xf]
      %v470 = vld [vmem:[%s245 + $0x38] sm:$0xf]
      %v471 = vld [vmem:[%s245 + $0x3c] sm:$0xf]
      %v536 = vunpack.c.l.b16 %v392
      %v537 = vunpack.c.l.b16 %v393
      %v538 = vunpack.c.l.b16 %v394
      %v539 = vunpack.c.l.b16 %v395
      %v540 = vunpack.c.l.b16 %v396
      %v541 = vunpack.c.l.b16 %v397
      %v542 = vunpack.c.l.b16 %v398
      %v543 = vunpack.c.l.b16 %v399
      %v544 = vunpack.c.l.b16 %v400
      %v545 = vunpack.c.l.b16 %v401
      %v546 = vunpack.c.l.b16 %v402
      %v547 = vunpack.c.l.b16 %v403
      %v548 = vunpack.c.l.b16 %v404
      %v549 = vunpack.c.l.b16 %v405
      %v550 = vunpack.c.l.b16 %v406
      %v551 = vunpack.c.l.b16 %v407
      %v552 = vunpack.c.l.b16 %v408
      %v553 = vunpack.c.l.b16 %v409
      %v554 = vunpack.c.l.b16 %v410
      %v555 = vunpack.c.l.b16 %v411
      %v556 = vunpack.c.l.b16 %v412
      %v557 = vunpack.c.l.b16 %v413
      %v558 = vunpack.c.l.b16 %v414
      %v559 = vunpack.c.l.b16 %v415
      %v560 = vunpack.c.l.b16 %v416
      %v561 = vunpack.c.l.b16 %v417
      %v562 = vunpack.c.l.b16 %v418
      %v563 = vunpack.c.l.b16 %v419
      %v564 = vunpack.c.l.b16 %v420
      %v565 = vunpack.c.l.b16 %v421
      %v566 = vunpack.c.l.b16 %v422
      %v567 = vunpack.c.l.b16 %v423
      %v568 = vunpack.c.l.b16 %v424
      %v569 = vunpack.c.l.b16 %v425
      %v570 = vunpack.c.l.b16 %v426
      %v571 = vunpack.c.l.b16 %v427
      %v572 = vunpack.c.l.b16 %v428
      %v573 = vunpack.c.l.b16 %v429
      %v574 = vunpack.c.l.b16 %v430
      %v575 = vunpack.c.l.b16 %v431
      %v576 = vunpack.c.l.b16 %v432
      %v577 = vunpack.c.l.b16 %v433
      %v578 = vunpack.c.l.b16 %v434
      %v579 = vunpack.c.l.b16 %v435
      %v580 = vunpack.c.l.b16 %v436
      %v581 = vunpack.c.l.b16 %v437
      %v582 = vunpack.c.l.b16 %v438
      %v583 = vunpack.c.l.b16 %v439
      %v584 = vunpack.c.l.b16 %v440
      %v585 = vunpack.c.l.b16 %v441
      %v586 = vunpack.c.l.b16 %v442
      %v587 = vunpack.c.l.b16 %v443
      %v588 = vunpack.c.l.b16 %v444
      %v589 = vunpack.c.l.b16 %v445
      %v590 = vunpack.c.l.b16 %v446
      %v591 = vunpack.c.l.b16 %v447
      %v592 = vunpack.c.l.b16 %v448
      %v593 = vunpack.c.l.b16 %v449
      %v594 = vunpack.c.l.b16 %v450
      %v595 = vunpack.c.l.b16 %v451
      %v596 = vunpack.c.l.b16 %v452
      %v597 = vunpack.c.l.b16 %v453
      %v598 = vunpack.c.l.b16 %v454
      %v599 = vunpack.c.l.b16 %v455
      %v600 = vpack.c.b16 %v537, %v536
      %v601 = vpack.c.b16 %v539, %v538
      %v602 = vpack.c.b16 %v541, %v540
      %v603 = vpack.c.b16 %v543, %v542
      %v604 = vpack.c.b16 %v545, %v544
      %v605 = vpack.c.b16 %v547, %v546
      %v606 = vpack.c.b16 %v549, %v548
      %v607 = vpack.c.b16 %v551, %v550
      %v608 = vpack.c.b16 %v553, %v552
      %v609 = vpack.c.b16 %v555, %v554
      %v610 = vpack.c.b16 %v557, %v556
      %v611 = vpack.c.b16 %v559, %v558
      %v612 = vpack.c.b16 %v561, %v560
      %v613 = vpack.c.b16 %v563, %v562
      %v614 = vpack.c.b16 %v565, %v564
      %v615 = vpack.c.b16 %v567, %v566
      %v616 = vpack.c.b16 %v569, %v568
      %v617 = vpack.c.b16 %v571, %v570
      %v618 = vpack.c.b16 %v573, %v572
      %v619 = vpack.c.b16 %v575, %v574
      %v620 = vpack.c.b16 %v577, %v576
      %v621 = vpack.c.b16 %v579, %v578
      %v622 = vpack.c.b16 %v581, %v580
      %v623 = vpack.c.b16 %v583, %v582
      %v624 = vpack.c.b16 %v585, %v584
      %v625 = vpack.c.b16 %v587, %v586
      %v626 = vpack.c.b16 %v589, %v588
      %v627 = vpack.c.b16 %v591, %v590
      %v628 = vpack.c.b16 %v593, %v592
      %v629 = vpack.c.b16 %v595, %v594
      %v630 = vpack.c.b16 %v597, %v596
      %v631 = vpack.c.b16 %v599, %v598
      %v680 = vunpack.c.l.b16 %v456
      %v681 = vunpack.c.l.b16 %v457
      %v682 = vunpack.c.l.b16 %v458
      %v683 = vunpack.c.l.b16 %v459
      %v684 = vunpack.c.l.b16 %v460
      %v685 = vunpack.c.l.b16 %v461
      %v686 = vunpack.c.l.b16 %v462
      %v687 = vunpack.c.l.b16 %v463
      %v688 = vunpack.c.l.b16 %v464
      %v689 = vunpack.c.l.b16 %v465
      %v690 = vunpack.c.l.b16 %v466
      %v691 = vunpack.c.l.b16 %v467
      %v692 = vunpack.c.l.b16 %v468
      %v693 = vunpack.c.l.b16 %v469
      %v694 = vunpack.c.l.b16 %v470
      %v695 = vunpack.c.l.b16 %v471
      %v696 = vpack.c.b16 %v681, %v680
      %v697 = vpack.c.b16 %v683, %v682
      %v698 = vpack.c.b16 %v685, %v684
      %v699 = vpack.c.b16 %v687, %v686
      %v700 = vpack.c.b16 %v689, %v688
      %v701 = vpack.c.b16 %v691, %v690
      %v702 = vpack.c.b16 %v693, %v692
      %v703 = vpack.c.b16 %v695, %v694
      %712 = vmatprep.subr.bf16.mxu0 0
      %713 = vmatpush1.bf16.msra.mxu0 %v696
      %714 = vmatprep.subr.bf16.mxu0 0
      %715 = vmatpush1.bf16.msra.mxu0 %v697
      %716 = vmatprep.subr.bf16.mxu0 0
      %717 = vmatpush1.bf16.msra.mxu0 %v698
      %718 = vmatprep.subr.bf16.mxu0 0
      %719 = vmatpush1.bf16.msra.mxu0 %v699
      %720 = vmatprep.subr.bf16.mxu0 0
      %721 = vmatpush1.bf16.msra.mxu0 %v700
      %722 = vmatprep.subr.bf16.mxu0 0
      %723 = vmatpush1.bf16.msra.mxu0 %v701
      %724 = vmatprep.subr.bf16.mxu0 0
      %725 = vmatpush1.bf16.msra.mxu0 %v702
      %726 = vmatprep.subr.bf16.mxu0 0
      %727 = vmatpush1.bf16.msra.mxu0 %v703
      %728 = vmatprep.subr.bf16.mxu0 0
      %729 = vmatpush1.bf16.msra.mxu0 0
      %730 = vmatprep.subr.bf16.mxu0 0
      %731 = vmatpush1.bf16.msra.mxu0 0
      %732 = vmatprep.subr.bf16.mxu0 0
      %733 = vmatpush1.bf16.msra.mxu0 0
      %734 = vmatprep.subr.bf16.mxu0 0
      %735 = vmatpush1.bf16.msra.mxu0 0
      %736 = vmatprep.subr.bf16.mxu0 0
      %737 = vmatpush1.bf16.msra.mxu0 0
      %738 = vmatprep.subr.bf16.mxu0 0
      %739 = vmatpush1.bf16.msra.mxu0 0
      %740 = vmatprep.subr.bf16.mxu0 0
      %741 = vmatpush1.bf16.msra.mxu0 0
      %742 = vmatprep.subr.bf16.mxu0 0
      %743 = vmatpush1.bf16.msra.mxu0 0
      %744 = vmatprep.mubr.bf16.mxu0 0
      %745 = vmatmul.mubr.bf16.gmra.mrb[0].mxu0 %v600
      %v746 = vpop.f32.mrb[0].mxu0
      %v747 = vadd.f32 0.0, %v746
      %v748 = vpop.f32.mrb[0].mxu0
      %v749 = vpop.f32.mrb[0].mxu0
      %v750 = vadd.f32 0.0, %v749
      %v751 = vpop.f32.mrb[0].mxu0
      %752 = vmatprep.mubr.bf16.mxu0 0
      %753 = vmatmul.mubr.bf16.gmra.mrb[0].mxu0 %v601
      %v754 = vpop.f32.mrb[0].mxu0
      %v755 = vadd.f32 0.0, %v754
      %v756 = vpop.f32.mrb[0].mxu0
      %v757 = vpop.f32.mrb[0].mxu0
      %v758 = vadd.f32 0.0, %v757
      %v759 = vpop.f32.mrb[0].mxu0
      %760 = vmatprep.mubr.bf16.mxu0 0
      %761 = vmatmul.mubr.bf16.gmra.mrb[0].mxu0 %v602
      %v762 = vpop.f32.mrb[0].mxu0
      %v763 = vadd.f32 0.0, %v762
      %v764 = vpop.f32.mrb[0].mxu0
      %v765 = vpop.f32.mrb[0].mxu0
      %v766 = vadd.f32 0.0, %v765
      %v767 = vpop.f32.mrb[0].mxu0
      %768 = vmatprep.mubr.bf16.mxu0 0
      %769 = vmatmul.mubr.bf16.gmra.mrb[0].mxu0 %v603
      %v770 = vpop.f32.mrb[0].mxu0
      %v771 = vadd.f32 0.0, %v770
      %v772 = vpop.f32.mrb[0].mxu0
      %v773 = vpop.f32.mrb[0].mxu0
      %v774 = vadd.f32 0.0, %v773
      %v775 = vpop.f32.mrb[0].mxu0
      %776 = vmatprep.mubr.bf16.mxu0 0
      %777 = vmatmul.mubr.bf16.gmra.mrb[0].mxu0 %v604
      %v778 = vpop.f32.mrb[0].mxu0
      %v779 = vadd.f32 0.0, %v778
      %v780 = vpop.f32.mrb[0].mxu0
      %v781 = vpop.f32.mrb[0].mxu0
      %v782 = vadd.f32 0.0, %v781
      %v783 = vpop.f32.mrb[0].mxu0
      %784 = vmatprep.mubr.bf16.mxu0 0
      %785 = vmatmul.mubr.bf16.gmra.mrb[0].mxu0 %v605
      %v786 = vpop.f32.mrb[0].mxu0
      %v787 = vadd.f32 0.0, %v786
      %v788 = vpop.f32.mrb[0].mxu0
      %v789 = vpop.f32.mrb[0].mxu0
      %v790 = vadd.f32 0.0, %v789
      %v791 = vpop.f32.mrb[0].mxu0
      %792 = vmatprep.mubr.bf16.mxu0 0
      %793 = vmatmul.mubr.bf16.gmra.mrb[0].mxu0 %v606
      %v794 = vpop.f32.mrb[0].mxu0
      %v795 = vadd.f32 0.0, %v794
      %v796 = vpop.f32.mrb[0].mxu0
      %v797 = vpop.f32.mrb[0].mxu0
      %v798 = vadd.f32 0.0, %v797
      %v799 = vpop.f32.mrb[0].mxu0
      %800 = vmatprep.mubr.bf16.mxu0 0
      %801 = vmatmul.mubr.bf16.gmra.mrb[0].mxu0 %v607
      %v802 = vpop.f32.mrb[0].mxu0
      %v803 = vadd.f32 0.0, %v802
      %v804 = vpop.f32.mrb[0].mxu0
      %v805 = vpop.f32.mrb[0].mxu0
      %v806 = vadd.f32 0.0, %v805
      %v807 = vpop.f32.mrb[0].mxu0
      %808 = vmatprep.mubr.bf16.mxu0 0
      %809 = vmatmul.mubr.bf16.gmra.mrb[0].mxu0 %v608
      %v810 = vpop.f32.mrb[0].mxu0
      %v811 = vadd.f32 0.0, %v810
      %v812 = vpop.f32.mrb[0].mxu0
      %v813 = vpop.f32.mrb[0].mxu0
      %v814 = vadd.f32 0.0, %v813
      %v815 = vpop.f32.mrb[0].mxu0
      %816 = vmatprep.mubr.bf16.mxu0 0
      %817 = vmatmul.mubr.bf16.gmra.mrb[0].mxu0 %v609
      %v818 = vpop.f32.mrb[0].mxu0
      %v819 = vadd.f32 0.0, %v818
      %v820 = vpop.f32.mrb[0].mxu0
      %v821 = vpop.f32.mrb[0].mxu0
      %v822 = vadd.f32 0.0, %v821
      %v823 = vpop.f32.mrb[0].mxu0
      %824 = vmatprep.mubr.bf16.mxu0 0
      %825 = vmatmul.mubr.bf16.gmra.mrb[0].mxu0 %v610
      %v826 = vpop.f32.mrb[0].mxu0
      %v827 = vadd.f32 0.0, %v826
      %v828 = vpop.f32.mrb[0].mxu0
      %v829 = vpop.f32.mrb[0].mxu0
      %v830 = vadd.f32 0.0, %v829
      %v831 = vpop.f32.mrb[0].mxu0
      %832 = vmatprep.mubr.bf16.mxu0 0
      %833 = vmatmul.mubr.bf16.gmra.mrb[0].mxu0 %v611
      %v834 = vpop.f32.mrb[0].mxu0
      %v835 = vadd.f32 0.0, %v834
      %v836 = vpop.f32.mrb[0].mxu0
      %v837 = vpop.f32.mrb[0].mxu0
      %v838 = vadd.f32 0.0, %v837
      %v839 = vpop.f32.mrb[0].mxu0
      %840 = vmatprep.mubr.bf16.mxu0 0
      %841 = vmatmul.mubr.bf16.gmra.mrb[0].mxu0 %v612
      %v842 = vpop.f32.mrb[0].mxu0
      %v843 = vadd.f32 0.0, %v842
      %v844 = vpop.f32.mrb[0].mxu0
      %v845 = vpop.f32.mrb[0].mxu0
      %v846 = vadd.f32 0.0, %v845
      %v847 = vpop.f32.mrb[0].mxu0
      %848 = vmatprep.mubr.bf16.mxu0 0
      %849 = vmatmul.mubr.bf16.gmra.mrb[0].mxu0 %v613
      %v850 = vpop.f32.mrb[0].mxu0
      %v851 = vadd.f32 0.0, %v850
      %v852 = vpop.f32.mrb[0].mxu0
      %v853 = vpop.f32.mrb[0].mxu0
      %v854 = vadd.f32 0.0, %v853
      %v855 = vpop.f32.mrb[0].mxu0
      %856 = vmatprep.mubr.bf16.mxu0 0
      %857 = vmatmul.mubr.bf16.gmra.mrb[0].mxu0 %v614
      %v858 = vpop.f32.mrb[0].mxu0
      %v859 = vadd.f32 0.0, %v858
      %v860 = vpop.f32.mrb[0].mxu0
      %v861 = vpop.f32.mrb[0].mxu0
      %v862 = vadd.f32 0.0, %v861
      %v863 = vpop.f32.mrb[0].mxu0
      %864 = vmatprep.mubr.bf16.mxu0 0
      %865 = vmatmul.mubr.bf16.gmra.mrb[0].mxu0 %v615
      %v866 = vpop.f32.mrb[0].mxu0
      %v867 = vadd.f32 0.0, %v866
      %v868 = vpop.f32.mrb[0].mxu0
      %v869 = vpop.f32.mrb[0].mxu0
      %v870 = vadd.f32 0.0, %v869
      %v871 = vpop.f32.mrb[0].mxu0
      %872 = vmatprep.mubr.bf16.mxu0 0
      %873 = vmatmul.mubr.bf16.gmra.mrb[0].mxu0 %v616
      %v874 = vpop.f32.mrb[0].mxu0
      %v875 = vadd.f32 0.0, %v874
      %v876 = vpop.f32.mrb[0].mxu0
      %v877 = vpop.f32.mrb[0].mxu0
      %v878 = vadd.f32 0.0, %v877
      %v879 = vpop.f32.mrb[0].mxu0
      %880 = vmatprep.mubr.bf16.mxu0 0
      %881 = vmatmul.mubr.bf16.gmra.mrb[0].mxu0 %v617
      %v882 = vpop.f32.mrb[0].mxu0
      %v883 = vadd.f32 0.0, %v882
      %v884 = vpop.f32.mrb[0].mxu0
      %v885 = vpop.f32.mrb[0].mxu0
      %v886 = vadd.f32 0.0, %v885
      %v887 = vpop.f32.mrb[0].mxu0
      %888 = vmatprep.mubr.bf16.mxu0 0
      %889 = vmatmul.mubr.bf16.gmra.mrb[0].mxu0 %v618
      %v890 = vpop.f32.mrb[0].mxu0
      %v891 = vadd.f32 0.0, %v890
      %v892 = vpop.f32.mrb[0].mxu0
      %v893 = vpop.f32.mrb[0].mxu0
      %v894 = vadd.f32 0.0, %v893
      %v895 = vpop.f32.mrb[0].mxu0
      %896 = vmatprep.mubr.bf16.mxu0 0
      %897 = vmatmul.mubr.bf16.gmra.mrb[0].mxu0 %v619
      %v898 = vpop.f32.mrb[0].mxu0
      %v899 = vadd.f32 0.0, %v898
      %v900 = vpop.f32.mrb[0].mxu0
      %v901 = vpop.f32.mrb[0].mxu0
      %v902 = vadd.f32 0.0, %v901
      %v903 = vpop.f32.mrb[0].mxu0
      %904 = vmatprep.mubr.bf16.mxu0 0
      %905 = vmatmul.mubr.bf16.gmra.mrb[0].mxu0 %v620
      %v906 = vpop.f32.mrb[0].mxu0
      %v907 = vadd.f32 0.0, %v906
      %v908 = vpop.f32.mrb[0].mxu0
      %v909 = vpop.f32.mrb[0].mxu0
      %v910 = vadd.f32 0.0, %v909
      %v911 = vpop.f32.mrb[0].mxu0
      %912 = vmatprep.mubr.bf16.mxu0 0
      %913 = vmatmul.mubr.bf16.gmra.mrb[0].mxu0 %v621
      %v914 = vpop.f32.mrb[0].mxu0
      %v915 = vadd.f32 0.0, %v914
      %v916 = vpop.f32.mrb[0].mxu0
      %v917 = vpop.f32.mrb[0].mxu0
      %v918 = vadd.f32 0.0, %v917
      %v919 = vpop.f32.mrb[0].mxu0
      %920 = vmatprep.mubr.bf16.mxu0 0
      %921 = vmatmul.mubr.bf16.gmra.mrb[0].mxu0 %v622
      %v922 = vpop.f32.mrb[0].mxu0
      %v923 = vadd.f32 0.0, %v922
      %v924 = vpop.f32.mrb[0].mxu0
      %v925 = vpop.f32.mrb[0].mxu0
      %v926 = vadd.f32 0.0, %v925
      %v927 = vpop.f32.mrb[0].mxu0
      %928 = vmatprep.mubr.bf16.mxu0 0
      %929 = vmatmul.mubr.bf16.gmra.mrb[0].mxu0 %v623
      %v930 = vpop.f32.mrb[0].mxu0
      %v931 = vadd.f32 0.0, %v930
      %v932 = vpop.f32.mrb[0].mxu0
      %v933 = vpop.f32.mrb[0].mxu0
      %v934 = vadd.f32 0.0, %v933
      %v935 = vpop.f32.mrb[0].mxu0
      %936 = vmatprep.mubr.bf16.mxu0 0
      %937 = vmatmul.mubr.bf16.gmra.mrb[0].mxu0 %v624
      %v938 = vpop.f32.mrb[0].mxu0
      %v939 = vadd.f32 0.0, %v938
      %v940 = vpop.f32.mrb[0].mxu0
      %v941 = vpop.f32.mrb[0].mxu0
      %v942 = vadd.f32 0.0, %v941
      %v943 = vpop.f32.mrb[0].mxu0
      %944 = vmatprep.mubr.bf16.mxu0 0
      %945 = vmatmul.mubr.bf16.gmra.mrb[0].mxu0 %v625
      %v946 = vpop.f32.mrb[0].mxu0
      %v947 = vadd.f32 0.0, %v946
      %v948 = vpop.f32.mrb[0].mxu0
      %v949 = vpop.f32.mrb[0].mxu0
      %v950 = vadd.f32 0.0, %v949
      %v951 = vpop.f32.mrb[0].mxu0
      %952 = vmatprep.mubr.bf16.mxu0 0
      %953 = vmatmul.mubr.bf16.gmra.mrb[0].mxu0 %v626
      %v954 = vpop.f32.mrb[0].mxu0
      %v955 = vadd.f32 0.0, %v954
      %v956 = vpop.f32.mrb[0].mxu0
      %v957 = vpop.f32.mrb[0].mxu0
      %v958 = vadd.f32 0.0, %v957
      %v959 = vpop.f32.mrb[0].mxu0
      %960 = vmatprep.mubr.bf16.mxu0 0
      %961 = vmatmul.mubr.bf16.gmra.mrb[0].mxu0 %v627
      %v962 = vpop.f32.mrb[0].mxu0
      %v963 = vadd.f32 0.0, %v962
      %v964 = vpop.f32.mrb[0].mxu0
      %v965 = vpop.f32.mrb[0].mxu0
      %v966 = vadd.f32 0.0, %v965
      %v967 = vpop.f32.mrb[0].mxu0
      %968 = vmatprep.mubr.bf16.mxu0 0
      %969 = vmatmul.mubr.bf16.gmra.mrb[0].mxu0 %v628
      %v970 = vpop.f32.mrb[0].mxu0
      %v971 = vadd.f32 0.0, %v970
      %v972 = vpop.f32.mrb[0].mxu0
      %v973 = vpop.f32.mrb[0].mxu0
      %v974 = vadd.f32 0.0, %v973
      %v975 = vpop.f32.mrb[0].mxu0
      %976 = vmatprep.mubr.bf16.mxu0 0
      %977 = vmatmul.mubr.bf16.gmra.mrb[0].mxu0 %v629
      %v978 = vpop.f32.mrb[0].mxu0
      %v979 = vadd.f32 0.0, %v978
      %v980 = vpop.f32.mrb[0].mxu0
      %v981 = vpop.f32.mrb[0].mxu0
      %v982 = vadd.f32 0.0, %v981
      %v983 = vpop.f32.mrb[0].mxu0
      %984 = vmatprep.mubr.bf16.mxu0 0
      %985 = vmatmul.mubr.bf16.gmra.mrb[0].mxu0 %v630
      %v986 = vpop.f32.mrb[0].mxu0
      %v987 = vadd.f32 0.0, %v986
      %v988 = vpop.f32.mrb[0].mxu0
      %v989 = vpop.f32.mrb[0].mxu0
      %v990 = vadd.f32 0.0, %v989
      %v991 = vpop.f32.mrb[0].mxu0
      %992 = vmatprep.mubr.bf16.mxu0 0
      %993 = vmatmul.mubr.bf16.gmra.mrb[0].mxu0 %v631
      %v994 = vpop.f32.mrb[0].mxu0
      %v995 = vadd.f32 0.0, %v994
      %v996 = vpop.f32.mrb[0].mxu0
      %v997 = vpop.f32.mrb[0].mxu0
      %v998 = vadd.f32 0.0, %v997
      %v999 = vpop.f32.mrb[0].mxu0
      %1000 = vdwg.mxu0
      %v1001 = vadd.f32 %v328, %v747
      %v1002 = vadd.f32 %v329, %v750
      %v1003 = vadd.f32 %v330, %v755
      %v1004 = vadd.f32 %v331, %v758
      %v1005 = vadd.f32 %v332, %v763
      %v1006 = vadd.f32 %v333, %v766
      %v1007 = vadd.f32 %v334, %v771
      %v1008 = vadd.f32 %v335, %v774
      %v1009 = vadd.f32 %v336, %v779
      %v1010 = vadd.f32 %v337, %v782
      %v1011 = vadd.f32 %v338, %v787
      %v1012 = vadd.f32 %v339, %v790
      %v1013 = vadd.f32 %v340, %v795
      %v1014 = vadd.f32 %v341, %v798
      %v1015 = vadd.f32 %v342, %v803
      %v1016 = vadd.f32 %v343, %v806
      %v1017 = vadd.f32 %v344, %v811
      %v1018 = vadd.f32 %v345, %v814
      %v1019 = vadd.f32 %v346, %v819
      %v1020 = vadd.f32 %v347, %v822
      %v1021 = vadd.f32 %v348, %v827
      %v1022 = vadd.f32 %v349, %v830
      %v1023 = vadd.f32 %v350, %v835
      %v1024 = vadd.f32 %v351, %v838
      %v1025 = vadd.f32 %v352, %v843
      %v1026 = vadd.f32 %v353, %v846
      %v1027 = vadd.f32 %v354, %v851
      %v1028 = vadd.f32 %v355, %v854
      %v1029 = vadd.f32 %v356, %v859
      %v1030 = vadd.f32 %v357, %v862
      %v1031 = vadd.f32 %v358, %v867
      %v1032 = vadd.f32 %v359, %v870
      %v1033 = vadd.f32 %v360, %v875
      %v1034 = vadd.f32 %v361, %v878
      %v1035 = vadd.f32 %v362, %v883
      %v1036 = vadd.f32 %v363, %v886
      %v1037 = vadd.f32 %v364, %v891
      %v1038 = vadd.f32 %v365, %v894
      %v1039 = vadd.f32 %v366, %v899
      %v1040 = vadd.f32 %v367, %v902
      %v1041 = vadd.f32 %v368, %v907
      %v1042 = vadd.f32 %v369, %v910
      %v1043 = vadd.f32 %v370, %v915
      %v1044 = vadd.f32 %v371, %v918
      %v1045 = vadd.f32 %v372, %v923
      %v1046 = vadd.f32 %v373, %v926
      %v1047 = vadd.f32 %v374, %v931
      %v1048 = vadd.f32 %v375, %v934
      %v1049 = vadd.f32 %v376, %v939
      %v1050 = vadd.f32 %v377, %v942
      %v1051 = vadd.f32 %v378, %v947
      %v1052 = vadd.f32 %v379, %v950
      %v1053 = vadd.f32 %v380, %v955
      %v1054 = vadd.f32 %v381, %v958
      %v1055 = vadd.f32 %v382, %v963
      %v1056 = vadd.f32 %v383, %v966
      %v1057 = vadd.f32 %v384, %v971
      %v1058 = vadd.f32 %v385, %v974
      %v1059 = vadd.f32 %v386, %v979
      %v1060 = vadd.f32 %v387, %v982
      %v1061 = vadd.f32 %v388, %v987
      %v1062 = vadd.f32 %v389, %v990
      %v1063 = vadd.f32 %v390, %v995
      %v1064 = vadd.f32 %v391, %v998
      %1065 = vst [vmem:[#allocation2] sm:$0xff] %v1001
      %1066 = vst [vmem:[#allocation2 + $0x8] sm:$0xff] %v1002
      %1067 = vst [vmem:[#allocation2 + $0x10] sm:$0xff] %v1003
      %1068 = vst [vmem:[#allocation2 + $0x18] sm:$0xff] %v1004
      %1069 = vst [vmem:[#allocation2 + $0x20] sm:$0xff] %v1005
      %1070 = vst [vmem:[#allocation2 + $0x28] sm:$0xff] %v1006
      %1071 = vst [vmem:[#allocation2 + $0x30] sm:$0xff] %v1007
      %1072 = vst [vmem:[#allocation2 + $0x38] sm:$0xff] %v1008
      %1073 = vst [vmem:[#allocation2 + $0x40] sm:$0xff] %v1009
      %1074 = vst [vmem:[#allocation2 + $0x48] sm:$0xff] %v1010
      %1075 = vst [vmem:[#allocation2 + $0x50] sm:$0xff] %v1011
      %1076 = vst [vmem:[#allocation2 + $0x58] sm:$0xff] %v1012
      %1077 = vst [vmem:[#allocation2 + $0x60] sm:$0xff] %v1013
      %1078 = vst [vmem:[#allocation2 + $0x68] sm:$0xff] %v1014
      %1079 = vst [vmem:[#allocation2 + $0x70] sm:$0xff] %v1015
      %1080 = vst [vmem:[#allocation2 + $0x78] sm:$0xff] %v1016
      %1081 = vst [vmem:[#allocation2 + $0x80] sm:$0xff] %v1017
      %1082 = vst [vmem:[#allocation2 + $0x88] sm:$0xff] %v1018
      %1083 = vst [vmem:[#allocation2 + $0x90] sm:$0xff] %v1019
      %1084 = vst [vmem:[#allocation2 + $0x98] sm:$0xff] %v1020
      %1085 = vst [vmem:[#allocation2 + $0xa0] sm:$0xff] %v1021
      %1086 = vst [vmem:[#allocation2 + $0xa8] sm:$0xff] %v1022
      %1087 = vst [vmem:[#allocation2 + $0xb0] sm:$0xff] %v1023
      %1088 = vst [vmem:[#allocation2 + $0xb8] sm:$0xff] %v1024
      %1089 = vst [vmem:[#allocation2 + $0xc0] sm:$0xff] %v1025
      %1090 = vst [vmem:[#allocation2 + $0xc8] sm:$0xff] %v1026
      %1091 = vst [vmem:[#allocation2 + $0xd0] sm:$0xff] %v1027
      %1092 = vst [vmem:[#allocation2 + $0xd8] sm:$0xff] %v1028
      %1093 = vst [vmem:[#allocation2 + $0xe0] sm:$0xff] %v1029
      %1094 = vst [vmem:[#allocation2 + $0xe8] sm:$0xff] %v1030
      %1095 = vst [vmem:[#allocation2 + $0xf0] sm:$0xff] %v1031
      %1096 = vst [vmem:[#allocation2 + $0xf8] sm:$0xff] %v1032
      %1097 = vst [vmem:[#allocation2 + $0x100] sm:$0xff] %v1033
      %1098 = vst [vmem:[#allocation2 + $0x108] sm:$0xff] %v1034
      %1099 = vst [vmem:[#allocation2 + $0x110] sm:$0xff] %v1035
      %1100 = vst [vmem:[#allocation2 + $0x118] sm:$0xff] %v1036
      %1101 = vst [vmem:[#allocation2 + $0x120] sm:$0xff] %v1037
      %1102 = vst [vmem:[#allocation2 + $0x128] sm:$0xff] %v1038
      %1103 = vst [vmem:[#allocation2 + $0x130] sm:$0xff] %v1039
      %1104 = vst [vmem:[#allocation2 + $0x138] sm:$0xff] %v1040
      %1105 = vst [vmem:[#allocation2 + $0x140] sm:$0xff] %v1041
      %1106 = vst [vmem:[#allocation2 + $0x148] sm:$0xff] %v1042
      %1107 = vst [vmem:[#allocation2 + $0x150] sm:$0xff] %v1043
      %1108 = vst [vmem:[#allocation2 + $0x158] sm:$0xff] %v1044
      %1109 = vst [vmem:[#allocation2 + $0x160] sm:$0xff] %v1045
      %1110 = vst [vmem:[#allocation2 + $0x168] sm:$0xff] %v1046
      %1111 = vst [vmem:[#allocation2 + $0x170] sm:$0xff] %v1047
      %1112 = vst [vmem:[#allocation2 + $0x178] sm:$0xff] %v1048
      %1113 = vst [vmem:[#allocation2 + $0x180] sm:$0xff] %v1049
      %1114 = vst [vmem:[#allocation2 + $0x188] sm:$0xff] %v1050
      %1115 = vst [vmem:[#allocation2 + $0x190] sm:$0xff] %v1051
      %1116 = vst [vmem:[#allocation2 + $0x198] sm:$0xff] %v1052
      %1117 = vst [vmem:[#allocation2 + $0x1a0] sm:$0xff] %v1053
      %1118 = vst [vmem:[#allocation2 + $0x1a8] sm:$0xff] %v1054
      %1119 = vst [vmem:[#allocation2 + $0x1b0] sm:$0xff] %v1055
      %1120 = vst [vmem:[#allocation2 + $0x1b8] sm:$0xff] %v1056
      %1121 = vst [vmem:[#allocation2 + $0x1c0] sm:$0xff] %v1057
      %1122 = vst [vmem:[#allocation2 + $0x1c8] sm:$0xff] %v1058
      %1123 = vst [vmem:[#allocation2 + $0x1d0] sm:$0xff] %v1059
      %1124 = vst [vmem:[#allocation2 + $0x1d8] sm:$0xff] %v1060
      %1125 = vst [vmem:[#allocation2 + $0x1e0] sm:$0xff] %v1061
      %1126 = vst [vmem:[#allocation2 + $0x1e8] sm:$0xff] %v1062
      %1127 = vst [vmem:[#allocation2 + $0x1f0] sm:$0xff] %v1063
      %1128 = vst [vmem:[#allocation2 + $0x1f8] sm:$0xff] %v1064
      // Predicated region
      $region37: #{discriminator_forward.8} parent=31 // pred_check
        %p1129 = pneg %p260
      $region38: #{discriminator_forward.8} parent=31 // pred_check_branch
        %1131 = sbr.rel (%p1129) target = $region40
      $region39: #{discriminator_forward.8} parent=31 // pred_region
        %v1132 = vld [vmem:[#allocation2] sm:$0xff]
        %v1133 = vld [vmem:[#allocation2 + $0x8] sm:$0xff]
        %v1134 = vld [vmem:[#allocation2 + $0x10] sm:$0xff]
        %v1135 = vld [vmem:[#allocation2 + $0x18] sm:$0xff]
        %v1136 = vld [vmem:[#allocation2 + $0x20] sm:$0xff]
        %v1137 = vld [vmem:[#allocation2 + $0x28] sm:$0xff]
        %v1138 = vld [vmem:[#allocation2 + $0x30] sm:$0xff]
        %v1139 = vld [vmem:[#allocation2 + $0x38] sm:$0xff]
        %v1140 = vld [vmem:[#allocation2 + $0x40] sm:$0xff]
        %v1141 = vld [vmem:[#allocation2 + $0x48] sm:$0xff]
        %v1142 = vld [vmem:[#allocation2 + $0x50] sm:$0xff]
        %v1143 = vld [vmem:[#allocation2 + $0x58] sm:$0xff]
        %v1144 = vld [vmem:[#allocation2 + $0x60] sm:$0xff]
        %v1145 = vld [vmem:[#allocation2 + $0x68] sm:$0xff]
        %v1146 = vld [vmem:[#allocation2 + $0x70] sm:$0xff]
        %v1147 = vld [vmem:[#allocation2 + $0x78] sm:$0xff]
        %v1148 = vld [vmem:[#allocation2 + $0x80] sm:$0xff]
        %v1149 = vld [vmem:[#allocation2 + $0x88] sm:$0xff]
        %v1150 = vld [vmem:[#allocation2 + $0x90] sm:$0xff]
        %v1151 = vld [vmem:[#allocation2 + $0x98] sm:$0xff]
        %v1152 = vld [vmem:[#allocation2 + $0xa0] sm:$0xff]
        %v1153 = vld [vmem:[#allocation2 + $0xa8] sm:$0xff]
        %v1154 = vld [vmem:[#allocation2 + $0xb0] sm:$0xff]
        %v1155 = vld [vmem:[#allocation2 + $0xb8] sm:$0xff]
        %v1156 = vld [vmem:[#allocation2 + $0xc0] sm:$0xff]
        %v1157 = vld [vmem:[#allocation2 + $0xc8] sm:$0xff]
        %v1158 = vld [vmem:[#allocation2 + $0xd0] sm:$0xff]
        %v1159 = vld [vmem:[#allocation2 + $0xd8] sm:$0xff]
        %v1160 = vld [vmem:[#allocation2 + $0xe0] sm:$0xff]
        %v1161 = vld [vmem:[#allocation2 + $0xe8] sm:$0xff]
        %v1162 = vld [vmem:[#allocation2 + $0xf0] sm:$0xff]
        %v1163 = vld [vmem:[#allocation2 + $0xf8] sm:$0xff]
        %v1164 = vld [vmem:[#allocation2 + $0x100] sm:$0xff]
        %v1165 = vld [vmem:[#allocation2 + $0x108] sm:$0xff]
        %v1166 = vld [vmem:[#allocation2 + $0x110] sm:$0xff]
        %v1167 = vld [vmem:[#allocation2 + $0x118] sm:$0xff]
        %v1168 = vld [vmem:[#allocation2 + $0x120] sm:$0xff]
        %v1169 = vld [vmem:[#allocation2 + $0x128] sm:$0xff]
        %v1170 = vld [vmem:[#allocation2 + $0x130] sm:$0xff]
        %v1171 = vld [vmem:[#allocation2 + $0x138] sm:$0xff]
        %v1172 = vld [vmem:[#allocation2 + $0x140] sm:$0xff]
        %v1173 = vld [vmem:[#allocation2 + $0x148] sm:$0xff]
        %v1174 = vld [vmem:[#allocation2 + $0x150] sm:$0xff]
        %v1175 = vld [vmem:[#allocation2 + $0x158] sm:$0xff]
        %v1176 = vld [vmem:[#allocation2 + $0x160] sm:$0xff]
        %v1177 = vld [vmem:[#allocation2 + $0x168] sm:$0xff]
        %v1178 = vld [vmem:[#allocation2 + $0x170] sm:$0xff]
        %v1179 = vld [vmem:[#allocation2 + $0x178] sm:$0xff]
        %v1180 = vld [vmem:[#allocation2 + $0x180] sm:$0xff]
        %v1181 = vld [vmem:[#allocation2 + $0x188] sm:$0xff]
        %v1182 = vld [vmem:[#allocation2 + $0x190] sm:$0xff]
        %v1183 = vld [vmem:[#allocation2 + $0x198] sm:$0xff]
        %v1184 = vld [vmem:[#allocation2 + $0x1a0] sm:$0xff]
        %v1185 = vld [vmem:[#allocation2 + $0x1a8] sm:$0xff]
        %v1186 = vld [vmem:[#allocation2 + $0x1b0] sm:$0xff]
        %v1187 = vld [vmem:[#allocation2 + $0x1b8] sm:$0xff]
        %v1188 = vld [vmem:[#allocation2 + $0x1c0] sm:$0xff]
        %v1189 = vld [vmem:[#allocation2 + $0x1c8] sm:$0xff]
        %v1190 = vld [vmem:[#allocation2 + $0x1d0] sm:$0xff]
        %v1191 = vld [vmem:[#allocation2 + $0x1d8] sm:$0xff]
        %v1192 = vld [vmem:[#allocation2 + $0x1e0] sm:$0xff]
        %v1193 = vld [vmem:[#allocation2 + $0x1e8] sm:$0xff]
        %v1194 = vld [vmem:[#allocation2 + $0x1f0] sm:$0xff]
        %v1195 = vld [vmem:[#allocation2 + $0x1f8] sm:$0xff]
        %v1196 = vld [vmem:[%s249] sm:$0x1]
        %v1198 = vlaneseq
        %v1199 = vshrl.u32 %v1198, 7
        %v1200 = vsub.s32 0, %v1199
        %v1201 = vrot.slane %v1196, %v1200
        %v1203 = vadd.f32 %v1132, %v1201
        %v1204 = vadd.f32 %v1133, %v1201
        %v1205 = vadd.f32 %v1134, %v1201
        %v1206 = vadd.f32 %v1135, %v1201
        %v1207 = vadd.f32 %v1136, %v1201
        %v1208 = vadd.f32 %v1137, %v1201
        %v1209 = vadd.f32 %v1138, %v1201
        %v1210 = vadd.f32 %v1139, %v1201
        %v1211 = vadd.f32 %v1140, %v1201
        %v1212 = vadd.f32 %v1141, %v1201
        %v1213 = vadd.f32 %v1142, %v1201
        %v1214 = vadd.f32 %v1143, %v1201
        %v1215 = vadd.f32 %v1144, %v1201
        %v1216 = vadd.f32 %v1145, %v1201
        %v1217 = vadd.f32 %v1146, %v1201
        %v1218 = vadd.f32 %v1147, %v1201
        %v1219 = vadd.f32 %v1148, %v1201
        %v1220 = vadd.f32 %v1149, %v1201
        %v1221 = vadd.f32 %v1150, %v1201
        %v1222 = vadd.f32 %v1151, %v1201
        %v1223 = vadd.f32 %v1152, %v1201
        %v1224 = vadd.f32 %v1153, %v1201
        %v1225 = vadd.f32 %v1154, %v1201
        %v1226 = vadd.f32 %v1155, %v1201
        %v1227 = vadd.f32 %v1156, %v1201
        %v1228 = vadd.f32 %v1157, %v1201
        %v1229 = vadd.f32 %v1158, %v1201
        %v1230 = vadd.f32 %v1159, %v1201
        %v1231 = vadd.f32 %v1160, %v1201
        %v1232 = vadd.f32 %v1161, %v1201
        %v1233 = vadd.f32 %v1162, %v1201
        %v1234 = vadd.f32 %v1163, %v1201
        %v1235 = vadd.f32 %v1164, %v1201
        %v1236 = vadd.f32 %v1165, %v1201
        %v1237 = vadd.f32 %v1166, %v1201
        %v1238 = vadd.f32 %v1167, %v1201
        %v1239 = vadd.f32 %v1168, %v1201
        %v1240 = vadd.f32 %v1169, %v1201
        %v1241 = vadd.f32 %v1170, %v1201
        %v1242 = vadd.f32 %v1171, %v1201
        %v1243 = vadd.f32 %v1172, %v1201
        %v1244 = vadd.f32 %v1173, %v1201
        %v1245 = vadd.f32 %v1174, %v1201
        %v1246 = vadd.f32 %v1175, %v1201
        %v1247 = vadd.f32 %v1176, %v1201
        %v1248 = vadd.f32 %v1177, %v1201
        %v1249 = vadd.f32 %v1178, %v1201
        %v1250 = vadd.f32 %v1179, %v1201
        %v1251 = vadd.f32 %v1180, %v1201
        %v1252 = vadd.f32 %v1181, %v1201
        %v1253 = vadd.f32 %v1182, %v1201
        %v1254 = vadd.f32 %v1183, %v1201
        %v1255 = vadd.f32 %v1184, %v1201
        %v1256 = vadd.f32 %v1185, %v1201
        %v1257 = vadd.f32 %v1186, %v1201
        %v1258 = vadd.f32 %v1187, %v1201
        %v1259 = vadd.f32 %v1188, %v1201
        %v1260 = vadd.f32 %v1189, %v1201
        %v1261 = vadd.f32 %v1190, %v1201
        %v1262 = vadd.f32 %v1191, %v1201
        %v1263 = vadd.f32 %v1192, %v1201
        %v1264 = vadd.f32 %v1193, %v1201
        %v1265 = vadd.f32 %v1194, %v1201
        %v1266 = vadd.f32 %v1195, %v1201
        %vm1267 = vcmp.ge.f32.partialorder %v1203, 0.0
        %vm1268 = vcmp.ge.f32.partialorder %v1204, 0.0
        %vm1269 = vcmp.ge.f32.partialorder %v1205, 0.0
        %vm1270 = vcmp.ge.f32.partialorder %v1206, 0.0
        %vm1271 = vcmp.ge.f32.partialorder %v1207, 0.0
        %vm1272 = vcmp.ge.f32.partialorder %v1208, 0.0
        %vm1273 = vcmp.ge.f32.partialorder %v1209, 0.0
        %vm1274 = vcmp.ge.f32.partialorder %v1210, 0.0
        %vm1275 = vcmp.ge.f32.partialorder %v1211, 0.0
        %vm1276 = vcmp.ge.f32.partialorder %v1212, 0.0
        %vm1277 = vcmp.ge.f32.partialorder %v1213, 0.0
        %vm1278 = vcmp.ge.f32.partialorder %v1214, 0.0
        %vm1279 = vcmp.ge.f32.partialorder %v1215, 0.0
        %vm1280 = vcmp.ge.f32.partialorder %v1216, 0.0
        %vm1281 = vcmp.ge.f32.partialorder %v1217, 0.0
        %vm1282 = vcmp.ge.f32.partialorder %v1218, 0.0
        %vm1283 = vcmp.ge.f32.partialorder %v1219, 0.0
        %vm1284 = vcmp.ge.f32.partialorder %v1220, 0.0
        %vm1285 = vcmp.ge.f32.partialorder %v1221, 0.0
        %vm1286 = vcmp.ge.f32.partialorder %v1222, 0.0
        %vm1287 = vcmp.ge.f32.partialorder %v1223, 0.0
        %vm1288 = vcmp.ge.f32.partialorder %v1224, 0.0
        %vm1289 = vcmp.ge.f32.partialorder %v1225, 0.0
        %vm1290 = vcmp.ge.f32.partialorder %v1226, 0.0
        %vm1291 = vcmp.ge.f32.partialorder %v1227, 0.0
        %vm1292 = vcmp.ge.f32.partialorder %v1228, 0.0
        %vm1293 = vcmp.ge.f32.partialorder %v1229, 0.0
        %vm1294 = vcmp.ge.f32.partialorder %v1230, 0.0
        %vm1295 = vcmp.ge.f32.partialorder %v1231, 0.0
        %vm1296 = vcmp.ge.f32.partialorder %v1232, 0.0
        %vm1297 = vcmp.ge.f32.partialorder %v1233, 0.0
        %vm1298 = vcmp.ge.f32.partialorder %v1234, 0.0
        %vm1299 = vcmp.ge.f32.partialorder %v1235, 0.0
        %vm1300 = vcmp.ge.f32.partialorder %v1236, 0.0
        %vm1301 = vcmp.ge.f32.partialorder %v1237, 0.0
        %vm1302 = vcmp.ge.f32.partialorder %v1238, 0.0
        %vm1303 = vcmp.ge.f32.partialorder %v1239, 0.0
        %vm1304 = vcmp.ge.f32.partialorder %v1240, 0.0
        %vm1305 = vcmp.ge.f32.partialorder %v1241, 0.0
        %vm1306 = vcmp.ge.f32.partialorder %v1242, 0.0
        %vm1307 = vcmp.ge.f32.partialorder %v1243, 0.0
        %vm1308 = vcmp.ge.f32.partialorder %v1244, 0.0
        %vm1309 = vcmp.ge.f32.partialorder %v1245, 0.0
        %vm1310 = vcmp.ge.f32.partialorder %v1246, 0.0
        %vm1311 = vcmp.ge.f32.partialorder %v1247, 0.0
        %vm1312 = vcmp.ge.f32.partialorder %v1248, 0.0
        %vm1313 = vcmp.ge.f32.partialorder %v1249, 0.0
        %vm1314 = vcmp.ge.f32.partialorder %v1250, 0.0
        %vm1315 = vcmp.ge.f32.partialorder %v1251, 0.0
        %vm1316 = vcmp.ge.f32.partialorder %v1252, 0.0
        %vm1317 = vcmp.ge.f32.partialorder %v1253, 0.0
        %vm1318 = vcmp.ge.f32.partialorder %v1254, 0.0
        %vm1319 = vcmp.ge.f32.partialorder %v1255, 0.0
        %vm1320 = vcmp.ge.f32.partialorder %v1256, 0.0
        %vm1321 = vcmp.ge.f32.partialorder %v1257, 0.0
        %vm1322 = vcmp.ge.f32.partialorder %v1258, 0.0
        %vm1323 = vcmp.ge.f32.partialorder %v1259, 0.0
        %vm1324 = vcmp.ge.f32.partialorder %v1260, 0.0
        %vm1325 = vcmp.ge.f32.partialorder %v1261, 0.0
        %vm1326 = vcmp.ge.f32.partialorder %v1262, 0.0
        %vm1327 = vcmp.ge.f32.partialorder %v1263, 0.0
        %vm1328 = vcmp.ge.f32.partialorder %v1264, 0.0
        %vm1329 = vcmp.ge.f32.partialorder %v1265, 0.0
        %vm1330 = vcmp.ge.f32.partialorder %v1266, 0.0
        %v1331 = vmul.f32 %v1203, 0.2
        %v1332 = vmul.f32 %v1204, 0.2
        %v1333 = vmul.f32 %v1205, 0.2
        %v1334 = vmul.f32 %v1206, 0.2
        %v1335 = vmul.f32 %v1207, 0.2
        %v1336 = vmul.f32 %v1208, 0.2
        %v1337 = vmul.f32 %v1209, 0.2
        %v1338 = vmul.f32 %v1210, 0.2
        %v1339 = vmul.f32 %v1211, 0.2
        %v1340 = vmul.f32 %v1212, 0.2
        %v1341 = vmul.f32 %v1213, 0.2
        %v1342 = vmul.f32 %v1214, 0.2
        %v1343 = vmul.f32 %v1215, 0.2
        %v1344 = vmul.f32 %v1216, 0.2
        %v1345 = vmul.f32 %v1217, 0.2
        %v1346 = vmul.f32 %v1218, 0.2
        %v1347 = vmul.f32 %v1219, 0.2
        %v1348 = vmul.f32 %v1220, 0.2
        %v1349 = vmul.f32 %v1221, 0.2
        %v1350 = vmul.f32 %v1222, 0.2
        %v1351 = vmul.f32 %v1223, 0.2
        %v1352 = vmul.f32 %v1224, 0.2
        %v1353 = vmul.f32 %v1225, 0.2
        %v1354 = vmul.f32 %v1226, 0.2
        %v1355 = vmul.f32 %v1227, 0.2
        %v1356 = vmul.f32 %v1228, 0.2
        %v1357 = vmul.f32 %v1229, 0.2
        %v1358 = vmul.f32 %v1230, 0.2
        %v1359 = vmul.f32 %v1231, 0.2
        %v1360 = vmul.f32 %v1232, 0.2
        %v1361 = vmul.f32 %v1233, 0.2
        %v1362 = vmul.f32 %v1234, 0.2
        %v1363 = vmul.f32 %v1235, 0.2
        %v1364 = vmul.f32 %v1236, 0.2
        %v1365 = vmul.f32 %v1237, 0.2
        %v1366 = vmul.f32 %v1238, 0.2
        %v1367 = vmul.f32 %v1239, 0.2
        %v1368 = vmul.f32 %v1240, 0.2
        %v1369 = vmul.f32 %v1241, 0.2
        %v1370 = vmul.f32 %v1242, 0.2
        %v1371 = vmul.f32 %v1243, 0.2
        %v1372 = vmul.f32 %v1244, 0.2
        %v1373 = vmul.f32 %v1245, 0.2
        %v1374 = vmul.f32 %v1246, 0.2
        %v1375 = vmul.f32 %v1247, 0.2
        %v1376 = vmul.f32 %v1248, 0.2
        %v1377 = vmul.f32 %v1249, 0.2
        %v1378 = vmul.f32 %v1250, 0.2
        %v1379 = vmul.f32 %v1251, 0.2
        %v1380 = vmul.f32 %v1252, 0.2
        %v1381 = vmul.f32 %v1253, 0.2
        %v1382 = vmul.f32 %v1254, 0.2
        %v1383 = vmul.f32 %v1255, 0.2
        %v1384 = vmul.f32 %v1256, 0.2
        %v1385 = vmul.f32 %v1257, 0.2
        %v1386 = vmul.f32 %v1258, 0.2
        %v1387 = vmul.f32 %v1259, 0.2
        %v1388 = vmul.f32 %v1260, 0.2
        %v1389 = vmul.f32 %v1261, 0.2
        %v1390 = vmul.f32 %v1262, 0.2
        %v1391 = vmul.f32 %v1263, 0.2
        %v1392 = vmul.f32 %v1264, 0.2
        %v1393 = vmul.f32 %v1265, 0.2
        %v1394 = vmul.f32 %v1266, 0.2
        %v1395 = vsel %vm1267, %v1203, %v1331
        %v1396 = vsel %vm1268, %v1204, %v1332
        %v1397 = vsel %vm1269, %v1205, %v1333
        %v1398 = vsel %vm1270, %v1206, %v1334
        %v1399 = vsel %vm1271, %v1207, %v1335
        %v1400 = vsel %vm1272, %v1208, %v1336
        %v1401 = vsel %vm1273, %v1209, %v1337
        %v1402 = vsel %vm1274, %v1210, %v1338
        %v1403 = vsel %vm1275, %v1211, %v1339
        %v1404 = vsel %vm1276, %v1212, %v1340
        %v1405 = vsel %vm1277, %v1213, %v1341
        %v1406 = vsel %vm1278, %v1214, %v1342
        %v1407 = vsel %vm1279, %v1215, %v1343
        %v1408 = vsel %vm1280, %v1216, %v1344
        %v1409 = vsel %vm1281, %v1217, %v1345
        %v1410 = vsel %vm1282, %v1218, %v1346
        %v1411 = vsel %vm1283, %v1219, %v1347
        %v1412 = vsel %vm1284, %v1220, %v1348
        %v1413 = vsel %vm1285, %v1221, %v1349
        %v1414 = vsel %vm1286, %v1222, %v1350
        %v1415 = vsel %vm1287, %v1223, %v1351
        %v1416 = vsel %vm1288, %v1224, %v1352
        %v1417 = vsel %vm1289, %v1225, %v1353
        %v1418 = vsel %vm1290, %v1226, %v1354
        %v1419 = vsel %vm1291, %v1227, %v1355
        %v1420 = vsel %vm1292, %v1228, %v1356
        %v1421 = vsel %vm1293, %v1229, %v1357
        %v1422 = vsel %vm1294, %v1230, %v1358
        %v1423 = vsel %vm1295, %v1231, %v1359
        %v1424 = vsel %vm1296, %v1232, %v1360
        %v1425 = vsel %vm1297, %v1233, %v1361
        %v1426 = vsel %vm1298, %v1234, %v1362
        %v1427 = vsel %vm1299, %v1235, %v1363
        %v1428 = vsel %vm1300, %v1236, %v1364
        %v1429 = vsel %vm1301, %v1237, %v1365
        %v1430 = vsel %vm1302, %v1238, %v1366
        %v1431 = vsel %vm1303, %v1239, %v1367
        %v1432 = vsel %vm1304, %v1240, %v1368
        %v1433 = vsel %vm1305, %v1241, %v1369
        %v1434 = vsel %vm1306, %v1242, %v1370
        %v1435 = vsel %vm1307, %v1243, %v1371
        %v1436 = vsel %vm1308, %v1244, %v1372
        %v1437 = vsel %vm1309, %v1245, %v1373
        %v1438 = vsel %vm1310, %v1246, %v1374
        %v1439 = vsel %vm1311, %v1247, %v1375
        %v1440 = vsel %vm1312, %v1248, %v1376
        %v1441 = vsel %vm1313, %v1249, %v1377
        %v1442 = vsel %vm1314, %v1250, %v1378
        %v1443 = vsel %vm1315, %v1251, %v1379
        %v1444 = vsel %vm1316, %v1252, %v1380
        %v1445 = vsel %vm1317, %v1253, %v1381
        %v1446 = vsel %vm1318, %v1254, %v1382
        %v1447 = vsel %vm1319, %v1255, %v1383
        %v1448 = vsel %vm1320, %v1256, %v1384
        %v1449 = vsel %vm1321, %v1257, %v1385
        %v1450 = vsel %vm1322, %v1258, %v1386
        %v1451 = vsel %vm1323, %v1259, %v1387
        %v1452 = vsel %vm1324, %v1260, %v1388
        %v1453 = vsel %vm1325, %v1261, %v1389
        %v1454 = vsel %vm1326, %v1262, %v1390
        %v1455 = vsel %vm1327, %v1263, %v1391
        %v1456 = vsel %vm1328, %v1264, %v1392
        %v1457 = vsel %vm1329, %v1265, %v1393
        %v1458 = vsel %vm1330, %v1266, %v1394
        %v1459 = vpack.c.bf16 %v1396, %v1395
        %v1460 = vpack.c.bf16 %v1398, %v1397
        %v1461 = vpack.c.bf16 %v1400, %v1399
        %v1462 = vpack.c.bf16 %v1402, %v1401
        %v1463 = vpack.c.bf16 %v1404, %v1403
        %v1464 = vpack.c.bf16 %v1406, %v1405
        %v1465 = vpack.c.bf16 %v1408, %v1407
        %v1466 = vpack.c.bf16 %v1410, %v1409
        %v1467 = vpack.c.bf16 %v1412, %v1411
        %v1468 = vpack.c.bf16 %v1414, %v1413
        %v1469 = vpack.c.bf16 %v1416, %v1415
        %v1470 = vpack.c.bf16 %v1418, %v1417
        %v1471 = vpack.c.bf16 %v1420, %v1419
        %v1472 = vpack.c.bf16 %v1422, %v1421
        %v1473 = vpack.c.bf16 %v1424, %v1423
        %v1474 = vpack.c.bf16 %v1426, %v1425
        %v1475 = vpack.c.bf16 %v1428, %v1427
        %v1476 = vpack.c.bf16 %v1430, %v1429
        %v1477 = vpack.c.bf16 %v1432, %v1431
        %v1478 = vpack.c.bf16 %v1434, %v1433
        %v1479 = vpack.c.bf16 %v1436, %v1435
        %v1480 = vpack.c.bf16 %v1438, %v1437
        %v1481 = vpack.c.bf16 %v1440, %v1439
        %v1482 = vpack.c.bf16 %v1442, %v1441
        %v1483 = vpack.c.bf16 %v1444, %v1443
        %v1484 = vpack.c.bf16 %v1446, %v1445
        %v1485 = vpack.c.bf16 %v1448, %v1447
        %v1486 = vpack.c.bf16 %v1450, %v1449
        %v1487 = vpack.c.bf16 %v1452, %v1451
        %v1488 = vpack.c.bf16 %v1454, %v1453
        %v1489 = vpack.c.bf16 %v1456, %v1455
        %v1490 = vpack.c.bf16 %v1458, %v1457
        %v1523 = vunpack.c.l.b16 %v1459
        %v1524 = vunpack.c.h.b16 %v1459
        %v1525 = vunpack.c.l.b16 %v1460
        %v1526 = vunpack.c.h.b16 %v1460
        %v1527 = vunpack.c.l.b16 %v1461
        %v1528 = vunpack.c.h.b16 %v1461
        %v1529 = vunpack.c.l.b16 %v1462
        %v1530 = vunpack.c.h.b16 %v1462
        %v1531 = vunpack.c.l.b16 %v1463
        %v1532 = vunpack.c.h.b16 %v1463
        %v1533 = vunpack.c.l.b16 %v1464
        %v1534 = vunpack.c.h.b16 %v1464
        %v1535 = vunpack.c.l.b16 %v1465
        %v1536 = vunpack.c.h.b16 %v1465
        %v1537 = vunpack.c.l.b16 %v1466
        %v1538 = vunpack.c.h.b16 %v1466
        %v1539 = vunpack.c.l.b16 %v1467
        %v1540 = vunpack.c.h.b16 %v1467
        %v1541 = vunpack.c.l.b16 %v1468
        %v1542 = vunpack.c.h.b16 %v1468
        %v1543 = vunpack.c.l.b16 %v1469
        %v1544 = vunpack.c.h.b16 %v1469
        %v1545 = vunpack.c.l.b16 %v1470
        %v1546 = vunpack.c.h.b16 %v1470
        %v1547 = vunpack.c.l.b16 %v1471
        %v1548 = vunpack.c.h.b16 %v1471
        %v1549 = vunpack.c.l.b16 %v1472
        %v1550 = vunpack.c.h.b16 %v1472
        %v1551 = vunpack.c.l.b16 %v1473
        %v1552 = vunpack.c.h.b16 %v1473
        %v1553 = vunpack.c.l.b16 %v1474
        %v1554 = vunpack.c.h.b16 %v1474
        %v1555 = vunpack.c.l.b16 %v1475
        %v1556 = vunpack.c.h.b16 %v1475
        %v1557 = vunpack.c.l.b16 %v1476
        %v1558 = vunpack.c.h.b16 %v1476
        %v1559 = vunpack.c.l.b16 %v1477
        %v1560 = vunpack.c.h.b16 %v1477
        %v1561 = vunpack.c.l.b16 %v1478
        %v1562 = vunpack.c.h.b16 %v1478
        %v1563 = vunpack.c.l.b16 %v1479
        %v1564 = vunpack.c.h.b16 %v1479
        %v1565 = vunpack.c.l.b16 %v1480
        %v1566 = vunpack.c.h.b16 %v1480
        %v1567 = vunpack.c.l.b16 %v1481
        %v1568 = vunpack.c.h.b16 %v1481
        %v1569 = vunpack.c.l.b16 %v1482
        %v1570 = vunpack.c.h.b16 %v1482
        %v1571 = vunpack.c.l.b16 %v1483
        %v1572 = vunpack.c.h.b16 %v1483
        %v1573 = vunpack.c.l.b16 %v1484
        %v1574 = vunpack.c.h.b16 %v1484
        %v1575 = vunpack.c.l.b16 %v1485
        %v1576 = vunpack.c.h.b16 %v1485
        %v1577 = vunpack.c.l.b16 %v1486
        %v1578 = vunpack.c.h.b16 %v1486
        %v1579 = vunpack.c.l.b16 %v1487
        %v1580 = vunpack.c.h.b16 %v1487
        %v1581 = vunpack.c.l.b16 %v1488
        %v1582 = vunpack.c.h.b16 %v1488
        %v1583 = vunpack.c.l.b16 %v1489
        %v1584 = vunpack.c.h.b16 %v1489
        %v1585 = vunpack.c.l.b16 %v1490
        %v1586 = vunpack.c.h.b16 %v1490
        %v1587 = vpack.c.b16 %v1523, %v1523
        %v1588 = vpack.c.b16 %v1524, %v1524
        %v1589 = vpack.c.b16 %v1525, %v1525
        %v1590 = vpack.c.b16 %v1526, %v1526
        %v1591 = vpack.c.b16 %v1527, %v1527
        %v1592 = vpack.c.b16 %v1528, %v1528
        %v1593 = vpack.c.b16 %v1529, %v1529
        %v1594 = vpack.c.b16 %v1530, %v1530
        %v1595 = vpack.c.b16 %v1531, %v1531
        %v1596 = vpack.c.b16 %v1532, %v1532
        %v1597 = vpack.c.b16 %v1533, %v1533
        %v1598 = vpack.c.b16 %v1534, %v1534
        %v1599 = vpack.c.b16 %v1535, %v1535
        %v1600 = vpack.c.b16 %v1536, %v1536
        %v1601 = vpack.c.b16 %v1537, %v1537
        %v1602 = vpack.c.b16 %v1538, %v1538
        %v1603 = vpack.c.b16 %v1539, %v1539
        %v1604 = vpack.c.b16 %v1540, %v1540
        %v1605 = vpack.c.b16 %v1541, %v1541
        %v1606 = vpack.c.b16 %v1542, %v1542
        %v1607 = vpack.c.b16 %v1543, %v1543
        %v1608 = vpack.c.b16 %v1544, %v1544
        %v1609 = vpack.c.b16 %v1545, %v1545
        %v1610 = vpack.c.b16 %v1546, %v1546
        %v1611 = vpack.c.b16 %v1547, %v1547
        %v1612 = vpack.c.b16 %v1548, %v1548
        %v1613 = vpack.c.b16 %v1549, %v1549
        %v1614 = vpack.c.b16 %v1550, %v1550
        %v1615 = vpack.c.b16 %v1551, %v1551
        %v1616 = vpack.c.b16 %v1552, %v1552
        %v1617 = vpack.c.b16 %v1553, %v1553
        %v1618 = vpack.c.b16 %v1554, %v1554
        %v1619 = vpack.c.b16 %v1555, %v1555
        %v1620 = vpack.c.b16 %v1556, %v1556
        %v1621 = vpack.c.b16 %v1557, %v1557
        %v1622 = vpack.c.b16 %v1558, %v1558
        %v1623 = vpack.c.b16 %v1559, %v1559
        %v1624 = vpack.c.b16 %v1560, %v1560
        %v1625 = vpack.c.b16 %v1561, %v1561
        %v1626 = vpack.c.b16 %v1562, %v1562
        %v1627 = vpack.c.b16 %v1563, %v1563
        %v1628 = vpack.c.b16 %v1564, %v1564
        %v1629 = vpack.c.b16 %v1565, %v1565
        %v1630 = vpack.c.b16 %v1566, %v1566
        %v1631 = vpack.c.b16 %v1567, %v1567
        %v1632 = vpack.c.b16 %v1568, %v1568
        %v1633 = vpack.c.b16 %v1569, %v1569
        %v1634 = vpack.c.b16 %v1570, %v1570
        %v1635 = vpack.c.b16 %v1571, %v1571
        %v1636 = vpack.c.b16 %v1572, %v1572
        %v1637 = vpack.c.b16 %v1573, %v1573
        %v1638 = vpack.c.b16 %v1574, %v1574
        %v1639 = vpack.c.b16 %v1575, %v1575
        %v1640 = vpack.c.b16 %v1576, %v1576
        %v1641 = vpack.c.b16 %v1577, %v1577
        %v1642 = vpack.c.b16 %v1578, %v1578
        %v1643 = vpack.c.b16 %v1579, %v1579
        %v1644 = vpack.c.b16 %v1580, %v1580
        %v1645 = vpack.c.b16 %v1581, %v1581
        %v1646 = vpack.c.b16 %v1582, %v1582
        %v1647 = vpack.c.b16 %v1583, %v1583
        %v1648 = vpack.c.b16 %v1584, %v1584
        %v1649 = vpack.c.b16 %v1585, %v1585
        %v1650 = vpack.c.b16 %v1586, %v1586
        %1715 = vst [vmem:[%s257] sm:$0xf] %v1587
        %1716 = vst [vmem:[%s257 + $0x4] sm:$0xf] %v1588
        %1717 = vst [vmem:[%s257 + $0x8] sm:$0xf] %v1589
        %1718 = vst [vmem:[%s257 + $0xc] sm:$0xf] %v1590
        %1719 = vst [vmem:[%s257 + $0x10] sm:$0xf] %v1591
        %1720 = vst [vmem:[%s257 + $0x14] sm:$0xf] %v1592
        %1721 = vst [vmem:[%s257 + $0x18] sm:$0xf] %v1593
        %1722 = vst [vmem:[%s257 + $0x1c] sm:$0xf] %v1594
        %1723 = vst [vmem:[%s257 + $0x20] sm:$0xf] %v1595
        %1724 = vst [vmem:[%s257 + $0x24] sm:$0xf] %v1596
        %1725 = vst [vmem:[%s257 + $0x28] sm:$0xf] %v1597
        %1726 = vst [vmem:[%s257 + $0x2c] sm:$0xf] %v1598
        %1727 = vst [vmem:[%s257 + $0x30] sm:$0xf] %v1599
        %1728 = vst [vmem:[%s257 + $0x34] sm:$0xf] %v1600
        %1729 = vst [vmem:[%s257 + $0x38] sm:$0xf] %v1601
        %1730 = vst [vmem:[%s257 + $0x3c] sm:$0xf] %v1602
        %1731 = vst [vmem:[%s257 + $0x40] sm:$0xf] %v1603
        %1732 = vst [vmem:[%s257 + $0x44] sm:$0xf] %v1604
        %1733 = vst [vmem:[%s257 + $0x48] sm:$0xf] %v1605
        %1734 = vst [vmem:[%s257 + $0x4c] sm:$0xf] %v1606
        %1735 = vst [vmem:[%s257 + $0x50] sm:$0xf] %v1607
        %1736 = vst [vmem:[%s257 + $0x54] sm:$0xf] %v1608
        %1737 = vst [vmem:[%s257 + $0x58] sm:$0xf] %v1609
        %1738 = vst [vmem:[%s257 + $0x5c] sm:$0xf] %v1610
        %1739 = vst [vmem:[%s257 + $0x60] sm:$0xf] %v1611
        %1740 = vst [vmem:[%s257 + $0x64] sm:$0xf] %v1612
        %1741 = vst [vmem:[%s257 + $0x68] sm:$0xf] %v1613
        %1742 = vst [vmem:[%s257 + $0x6c] sm:$0xf] %v1614
        %1743 = vst [vmem:[%s257 + $0x70] sm:$0xf] %v1615
        %1744 = vst [vmem:[%s257 + $0x74] sm:$0xf] %v1616
        %1745 = vst [vmem:[%s257 + $0x78] sm:$0xf] %v1617
        %1746 = vst [vmem:[%s257 + $0x7c] sm:$0xf] %v1618
        %1747 = vst [vmem:[%s257 + $0x80] sm:$0xf] %v1619
        %1748 = vst [vmem:[%s257 + $0x84] sm:$0xf] %v1620
        %1749 = vst [vmem:[%s257 + $0x88] sm:$0xf] %v1621
        %1750 = vst [vmem:[%s257 + $0x8c] sm:$0xf] %v1622
        %1751 = vst [vmem:[%s257 + $0x90] sm:$0xf] %v1623
        %1752 = vst [vmem:[%s257 + $0x94] sm:$0xf] %v1624
        %1753 = vst [vmem:[%s257 + $0x98] sm:$0xf] %v1625
        %1754 = vst [vmem:[%s257 + $0x9c] sm:$0xf] %v1626
        %1755 = vst [vmem:[%s257 + $0xa0] sm:$0xf] %v1627
        %1756 = vst [vmem:[%s257 + $0xa4] sm:$0xf] %v1628
        %1757 = vst [vmem:[%s257 + $0xa8] sm:$0xf] %v1629
        %1758 = vst [vmem:[%s257 + $0xac] sm:$0xf] %v1630
        %1759 = vst [vmem:[%s257 + $0xb0] sm:$0xf] %v1631
        %1760 = vst [vmem:[%s257 + $0xb4] sm:$0xf] %v1632
        %1761 = vst [vmem:[%s257 + $0xb8] sm:$0xf] %v1633
        %1762 = vst [vmem:[%s257 + $0xbc] sm:$0xf] %v1634
        %1763 = vst [vmem:[%s257 + $0xc0] sm:$0xf] %v1635
        %1764 = vst [vmem:[%s257 + $0xc4] sm:$0xf] %v1636
        %1765 = vst [vmem:[%s257 + $0xc8] sm:$0xf] %v1637
        %1766 = vst [vmem:[%s257 + $0xcc] sm:$0xf] %v1638
        %1767 = vst [vmem:[%s257 + $0xd0] sm:$0xf] %v1639
        %1768 = vst [vmem:[%s257 + $0xd4] sm:$0xf] %v1640
        %1769 = vst [vmem:[%s257 + $0xd8] sm:$0xf] %v1641
        %1770 = vst [vmem:[%s257 + $0xdc] sm:$0xf] %v1642
        %1771 = vst [vmem:[%s257 + $0xe0] sm:$0xf] %v1643
        %1772 = vst [vmem:[%s257 + $0xe4] sm:$0xf] %v1644
        %1773 = vst [vmem:[%s257 + $0xe8] sm:$0xf] %v1645
        %1774 = vst [vmem:[%s257 + $0xec] sm:$0xf] %v1646
        %1775 = vst [vmem:[%s257 + $0xf0] sm:$0xf] %v1647
        %1776 = vst [vmem:[%s257 + $0xf4] sm:$0xf] %v1648
        %1777 = vst [vmem:[%s257 + $0xf8] sm:$0xf] %v1649
        %1778 = vst [vmem:[%s257 + $0xfc] sm:$0xf] %v1650
      $region40: #{discriminator_forward.8} parent=31 // pred_fallthru
        _
      %s1779 = smul.u32 64, %s19
      %p1780 = scmp.lt.s32.totalorder %s1779, 255
      %s1781 = scalar_select %p1780, %s1779, 255
      %p1782 = scmp.lt.s32.totalorder %s20, 0
      %s1783 = scalar_select %p1782, %s20, 0
      %s1784 = sadd.s32 %s1783, %s1781
      %s1785 = smul.addr %s1784, 4
      %s1786 = scalar_lea.vmem %s3, %s1785
      // Predicated region
      $region41: #{discriminator_forward.8} parent=31 // pred_check
        %p1787 = pneg %p135
      $region42: #{discriminator_forward.8} parent=31 // pred_check_branch
        %1789 = sbr.rel (%p1787) target = $region44
      $region43: #{discriminator_forward.8} parent=31 // pred_region
        %s1790 = smul.u32 64, %s19
      $region44: #{discriminator_forward.8} parent=31 // pred_fallthru
        _
    $region32: #{discriminator_forward.8} parent=5 // pred_fallthru
      _
    %p1791 = scmp.le.s32.totalorder 2, %s9
    // Predicated region
    $region45: #{discriminator_forward.8} parent=5 // pred_check
      %p1792 = pneg %p1791
    $region46: #{discriminator_forward.8} parent=5 // pred_check_branch
      %1794 = sbr.rel (%p1792) target = $region48
    $region47: #{discriminator_forward.8} parent=5 // pred_region
      %s1795 = ssub.s32 %s9, 2
      // Predicated region
      $region49: #{discriminator_forward.8} parent=47 // pred_check
        %p1796 = pneg %p141
      $region50: #{discriminator_forward.8} parent=47 // pred_check_branch
        %1798 = sbr.rel (%p1796) target = $region52
      $region51: #{discriminator_forward.8} parent=47 // pred_region
        %s1799 = smul.u32 64, %s22
        %p1800 = scmp.lt.s32.totalorder %s1799, 255
        %s1801 = scalar_select %p1800, %s1799, 255
        %p1802 = scmp.lt.s32.totalorder %s23, 0
        %s1803 = scalar_select %p1802, %s23, 0
        %s1804 = sadd.s32 %s1803, %s1801
        %s1805 = smul.addr %s1804, 4
        %s1806 = scalar_lea.vmem %s3, %s1805
      $region52: #{discriminator_forward.8} parent=47 // pred_fallthru
        _
    $region48: #{discriminator_forward.8} parent=5 // pred_fallthru
      _
  $region6: #{discriminator_forward.8} parent=0 // loop_footer
    %s13 = sadd.s32 1, %s9
  $region7: #{discriminator_forward.8} parent=0 // loop_footer_branch
    %8 = sbr.rel target = $region3
  $region8: #{discriminator_forward.8} parent=0 // loop_exit
    _

// kernel: discriminator_forward.10
$region0: #{discriminator_forward.10}
  #allocation0 [shape = 'u32[]', space=smem, size = 0x4, offset = 0x4, fixed_abs, tag = 'smem constant byte address 0x4 - core index']
  #allocation1 [shape = 'u32[144,128]{1,0:T(1,128)}', space=vmem, size = 0x12000, scoped, tag = 'internal scratch']
  %s0 = inlined_call_operand.vmem [shape: f32[512,128], index: 0, kind: input, shape index: {}]
  %s1 = inlined_call_operand.vmem [shape: f32[1,128], index: 1, kind: input, shape index: {}]
  %s2 = inlined_call_operand.vmem [shape: f32[1,128], index: 2, kind: input, shape index: {}]
  %s3 = inlined_call_operand.vmem [shape: bf16[512,128], index: 3, kind: output, shape index: {}]
  %s4 = sld [smem:[#allocation0]]
  $region22: #{discriminator_forward.10} parent=0
    _
  %s6 = ssub.s32 1, %s4
  %s7 = scalar_select 0, %s6, %s4
  // Predicated region
  $region2: #{discriminator_forward.10} parent=0 // pred_check
    _
  $region3: #{discriminator_forward.10} parent=0 // pred_check_branch
    %9 = sbr.rel (0) target = $region5
  $region4: #{discriminator_forward.10} parent=0 // pred_region
    _
  $region5: #{discriminator_forward.10} parent=0 // pred_fallthru
    _
  // Predicated region
  $region6: #{discriminator_forward.10} parent=0 // pred_check
    _
  $region7: #{discriminator_forward.10} parent=0 // pred_check_branch
    %11 = sbr.rel (0) target = $region9
  $region8: #{discriminator_forward.10} parent=0 // pred_region
    _
  $region9: #{discriminator_forward.10} parent=0 // pred_fallthru
    _
  // Predicated region
  $region10: #{discriminator_forward.10} parent=0 // pred_check
    _
  $region11: #{discriminator_forward.10} parent=0 // pred_check_branch
    %13 = sbr.rel (0) target = $region13
  $region12: #{discriminator_forward.10} parent=0 // pred_region
    _
  $region13: #{discriminator_forward.10} parent=0 // pred_fallthru
    _
  %v14 = vld [vmem:[%s0] sm:$0xff]
  %v15 = vld [vmem:[%s0 + $0x8] sm:$0xff]
  %v16 = vld [vmem:[%s0 + $0x10] sm:$0xff]
  %v17 = vld [vmem:[%s0 + $0x18] sm:$0xff]
  %v18 = vld [vmem:[%s0 + $0x20] sm:$0xff]
  %v19 = vld [vmem:[%s0 + $0x28] sm:$0xff]
  %v20 = vld [vmem:[%s0 + $0x30] sm:$0xff]
  %v21 = vld [vmem:[%s0 + $0x38] sm:$0xff]
  %v22 = vld [vmem:[%s0 + $0x40] sm:$0xff]
  %v23 = vld [vmem:[%s0 + $0x48] sm:$0xff]
  %v24 = vld [vmem:[%s0 + $0x50] sm:$0xff]
  %v25 = vld [vmem:[%s0 + $0x58] sm:$0xff]
  %v26 = vld [vmem:[%s0 + $0x60] sm:$0xff]
  %v27 = vld [vmem:[%s0 + $0x68] sm:$0xff]
  %v28 = vld [vmem:[%s0 + $0x70] sm:$0xff]
  %v29 = vld [vmem:[%s0 + $0x78] sm:$0xff]
  %v30 = vld [vmem:[%s0 + $0x80] sm:$0xff]
  %v31 = vld [vmem:[%s0 + $0x88] sm:$0xff]
  %v32 = vld [vmem:[%s0 + $0x90] sm:$0xff]
  %v33 = vld [vmem:[%s0 + $0x98] sm:$0xff]
  %v34 = vld [vmem:[%s0 + $0xa0] sm:$0xff]
  %v35 = vld [vmem:[%s0 + $0xa8] sm:$0xff]
  %v36 = vld [vmem:[%s0 + $0xb0] sm:$0xff]
  %v37 = vld [vmem:[%s0 + $0xb8] sm:$0xff]
  %v38 = vld [vmem:[%s0 + $0xc0] sm:$0xff]
  %v39 = vld [vmem:[%s0 + $0xc8] sm:$0xff]
  %v40 = vld [vmem:[%s0 + $0xd0] sm:$0xff]
  %v41 = vld [vmem:[%s0 + $0xd8] sm:$0xff]
  %v42 = vld [vmem:[%s0 + $0xe0] sm:$0xff]
  %v43 = vld [vmem:[%s0 + $0xe8] sm:$0xff]
  %v44 = vld [vmem:[%s0 + $0xf0] sm:$0xff]
  %v45 = vld [vmem:[%s0 + $0xf8] sm:$0xff]
  %v46 = vld [vmem:[%s0 + $0x100] sm:$0xff]
  %v47 = vld [vmem:[%s0 + $0x108] sm:$0xff]
  %v48 = vld [vmem:[%s0 + $0x110] sm:$0xff]
  %v49 = vld [vmem:[%s0 + $0x118] sm:$0xff]
  %v50 = vld [vmem:[%s0 + $0x120] sm:$0xff]
  %v51 = vld [vmem:[%s0 + $0x128] sm:$0xff]
  %v52 = vld [vmem:[%s0 + $0x130] sm:$0xff]
  %v53 = vld [vmem:[%s0 + $0x138] sm:$0xff]
  %v54 = vld [vmem:[%s0 + $0x140] sm:$0xff]
  %v55 = vld [vmem:[%s0 + $0x148] sm:$0xff]
  %v56 = vld [vmem:[%s0 + $0x150] sm:$0xff]
  %v57 = vld [vmem:[%s0 + $0x158] sm:$0xff]
  %v58 = vld [vmem:[%s0 + $0x160] sm:$0xff]
  %v59 = vld [vmem:[%s0 + $0x168] sm:$0xff]
  %v60 = vld [vmem:[%s0 + $0x170] sm:$0xff]
  %v61 = vld [vmem:[%s0 + $0x178] sm:$0xff]
  %v62 = vld [vmem:[%s0 + $0x180] sm:$0xff]
  %v63 = vld [vmem:[%s0 + $0x188] sm:$0xff]
  %v64 = vld [vmem:[%s0 + $0x190] sm:$0xff]
  %v65 = vld [vmem:[%s0 + $0x198] sm:$0xff]
  %v66 = vld [vmem:[%s0 + $0x1a0] sm:$0xff]
  %v67 = vld [vmem:[%s0 + $0x1a8] sm:$0xff]
  %v68 = vld [vmem:[%s0 + $0x1b0] sm:$0xff]
  %v69 = vld [vmem:[%s0 + $0x1b8] sm:$0xff]
  %v70 = vld [vmem:[%s0 + $0x1c0] sm:$0xff]
  %v71 = vld [vmem:[%s0 + $0x1c8] sm:$0xff]
  %v72 = vld [vmem:[%s0 + $0x1d0] sm:$0xff]
  %v73 = vld [vmem:[%s0 + $0x1d8] sm:$0xff]
  %v74 = vld [vmem:[%s0 + $0x1e0] sm:$0xff]
  %v75 = vld [vmem:[%s0 + $0x1e8] sm:$0xff]
  %v76 = vld [vmem:[%s0 + $0x1f0] sm:$0xff]
  %v77 = vld [vmem:[%s0 + $0x1f8] sm:$0xff]
  %v78 = vld [vmem:[%s1] sm:$0x1]
  %v80 = vlaneseq
  %v81 = vshrl.u32 %v80, 7
  %v82 = vsub.s32 0, %v81
  %v83 = vrot.slane %v78, %v82
  %v85 = vmul.f32 %v14, %v83
  %v86 = vmul.f32 %v15, %v83
  %v87 = vmul.f32 %v16, %v83
  %v88 = vmul.f32 %v17, %v83
  %v89 = vmul.f32 %v18, %v83
  %v90 = vmul.f32 %v19, %v83
  %v91 = vmul.f32 %v20, %v83
  %v92 = vmul.f32 %v21, %v83
  %v93 = vmul.f32 %v22, %v83
  %v94 = vmul.f32 %v23, %v83
  %v95 = vmul.f32 %v24, %v83
  %v96 = vmul.f32 %v25, %v83
  %v97 = vmul.f32 %v26, %v83
  %v98 = vmul.f32 %v27, %v83
  %v99 = vmul.f32 %v28, %v83
  %v100 = vmul.f32 %v29, %v83
  %v101 = vmul.f32 %v30, %v83
  %v102 = vmul.f32 %v31, %v83
  %v103 = vmul.f32 %v32, %v83
  %v104 = vmul.f32 %v33, %v83
  %v105 = vmul.f32 %v34, %v83
  %v106 = vmul.f32 %v35, %v83
  %v107 = vmul.f32 %v36, %v83
  %v108 = vmul.f32 %v37, %v83
  %v109 = vmul.f32 %v38, %v83
  %v110 = vmul.f32 %v39, %v83
  %v111 = vmul.f32 %v40, %v83
  %v112 = vmul.f32 %v41, %v83
  %v113 = vmul.f32 %v42, %v83
  %v114 = vmul.f32 %v43, %v83
  %v115 = vmul.f32 %v44, %v83
  %v116 = vmul.f32 %v45, %v83
  %v117 = vmul.f32 %v46, %v83
  %v118 = vmul.f32 %v47, %v83
  %v119 = vmul.f32 %v48, %v83
  %v120 = vmul.f32 %v49, %v83
  %v121 = vmul.f32 %v50, %v83
  %v122 = vmul.f32 %v51, %v83
  %v123 = vmul.f32 %v52, %v83
  %v124 = vmul.f32 %v53, %v83
  %v125 = vmul.f32 %v54, %v83
  %v126 = vmul.f32 %v55, %v83
  %v127 = vmul.f32 %v56, %v83
  %v128 = vmul.f32 %v57, %v83
  %v129 = vmul.f32 %v58, %v83
  %v130 = vmul.f32 %v59, %v83
  %v131 = vmul.f32 %v60, %v83
  %v132 = vmul.f32 %v61, %v83
  %v133 = vmul.f32 %v62, %v83
  %v134 = vmul.f32 %v63, %v83
  %v135 = vmul.f32 %v64, %v83
  %v136 = vmul.f32 %v65, %v83
  %v137 = vmul.f32 %v66, %v83
  %v138 = vmul.f32 %v67, %v83
  %v139 = vmul.f32 %v68, %v83
  %v140 = vmul.f32 %v69, %v83
  %v141 = vmul.f32 %v70, %v83
  %v142 = vmul.f32 %v71, %v83
  %v143 = vmul.f32 %v72, %v83
  %v144 = vmul.f32 %v73, %v83
  %v145 = vmul.f32 %v74, %v83
  %v146 = vmul.f32 %v75, %v83
  %v147 = vmul.f32 %v76, %v83
  %v148 = vmul.f32 %v77, %v83
  %v149 = vld [vmem:[%s2] sm:$0x1]
  %v151 = vlaneseq
  %v152 = vshrl.u32 %v151, 7
  %v153 = vsub.s32 0, %v152
  %v154 = vrot.slane %v149, %v153
  %v156 = vadd.f32 %v85, %v154
  %v157 = vadd.f32 %v86, %v154
  %v158 = vadd.f32 %v87, %v154
  %v159 = vadd.f32 %v88, %v154
  %v160 = vadd.f32 %v89, %v154
  %v161 = vadd.f32 %v90, %v154
  %v162 = vadd.f32 %v91, %v154
  %v163 = vadd.f32 %v92, %v154
  %v164 = vadd.f32 %v93, %v154
  %v165 = vadd.f32 %v94, %v154
  %v166 = vadd.f32 %v95, %v154
  %v167 = vadd.f32 %v96, %v154
  %v168 = vadd.f32 %v97, %v154
  %v169 = vadd.f32 %v98, %v154
  %v170 = vadd.f32 %v99, %v154
  %v171 = vadd.f32 %v100, %v154
  %v172 = vadd.f32 %v101, %v154
  %v173 = vadd.f32 %v102, %v154
  %v174 = vadd.f32 %v103, %v154
  %v175 = vadd.f32 %v104, %v154
  %v176 = vadd.f32 %v105, %v154
  %v177 = vadd.f32 %v106, %v154
  %v178 = vadd.f32 %v107, %v154
  %v179 = vadd.f32 %v108, %v154
  %v180 = vadd.f32 %v109, %v154
  %v181 = vadd.f32 %v110, %v154
  %v182 = vadd.f32 %v111, %v154
  %v183 = vadd.f32 %v112, %v154
  %v184 = vadd.f32 %v113, %v154
  %v185 = vadd.f32 %v114, %v154
  %v186 = vadd.f32 %v115, %v154
  %v187 = vadd.f32 %v116, %v154
  %v188 = vadd.f32 %v117, %v154
  %v189 = vadd.f32 %v118, %v154
  %v190 = vadd.f32 %v119, %v154
  %v191 = vadd.f32 %v120, %v154
  %v192 = vadd.f32 %v121, %v154
  %v193 = vadd.f32 %v122, %v154
  %v194 = vadd.f32 %v123, %v154
  %v195 = vadd.f32 %v124, %v154
  %v196 = vadd.f32 %v125, %v154
  %v197 = vadd.f32 %v126, %v154
  %v198 = vadd.f32 %v127, %v154
  %v199 = vadd.f32 %v128, %v154
  %v200 = vadd.f32 %v129, %v154
  %v201 = vadd.f32 %v130, %v154
  %v202 = vadd.f32 %v131, %v154
  %v203 = vadd.f32 %v132, %v154
  %v204 = vadd.f32 %v133, %v154
  %v205 = vadd.f32 %v134, %v154
  %v206 = vadd.f32 %v135, %v154
  %v207 = vadd.f32 %v136, %v154
  %v208 = vadd.f32 %v137, %v154
  %v209 = vadd.f32 %v138, %v154
  %v210 = vadd.f32 %v139, %v154
  %v211 = vadd.f32 %v140, %v154
  %v212 = vadd.f32 %v141, %v154
  %v213 = vadd.f32 %v142, %v154
  %v214 = vadd.f32 %v143, %v154
  %v215 = vadd.f32 %v144, %v154
  %v216 = vadd.f32 %v145, %v154
  %v217 = vadd.f32 %v146, %v154
  %v218 = vadd.f32 %v147, %v154
  %v219 = vadd.f32 %v148, %v154
  %vm220 = vcmp.ge.f32.partialorder %v156, 0.0
  %vm221 = vcmp.ge.f32.partialorder %v157, 0.0
  %vm222 = vcmp.ge.f32.partialorder %v158, 0.0
  %vm223 = vcmp.ge.f32.partialorder %v159, 0.0
  %vm224 = vcmp.ge.f32.partialorder %v160, 0.0
  %vm225 = vcmp.ge.f32.partialorder %v161, 0.0
  %vm226 = vcmp.ge.f32.partialorder %v162, 0.0
  %vm227 = vcmp.ge.f32.partialorder %v163, 0.0
  %vm228 = vcmp.ge.f32.partialorder %v164, 0.0
  %vm229 = vcmp.ge.f32.partialorder %v165, 0.0
  %vm230 = vcmp.ge.f32.partialorder %v166, 0.0
  %vm231 = vcmp.ge.f32.partialorder %v167, 0.0
  %vm232 = vcmp.ge.f32.partialorder %v168, 0.0
  %vm233 = vcmp.ge.f32.partialorder %v169, 0.0
  %vm234 = vcmp.ge.f32.partialorder %v170, 0.0
  %vm235 = vcmp.ge.f32.partialorder %v171, 0.0
  %vm236 = vcmp.ge.f32.partialorder %v172, 0.0
  %vm237 = vcmp.ge.f32.partialorder %v173, 0.0
  %vm238 = vcmp.ge.f32.partialorder %v174, 0.0
  %vm239 = vcmp.ge.f32.partialorder %v175, 0.0
  %vm240 = vcmp.ge.f32.partialorder %v176, 0.0
  %vm241 = vcmp.ge.f32.partialorder %v177, 0.0
  %vm242 = vcmp.ge.f32.partialorder %v178, 0.0
  %vm243 = vcmp.ge.f32.partialorder %v179, 0.0
  %vm244 = vcmp.ge.f32.partialorder %v180, 0.0
  %vm245 = vcmp.ge.f32.partialorder %v181, 0.0
  %vm246 = vcmp.ge.f32.partialorder %v182, 0.0
  %vm247 = vcmp.ge.f32.partialorder %v183, 0.0
  %vm248 = vcmp.ge.f32.partialorder %v184, 0.0
  %vm249 = vcmp.ge.f32.partialorder %v185, 0.0
  %vm250 = vcmp.ge.f32.partialorder %v186, 0.0
  %vm251 = vcmp.ge.f32.partialorder %v187, 0.0
  %vm252 = vcmp.ge.f32.partialorder %v188, 0.0
  %vm253 = vcmp.ge.f32.partialorder %v189, 0.0
  %vm254 = vcmp.ge.f32.partialorder %v190, 0.0
  %vm255 = vcmp.ge.f32.partialorder %v191, 0.0
  %vm256 = vcmp.ge.f32.partialorder %v192, 0.0
  %vm257 = vcmp.ge.f32.partialorder %v193, 0.0
  %vm258 = vcmp.ge.f32.partialorder %v194, 0.0
  %vm259 = vcmp.ge.f32.partialorder %v195, 0.0
  %vm260 = vcmp.ge.f32.partialorder %v196, 0.0
  %vm261 = vcmp.ge.f32.partialorder %v197, 0.0
  %vm262 = vcmp.ge.f32.partialorder %v198, 0.0
  %vm263 = vcmp.ge.f32.partialorder %v199, 0.0
  %vm264 = vcmp.ge.f32.partialorder %v200, 0.0
  %vm265 = vcmp.ge.f32.partialorder %v201, 0.0
  %vm266 = vcmp.ge.f32.partialorder %v202, 0.0
  %vm267 = vcmp.ge.f32.partialorder %v203, 0.0
  %vm268 = vcmp.ge.f32.partialorder %v204, 0.0
  %vm269 = vcmp.ge.f32.partialorder %v205, 0.0
  %vm270 = vcmp.ge.f32.partialorder %v206, 0.0
  %vm271 = vcmp.ge.f32.partialorder %v207, 0.0
  %vm272 = vcmp.ge.f32.partialorder %v208, 0.0
  %vm273 = vcmp.ge.f32.partialorder %v209, 0.0
  %vm274 = vcmp.ge.f32.partialorder %v210, 0.0
  %vm275 = vcmp.ge.f32.partialorder %v211, 0.0
  %vm276 = vcmp.ge.f32.partialorder %v212, 0.0
  %vm277 = vcmp.ge.f32.partialorder %v213, 0.0
  %vm278 = vcmp.ge.f32.partialorder %v214, 0.0
  %vm279 = vcmp.ge.f32.partialorder %v215, 0.0
  %vm280 = vcmp.ge.f32.partialorder %v216, 0.0
  %vm281 = vcmp.ge.f32.partialorder %v217, 0.0
  %vm282 = vcmp.ge.f32.partialorder %v218, 0.0
  %vm283 = vcmp.ge.f32.partialorder %v219, 0.0
  %v284 = vmul.f32 %v156, 0.2
  %v285 = vmul.f32 %v157, 0.2
  %v286 = vmul.f32 %v158, 0.2
  %v287 = vmul.f32 %v159, 0.2
  %v288 = vmul.f32 %v160, 0.2
  %v289 = vmul.f32 %v161, 0.2
  %v290 = vmul.f32 %v162, 0.2
  %v291 = vmul.f32 %v163, 0.2
  %v292 = vmul.f32 %v164, 0.2
  %v293 = vmul.f32 %v165, 0.2
  %v294 = vmul.f32 %v166, 0.2
  %v295 = vmul.f32 %v167, 0.2
  %v296 = vmul.f32 %v168, 0.2
  %v297 = vmul.f32 %v169, 0.2
  %v298 = vmul.f32 %v170, 0.2
  %v299 = vmul.f32 %v171, 0.2
  %v300 = vmul.f32 %v172, 0.2
  %v301 = vmul.f32 %v173, 0.2
  %v302 = vmul.f32 %v174, 0.2
  %v303 = vmul.f32 %v175, 0.2
  %v304 = vmul.f32 %v176, 0.2
  %v305 = vmul.f32 %v177, 0.2
  %v306 = vmul.f32 %v178, 0.2
  %v307 = vmul.f32 %v179, 0.2
  %v308 = vmul.f32 %v180, 0.2
  %v309 = vmul.f32 %v181, 0.2
  %v310 = vmul.f32 %v182, 0.2
  %v311 = vmul.f32 %v183, 0.2
  %v312 = vmul.f32 %v184, 0.2
  %v313 = vmul.f32 %v185, 0.2
  %v314 = vmul.f32 %v186, 0.2
  %v315 = vmul.f32 %v187, 0.2
  %v316 = vmul.f32 %v188, 0.2
  %v317 = vmul.f32 %v189, 0.2
  %v318 = vmul.f32 %v190, 0.2
  %v319 = vmul.f32 %v191, 0.2
  %v320 = vmul.f32 %v192, 0.2
  %v321 = vmul.f32 %v193, 0.2
  %v322 = vmul.f32 %v194, 0.2
  %v323 = vmul.f32 %v195, 0.2
  %v324 = vmul.f32 %v196, 0.2
  %v325 = vmul.f32 %v197, 0.2
  %v326 = vmul.f32 %v198, 0.2
  %v327 = vmul.f32 %v199, 0.2
  %v328 = vmul.f32 %v200, 0.2
  %v329 = vmul.f32 %v201, 0.2
  %v330 = vmul.f32 %v202, 0.2
  %v331 = vmul.f32 %v203, 0.2
  %v332 = vmul.f32 %v204, 0.2
  %v333 = vmul.f32 %v205, 0.2
  %v334 = vmul.f32 %v206, 0.2
  %v335 = vmul.f32 %v207, 0.2
  %v336 = vmul.f32 %v208, 0.2
  %v337 = vmul.f32 %v209, 0.2
  %v338 = vmul.f32 %v210, 0.2
  %v339 = vmul.f32 %v211, 0.2
  %v340 = vmul.f32 %v212, 0.2
  %v341 = vmul.f32 %v213, 0.2
  %v342 = vmul.f32 %v214, 0.2
  %v343 = vmul.f32 %v215, 0.2
  %v344 = vmul.f32 %v216, 0.2
  %v345 = vmul.f32 %v217, 0.2
  %v346 = vmul.f32 %v218, 0.2
  %v347 = vmul.f32 %v219, 0.2
  %v348 = vsel %vm220, %v156, %v284
  %v349 = vsel %vm221, %v157, %v285
  %v350 = vsel %vm222, %v158, %v286
  %v351 = vsel %vm223, %v159, %v287
  %v352 = vsel %vm224, %v160, %v288
  %v353 = vsel %vm225, %v161, %v289
  %v354 = vsel %vm226, %v162, %v290
  %v355 = vsel %vm227, %v163, %v291
  %v356 = vsel %vm228, %v164, %v292
  %v357 = vsel %vm229, %v165, %v293
  %v358 = vsel %vm230, %v166, %v294
  %v359 = vsel %vm231, %v167, %v295
  %v360 = vsel %vm232, %v168, %v296
  %v361 = vsel %vm233, %v169, %v297
  %v362 = vsel %vm234, %v170, %v298
  %v363 = vsel %vm235, %v171, %v299
  %v364 = vsel %vm236, %v172, %v300
  %v365 = vsel %vm237, %v173, %v301
  %v366 = vsel %vm238, %v174, %v302
  %v367 = vsel %vm239, %v175, %v303
  %v368 = vsel %vm240, %v176, %v304
  %v369 = vsel %vm241, %v177, %v305
  %v370 = vsel %vm242, %v178, %v306
  %v371 = vsel %vm243, %v179, %v307
  %v372 = vsel %vm244, %v180, %v308
  %v373 = vsel %vm245, %v181, %v309
  %v374 = vsel %vm246, %v182, %v310
  %v375 = vsel %vm247, %v183, %v311
  %v376 = vsel %vm248, %v184, %v312
  %v377 = vsel %vm249, %v185, %v313
  %v378 = vsel %vm250, %v186, %v314
  %v379 = vsel %vm251, %v187, %v315
  %v380 = vsel %vm252, %v188, %v316
  %v381 = vsel %vm253, %v189, %v317
  %v382 = vsel %vm254, %v190, %v318
  %v383 = vsel %vm255, %v191, %v319
  %v384 = vsel %vm256, %v192, %v320
  %v385 = vsel %vm257, %v193, %v321
  %v386 = vsel %vm258, %v194, %v322
  %v387 = vsel %vm259, %v195, %v323
  %v388 = vsel %vm260, %v196, %v324
  %v389 = vsel %vm261, %v197, %v325
  %v390 = vsel %vm262, %v198, %v326
  %v391 = vsel %vm263, %v199, %v327
  %v392 = vsel %vm264, %v200, %v328
  %v393 = vsel %vm265, %v201, %v329
  %v394 = vsel %vm266, %v202, %v330
  %v395 = vsel %vm267, %v203, %v331
  %v396 = vsel %vm268, %v204, %v332
  %v397 = vsel %vm269, %v205, %v333
  %v398 = vsel %vm270, %v206, %v334
  %v399 = vsel %vm271, %v207, %v335
  %v400 = vsel %vm272, %v208, %v336
  %v401 = vsel %vm273, %v209, %v337
  %v402 = vsel %vm274, %v210, %v338
  %v403 = vsel %vm275, %v211, %v339
  %v404 = vsel %vm276, %v212, %v340
  %v405 = vsel %vm277, %v213, %v341
  %v406 = vsel %vm278, %v214, %v342
  %v407 = vsel %vm279, %v215, %v343
  %v408 = vsel %vm280, %v216, %v344
  %v409 = vsel %vm281, %v217, %v345
  %v410 = vsel %vm282, %v218, %v346
  %v411 = vsel %vm283, %v219, %v347
  %v412 = vpack.c.bf16 %v349, %v348
  %v413 = vpack.c.bf16 %v351, %v350
  %v414 = vpack.c.bf16 %v353, %v352
  %v415 = vpack.c.bf16 %v355, %v354
  %v416 = vpack.c.bf16 %v357, %v356
  %v417 = vpack.c.bf16 %v359, %v358
  %v418 = vpack.c.bf16 %v361, %v360
  %v419 = vpack.c.bf16 %v363, %v362
  %v420 = vpack.c.bf16 %v365, %v364
  %v421 = vpack.c.bf16 %v367, %v366
  %v422 = vpack.c.bf16 %v369, %v368
  %v423 = vpack.c.bf16 %v371, %v370
  %v424 = vpack.c.bf16 %v373, %v372
  %v425 = vpack.c.bf16 %v375, %v374
  %v426 = vpack.c.bf16 %v377, %v376
  %v427 = vpack.c.bf16 %v379, %v378
  %v428 = vpack.c.bf16 %v381, %v380
  %v429 = vpack.c.bf16 %v383, %v382
  %v430 = vpack.c.bf16 %v385, %v384
  %v431 = vpack.c.bf16 %v387, %v386
  %v432 = vpack.c.bf16 %v389, %v388
  %v433 = vpack.c.bf16 %v391, %v390
  %v434 = vpack.c.bf16 %v393, %v392
  %v435 = vpack.c.bf16 %v395, %v394
  %v436 = vpack.c.bf16 %v397, %v396
  %v437 = vpack.c.bf16 %v399, %v398
  %v438 = vpack.c.bf16 %v401, %v400
  %v439 = vpack.c.bf16 %v403, %v402
  %v440 = vpack.c.bf16 %v405, %v404
  %v441 = vpack.c.bf16 %v407, %v406
  %v442 = vpack.c.bf16 %v409, %v408
  %v443 = vpack.c.bf16 %v411, %v410
  %v476 = vunpack.c.l.b16 %v412
  %v477 = vunpack.c.h.b16 %v412
  %v478 = vunpack.c.l.b16 %v413
  %v479 = vunpack.c.h.b16 %v413
  %v480 = vunpack.c.l.b16 %v414
  %v481 = vunpack.c.h.b16 %v414
  %v482 = vunpack.c.l.b16 %v415
  %v483 = vunpack.c.h.b16 %v415
  %v484 = vunpack.c.l.b16 %v416
  %v485 = vunpack.c.h.b16 %v416
  %v486 = vunpack.c.l.b16 %v417
  %v487 = vunpack.c.h.b16 %v417
  %v488 = vunpack.c.l.b16 %v418
  %v489 = vunpack.c.h.b16 %v418
  %v490 = vunpack.c.l.b16 %v419
  %v491 = vunpack.c.h.b16 %v419
  %v492 = vunpack.c.l.b16 %v420
  %v493 = vunpack.c.h.b16 %v420
  %v494 = vunpack.c.l.b16 %v421
  %v495 = vunpack.c.h.b16 %v421
  %v496 = vunpack.c.l.b16 %v422
  %v497 = vunpack.c.h.b16 %v422
  %v498 = vunpack.c.l.b16 %v423
  %v499 = vunpack.c.h.b16 %v423
  %v500 = vunpack.c.l.b16 %v424
  %v501 = vunpack.c.h.b16 %v424
  %v502 = vunpack.c.l.b16 %v425
  %v503 = vunpack.c.h.b16 %v425
  %v504 = vunpack.c.l.b16 %v426
  %v505 = vunpack.c.h.b16 %v426
  %v506 = vunpack.c.l.b16 %v427
  %v507 = vunpack.c.h.b16 %v427
  %v508 = vunpack.c.l.b16 %v428
  %v509 = vunpack.c.h.b16 %v428
  %v510 = vunpack.c.l.b16 %v429
  %v511 = vunpack.c.h.b16 %v429
  %v512 = vunpack.c.l.b16 %v430
  %v513 = vunpack.c.h.b16 %v430
  %v514 = vunpack.c.l.b16 %v431
  %v515 = vunpack.c.h.b16 %v431
  %v516 = vunpack.c.l.b16 %v432
  %v517 = vunpack.c.h.b16 %v432
  %v518 = vunpack.c.l.b16 %v433
  %v519 = vunpack.c.h.b16 %v433
  %v520 = vunpack.c.l.b16 %v434
  %v521 = vunpack.c.h.b16 %v434
  %v522 = vunpack.c.l.b16 %v435
  %v523 = vunpack.c.h.b16 %v435
  %v524 = vunpack.c.l.b16 %v436
  %v525 = vunpack.c.h.b16 %v436
  %v526 = vunpack.c.l.b16 %v437
  %v527 = vunpack.c.h.b16 %v437
  %v528 = vunpack.c.l.b16 %v438
  %v529 = vunpack.c.h.b16 %v438
  %v530 = vunpack.c.l.b16 %v439
  %v531 = vunpack.c.h.b16 %v439
  %v532 = vunpack.c.l.b16 %v440
  %v533 = vunpack.c.h.b16 %v440
  %v534 = vunpack.c.l.b16 %v441
  %v535 = vunpack.c.h.b16 %v441
  %v536 = vunpack.c.l.b16 %v442
  %v537 = vunpack.c.h.b16 %v442
  %v538 = vunpack.c.l.b16 %v443
  %v539 = vunpack.c.h.b16 %v443
  %v540 = vpack.c.b16 %v476, %v476
  %v541 = vpack.c.b16 %v477, %v477
  %v542 = vpack.c.b16 %v478, %v478
  %v543 = vpack.c.b16 %v479, %v479
  %v544 = vpack.c.b16 %v480, %v480
  %v545 = vpack.c.b16 %v481, %v481
  %v546 = vpack.c.b16 %v482, %v482
  %v547 = vpack.c.b16 %v483, %v483
  %v548 = vpack.c.b16 %v484, %v484
  %v549 = vpack.c.b16 %v485, %v485
  %v550 = vpack.c.b16 %v486, %v486
  %v551 = vpack.c.b16 %v487, %v487
  %v552 = vpack.c.b16 %v488, %v488
  %v553 = vpack.c.b16 %v489, %v489
  %v554 = vpack.c.b16 %v490, %v490
  %v555 = vpack.c.b16 %v491, %v491
  %v556 = vpack.c.b16 %v492, %v492
  %v557 = vpack.c.b16 %v493, %v493
  %v558 = vpack.c.b16 %v494, %v494
  %v559 = vpack.c.b16 %v495, %v495
  %v560 = vpack.c.b16 %v496, %v496
  %v561 = vpack.c.b16 %v497, %v497
  %v562 = vpack.c.b16 %v498, %v498
  %v563 = vpack.c.b16 %v499, %v499
  %v564 = vpack.c.b16 %v500, %v500
  %v565 = vpack.c.b16 %v501, %v501
  %v566 = vpack.c.b16 %v502, %v502
  %v567 = vpack.c.b16 %v503, %v503
  %v568 = vpack.c.b16 %v504, %v504
  %v569 = vpack.c.b16 %v505, %v505
  %v570 = vpack.c.b16 %v506, %v506
  %v571 = vpack.c.b16 %v507, %v507
  %v572 = vpack.c.b16 %v508, %v508
  %v573 = vpack.c.b16 %v509, %v509
  %v574 = vpack.c.b16 %v510, %v510
  %v575 = vpack.c.b16 %v511, %v511
  %v576 = vpack.c.b16 %v512, %v512
  %v577 = vpack.c.b16 %v513, %v513
  %v578 = vpack.c.b16 %v514, %v514
  %v579 = vpack.c.b16 %v515, %v515
  %v580 = vpack.c.b16 %v516, %v516
  %v581 = vpack.c.b16 %v517, %v517
  %v582 = vpack.c.b16 %v518, %v518
  %v583 = vpack.c.b16 %v519, %v519
  %v584 = vpack.c.b16 %v520, %v520
  %v585 = vpack.c.b16 %v521, %v521
  %v586 = vpack.c.b16 %v522, %v522
  %v587 = vpack.c.b16 %v523, %v523
  %v588 = vpack.c.b16 %v524, %v524
  %v589 = vpack.c.b16 %v525, %v525
  %v590 = vpack.c.b16 %v526, %v526
  %v591 = vpack.c.b16 %v527, %v527
  %v592 = vpack.c.b16 %v528, %v528
  %v593 = vpack.c.b16 %v529, %v529
  %v594 = vpack.c.b16 %v530, %v530
  %v595 = vpack.c.b16 %v531, %v531
  %v596 = vpack.c.b16 %v532, %v532
  %v597 = vpack.c.b16 %v533, %v533
  %v598 = vpack.c.b16 %v534, %v534
  %v599 = vpack.c.b16 %v535, %v535
  %v600 = vpack.c.b16 %v536, %v536
  %v601 = vpack.c.b16 %v537, %v537
  %v602 = vpack.c.b16 %v538, %v538
  %v603 = vpack.c.b16 %v539, %v539
  %668 = vst [vmem:[%s3] sm:$0xf] %v540
  %669 = vst [vmem:[%s3 + $0x4] sm:$0xf] %v541
  %670 = vst [vmem:[%s3 + $0x8] sm:$0xf] %v542
  %671 = vst [vmem:[%s3 + $0xc] sm:$0xf] %v543
  %672 = vst [vmem:[%s3 + $0x10] sm:$0xf] %v544
  %673 = vst [vmem:[%s3 + $0x14] sm:$0xf] %v545
  %674 = vst [vmem:[%s3 + $0x18] sm:$0xf] %v546
  %675 = vst [vmem:[%s3 + $0x1c] sm:$0xf] %v547
  %676 = vst [vmem:[%s3 + $0x20] sm:$0xf] %v548
  %677 = vst [vmem:[%s3 + $0x24] sm:$0xf] %v549
  %678 = vst [vmem:[%s3 + $0x28] sm:$0xf] %v550
  %679 = vst [vmem:[%s3 + $0x2c] sm:$0xf] %v551
  %680 = vst [vmem:[%s3 + $0x30] sm:$0xf] %v552
  %681 = vst [vmem:[%s3 + $0x34] sm:$0xf] %v553
  %682 = vst [vmem:[%s3 + $0x38] sm:$0xf] %v554
  %683 = vst [vmem:[%s3 + $0x3c] sm:$0xf] %v555
  %684 = vst [vmem:[%s3 + $0x40] sm:$0xf] %v556
  %685 = vst [vmem:[%s3 + $0x44] sm:$0xf] %v557
  %686 = vst [vmem:[%s3 + $0x48] sm:$0xf] %v558
  %687 = vst [vmem:[%s3 + $0x4c] sm:$0xf] %v559
  %688 = vst [vmem:[%s3 + $0x50] sm:$0xf] %v560
  %689 = vst [vmem:[%s3 + $0x54] sm:$0xf] %v561
  %690 = vst [vmem:[%s3 + $0x58] sm:$0xf] %v562
  %691 = vst [vmem:[%s3 + $0x5c] sm:$0xf] %v563
  %692 = vst [vmem:[%s3 + $0x60] sm:$0xf] %v564
  %693 = vst [vmem:[%s3 + $0x64] sm:$0xf] %v565
  %694 = vst [vmem:[%s3 + $0x68] sm:$0xf] %v566
  %695 = vst [vmem:[%s3 + $0x6c] sm:$0xf] %v567
  %696 = vst [vmem:[%s3 + $0x70] sm:$0xf] %v568
  %697 = vst [vmem:[%s3 + $0x74] sm:$0xf] %v569
  %698 = vst [vmem:[%s3 + $0x78] sm:$0xf] %v570
  %699 = vst [vmem:[%s3 + $0x7c] sm:$0xf] %v571
  %700 = vst [vmem:[%s3 + $0x80] sm:$0xf] %v572
  %701 = vst [vmem:[%s3 + $0x84] sm:$0xf] %v573
  %702 = vst [vmem:[%s3 + $0x88] sm:$0xf] %v574
  %703 = vst [vmem:[%s3 + $0x8c] sm:$0xf] %v575
  %704 = vst [vmem:[%s3 + $0x90] sm:$0xf] %v576
  %705 = vst [vmem:[%s3 + $0x94] sm:$0xf] %v577
  %706 = vst [vmem:[%s3 + $0x98] sm:$0xf] %v578
  %707 = vst [vmem:[%s3 + $0x9c] sm:$0xf] %v579
  %708 = vst [vmem:[%s3 + $0xa0] sm:$0xf] %v580
  %709 = vst [vmem:[%s3 + $0xa4] sm:$0xf] %v581
  %710 = vst [vmem:[%s3 + $0xa8] sm:$0xf] %v582
  %711 = vst [vmem:[%s3 + $0xac] sm:$0xf] %v583
  %712 = vst [vmem:[%s3 + $0xb0] sm:$0xf] %v584
  %713 = vst [vmem:[%s3 + $0xb4] sm:$0xf] %v585
  %714 = vst [vmem:[%s3 + $0xb8] sm:$0xf] %v586
  %715 = vst [vmem:[%s3 + $0xbc] sm:$0xf] %v587
  %716 = vst [vmem:[%s3 + $0xc0] sm:$0xf] %v588
  %717 = vst [vmem:[%s3 + $0xc4] sm:$0xf] %v589
  %718 = vst [vmem:[%s3 + $0xc8] sm:$0xf] %v590
  %719 = vst [vmem:[%s3 + $0xcc] sm:$0xf] %v591
  %720 = vst [vmem:[%s3 + $0xd0] sm:$0xf] %v592
  %721 = vst [vmem:[%s3 + $0xd4] sm:$0xf] %v593
  %722 = vst [vmem:[%s3 + $0xd8] sm:$0xf] %v594
  %723 = vst [vmem:[%s3 + $0xdc] sm:$0xf] %v595
  %724 = vst [vmem:[%s3 + $0xe0] sm:$0xf] %v596
  %725 = vst [vmem:[%s3 + $0xe4] sm:$0xf] %v597
  %726 = vst [vmem:[%s3 + $0xe8] sm:$0xf] %v598
  %727 = vst [vmem:[%s3 + $0xec] sm:$0xf] %v599
  %728 = vst [vmem:[%s3 + $0xf0] sm:$0xf] %v600
  %729 = vst [vmem:[%s3 + $0xf4] sm:$0xf] %v601
  %730 = vst [vmem:[%s3 + $0xf8] sm:$0xf] %v602
  %731 = vst [vmem:[%s3 + $0xfc] sm:$0xf] %v603
  // Predicated region
  $region14: #{discriminator_forward.10} parent=0 // pred_check
    _
  $region15: #{discriminator_forward.10} parent=0 // pred_check_branch
    %733 = sbr.rel (0) target = $region17
  $region16: #{discriminator_forward.10} parent=0 // pred_region
    _
  $region17: #{discriminator_forward.10} parent=0 // pred_fallthru
    _
  // Predicated region
  $region18: #{discriminator_forward.10} parent=0 // pred_check
    _
  $region19: #{discriminator_forward.10} parent=0 // pred_check_branch
    %735 = sbr.rel (0) target = $region21
  $region20: #{discriminator_forward.10} parent=0 // pred_region
    _
  $region21: #{discriminator_forward.10} parent=0 // pred_fallthru
    _

// kernel: discriminator_forward.9
$region0: #{discriminator_forward.9}
  #allocation0 [shape = 'u32[]', space=smem, size = 0x4, offset = 0x4, fixed_abs, tag = 'smem constant byte address 0x4 - core index']
  #allocation1 [shape = 'u32[144,128]{1,0:T(1,128)}', space=vmem, size = 0x12000, scoped, tag = 'internal scratch']
  #allocation2 [shape = 'f32[512,128]{1,0:T(8,128)}', space=vmem, size = 0x40000, scoped, tag = 'scratch operand']
  %s0 = inlined_call_operand.vmem [shape: bf16[512,128], index: 0, kind: input, shape index: {}]
  %s1 = inlined_call_operand.vmem [shape: bf16[128,128], index: 1, kind: input, shape index: {}]
  %s2 = inlined_call_operand.vmem [shape: f32[512,128], index: 2, kind: output, shape index: {0}]
  %s3 = inlined_call_operand.vmem [shape: f32[1,1,128], index: 3, kind: output, shape index: {1}]
  %s4 = inlined_call_operand.vmem [shape: f32[1,1,128], index: 4, kind: output, shape index: {2}]
  %5 = xla_tuple %s2, %s3, %s4
  %s6 = sld [smem:[#allocation0]]
  $region42: #{discriminator_forward.9} parent=0
    _
  %s8 = ssub.s32 1, %s6
  %s9 = scalar_select 0, %s8, %s6
  // Predicated region
  $region2: #{discriminator_forward.9} parent=0 // pred_check
    _
  $region3: #{discriminator_forward.9} parent=0 // pred_check_branch
    %11 = sbr.rel (0) target = $region5
  $region4: #{discriminator_forward.9} parent=0 // pred_region
    _
  $region5: #{discriminator_forward.9} parent=0 // pred_fallthru
    _
  // Predicated region
  $region6: #{discriminator_forward.9} parent=0 // pred_check
    _
  $region7: #{discriminator_forward.9} parent=0 // pred_check_branch
    %13 = sbr.rel (0) target = $region9
  $region8: #{discriminator_forward.9} parent=0 // pred_region
    _
  $region9: #{discriminator_forward.9} parent=0 // pred_fallthru
    _
  %p15 = scmp.eq.s32.totalorder 0, 0
  // Predicated region
  $region10: #{discriminator_forward.9} parent=0 // pred_check
    %p16 = pneg %p15
  $region11: #{discriminator_forward.9} parent=0 // pred_check_branch
    %18 = sbr.rel (%p16) target = $region13
  $region12: #{discriminator_forward.9} parent=0 // pred_region
    %19 = vst [vmem:[#allocation2] sm:$0xff] 0.0
    %20 = vst [vmem:[#allocation2 + $0x8] sm:$0xff] 0.0
    %21 = vst [vmem:[#allocation2 + $0x10] sm:$0xff] 0.0
    %22 = vst [vmem:[#allocation2 + $0x18] sm:$0xff] 0.0
    %23 = vst [vmem:[#allocation2 + $0x20] sm:$0xff] 0.0
    %24 = vst [vmem:[#allocation2 + $0x28] sm:$0xff] 0.0
    %25 = vst [vmem:[#allocation2 + $0x30] sm:$0xff] 0.0
    %26 = vst [vmem:[#allocation2 + $0x38] sm:$0xff] 0.0
    %27 = vst [vmem:[#allocation2 + $0x40] sm:$0xff] 0.0
    %28 = vst [vmem:[#allocation2 + $0x48] sm:$0xff] 0.0
    %29 = vst [vmem:[#allocation2 + $0x50] sm:$0xff] 0.0
    %30 = vst [vmem:[#allocation2 + $0x58] sm:$0xff] 0.0
    %31 = vst [vmem:[#allocation2 + $0x60] sm:$0xff] 0.0
    %32 = vst [vmem:[#allocation2 + $0x68] sm:$0xff] 0.0
    %33 = vst [vmem:[#allocation2 + $0x70] sm:$0xff] 0.0
    %34 = vst [vmem:[#allocation2 + $0x78] sm:$0xff] 0.0
    %35 = vst [vmem:[#allocation2 + $0x80] sm:$0xff] 0.0
    %36 = vst [vmem:[#allocation2 + $0x88] sm:$0xff] 0.0
    %37 = vst [vmem:[#allocation2 + $0x90] sm:$0xff] 0.0
    %38 = vst [vmem:[#allocation2 + $0x98] sm:$0xff] 0.0
    %39 = vst [vmem:[#allocation2 + $0xa0] sm:$0xff] 0.0
    %40 = vst [vmem:[#allocation2 + $0xa8] sm:$0xff] 0.0
    %41 = vst [vmem:[#allocation2 + $0xb0] sm:$0xff] 0.0
    %42 = vst [vmem:[#allocation2 + $0xb8] sm:$0xff] 0.0
    %43 = vst [vmem:[#allocation2 + $0xc0] sm:$0xff] 0.0
    %44 = vst [vmem:[#allocation2 + $0xc8] sm:$0xff] 0.0
    %45 = vst [vmem:[#allocation2 + $0xd0] sm:$0xff] 0.0
    %46 = vst [vmem:[#allocation2 + $0xd8] sm:$0xff] 0.0
    %47 = vst [vmem:[#allocation2 + $0xe0] sm:$0xff] 0.0
    %48 = vst [vmem:[#allocation2 + $0xe8] sm:$0xff] 0.0
    %49 = vst [vmem:[#allocation2 + $0xf0] sm:$0xff] 0.0
    %50 = vst [vmem:[#allocation2 + $0xf8] sm:$0xff] 0.0
    %51 = vst [vmem:[#allocation2 + $0x100] sm:$0xff] 0.0
    %52 = vst [vmem:[#allocation2 + $0x108] sm:$0xff] 0.0
    %53 = vst [vmem:[#allocation2 + $0x110] sm:$0xff] 0.0
    %54 = vst [vmem:[#allocation2 + $0x118] sm:$0xff] 0.0
    %55 = vst [vmem:[#allocation2 + $0x120] sm:$0xff] 0.0
    %56 = vst [vmem:[#allocation2 + $0x128] sm:$0xff] 0.0
    %57 = vst [vmem:[#allocation2 + $0x130] sm:$0xff] 0.0
    %58 = vst [vmem:[#allocation2 + $0x138] sm:$0xff] 0.0
    %59 = vst [vmem:[#allocation2 + $0x140] sm:$0xff] 0.0
    %60 = vst [vmem:[#allocation2 + $0x148] sm:$0xff] 0.0
    %61 = vst [vmem:[#allocation2 + $0x150] sm:$0xff] 0.0
    %62 = vst [vmem:[#allocation2 + $0x158] sm:$0xff] 0.0
    %63 = vst [vmem:[#allocation2 + $0x160] sm:$0xff] 0.0
    %64 = vst [vmem:[#allocation2 + $0x168] sm:$0xff] 0.0
    %65 = vst [vmem:[#allocation2 + $0x170] sm:$0xff] 0.0
    %66 = vst [vmem:[#allocation2 + $0x178] sm:$0xff] 0.0
    %67 = vst [vmem:[#allocation2 + $0x180] sm:$0xff] 0.0
    %68 = vst [vmem:[#allocation2 + $0x188] sm:$0xff] 0.0
    %69 = vst [vmem:[#allocation2 + $0x190] sm:$0xff] 0.0
    %70 = vst [vmem:[#allocation2 + $0x198] sm:$0xff] 0.0
    %71 = vst [vmem:[#allocation2 + $0x1a0] sm:$0xff] 0.0
    %72 = vst [vmem:[#allocation2 + $0x1a8] sm:$0xff] 0.0
    %73 = vst [vmem:[#allocation2 + $0x1b0] sm:$0xff] 0.0
    %74 = vst [vmem:[#allocation2 + $0x1b8] sm:$0xff] 0.0
    %75 = vst [vmem:[#allocation2 + $0x1c0] sm:$0xff] 0.0
    %76 = vst [vmem:[#allocation2 + $0x1c8] sm:$0xff] 0.0
    %77 = vst [vmem:[#allocation2 + $0x1d0] sm:$0xff] 0.0
    %78 = vst [vmem:[#allocation2 + $0x1d8] sm:$0xff] 0.0
    %79 = vst [vmem:[#allocation2 + $0x1e0] sm:$0xff] 0.0
    %80 = vst [vmem:[#allocation2 + $0x1e8] sm:$0xff] 0.0
    %81 = vst [vmem:[#allocation2 + $0x1f0] sm:$0xff] 0.0
    %82 = vst [vmem:[#allocation2 + $0x1f8] sm:$0xff] 0.0
  $region13: #{discriminator_forward.9} parent=0 // pred_fallthru
    _
  %v83 = vld [vmem:[#allocation2] sm:$0xff]
  %v84 = vld [vmem:[#allocation2 + $0x8] sm:$0xff]
  %v85 = vld [vmem:[#allocation2 + $0x10] sm:$0xff]
  %v86 = vld [vmem:[#allocation2 + $0x18] sm:$0xff]
  %v87 = vld [vmem:[#allocation2 + $0x20] sm:$0xff]
  %v88 = vld [vmem:[#allocation2 + $0x28] sm:$0xff]
  %v89 = vld [vmem:[#allocation2 + $0x30] sm:$0xff]
  %v90 = vld [vmem:[#allocation2 + $0x38] sm:$0xff]
  %v91 = vld [vmem:[#allocation2 + $0x40] sm:$0xff]
  %v92 = vld [vmem:[#allocation2 + $0x48] sm:$0xff]
  %v93 = vld [vmem:[#allocation2 + $0x50] sm:$0xff]
  %v94 = vld [vmem:[#allocation2 + $0x58] sm:$0xff]
  %v95 = vld [vmem:[#allocation2 + $0x60] sm:$0xff]
  %v96 = vld [vmem:[#allocation2 + $0x68] sm:$0xff]
  %v97 = vld [vmem:[#allocation2 + $0x70] sm:$0xff]
  %v98 = vld [vmem:[#allocation2 + $0x78] sm:$0xff]
  %v99 = vld [vmem:[#allocation2 + $0x80] sm:$0xff]
  %v100 = vld [vmem:[#allocation2 + $0x88] sm:$0xff]
  %v101 = vld [vmem:[#allocation2 + $0x90] sm:$0xff]
  %v102 = vld [vmem:[#allocation2 + $0x98] sm:$0xff]
  %v103 = vld [vmem:[#allocation2 + $0xa0] sm:$0xff]
  %v104 = vld [vmem:[#allocation2 + $0xa8] sm:$0xff]
  %v105 = vld [vmem:[#allocation2 + $0xb0] sm:$0xff]
  %v106 = vld [vmem:[#allocation2 + $0xb8] sm:$0xff]
  %v107 = vld [vmem:[#allocation2 + $0xc0] sm:$0xff]
  %v108 = vld [vmem:[#allocation2 + $0xc8] sm:$0xff]
  %v109 = vld [vmem:[#allocation2 + $0xd0] sm:$0xff]
  %v110 = vld [vmem:[#allocation2 + $0xd8] sm:$0xff]
  %v111 = vld [vmem:[#allocation2 + $0xe0] sm:$0xff]
  %v112 = vld [vmem:[#allocation2 + $0xe8] sm:$0xff]
  %v113 = vld [vmem:[#allocation2 + $0xf0] sm:$0xff]
  %v114 = vld [vmem:[#allocation2 + $0xf8] sm:$0xff]
  %v115 = vld [vmem:[#allocation2 + $0x100] sm:$0xff]
  %v116 = vld [vmem:[#allocation2 + $0x108] sm:$0xff]
  %v117 = vld [vmem:[#allocation2 + $0x110] sm:$0xff]
  %v118 = vld [vmem:[#allocation2 + $0x118] sm:$0xff]
  %v119 = vld [vmem:[#allocation2 + $0x120] sm:$0xff]
  %v120 = vld [vmem:[#allocation2 + $0x128] sm:$0xff]
  %v121 = vld [vmem:[#allocation2 + $0x130] sm:$0xff]
  %v122 = vld [vmem:[#allocation2 + $0x138] sm:$0xff]
  %v123 = vld [vmem:[#allocation2 + $0x140] sm:$0xff]
  %v124 = vld [vmem:[#allocation2 + $0x148] sm:$0xff]
  %v125 = vld [vmem:[#allocation2 + $0x150] sm:$0xff]
  %v126 = vld [vmem:[#allocation2 + $0x158] sm:$0xff]
  %v127 = vld [vmem:[#allocation2 + $0x160] sm:$0xff]
  %v128 = vld [vmem:[#allocation2 + $0x168] sm:$0xff]
  %v129 = vld [vmem:[#allocation2 + $0x170] sm:$0xff]
  %v130 = vld [vmem:[#allocation2 + $0x178] sm:$0xff]
  %v131 = vld [vmem:[#allocation2 + $0x180] sm:$0xff]
  %v132 = vld [vmem:[#allocation2 + $0x188] sm:$0xff]
  %v133 = vld [vmem:[#allocation2 + $0x190] sm:$0xff]
  %v134 = vld [vmem:[#allocation2 + $0x198] sm:$0xff]
  %v135 = vld [vmem:[#allocation2 + $0x1a0] sm:$0xff]
  %v136 = vld [vmem:[#allocation2 + $0x1a8] sm:$0xff]
  %v137 = vld [vmem:[#allocation2 + $0x1b0] sm:$0xff]
  %v138 = vld [vmem:[#allocation2 + $0x1b8] sm:$0xff]
  %v139 = vld [vmem:[#allocation2 + $0x1c0] sm:$0xff]
  %v140 = vld [vmem:[#allocation2 + $0x1c8] sm:$0xff]
  %v141 = vld [vmem:[#allocation2 + $0x1d0] sm:$0xff]
  %v142 = vld [vmem:[#allocation2 + $0x1d8] sm:$0xff]
  %v143 = vld [vmem:[#allocation2 + $0x1e0] sm:$0xff]
  %v144 = vld [vmem:[#allocation2 + $0x1e8] sm:$0xff]
  %v145 = vld [vmem:[#allocation2 + $0x1f0] sm:$0xff]
  %v146 = vld [vmem:[#allocation2 + $0x1f8] sm:$0xff]
  %v147 = vld [vmem:[%s0] sm:$0xf]
  %v148 = vld [vmem:[%s0 + $0x4] sm:$0xf]
  %v149 = vld [vmem:[%s0 + $0x8] sm:$0xf]
  %v150 = vld [vmem:[%s0 + $0xc] sm:$0xf]
  %v151 = vld [vmem:[%s0 + $0x10] sm:$0xf]
  %v152 = vld [vmem:[%s0 + $0x14] sm:$0xf]
  %v153 = vld [vmem:[%s0 + $0x18] sm:$0xf]
  %v154 = vld [vmem:[%s0 + $0x1c] sm:$0xf]
  %v155 = vld [vmem:[%s0 + $0x20] sm:$0xf]
  %v156 = vld [vmem:[%s0 + $0x24] sm:$0xf]
  %v157 = vld [vmem:[%s0 + $0x28] sm:$0xf]
  %v158 = vld [vmem:[%s0 + $0x2c] sm:$0xf]
  %v159 = vld [vmem:[%s0 + $0x30] sm:$0xf]
  %v160 = vld [vmem:[%s0 + $0x34] sm:$0xf]
  %v161 = vld [vmem:[%s0 + $0x38] sm:$0xf]
  %v162 = vld [vmem:[%s0 + $0x3c] sm:$0xf]
  %v163 = vld [vmem:[%s0 + $0x40] sm:$0xf]
  %v164 = vld [vmem:[%s0 + $0x44] sm:$0xf]
  %v165 = vld [vmem:[%s0 + $0x48] sm:$0xf]
  %v166 = vld [vmem:[%s0 + $0x4c] sm:$0xf]
  %v167 = vld [vmem:[%s0 + $0x50] sm:$0xf]
  %v168 = vld [vmem:[%s0 + $0x54] sm:$0xf]
  %v169 = vld [vmem:[%s0 + $0x58] sm:$0xf]
  %v170 = vld [vmem:[%s0 + $0x5c] sm:$0xf]
  %v171 = vld [vmem:[%s0 + $0x60] sm:$0xf]
  %v172 = vld [vmem:[%s0 + $0x64] sm:$0xf]
  %v173 = vld [vmem:[%s0 + $0x68] sm:$0xf]
  %v174 = vld [vmem:[%s0 + $0x6c] sm:$0xf]
  %v175 = vld [vmem:[%s0 + $0x70] sm:$0xf]
  %v176 = vld [vmem:[%s0 + $0x74] sm:$0xf]
  %v177 = vld [vmem:[%s0 + $0x78] sm:$0xf]
  %v178 = vld [vmem:[%s0 + $0x7c] sm:$0xf]
  %v179 = vld [vmem:[%s0 + $0x80] sm:$0xf]
  %v180 = vld [vmem:[%s0 + $0x84] sm:$0xf]
  %v181 = vld [vmem:[%s0 + $0x88] sm:$0xf]
  %v182 = vld [vmem:[%s0 + $0x8c] sm:$0xf]
  %v183 = vld [vmem:[%s0 + $0x90] sm:$0xf]
  %v184 = vld [vmem:[%s0 + $0x94] sm:$0xf]
  %v185 = vld [vmem:[%s0 + $0x98] sm:$0xf]
  %v186 = vld [vmem:[%s0 + $0x9c] sm:$0xf]
  %v187 = vld [vmem:[%s0 + $0xa0] sm:$0xf]
  %v188 = vld [vmem:[%s0 + $0xa4] sm:$0xf]
  %v189 = vld [vmem:[%s0 + $0xa8] sm:$0xf]
  %v190 = vld [vmem:[%s0 + $0xac] sm:$0xf]
  %v191 = vld [vmem:[%s0 + $0xb0] sm:$0xf]
  %v192 = vld [vmem:[%s0 + $0xb4] sm:$0xf]
  %v193 = vld [vmem:[%s0 + $0xb8] sm:$0xf]
  %v194 = vld [vmem:[%s0 + $0xbc] sm:$0xf]
  %v195 = vld [vmem:[%s0 + $0xc0] sm:$0xf]
  %v196 = vld [vmem:[%s0 + $0xc4] sm:$0xf]
  %v197 = vld [vmem:[%s0 + $0xc8] sm:$0xf]
  %v198 = vld [vmem:[%s0 + $0xcc] sm:$0xf]
  %v199 = vld [vmem:[%s0 + $0xd0] sm:$0xf]
  %v200 = vld [vmem:[%s0 + $0xd4] sm:$0xf]
  %v201 = vld [vmem:[%s0 + $0xd8] sm:$0xf]
  %v202 = vld [vmem:[%s0 + $0xdc] sm:$0xf]
  %v203 = vld [vmem:[%s0 + $0xe0] sm:$0xf]
  %v204 = vld [vmem:[%s0 + $0xe4] sm:$0xf]
  %v205 = vld [vmem:[%s0 + $0xe8] sm:$0xf]
  %v206 = vld [vmem:[%s0 + $0xec] sm:$0xf]
  %v207 = vld [vmem:[%s0 + $0xf0] sm:$0xf]
  %v208 = vld [vmem:[%s0 + $0xf4] sm:$0xf]
  %v209 = vld [vmem:[%s0 + $0xf8] sm:$0xf]
  %v210 = vld [vmem:[%s0 + $0xfc] sm:$0xf]
  %v211 = vld [vmem:[%s1] sm:$0xf]
  %v212 = vld [vmem:[%s1 + $0x4] sm:$0xf]
  %v213 = vld [vmem:[%s1 + $0x8] sm:$0xf]
  %v214 = vld [vmem:[%s1 + $0xc] sm:$0xf]
  %v215 = vld [vmem:[%s1 + $0x10] sm:$0xf]
  %v216 = vld [vmem:[%s1 + $0x14] sm:$0xf]
  %v217 = vld [vmem:[%s1 + $0x18] sm:$0xf]
  %v218 = vld [vmem:[%s1 + $0x1c] sm:$0xf]
  %v219 = vld [vmem:[%s1 + $0x20] sm:$0xf]
  %v220 = vld [vmem:[%s1 + $0x24] sm:$0xf]
  %v221 = vld [vmem:[%s1 + $0x28] sm:$0xf]
  %v222 = vld [vmem:[%s1 + $0x2c] sm:$0xf]
  %v223 = vld [vmem:[%s1 + $0x30] sm:$0xf]
  %v224 = vld [vmem:[%s1 + $0x34] sm:$0xf]
  %v225 = vld [vmem:[%s1 + $0x38] sm:$0xf]
  %v226 = vld [vmem:[%s1 + $0x3c] sm:$0xf]
  %v291 = vunpack.c.l.b16 %v147
  %v292 = vunpack.c.l.b16 %v148
  %v293 = vunpack.c.l.b16 %v149
  %v294 = vunpack.c.l.b16 %v150
  %v295 = vunpack.c.l.b16 %v151
  %v296 = vunpack.c.l.b16 %v152
  %v297 = vunpack.c.l.b16 %v153
  %v298 = vunpack.c.l.b16 %v154
  %v299 = vunpack.c.l.b16 %v155
  %v300 = vunpack.c.l.b16 %v156
  %v301 = vunpack.c.l.b16 %v157
  %v302 = vunpack.c.l.b16 %v158
  %v303 = vunpack.c.l.b16 %v159
  %v304 = vunpack.c.l.b16 %v160
  %v305 = vunpack.c.l.b16 %v161
  %v306 = vunpack.c.l.b16 %v162
  %v307 = vunpack.c.l.b16 %v163
  %v308 = vunpack.c.l.b16 %v164
  %v309 = vunpack.c.l.b16 %v165
  %v310 = vunpack.c.l.b16 %v166
  %v311 = vunpack.c.l.b16 %v167
  %v312 = vunpack.c.l.b16 %v168
  %v313 = vunpack.c.l.b16 %v169
  %v314 = vunpack.c.l.b16 %v170
  %v315 = vunpack.c.l.b16 %v171
  %v316 = vunpack.c.l.b16 %v172
  %v317 = vunpack.c.l.b16 %v173
  %v318 = vunpack.c.l.b16 %v174
  %v319 = vunpack.c.l.b16 %v175
  %v320 = vunpack.c.l.b16 %v176
  %v321 = vunpack.c.l.b16 %v177
  %v322 = vunpack.c.l.b16 %v178
  %v323 = vunpack.c.l.b16 %v179
  %v324 = vunpack.c.l.b16 %v180
  %v325 = vunpack.c.l.b16 %v181
  %v326 = vunpack.c.l.b16 %v182
  %v327 = vunpack.c.l.b16 %v183
  %v328 = vunpack.c.l.b16 %v184
  %v329 = vunpack.c.l.b16 %v185
  %v330 = vunpack.c.l.b16 %v186
  %v331 = vunpack.c.l.b16 %v187
  %v332 = vunpack.c.l.b16 %v188
  %v333 = vunpack.c.l.b16 %v189
  %v334 = vunpack.c.l.b16 %v190
  %v335 = vunpack.c.l.b16 %v191
  %v336 = vunpack.c.l.b16 %v192
  %v337 = vunpack.c.l.b16 %v193
  %v338 = vunpack.c.l.b16 %v194
  %v339 = vunpack.c.l.b16 %v195
  %v340 = vunpack.c.l.b16 %v196
  %v341 = vunpack.c.l.b16 %v197
  %v342 = vunpack.c.l.b16 %v198
  %v343 = vunpack.c.l.b16 %v199
  %v344 = vunpack.c.l.b16 %v200
  %v345 = vunpack.c.l.b16 %v201
  %v346 = vunpack.c.l.b16 %v202
  %v347 = vunpack.c.l.b16 %v203
  %v348 = vunpack.c.l.b16 %v204
  %v349 = vunpack.c.l.b16 %v205
  %v350 = vunpack.c.l.b16 %v206
  %v351 = vunpack.c.l.b16 %v207
  %v352 = vunpack.c.l.b16 %v208
  %v353 = vunpack.c.l.b16 %v209
  %v354 = vunpack.c.l.b16 %v210
  %v355 = vpack.c.b16 %v292, %v291
  %v356 = vpack.c.b16 %v294, %v293
  %v357 = vpack.c.b16 %v296, %v295
  %v358 = vpack.c.b16 %v298, %v297
  %v359 = vpack.c.b16 %v300, %v299
  %v360 = vpack.c.b16 %v302, %v301
  %v361 = vpack.c.b16 %v304, %v303
  %v362 = vpack.c.b16 %v306, %v305
  %v363 = vpack.c.b16 %v308, %v307
  %v364 = vpack.c.b16 %v310, %v309
  %v365 = vpack.c.b16 %v312, %v311
  %v366 = vpack.c.b16 %v314, %v313
  %v367 = vpack.c.b16 %v316, %v315
  %v368 = vpack.c.b16 %v318, %v317
  %v369 = vpack.c.b16 %v320, %v319
  %v370 = vpack.c.b16 %v322, %v321
  %v371 = vpack.c.b16 %v324, %v323
  %v372 = vpack.c.b16 %v326, %v325
  %v373 = vpack.c.b16 %v328, %v327
  %v374 = vpack.c.b16 %v330, %v329
  %v375 = vpack.c.b16 %v332, %v331
  %v376 = vpack.c.b16 %v334, %v333
  %v377 = vpack.c.b16 %v336, %v335
  %v378 = vpack.c.b16 %v338, %v337
  %v379 = vpack.c.b16 %v340, %v339
  %v380 = vpack.c.b16 %v342, %v341
  %v381 = vpack.c.b16 %v344, %v343
  %v382 = vpack.c.b16 %v346, %v345
  %v383 = vpack.c.b16 %v348, %v347
  %v384 = vpack.c.b16 %v350, %v349
  %v385 = vpack.c.b16 %v352, %v351
  %v386 = vpack.c.b16 %v354, %v353
  %v435 = vunpack.c.l.b16 %v211
  %v436 = vunpack.c.l.b16 %v212
  %v437 = vunpack.c.l.b16 %v213
  %v438 = vunpack.c.l.b16 %v214
  %v439 = vunpack.c.l.b16 %v215
  %v440 = vunpack.c.l.b16 %v216
  %v441 = vunpack.c.l.b16 %v217
  %v442 = vunpack.c.l.b16 %v218
  %v443 = vunpack.c.l.b16 %v219
  %v444 = vunpack.c.l.b16 %v220
  %v445 = vunpack.c.l.b16 %v221
  %v446 = vunpack.c.l.b16 %v222
  %v447 = vunpack.c.l.b16 %v223
  %v448 = vunpack.c.l.b16 %v224
  %v449 = vunpack.c.l.b16 %v225
  %v450 = vunpack.c.l.b16 %v226
  %v451 = vpack.c.b16 %v436, %v435
  %v452 = vpack.c.b16 %v438, %v437
  %v453 = vpack.c.b16 %v440, %v439
  %v454 = vpack.c.b16 %v442, %v441
  %v455 = vpack.c.b16 %v444, %v443
  %v456 = vpack.c.b16 %v446, %v445
  %v457 = vpack.c.b16 %v448, %v447
  %v458 = vpack.c.b16 %v450, %v449
  %467 = vmatprep.subr.bf16.mxu0 0
  %468 = vmatpush1.bf16.msra.mxu0 %v451
  %469 = vmatprep.subr.bf16.mxu0 0
  %470 = vmatpush1.bf16.msra.mxu0 %v452
  %471 = vmatprep.subr.bf16.mxu0 0
  %472 = vmatpush1.bf16.msra.mxu0 %v453
  %473 = vmatprep.subr.bf16.mxu0 0
  %474 = vmatpush1.bf16.msra.mxu0 %v454
  %475 = vmatprep.subr.bf16.mxu0 0
  %476 = vmatpush1.bf16.msra.mxu0 %v455
  %477 = vmatprep.subr.bf16.mxu0 0
  %478 = vmatpush1.bf16.msra.mxu0 %v456
  %479 = vmatprep.subr.bf16.mxu0 0
  %480 = vmatpush1.bf16.msra.mxu0 %v457
  %481 = vmatprep.subr.bf16.mxu0 0
  %482 = vmatpush1.bf16.msra.mxu0 %v458
  %483 = vmatprep.subr.bf16.mxu0 0
  %484 = vmatpush1.bf16.msra.mxu0 0
  %485 = vmatprep.subr.bf16.mxu0 0
  %486 = vmatpush1.bf16.msra.mxu0 0
  %487 = vmatprep.subr.bf16.mxu0 0
  %488 = vmatpush1.bf16.msra.mxu0 0
  %489 = vmatprep.subr.bf16.mxu0 0
  %490 = vmatpush1.bf16.msra.mxu0 0
  %491 = vmatprep.subr.bf16.mxu0 0
  %492 = vmatpush1.bf16.msra.mxu0 0
  %493 = vmatprep.subr.bf16.mxu0 0
  %494 = vmatpush1.bf16.msra.mxu0 0
  %495 = vmatprep.subr.bf16.mxu0 0
  %496 = vmatpush1.bf16.msra.mxu0 0
  %497 = vmatprep.subr.bf16.mxu0 0
  %498 = vmatpush1.bf16.msra.mxu0 0
  %499 = vmatprep.mubr.bf16.mxu0 0
  %500 = vmatmul.mubr.bf16.gmra.mrb[0].mxu0 %v355
  %v501 = vpop.f32.mrb[0].mxu0
  %v502 = vadd.f32 0.0, %v501
  %v503 = vpop.f32.mrb[0].mxu0
  %v504 = vpop.f32.mrb[0].mxu0
  %v505 = vadd.f32 0.0, %v504
  %v506 = vpop.f32.mrb[0].mxu0
  %507 = vmatprep.mubr.bf16.mxu0 0
  %508 = vmatmul.mubr.bf16.gmra.mrb[0].mxu0 %v356
  %v509 = vpop.f32.mrb[0].mxu0
  %v510 = vadd.f32 0.0, %v509
  %v511 = vpop.f32.mrb[0].mxu0
  %v512 = vpop.f32.mrb[0].mxu0
  %v513 = vadd.f32 0.0, %v512
  %v514 = vpop.f32.mrb[0].mxu0
  %515 = vmatprep.mubr.bf16.mxu0 0
  %516 = vmatmul.mubr.bf16.gmra.mrb[0].mxu0 %v357
  %v517 = vpop.f32.mrb[0].mxu0
  %v518 = vadd.f32 0.0, %v517
  %v519 = vpop.f32.mrb[0].mxu0
  %v520 = vpop.f32.mrb[0].mxu0
  %v521 = vadd.f32 0.0, %v520
  %v522 = vpop.f32.mrb[0].mxu0
  %523 = vmatprep.mubr.bf16.mxu0 0
  %524 = vmatmul.mubr.bf16.gmra.mrb[0].mxu0 %v358
  %v525 = vpop.f32.mrb[0].mxu0
  %v526 = vadd.f32 0.0, %v525
  %v527 = vpop.f32.mrb[0].mxu0
  %v528 = vpop.f32.mrb[0].mxu0
  %v529 = vadd.f32 0.0, %v528
  %v530 = vpop.f32.mrb[0].mxu0
  %531 = vmatprep.mubr.bf16.mxu0 0
  %532 = vmatmul.mubr.bf16.gmra.mrb[0].mxu0 %v359
  %v533 = vpop.f32.mrb[0].mxu0
  %v534 = vadd.f32 0.0, %v533
  %v535 = vpop.f32.mrb[0].mxu0
  %v536 = vpop.f32.mrb[0].mxu0
  %v537 = vadd.f32 0.0, %v536
  %v538 = vpop.f32.mrb[0].mxu0
  %539 = vmatprep.mubr.bf16.mxu0 0
  %540 = vmatmul.mubr.bf16.gmra.mrb[0].mxu0 %v360
  %v541 = vpop.f32.mrb[0].mxu0
  %v542 = vadd.f32 0.0, %v541
  %v543 = vpop.f32.mrb[0].mxu0
  %v544 = vpop.f32.mrb[0].mxu0
  %v545 = vadd.f32 0.0, %v544
  %v546 = vpop.f32.mrb[0].mxu0
  %547 = vmatprep.mubr.bf16.mxu0 0
  %548 = vmatmul.mubr.bf16.gmra.mrb[0].mxu0 %v361
  %v549 = vpop.f32.mrb[0].mxu0
  %v550 = vadd.f32 0.0, %v549
  %v551 = vpop.f32.mrb[0].mxu0
  %v552 = vpop.f32.mrb[0].mxu0
  %v553 = vadd.f32 0.0, %v552
  %v554 = vpop.f32.mrb[0].mxu0
  %555 = vmatprep.mubr.bf16.mxu0 0
  %556 = vmatmul.mubr.bf16.gmra.mrb[0].mxu0 %v362
  %v557 = vpop.f32.mrb[0].mxu0
  %v558 = vadd.f32 0.0, %v557
  %v559 = vpop.f32.mrb[0].mxu0
  %v560 = vpop.f32.mrb[0].mxu0
  %v561 = vadd.f32 0.0, %v560
  %v562 = vpop.f32.mrb[0].mxu0
  %563 = vmatprep.mubr.bf16.mxu0 0
  %564 = vmatmul.mubr.bf16.gmra.mrb[0].mxu0 %v363
  %v565 = vpop.f32.mrb[0].mxu0
  %v566 = vadd.f32 0.0, %v565
  %v567 = vpop.f32.mrb[0].mxu0
  %v568 = vpop.f32.mrb[0].mxu0
  %v569 = vadd.f32 0.0, %v568
  %v570 = vpop.f32.mrb[0].mxu0
  %571 = vmatprep.mubr.bf16.mxu0 0
  %572 = vmatmul.mubr.bf16.gmra.mrb[0].mxu0 %v364
  %v573 = vpop.f32.mrb[0].mxu0
  %v574 = vadd.f32 0.0, %v573
  %v575 = vpop.f32.mrb[0].mxu0
  %v576 = vpop.f32.mrb[0].mxu0
  %v577 = vadd.f32 0.0, %v576
  %v578 = vpop.f32.mrb[0].mxu0
  %579 = vmatprep.mubr.bf16.mxu0 0
  %580 = vmatmul.mubr.bf16.gmra.mrb[0].mxu0 %v365
  %v581 = vpop.f32.mrb[0].mxu0
  %v582 = vadd.f32 0.0, %v581
  %v583 = vpop.f32.mrb[0].mxu0
  %v584 = vpop.f32.mrb[0].mxu0
  %v585 = vadd.f32 0.0, %v584
  %v586 = vpop.f32.mrb[0].mxu0
  %587 = vmatprep.mubr.bf16.mxu0 0
  %588 = vmatmul.mubr.bf16.gmra.mrb[0].mxu0 %v366
  %v589 = vpop.f32.mrb[0].mxu0
  %v590 = vadd.f32 0.0, %v589
  %v591 = vpop.f32.mrb[0].mxu0
  %v592 = vpop.f32.mrb[0].mxu0
  %v593 = vadd.f32 0.0, %v592
  %v594 = vpop.f32.mrb[0].mxu0
  %595 = vmatprep.mubr.bf16.mxu0 0
  %596 = vmatmul.mubr.bf16.gmra.mrb[0].mxu0 %v367
  %v597 = vpop.f32.mrb[0].mxu0
  %v598 = vadd.f32 0.0, %v597
  %v599 = vpop.f32.mrb[0].mxu0
  %v600 = vpop.f32.mrb[0].mxu0
  %v601 = vadd.f32 0.0, %v600
  %v602 = vpop.f32.mrb[0].mxu0
  %603 = vmatprep.mubr.bf16.mxu0 0
  %604 = vmatmul.mubr.bf16.gmra.mrb[0].mxu0 %v368
  %v605 = vpop.f32.mrb[0].mxu0
  %v606 = vadd.f32 0.0, %v605
  %v607 = vpop.f32.mrb[0].mxu0
  %v608 = vpop.f32.mrb[0].mxu0
  %v609 = vadd.f32 0.0, %v608
  %v610 = vpop.f32.mrb[0].mxu0
  %611 = vmatprep.mubr.bf16.mxu0 0
  %612 = vmatmul.mubr.bf16.gmra.mrb[0].mxu0 %v369
  %v613 = vpop.f32.mrb[0].mxu0
  %v614 = vadd.f32 0.0, %v613
  %v615 = vpop.f32.mrb[0].mxu0
  %v616 = vpop.f32.mrb[0].mxu0
  %v617 = vadd.f32 0.0, %v616
  %v618 = vpop.f32.mrb[0].mxu0
  %619 = vmatprep.mubr.bf16.mxu0 0
  %620 = vmatmul.mubr.bf16.gmra.mrb[0].mxu0 %v370
  %v621 = vpop.f32.mrb[0].mxu0
  %v622 = vadd.f32 0.0, %v621
  %v623 = vpop.f32.mrb[0].mxu0
  %v624 = vpop.f32.mrb[0].mxu0
  %v625 = vadd.f32 0.0, %v624
  %v626 = vpop.f32.mrb[0].mxu0
  %627 = vmatprep.mubr.bf16.mxu0 0
  %628 = vmatmul.mubr.bf16.gmra.mrb[0].mxu0 %v371
  %v629 = vpop.f32.mrb[0].mxu0
  %v630 = vadd.f32 0.0, %v629
  %v631 = vpop.f32.mrb[0].mxu0
  %v632 = vpop.f32.mrb[0].mxu0
  %v633 = vadd.f32 0.0, %v632
  %v634 = vpop.f32.mrb[0].mxu0
  %635 = vmatprep.mubr.bf16.mxu0 0
  %636 = vmatmul.mubr.bf16.gmra.mrb[0].mxu0 %v372
  %v637 = vpop.f32.mrb[0].mxu0
  %v638 = vadd.f32 0.0, %v637
  %v639 = vpop.f32.mrb[0].mxu0
  %v640 = vpop.f32.mrb[0].mxu0
  %v641 = vadd.f32 0.0, %v640
  %v642 = vpop.f32.mrb[0].mxu0
  %643 = vmatprep.mubr.bf16.mxu0 0
  %644 = vmatmul.mubr.bf16.gmra.mrb[0].mxu0 %v373
  %v645 = vpop.f32.mrb[0].mxu0
  %v646 = vadd.f32 0.0, %v645
  %v647 = vpop.f32.mrb[0].mxu0
  %v648 = vpop.f32.mrb[0].mxu0
  %v649 = vadd.f32 0.0, %v648
  %v650 = vpop.f32.mrb[0].mxu0
  %651 = vmatprep.mubr.bf16.mxu0 0
  %652 = vmatmul.mubr.bf16.gmra.mrb[0].mxu0 %v374
  %v653 = vpop.f32.mrb[0].mxu0
  %v654 = vadd.f32 0.0, %v653
  %v655 = vpop.f32.mrb[0].mxu0
  %v656 = vpop.f32.mrb[0].mxu0
  %v657 = vadd.f32 0.0, %v656
  %v658 = vpop.f32.mrb[0].mxu0
  %659 = vmatprep.mubr.bf16.mxu0 0
  %660 = vmatmul.mubr.bf16.gmra.mrb[0].mxu0 %v375
  %v661 = vpop.f32.mrb[0].mxu0
  %v662 = vadd.f32 0.0, %v661
  %v663 = vpop.f32.mrb[0].mxu0
  %v664 = vpop.f32.mrb[0].mxu0
  %v665 = vadd.f32 0.0, %v664
  %v666 = vpop.f32.mrb[0].mxu0
  %667 = vmatprep.mubr.bf16.mxu0 0
  %668 = vmatmul.mubr.bf16.gmra.mrb[0].mxu0 %v376
  %v669 = vpop.f32.mrb[0].mxu0
  %v670 = vadd.f32 0.0, %v669
  %v671 = vpop.f32.mrb[0].mxu0
  %v672 = vpop.f32.mrb[0].mxu0
  %v673 = vadd.f32 0.0, %v672
  %v674 = vpop.f32.mrb[0].mxu0
  %675 = vmatprep.mubr.bf16.mxu0 0
  %676 = vmatmul.mubr.bf16.gmra.mrb[0].mxu0 %v377
  %v677 = vpop.f32.mrb[0].mxu0
  %v678 = vadd.f32 0.0, %v677
  %v679 = vpop.f32.mrb[0].mxu0
  %v680 = vpop.f32.mrb[0].mxu0
  %v681 = vadd.f32 0.0, %v680
  %v682 = vpop.f32.mrb[0].mxu0
  %683 = vmatprep.mubr.bf16.mxu0 0
  %684 = vmatmul.mubr.bf16.gmra.mrb[0].mxu0 %v378
  %v685 = vpop.f32.mrb[0].mxu0
  %v686 = vadd.f32 0.0, %v685
  %v687 = vpop.f32.mrb[0].mxu0
  %v688 = vpop.f32.mrb[0].mxu0
  %v689 = vadd.f32 0.0, %v688
  %v690 = vpop.f32.mrb[0].mxu0
  %691 = vmatprep.mubr.bf16.mxu0 0
  %692 = vmatmul.mubr.bf16.gmra.mrb[0].mxu0 %v379
  %v693 = vpop.f32.mrb[0].mxu0
  %v694 = vadd.f32 0.0, %v693
  %v695 = vpop.f32.mrb[0].mxu0
  %v696 = vpop.f32.mrb[0].mxu0
  %v697 = vadd.f32 0.0, %v696
  %v698 = vpop.f32.mrb[0].mxu0
  %699 = vmatprep.mubr.bf16.mxu0 0
  %700 = vmatmul.mubr.bf16.gmra.mrb[0].mxu0 %v380
  %v701 = vpop.f32.mrb[0].mxu0
  %v702 = vadd.f32 0.0, %v701
  %v703 = vpop.f32.mrb[0].mxu0
  %v704 = vpop.f32.mrb[0].mxu0
  %v705 = vadd.f32 0.0, %v704
  %v706 = vpop.f32.mrb[0].mxu0
  %707 = vmatprep.mubr.bf16.mxu0 0
  %708 = vmatmul.mubr.bf16.gmra.mrb[0].mxu0 %v381
  %v709 = vpop.f32.mrb[0].mxu0
  %v710 = vadd.f32 0.0, %v709
  %v711 = vpop.f32.mrb[0].mxu0
  %v712 = vpop.f32.mrb[0].mxu0
  %v713 = vadd.f32 0.0, %v712
  %v714 = vpop.f32.mrb[0].mxu0
  %715 = vmatprep.mubr.bf16.mxu0 0
  %716 = vmatmul.mubr.bf16.gmra.mrb[0].mxu0 %v382
  %v717 = vpop.f32.mrb[0].mxu0
  %v718 = vadd.f32 0.0, %v717
  %v719 = vpop.f32.mrb[0].mxu0
  %v720 = vpop.f32.mrb[0].mxu0
  %v721 = vadd.f32 0.0, %v720
  %v722 = vpop.f32.mrb[0].mxu0
  %723 = vmatprep.mubr.bf16.mxu0 0
  %724 = vmatmul.mubr.bf16.gmra.mrb[0].mxu0 %v383
  %v725 = vpop.f32.mrb[0].mxu0
  %v726 = vadd.f32 0.0, %v725
  %v727 = vpop.f32.mrb[0].mxu0
  %v728 = vpop.f32.mrb[0].mxu0
  %v729 = vadd.f32 0.0, %v728
  %v730 = vpop.f32.mrb[0].mxu0
  %731 = vmatprep.mubr.bf16.mxu0 0
  %732 = vmatmul.mubr.bf16.gmra.mrb[0].mxu0 %v384
  %v733 = vpop.f32.mrb[0].mxu0
  %v734 = vadd.f32 0.0, %v733
  %v735 = vpop.f32.mrb[0].mxu0
  %v736 = vpop.f32.mrb[0].mxu0
  %v737 = vadd.f32 0.0, %v736
  %v738 = vpop.f32.mrb[0].mxu0
  %739 = vmatprep.mubr.bf16.mxu0 0
  %740 = vmatmul.mubr.bf16.gmra.mrb[0].mxu0 %v385
  %v741 = vpop.f32.mrb[0].mxu0
  %v742 = vadd.f32 0.0, %v741
  %v743 = vpop.f32.mrb[0].mxu0
  %v744 = vpop.f32.mrb[0].mxu0
  %v745 = vadd.f32 0.0, %v744
  %v746 = vpop.f32.mrb[0].mxu0
  %747 = vmatprep.mubr.bf16.mxu0 0
  %748 = vmatmul.mubr.bf16.gmra.mrb[0].mxu0 %v386
  %v749 = vpop.f32.mrb[0].mxu0
  %v750 = vadd.f32 0.0, %v749
  %v751 = vpop.f32.mrb[0].mxu0
  %v752 = vpop.f32.mrb[0].mxu0
  %v753 = vadd.f32 0.0, %v752
  %v754 = vpop.f32.mrb[0].mxu0
  %755 = vdwg.mxu0
  %v756 = vadd.f32 %v83, %v502
  %v757 = vadd.f32 %v84, %v505
  %v758 = vadd.f32 %v85, %v510
  %v759 = vadd.f32 %v86, %v513
  %v760 = vadd.f32 %v87, %v518
  %v761 = vadd.f32 %v88, %v521
  %v762 = vadd.f32 %v89, %v526
  %v763 = vadd.f32 %v90, %v529
  %v764 = vadd.f32 %v91, %v534
  %v765 = vadd.f32 %v92, %v537
  %v766 = vadd.f32 %v93, %v542
  %v767 = vadd.f32 %v94, %v545
  %v768 = vadd.f32 %v95, %v550
  %v769 = vadd.f32 %v96, %v553
  %v770 = vadd.f32 %v97, %v558
  %v771 = vadd.f32 %v98, %v561
  %v772 = vadd.f32 %v99, %v566
  %v773 = vadd.f32 %v100, %v569
  %v774 = vadd.f32 %v101, %v574
  %v775 = vadd.f32 %v102, %v577
  %v776 = vadd.f32 %v103, %v582
  %v777 = vadd.f32 %v104, %v585
  %v778 = vadd.f32 %v105, %v590
  %v779 = vadd.f32 %v106, %v593
  %v780 = vadd.f32 %v107, %v598
  %v781 = vadd.f32 %v108, %v601
  %v782 = vadd.f32 %v109, %v606
  %v783 = vadd.f32 %v110, %v609
  %v784 = vadd.f32 %v111, %v614
  %v785 = vadd.f32 %v112, %v617
  %v786 = vadd.f32 %v113, %v622
  %v787 = vadd.f32 %v114, %v625
  %v788 = vadd.f32 %v115, %v630
  %v789 = vadd.f32 %v116, %v633
  %v790 = vadd.f32 %v117, %v638
  %v791 = vadd.f32 %v118, %v641
  %v792 = vadd.f32 %v119, %v646
  %v793 = vadd.f32 %v120, %v649
  %v794 = vadd.f32 %v121, %v654
  %v795 = vadd.f32 %v122, %v657
  %v796 = vadd.f32 %v123, %v662
  %v797 = vadd.f32 %v124, %v665
  %v798 = vadd.f32 %v125, %v670
  %v799 = vadd.f32 %v126, %v673
  %v800 = vadd.f32 %v127, %v678
  %v801 = vadd.f32 %v128, %v681
  %v802 = vadd.f32 %v129, %v686
  %v803 = vadd.f32 %v130, %v689
  %v804 = vadd.f32 %v131, %v694
  %v805 = vadd.f32 %v132, %v697
  %v806 = vadd.f32 %v133, %v702
  %v807 = vadd.f32 %v134, %v705
  %v808 = vadd.f32 %v135, %v710
  %v809 = vadd.f32 %v136, %v713
  %v810 = vadd.f32 %v137, %v718
  %v811 = vadd.f32 %v138, %v721
  %v812 = vadd.f32 %v139, %v726
  %v813 = vadd.f32 %v140, %v729
  %v814 = vadd.f32 %v141, %v734
  %v815 = vadd.f32 %v142, %v737
  %v816 = vadd.f32 %v143, %v742
  %v817 = vadd.f32 %v144, %v745
  %v818 = vadd.f32 %v145, %v750
  %v819 = vadd.f32 %v146, %v753
  %820 = vst [vmem:[#allocation2] sm:$0xff] %v756
  %821 = vst [vmem:[#allocation2 + $0x8] sm:$0xff] %v757
  %822 = vst [vmem:[#allocation2 + $0x10] sm:$0xff] %v758
  %823 = vst [vmem:[#allocation2 + $0x18] sm:$0xff] %v759
  %824 = vst [vmem:[#allocation2 + $0x20] sm:$0xff] %v760
  %825 = vst [vmem:[#allocation2 + $0x28] sm:$0xff] %v761
  %826 = vst [vmem:[#allocation2 + $0x30] sm:$0xff] %v762
  %827 = vst [vmem:[#allocation2 + $0x38] sm:$0xff] %v763
  %828 = vst [vmem:[#allocation2 + $0x40] sm:$0xff] %v764
  %829 = vst [vmem:[#allocation2 + $0x48] sm:$0xff] %v765
  %830 = vst [vmem:[#allocation2 + $0x50] sm:$0xff] %v766
  %831 = vst [vmem:[#allocation2 + $0x58] sm:$0xff] %v767
  %832 = vst [vmem:[#allocation2 + $0x60] sm:$0xff] %v768
  %833 = vst [vmem:[#allocation2 + $0x68] sm:$0xff] %v769
  %834 = vst [vmem:[#allocation2 + $0x70] sm:$0xff] %v770
  %835 = vst [vmem:[#allocation2 + $0x78] sm:$0xff] %v771
  %836 = vst [vmem:[#allocation2 + $0x80] sm:$0xff] %v772
  %837 = vst [vmem:[#allocation2 + $0x88] sm:$0xff] %v773
  %838 = vst [vmem:[#allocation2 + $0x90] sm:$0xff] %v774
  %839 = vst [vmem:[#allocation2 + $0x98] sm:$0xff] %v775
  %840 = vst [vmem:[#allocation2 + $0xa0] sm:$0xff] %v776
  %841 = vst [vmem:[#allocation2 + $0xa8] sm:$0xff] %v777
  %842 = vst [vmem:[#allocation2 + $0xb0] sm:$0xff] %v778
  %843 = vst [vmem:[#allocation2 + $0xb8] sm:$0xff] %v779
  %844 = vst [vmem:[#allocation2 + $0xc0] sm:$0xff] %v780
  %845 = vst [vmem:[#allocation2 + $0xc8] sm:$0xff] %v781
  %846 = vst [vmem:[#allocation2 + $0xd0] sm:$0xff] %v782
  %847 = vst [vmem:[#allocation2 + $0xd8] sm:$0xff] %v783
  %848 = vst [vmem:[#allocation2 + $0xe0] sm:$0xff] %v784
  %849 = vst [vmem:[#allocation2 + $0xe8] sm:$0xff] %v785
  %850 = vst [vmem:[#allocation2 + $0xf0] sm:$0xff] %v786
  %851 = vst [vmem:[#allocation2 + $0xf8] sm:$0xff] %v787
  %852 = vst [vmem:[#allocation2 + $0x100] sm:$0xff] %v788
  %853 = vst [vmem:[#allocation2 + $0x108] sm:$0xff] %v789
  %854 = vst [vmem:[#allocation2 + $0x110] sm:$0xff] %v790
  %855 = vst [vmem:[#allocation2 + $0x118] sm:$0xff] %v791
  %856 = vst [vmem:[#allocation2 + $0x120] sm:$0xff] %v792
  %857 = vst [vmem:[#allocation2 + $0x128] sm:$0xff] %v793
  %858 = vst [vmem:[#allocation2 + $0x130] sm:$0xff] %v794
  %859 = vst [vmem:[#allocation2 + $0x138] sm:$0xff] %v795
  %860 = vst [vmem:[#allocation2 + $0x140] sm:$0xff] %v796
  %861 = vst [vmem:[#allocation2 + $0x148] sm:$0xff] %v797
  %862 = vst [vmem:[#allocation2 + $0x150] sm:$0xff] %v798
  %863 = vst [vmem:[#allocation2 + $0x158] sm:$0xff] %v799
  %864 = vst [vmem:[#allocation2 + $0x160] sm:$0xff] %v800
  %865 = vst [vmem:[#allocation2 + $0x168] sm:$0xff] %v801
  %866 = vst [vmem:[#allocation2 + $0x170] sm:$0xff] %v802
  %867 = vst [vmem:[#allocation2 + $0x178] sm:$0xff] %v803
  %868 = vst [vmem:[#allocation2 + $0x180] sm:$0xff] %v804
  %869 = vst [vmem:[#allocation2 + $0x188] sm:$0xff] %v805
  %870 = vst [vmem:[#allocation2 + $0x190] sm:$0xff] %v806
  %871 = vst [vmem:[#allocation2 + $0x198] sm:$0xff] %v807
  %872 = vst [vmem:[#allocation2 + $0x1a0] sm:$0xff] %v808
  %873 = vst [vmem:[#allocation2 + $0x1a8] sm:$0xff] %v809
  %874 = vst [vmem:[#allocation2 + $0x1b0] sm:$0xff] %v810
  %875 = vst [vmem:[#allocation2 + $0x1b8] sm:$0xff] %v811
  %876 = vst [vmem:[#allocation2 + $0x1c0] sm:$0xff] %v812
  %877 = vst [vmem:[#allocation2 + $0x1c8] sm:$0xff] %v813
  %878 = vst [vmem:[#allocation2 + $0x1d0] sm:$0xff] %v814
  %879 = vst [vmem:[#allocation2 + $0x1d8] sm:$0xff] %v815
  %880 = vst [vmem:[#allocation2 + $0x1e0] sm:$0xff] %v816
  %881 = vst [vmem:[#allocation2 + $0x1e8] sm:$0xff] %v817
  %882 = vst [vmem:[#allocation2 + $0x1f0] sm:$0xff] %v818
  %883 = vst [vmem:[#allocation2 + $0x1f8] sm:$0xff] %v819
  // Predicated region
  $region14: #{discriminator_forward.9} parent=0 // pred_check
    %p884 = pneg %p15
  $region15: #{discriminator_forward.9} parent=0 // pred_check_branch
    %886 = sbr.rel (%p884) target = $region17
  $region16: #{discriminator_forward.9} parent=0 // pred_region
    %v887 = vld [vmem:[#allocation2] sm:$0xff]
    %v888 = vld [vmem:[#allocation2 + $0x8] sm:$0xff]
    %v889 = vld [vmem:[#allocation2 + $0x10] sm:$0xff]
    %v890 = vld [vmem:[#allocation2 + $0x18] sm:$0xff]
    %v891 = vld [vmem:[#allocation2 + $0x20] sm:$0xff]
    %v892 = vld [vmem:[#allocation2 + $0x28] sm:$0xff]
    %v893 = vld [vmem:[#allocation2 + $0x30] sm:$0xff]
    %v894 = vld [vmem:[#allocation2 + $0x38] sm:$0xff]
    %v895 = vld [vmem:[#allocation2 + $0x40] sm:$0xff]
    %v896 = vld [vmem:[#allocation2 + $0x48] sm:$0xff]
    %v897 = vld [vmem:[#allocation2 + $0x50] sm:$0xff]
    %v898 = vld [vmem:[#allocation2 + $0x58] sm:$0xff]
    %v899 = vld [vmem:[#allocation2 + $0x60] sm:$0xff]
    %v900 = vld [vmem:[#allocation2 + $0x68] sm:$0xff]
    %v901 = vld [vmem:[#allocation2 + $0x70] sm:$0xff]
    %v902 = vld [vmem:[#allocation2 + $0x78] sm:$0xff]
    %v903 = vld [vmem:[#allocation2 + $0x80] sm:$0xff]
    %v904 = vld [vmem:[#allocation2 + $0x88] sm:$0xff]
    %v905 = vld [vmem:[#allocation2 + $0x90] sm:$0xff]
    %v906 = vld [vmem:[#allocation2 + $0x98] sm:$0xff]
    %v907 = vld [vmem:[#allocation2 + $0xa0] sm:$0xff]
    %v908 = vld [vmem:[#allocation2 + $0xa8] sm:$0xff]
    %v909 = vld [vmem:[#allocation2 + $0xb0] sm:$0xff]
    %v910 = vld [vmem:[#allocation2 + $0xb8] sm:$0xff]
    %v911 = vld [vmem:[#allocation2 + $0xc0] sm:$0xff]
    %v912 = vld [vmem:[#allocation2 + $0xc8] sm:$0xff]
    %v913 = vld [vmem:[#allocation2 + $0xd0] sm:$0xff]
    %v914 = vld [vmem:[#allocation2 + $0xd8] sm:$0xff]
    %v915 = vld [vmem:[#allocation2 + $0xe0] sm:$0xff]
    %v916 = vld [vmem:[#allocation2 + $0xe8] sm:$0xff]
    %v917 = vld [vmem:[#allocation2 + $0xf0] sm:$0xff]
    %v918 = vld [vmem:[#allocation2 + $0xf8] sm:$0xff]
    %v919 = vld [vmem:[#allocation2 + $0x100] sm:$0xff]
    %v920 = vld [vmem:[#allocation2 + $0x108] sm:$0xff]
    %v921 = vld [vmem:[#allocation2 + $0x110] sm:$0xff]
    %v922 = vld [vmem:[#allocation2 + $0x118] sm:$0xff]
    %v923 = vld [vmem:[#allocation2 + $0x120] sm:$0xff]
    %v924 = vld [vmem:[#allocation2 + $0x128] sm:$0xff]
    %v925 = vld [vmem:[#allocation2 + $0x130] sm:$0xff]
    %v926 = vld [vmem:[#allocation2 + $0x138] sm:$0xff]
    %v927 = vld [vmem:[#allocation2 + $0x140] sm:$0xff]
    %v928 = vld [vmem:[#allocation2 + $0x148] sm:$0xff]
    %v929 = vld [vmem:[#allocation2 + $0x150] sm:$0xff]
    %v930 = vld [vmem:[#allocation2 + $0x158] sm:$0xff]
    %v931 = vld [vmem:[#allocation2 + $0x160] sm:$0xff]
    %v932 = vld [vmem:[#allocation2 + $0x168] sm:$0xff]
    %v933 = vld [vmem:[#allocation2 + $0x170] sm:$0xff]
    %v934 = vld [vmem:[#allocation2 + $0x178] sm:$0xff]
    %v935 = vld [vmem:[#allocation2 + $0x180] sm:$0xff]
    %v936 = vld [vmem:[#allocation2 + $0x188] sm:$0xff]
    %v937 = vld [vmem:[#allocation2 + $0x190] sm:$0xff]
    %v938 = vld [vmem:[#allocation2 + $0x198] sm:$0xff]
    %v939 = vld [vmem:[#allocation2 + $0x1a0] sm:$0xff]
    %v940 = vld [vmem:[#allocation2 + $0x1a8] sm:$0xff]
    %v941 = vld [vmem:[#allocation2 + $0x1b0] sm:$0xff]
    %v942 = vld [vmem:[#allocation2 + $0x1b8] sm:$0xff]
    %v943 = vld [vmem:[#allocation2 + $0x1c0] sm:$0xff]
    %v944 = vld [vmem:[#allocation2 + $0x1c8] sm:$0xff]
    %v945 = vld [vmem:[#allocation2 + $0x1d0] sm:$0xff]
    %v946 = vld [vmem:[#allocation2 + $0x1d8] sm:$0xff]
    %v947 = vld [vmem:[#allocation2 + $0x1e0] sm:$0xff]
    %v948 = vld [vmem:[#allocation2 + $0x1e8] sm:$0xff]
    %v949 = vld [vmem:[#allocation2 + $0x1f0] sm:$0xff]
    %v950 = vld [vmem:[#allocation2 + $0x1f8] sm:$0xff]
    %951 = vst [vmem:[%s2] sm:$0xff] %v887
    %952 = vst [vmem:[%s2 + $0x8] sm:$0xff] %v888
    %953 = vst [vmem:[%s2 + $0x10] sm:$0xff] %v889
    %954 = vst [vmem:[%s2 + $0x18] sm:$0xff] %v890
    %955 = vst [vmem:[%s2 + $0x20] sm:$0xff] %v891
    %956 = vst [vmem:[%s2 + $0x28] sm:$0xff] %v892
    %957 = vst [vmem:[%s2 + $0x30] sm:$0xff] %v893
    %958 = vst [vmem:[%s2 + $0x38] sm:$0xff] %v894
    %959 = vst [vmem:[%s2 + $0x40] sm:$0xff] %v895
    %960 = vst [vmem:[%s2 + $0x48] sm:$0xff] %v896
    %961 = vst [vmem:[%s2 + $0x50] sm:$0xff] %v897
    %962 = vst [vmem:[%s2 + $0x58] sm:$0xff] %v898
    %963 = vst [vmem:[%s2 + $0x60] sm:$0xff] %v899
    %964 = vst [vmem:[%s2 + $0x68] sm:$0xff] %v900
    %965 = vst [vmem:[%s2 + $0x70] sm:$0xff] %v901
    %966 = vst [vmem:[%s2 + $0x78] sm:$0xff] %v902
    %967 = vst [vmem:[%s2 + $0x80] sm:$0xff] %v903
    %968 = vst [vmem:[%s2 + $0x88] sm:$0xff] %v904
    %969 = vst [vmem:[%s2 + $0x90] sm:$0xff] %v905
    %970 = vst [vmem:[%s2 + $0x98] sm:$0xff] %v906
    %971 = vst [vmem:[%s2 + $0xa0] sm:$0xff] %v907
    %972 = vst [vmem:[%s2 + $0xa8] sm:$0xff] %v908
    %973 = vst [vmem:[%s2 + $0xb0] sm:$0xff] %v909
    %974 = vst [vmem:[%s2 + $0xb8] sm:$0xff] %v910
    %975 = vst [vmem:[%s2 + $0xc0] sm:$0xff] %v911
    %976 = vst [vmem:[%s2 + $0xc8] sm:$0xff] %v912
    %977 = vst [vmem:[%s2 + $0xd0] sm:$0xff] %v913
    %978 = vst [vmem:[%s2 + $0xd8] sm:$0xff] %v914
    %979 = vst [vmem:[%s2 + $0xe0] sm:$0xff] %v915
    %980 = vst [vmem:[%s2 + $0xe8] sm:$0xff] %v916
    %981 = vst [vmem:[%s2 + $0xf0] sm:$0xff] %v917
    %982 = vst [vmem:[%s2 + $0xf8] sm:$0xff] %v918
    %983 = vst [vmem:[%s2 + $0x100] sm:$0xff] %v919
    %984 = vst [vmem:[%s2 + $0x108] sm:$0xff] %v920
    %985 = vst [vmem:[%s2 + $0x110] sm:$0xff] %v921
    %986 = vst [vmem:[%s2 + $0x118] sm:$0xff] %v922
    %987 = vst [vmem:[%s2 + $0x120] sm:$0xff] %v923
    %988 = vst [vmem:[%s2 + $0x128] sm:$0xff] %v924
    %989 = vst [vmem:[%s2 + $0x130] sm:$0xff] %v925
    %990 = vst [vmem:[%s2 + $0x138] sm:$0xff] %v926
    %991 = vst [vmem:[%s2 + $0x140] sm:$0xff] %v927
    %992 = vst [vmem:[%s2 + $0x148] sm:$0xff] %v928
    %993 = vst [vmem:[%s2 + $0x150] sm:$0xff] %v929
    %994 = vst [vmem:[%s2 + $0x158] sm:$0xff] %v930
    %995 = vst [vmem:[%s2 + $0x160] sm:$0xff] %v931
    %996 = vst [vmem:[%s2 + $0x168] sm:$0xff] %v932
    %997 = vst [vmem:[%s2 + $0x170] sm:$0xff] %v933
    %998 = vst [vmem:[%s2 + $0x178] sm:$0xff] %v934
    %999 = vst [vmem:[%s2 + $0x180] sm:$0xff] %v935
    %1000 = vst [vmem:[%s2 + $0x188] sm:$0xff] %v936
    %1001 = vst [vmem:[%s2 + $0x190] sm:$0xff] %v937
    %1002 = vst [vmem:[%s2 + $0x198] sm:$0xff] %v938
    %1003 = vst [vmem:[%s2 + $0x1a0] sm:$0xff] %v939
    %1004 = vst [vmem:[%s2 + $0x1a8] sm:$0xff] %v940
    %1005 = vst [vmem:[%s2 + $0x1b0] sm:$0xff] %v941
    %1006 = vst [vmem:[%s2 + $0x1b8] sm:$0xff] %v942
    %1007 = vst [vmem:[%s2 + $0x1c0] sm:$0xff] %v943
    %1008 = vst [vmem:[%s2 + $0x1c8] sm:$0xff] %v944
    %1009 = vst [vmem:[%s2 + $0x1d0] sm:$0xff] %v945
    %1010 = vst [vmem:[%s2 + $0x1d8] sm:$0xff] %v946
    %1011 = vst [vmem:[%s2 + $0x1e0] sm:$0xff] %v947
    %1012 = vst [vmem:[%s2 + $0x1e8] sm:$0xff] %v948
    %1013 = vst [vmem:[%s2 + $0x1f0] sm:$0xff] %v949
    %1014 = vst [vmem:[%s2 + $0x1f8] sm:$0xff] %v950
    %v1015 = vadd.f32 %v887, %v888
    %v1016 = vadd.f32 %v1015, %v889
    %v1017 = vadd.f32 %v1016, %v890
    %v1018 = vadd.f32 %v1017, %v891
    %v1019 = vadd.f32 %v1018, %v892
    %v1020 = vadd.f32 %v1019, %v893
    %v1021 = vadd.f32 %v1020, %v894
    %v1022 = vadd.f32 %v1021, %v895
    %v1023 = vadd.f32 %v1022, %v896
    %v1024 = vadd.f32 %v1023, %v897
    %v1025 = vadd.f32 %v1024, %v898
    %v1026 = vadd.f32 %v1025, %v899
    %v1027 = vadd.f32 %v1026, %v900
    %v1028 = vadd.f32 %v1027, %v901
    %v1029 = vadd.f32 %v1028, %v902
    %v1030 = vadd.f32 %v1029, %v903
    %v1031 = vadd.f32 %v1030, %v904
    %v1032 = vadd.f32 %v1031, %v905
    %v1033 = vadd.f32 %v1032, %v906
    %v1034 = vadd.f32 %v1033, %v907
    %v1035 = vadd.f32 %v1034, %v908
    %v1036 = vadd.f32 %v1035, %v909
    %v1037 = vadd.f32 %v1036, %v910
    %v1038 = vadd.f32 %v1037, %v911
    %v1039 = vadd.f32 %v1038, %v912
    %v1040 = vadd.f32 %v1039, %v913
    %v1041 = vadd.f32 %v1040, %v914
    %v1042 = vadd.f32 %v1041, %v915
    %v1043 = vadd.f32 %v1042, %v916
    %v1044 = vadd.f32 %v1043, %v917
    %v1045 = vadd.f32 %v1044, %v918
    %v1046 = vadd.f32 %v1045, %v919
    %v1047 = vadd.f32 %v1046, %v920
    %v1048 = vadd.f32 %v1047, %v921
    %v1049 = vadd.f32 %v1048, %v922
    %v1050 = vadd.f32 %v1049, %v923
    %v1051 = vadd.f32 %v1050, %v924
    %v1052 = vadd.f32 %v1051, %v925
    %v1053 = vadd.f32 %v1052, %v926
    %v1054 = vadd.f32 %v1053, %v927
    %v1055 = vadd.f32 %v1054, %v928
    %v1056 = vadd.f32 %v1055, %v929
    %v1057 = vadd.f32 %v1056, %v930
    %v1058 = vadd.f32 %v1057, %v931
    %v1059 = vadd.f32 %v1058, %v932
    %v1060 = vadd.f32 %v1059, %v933
    %v1061 = vadd.f32 %v1060, %v934
    %v1062 = vadd.f32 %v1061, %v935
    %v1063 = vadd.f32 %v1062, %v936
    %v1064 = vadd.f32 %v1063, %v937
    %v1065 = vadd.f32 %v1064, %v938
    %v1066 = vadd.f32 %v1065, %v939
    %v1067 = vadd.f32 %v1066, %v940
    %v1068 = vadd.f32 %v1067, %v941
    %v1069 = vadd.f32 %v1068, %v942
    %v1070 = vadd.f32 %v1069, %v943
    %v1071 = vadd.f32 %v1070, %v944
    %v1072 = vadd.f32 %v1071, %v945
    %v1073 = vadd.f32 %v1072, %v946
    %v1074 = vadd.f32 %v1073, %v947
    %v1075 = vadd.f32 %v1074, %v948
    %v1076 = vadd.f32 %v1075, %v949
    %v1077 = vadd.f32 %v1076, %v950
    %v1078 = vrot.slane %v1077, 4
    %v1079 = vadd.f32 %v1077, %v1078
    %v1080 = vrot.slane %v1079, 2
    %v1081 = vadd.f32 %v1079, %v1080
    %v1082 = vrot.slane %v1081, 1
    %v1083 = vadd.f32 %v1081, %v1082
    %1084 = vst [vmem:[%s3] sm:$0x1] %v1083
    %v1085 = vmul.f32 %v887, %v887
    %v1086 = vmul.f32 %v888, %v888
    %v1087 = vmul.f32 %v889, %v889
    %v1088 = vmul.f32 %v890, %v890
    %v1089 = vmul.f32 %v891, %v891
    %v1090 = vmul.f32 %v892, %v892
    %v1091 = vmul.f32 %v893, %v893
    %v1092 = vmul.f32 %v894, %v894
    %v1093 = vmul.f32 %v895, %v895
    %v1094 = vmul.f32 %v896, %v896
    %v1095 = vmul.f32 %v897, %v897
    %v1096 = vmul.f32 %v898, %v898
    %v1097 = vmul.f32 %v899, %v899
    %v1098 = vmul.f32 %v900, %v900
    %v1099 = vmul.f32 %v901, %v901
    %v1100 = vmul.f32 %v902, %v902
    %v1101 = vmul.f32 %v903, %v903
    %v1102 = vmul.f32 %v904, %v904
    %v1103 = vmul.f32 %v905, %v905
    %v1104 = vmul.f32 %v906, %v906
    %v1105 = vmul.f32 %v907, %v907
    %v1106 = vmul.f32 %v908, %v908
    %v1107 = vmul.f32 %v909, %v909
    %v1108 = vmul.f32 %v910, %v910
    %v1109 = vmul.f32 %v911, %v911
    %v1110 = vmul.f32 %v912, %v912
    %v1111 = vmul.f32 %v913, %v913
    %v1112 = vmul.f32 %v914, %v914
    %v1113 = vmul.f32 %v915, %v915
    %v1114 = vmul.f32 %v916, %v916
    %v1115 = vmul.f32 %v917, %v917
    %v1116 = vmul.f32 %v918, %v918
    %v1117 = vmul.f32 %v919, %v919
    %v1118 = vmul.f32 %v920, %v920
    %v1119 = vmul.f32 %v921, %v921
    %v1120 = vmul.f32 %v922, %v922
    %v1121 = vmul.f32 %v923, %v923
    %v1122 = vmul.f32 %v924, %v924
    %v1123 = vmul.f32 %v925, %v925
    %v1124 = vmul.f32 %v926, %v926
    %v1125 = vmul.f32 %v927, %v927
    %v1126 = vmul.f32 %v928, %v928
    %v1127 = vmul.f32 %v929, %v929
    %v1128 = vmul.f32 %v930, %v930
    %v1129 = vmul.f32 %v931, %v931
    %v1130 = vmul.f32 %v932, %v932
    %v1131 = vmul.f32 %v933, %v933
    %v1132 = vmul.f32 %v934, %v934
    %v1133 = vmul.f32 %v935, %v935
    %v1134 = vmul.f32 %v936, %v936
    %v1135 = vmul.f32 %v937, %v937
    %v1136 = vmul.f32 %v938, %v938
    %v1137 = vmul.f32 %v939, %v939
    %v1138 = vmul.f32 %v940, %v940
    %v1139 = vmul.f32 %v941, %v941
    %v1140 = vmul.f32 %v942, %v942
    %v1141 = vmul.f32 %v943, %v943
    %v1142 = vmul.f32 %v944, %v944
    %v1143 = vmul.f32 %v945, %v945
    %v1144 = vmul.f32 %v946, %v946
    %v1145 = vmul.f32 %v947, %v947
    %v1146 = vmul.f32 %v948, %v948
    %v1147 = vmul.f32 %v949, %v949
    %v1148 = vmul.f32 %v950, %v950
    %v1149 = vadd.f32 %v1085, %v1086
    %v1150 = vadd.f32 %v1149, %v1087
    %v1151 = vadd.f32 %v1150, %v1088
    %v1152 = vadd.f32 %v1151, %v1089
    %v1153 = vadd.f32 %v1152, %v1090
    %v1154 = vadd.f32 %v1153, %v1091
    %v1155 = vadd.f32 %v1154, %v1092
    %v1156 = vadd.f32 %v1155, %v1093
    %v1157 = vadd.f32 %v1156, %v1094
    %v1158 = vadd.f32 %v1157, %v1095
    %v1159 = vadd.f32 %v1158, %v1096
    %v1160 = vadd.f32 %v1159, %v1097
    %v1161 = vadd.f32 %v1160, %v1098
    %v1162 = vadd.f32 %v1161, %v1099
    %v1163 = vadd.f32 %v1162, %v1100
    %v1164 = vadd.f32 %v1163, %v1101
    %v1165 = vadd.f32 %v1164, %v1102
    %v1166 = vadd.f32 %v1165, %v1103
    %v1167 = vadd.f32 %v1166, %v1104
    %v1168 = vadd.f32 %v1167, %v1105
    %v1169 = vadd.f32 %v1168, %v1106
    %v1170 = vadd.f32 %v1169, %v1107
    %v1171 = vadd.f32 %v1170, %v1108
    %v1172 = vadd.f32 %v1171, %v1109
    %v1173 = vadd.f32 %v1172, %v1110
    %v1174 = vadd.f32 %v1173, %v1111
    %v1175 = vadd.f32 %v1174, %v1112
    %v1176 = vadd.f32 %v1175, %v1113
    %v1177 = vadd.f32 %v1176, %v1114
    %v1178 = vadd.f32 %v1177, %v1115
    %v1179 = vadd.f32 %v1178, %v1116
    %v1180 = vadd.f32 %v1179, %v1117
    %v1181 = vadd.f32 %v1180, %v1118
    %v1182 = vadd.f32 %v1181, %v1119
    %v1183 = vadd.f32 %v1182, %v1120
    %v1184 = vadd.f32 %v1183, %v1121
    %v1185 = vadd.f32 %v1184, %v1122
    %v1186 = vadd.f32 %v1185, %v1123
    %v1187 = vadd.f32 %v1186, %v1124
    %v1188 = vadd.f32 %v1187, %v1125
    %v1189 = vadd.f32 %v1188, %v1126
    %v1190 = vadd.f32 %v1189, %v1127
    %v1191 = vadd.f32 %v1190, %v1128
    %v1192 = vadd.f32 %v1191, %v1129
    %v1193 = vadd.f32 %v1192, %v1130
    %v1194 = vadd.f32 %v1193, %v1131
    %v1195 = vadd.f32 %v1194, %v1132
    %v1196 = vadd.f32 %v1195, %v1133
    %v1197 = vadd.f32 %v1196, %v1134
    %v1198 = vadd.f32 %v1197, %v1135
    %v1199 = vadd.f32 %v1198, %v1136
    %v1200 = vadd.f32 %v1199, %v1137
    %v1201 = vadd.f32 %v1200, %v1138
    %v1202 = vadd.f32 %v1201, %v1139
    %v1203 = vadd.f32 %v1202, %v1140
    %v1204 = vadd.f32 %v1203, %v1141
    %v1205 = vadd.f32 %v1204, %v1142
    %v1206 = vadd.f32 %v1205, %v1143
    %v1207 = vadd.f32 %v1206, %v1144
    %v1208 = vadd.f32 %v1207, %v1145
    %v1209 = vadd.f32 %v1208, %v1146
    %v1210 = vadd.f32 %v1209, %v1147
    %v1211 = vadd.f32 %v1210, %v1148
    %v1212 = vrot.slane %v1211, 4
    %v1213 = vadd.f32 %v1211, %v1212
    %v1214 = vrot.slane %v1213, 2
    %v1215 = vadd.f32 %v1213, %v1214
    %v1216 = vrot.slane %v1215, 1
    %v1217 = vadd.f32 %v1215, %v1216
    %1218 = vst [vmem:[%s4] sm:$0x1] %v1217
  $region17: #{discriminator_forward.9} parent=0 // pred_fallthru
    _
  // Predicated region
  $region18: #{discriminator_forward.9} parent=0 // pred_check
    _
  $region19: #{discriminator_forward.9} parent=0 // pred_check_branch
    %1220 = sbr.rel (0) target = $region21
  $region20: #{discriminator_forward.9} parent=0 // pred_region
    _
  $region21: #{discriminator_forward.9} parent=0 // pred_fallthru
    _
  // Predicated region
  $region22: #{discriminator_forward.9} parent=0 // pred_check
    _
  $region23: #{discriminator_forward.9} parent=0 // pred_check_branch
    %1222 = sbr.rel (0) target = $region25
  $region24: #{discriminator_forward.9} parent=0 // pred_region
    _
  $region25: #{discriminator_forward.9} parent=0 // pred_fallthru
    _
  // Predicated region
  $region26: #{discriminator_forward.9} parent=0 // pred_check
    _
  $region27: #{discriminator_forward.9} parent=0 // pred_check_branch
    %1224 = sbr.rel (0) target = $region29
  $region28: #{discriminator_forward.9} parent=0 // pred_region
    _
  $region29: #{discriminator_forward.9} parent=0 // pred_fallthru
    _
  // Predicated region
  $region30: #{discriminator_forward.9} parent=0 // pred_check
    _
  $region31: #{discriminator_forward.9} parent=0 // pred_check_branch
    %1226 = sbr.rel (0) target = $region33
  $region32: #{discriminator_forward.9} parent=0 // pred_region
    _
  $region33: #{discriminator_forward.9} parent=0 // pred_fallthru
    _
  // Predicated region
  $region34: #{discriminator_forward.9} parent=0 // pred_check
    _
  $region35: #{discriminator_forward.9} parent=0 // pred_check_branch
    %1228 = sbr.rel (0) target = $region37
  $region36: #{discriminator_forward.9} parent=0 // pred_region
    _
  $region37: #{discriminator_forward.9} parent=0 // pred_fallthru
    _
  // Predicated region
  $region38: #{discriminator_forward.9} parent=0 // pred_check
    _
  $region39: #{discriminator_forward.9} parent=0 // pred_check_branch
    %1230 = sbr.rel (0) target = $region41
  $region40: #{discriminator_forward.9} parent=0 // pred_region
    _
  $region41: #{discriminator_forward.9} parent=0 // pred_fallthru
    _

// kernel: discriminator_forward.12
$region0: #{discriminator_forward.12}
  #allocation0 [shape = 'u32[]', space=smem, size = 0x4, offset = 0x4, fixed_abs, tag = 'smem constant byte address 0x4 - core index']
  #allocation1 [shape = 'u32[144,128]{1,0:T(1,128)}', space=vmem, size = 0x12000, scoped, tag = 'internal scratch']
  %s0 = inlined_call_operand.vmem [shape: f32[128,128], index: 0, kind: input, shape index: {}]
  %s1 = inlined_call_operand.vmem [shape: f32[1,128], index: 1, kind: input, shape index: {}]
  %s2 = inlined_call_operand.vmem [shape: f32[1,128], index: 2, kind: input, shape index: {}]
  %s3 = inlined_call_operand.vmem [shape: bf16[128,128], index: 3, kind: output, shape index: {}]
  %s4 = sld [smem:[#allocation0]]
  $region22: #{discriminator_forward.12} parent=0
    _
  %s6 = ssub.s32 1, %s4
  %s7 = scalar_select 0, %s6, %s4
  // Predicated region
  $region2: #{discriminator_forward.12} parent=0 // pred_check
    _
  $region3: #{discriminator_forward.12} parent=0 // pred_check_branch
    %9 = sbr.rel (0) target = $region5
  $region4: #{discriminator_forward.12} parent=0 // pred_region
    _
  $region5: #{discriminator_forward.12} parent=0 // pred_fallthru
    _
  // Predicated region
  $region6: #{discriminator_forward.12} parent=0 // pred_check
    _
  $region7: #{discriminator_forward.12} parent=0 // pred_check_branch
    %11 = sbr.rel (0) target = $region9
  $region8: #{discriminator_forward.12} parent=0 // pred_region
    _
  $region9: #{discriminator_forward.12} parent=0 // pred_fallthru
    _
  // Predicated region
  $region10: #{discriminator_forward.12} parent=0 // pred_check
    _
  $region11: #{discriminator_forward.12} parent=0 // pred_check_branch
    %13 = sbr.rel (0) target = $region13
  $region12: #{discriminator_forward.12} parent=0 // pred_region
    _
  $region13: #{discriminator_forward.12} parent=0 // pred_fallthru
    _
  %v14 = vld [vmem:[%s0] sm:$0xff]
  %v15 = vld [vmem:[%s0 + $0x8] sm:$0xff]
  %v16 = vld [vmem:[%s0 + $0x10] sm:$0xff]
  %v17 = vld [vmem:[%s0 + $0x18] sm:$0xff]
  %v18 = vld [vmem:[%s0 + $0x20] sm:$0xff]
  %v19 = vld [vmem:[%s0 + $0x28] sm:$0xff]
  %v20 = vld [vmem:[%s0 + $0x30] sm:$0xff]
  %v21 = vld [vmem:[%s0 + $0x38] sm:$0xff]
  %v22 = vld [vmem:[%s0 + $0x40] sm:$0xff]
  %v23 = vld [vmem:[%s0 + $0x48] sm:$0xff]
  %v24 = vld [vmem:[%s0 + $0x50] sm:$0xff]
  %v25 = vld [vmem:[%s0 + $0x58] sm:$0xff]
  %v26 = vld [vmem:[%s0 + $0x60] sm:$0xff]
  %v27 = vld [vmem:[%s0 + $0x68] sm:$0xff]
  %v28 = vld [vmem:[%s0 + $0x70] sm:$0xff]
  %v29 = vld [vmem:[%s0 + $0x78] sm:$0xff]
  %v30 = vld [vmem:[%s1] sm:$0x1]
  %v32 = vlaneseq
  %v33 = vshrl.u32 %v32, 7
  %v34 = vsub.s32 0, %v33
  %v35 = vrot.slane %v30, %v34
  %v37 = vmul.f32 %v14, %v35
  %v38 = vmul.f32 %v15, %v35
  %v39 = vmul.f32 %v16, %v35
  %v40 = vmul.f32 %v17, %v35
  %v41 = vmul.f32 %v18, %v35
  %v42 = vmul.f32 %v19, %v35
  %v43 = vmul.f32 %v20, %v35
  %v44 = vmul.f32 %v21, %v35
  %v45 = vmul.f32 %v22, %v35
  %v46 = vmul.f32 %v23, %v35
  %v47 = vmul.f32 %v24, %v35
  %v48 = vmul.f32 %v25, %v35
  %v49 = vmul.f32 %v26, %v35
  %v50 = vmul.f32 %v27, %v35
  %v51 = vmul.f32 %v28, %v35
  %v52 = vmul.f32 %v29, %v35
  %v53 = vld [vmem:[%s2] sm:$0x1]
  %v55 = vlaneseq
  %v56 = vshrl.u32 %v55, 7
  %v57 = vsub.s32 0, %v56
  %v58 = vrot.slane %v53, %v57
  %v60 = vadd.f32 %v37, %v58
  %v61 = vadd.f32 %v38, %v58
  %v62 = vadd.f32 %v39, %v58
  %v63 = vadd.f32 %v40, %v58
  %v64 = vadd.f32 %v41, %v58
  %v65 = vadd.f32 %v42, %v58
  %v66 = vadd.f32 %v43, %v58
  %v67 = vadd.f32 %v44, %v58
  %v68 = vadd.f32 %v45, %v58
  %v69 = vadd.f32 %v46, %v58
  %v70 = vadd.f32 %v47, %v58
  %v71 = vadd.f32 %v48, %v58
  %v72 = vadd.f32 %v49, %v58
  %v73 = vadd.f32 %v50, %v58
  %v74 = vadd.f32 %v51, %v58
  %v75 = vadd.f32 %v52, %v58
  %vm76 = vcmp.ge.f32.partialorder %v60, 0.0
  %vm77 = vcmp.ge.f32.partialorder %v61, 0.0
  %vm78 = vcmp.ge.f32.partialorder %v62, 0.0
  %vm79 = vcmp.ge.f32.partialorder %v63, 0.0
  %vm80 = vcmp.ge.f32.partialorder %v64, 0.0
  %vm81 = vcmp.ge.f32.partialorder %v65, 0.0
  %vm82 = vcmp.ge.f32.partialorder %v66, 0.0
  %vm83 = vcmp.ge.f32.partialorder %v67, 0.0
  %vm84 = vcmp.ge.f32.partialorder %v68, 0.0
  %vm85 = vcmp.ge.f32.partialorder %v69, 0.0
  %vm86 = vcmp.ge.f32.partialorder %v70, 0.0
  %vm87 = vcmp.ge.f32.partialorder %v71, 0.0
  %vm88 = vcmp.ge.f32.partialorder %v72, 0.0
  %vm89 = vcmp.ge.f32.partialorder %v73, 0.0
  %vm90 = vcmp.ge.f32.partialorder %v74, 0.0
  %vm91 = vcmp.ge.f32.partialorder %v75, 0.0
  %v92 = vmul.f32 %v60, 0.2
  %v93 = vmul.f32 %v61, 0.2
  %v94 = vmul.f32 %v62, 0.2
  %v95 = vmul.f32 %v63, 0.2
  %v96 = vmul.f32 %v64, 0.2
  %v97 = vmul.f32 %v65, 0.2
  %v98 = vmul.f32 %v66, 0.2
  %v99 = vmul.f32 %v67, 0.2
  %v100 = vmul.f32 %v68, 0.2
  %v101 = vmul.f32 %v69, 0.2
  %v102 = vmul.f32 %v70, 0.2
  %v103 = vmul.f32 %v71, 0.2
  %v104 = vmul.f32 %v72, 0.2
  %v105 = vmul.f32 %v73, 0.2
  %v106 = vmul.f32 %v74, 0.2
  %v107 = vmul.f32 %v75, 0.2
  %v108 = vsel %vm76, %v60, %v92
  %v109 = vsel %vm77, %v61, %v93
  %v110 = vsel %vm78, %v62, %v94
  %v111 = vsel %vm79, %v63, %v95
  %v112 = vsel %vm80, %v64, %v96
  %v113 = vsel %vm81, %v65, %v97
  %v114 = vsel %vm82, %v66, %v98
  %v115 = vsel %vm83, %v67, %v99
  %v116 = vsel %vm84, %v68, %v100
  %v117 = vsel %vm85, %v69, %v101
  %v118 = vsel %vm86, %v70, %v102
  %v119 = vsel %vm87, %v71, %v103
  %v120 = vsel %vm88, %v72, %v104
  %v121 = vsel %vm89, %v73, %v105
  %v122 = vsel %vm90, %v74, %v106
  %v123 = vsel %vm91, %v75, %v107
  %v124 = vpack.c.bf16 %v109, %v108
  %v125 = vpack.c.bf16 %v111, %v110
  %v126 = vpack.c.bf16 %v113, %v112
  %v127 = vpack.c.bf16 %v115, %v114
  %v128 = vpack.c.bf16 %v117, %v116
  %v129 = vpack.c.bf16 %v119, %v118
  %v130 = vpack.c.bf16 %v121, %v120
  %v131 = vpack.c.bf16 %v123, %v122
  %v140 = vunpack.c.l.b16 %v124
  %v141 = vunpack.c.h.b16 %v124
  %v142 = vunpack.c.l.b16 %v125
  %v143 = vunpack.c.h.b16 %v125
  %v144 = vunpack.c.l.b16 %v126
  %v145 = vunpack.c.h.b16 %v126
  %v146 = vunpack.c.l.b16 %v127
  %v147 = vunpack.c.h.b16 %v127
  %v148 = vunpack.c.l.b16 %v128
  %v149 = vunpack.c.h.b16 %v128
  %v150 = vunpack.c.l.b16 %v129
  %v151 = vunpack.c.h.b16 %v129
  %v152 = vunpack.c.l.b16 %v130
  %v153 = vunpack.c.h.b16 %v130
  %v154 = vunpack.c.l.b16 %v131
  %v155 = vunpack.c.h.b16 %v131
  %v156 = vpack.c.b16 %v140, %v140
  %v157 = vpack.c.b16 %v141, %v141
  %v158 = vpack.c.b16 %v142, %v142
  %v159 = vpack.c.b16 %v143, %v143
  %v160 = vpack.c.b16 %v144, %v144
  %v161 = vpack.c.b16 %v145, %v145
  %v162 = vpack.c.b16 %v146, %v146
  %v163 = vpack.c.b16 %v147, %v147
  %v164 = vpack.c.b16 %v148, %v148
  %v165 = vpack.c.b16 %v149, %v149
  %v166 = vpack.c.b16 %v150, %v150
  %v167 = vpack.c.b16 %v151, %v151
  %v168 = vpack.c.b16 %v152, %v152
  %v169 = vpack.c.b16 %v153, %v153
  %v170 = vpack.c.b16 %v154, %v154
  %v171 = vpack.c.b16 %v155, %v155
  %188 = vst [vmem:[%s3] sm:$0xf] %v156
  %189 = vst [vmem:[%s3 + $0x4] sm:$0xf] %v157
  %190 = vst [vmem:[%s3 + $0x8] sm:$0xf] %v158
  %191 = vst [vmem:[%s3 + $0xc] sm:$0xf] %v159
  %192 = vst [vmem:[%s3 + $0x10] sm:$0xf] %v160
  %193 = vst [vmem:[%s3 + $0x14] sm:$0xf] %v161
  %194 = vst [vmem:[%s3 + $0x18] sm:$0xf] %v162
  %195 = vst [vmem:[%s3 + $0x1c] sm:$0xf] %v163
  %196 = vst [vmem:[%s3 + $0x20] sm:$0xf] %v164
  %197 = vst [vmem:[%s3 + $0x24] sm:$0xf] %v165
  %198 = vst [vmem:[%s3 + $0x28] sm:$0xf] %v166
  %199 = vst [vmem:[%s3 + $0x2c] sm:$0xf] %v167
  %200 = vst [vmem:[%s3 + $0x30] sm:$0xf] %v168
  %201 = vst [vmem:[%s3 + $0x34] sm:$0xf] %v169
  %202 = vst [vmem:[%s3 + $0x38] sm:$0xf] %v170
  %203 = vst [vmem:[%s3 + $0x3c] sm:$0xf] %v171
  // Predicated region
  $region14: #{discriminator_forward.12} parent=0 // pred_check
    _
  $region15: #{discriminator_forward.12} parent=0 // pred_check_branch
    %205 = sbr.rel (0) target = $region17
  $region16: #{discriminator_forward.12} parent=0 // pred_region
    _
  $region17: #{discriminator_forward.12} parent=0 // pred_fallthru
    _
  // Predicated region
  $region18: #{discriminator_forward.12} parent=0 // pred_check
    _
  $region19: #{discriminator_forward.12} parent=0 // pred_check_branch
    %207 = sbr.rel (0) target = $region21
  $region20: #{discriminator_forward.12} parent=0 // pred_region
    _
  $region21: #{discriminator_forward.12} parent=0 // pred_fallthru
    _

// kernel: discriminator_forward.11
$region0: #{discriminator_forward.11}
  #allocation0 [shape = 'u32[]', space=smem, size = 0x4, offset = 0x4, fixed_abs, tag = 'smem constant byte address 0x4 - core index']
  #allocation1 [shape = 'u32[144,128]{1,0:T(1,128)}', space=vmem, size = 0x12000, scoped, tag = 'internal scratch']
  #allocation2 [shape = 'f32[128,128]{1,0:T(8,128)}', space=vmem, size = 0x10000, scoped, tag = 'scratch operand']
  %s0 = inlined_call_operand.vmem [shape: bf16[128,256], index: 0, kind: input, shape index: {}]
  %s1 = inlined_call_operand.vmem [shape: bf16[256,128], index: 1, kind: input, shape index: {}]
  %s2 = inlined_call_operand.vmem [shape: f32[128,128], index: 2, kind: output, shape index: {0}]
  %s3 = inlined_call_operand.vmem [shape: f32[1,1,128], index: 3, kind: output, shape index: {1}]
  %s4 = inlined_call_operand.vmem [shape: f32[1,1,128], index: 4, kind: output, shape index: {2}]
  %5 = xla_tuple %s2, %s3, %s4
  %s6 = sld [smem:[#allocation0]]
  $region42: #{discriminator_forward.11} parent=0
    _
  %s8 = ssub.s32 1, %s6
  %s9 = scalar_select 0, %s8, %s6
  // Predicated region
  $region2: #{discriminator_forward.11} parent=0 // pred_check
    _
  $region3: #{discriminator_forward.11} parent=0 // pred_check_branch
    %11 = sbr.rel (0) target = $region5
  $region4: #{discriminator_forward.11} parent=0 // pred_region
    _
  $region5: #{discriminator_forward.11} parent=0 // pred_fallthru
    _
  // Predicated region
  $region6: #{discriminator_forward.11} parent=0 // pred_check
    _
  $region7: #{discriminator_forward.11} parent=0 // pred_check_branch
    %13 = sbr.rel (0) target = $region9
  $region8: #{discriminator_forward.11} parent=0 // pred_region
    _
  $region9: #{discriminator_forward.11} parent=0 // pred_fallthru
    _
  %p15 = scmp.eq.s32.totalorder 0, 0
  // Predicated region
  $region10: #{discriminator_forward.11} parent=0 // pred_check
    %p16 = pneg %p15
  $region11: #{discriminator_forward.11} parent=0 // pred_check_branch
    %18 = sbr.rel (%p16) target = $region13
  $region12: #{discriminator_forward.11} parent=0 // pred_region
    %19 = vst [vmem:[#allocation2] sm:$0xff] 0.0
    %20 = vst [vmem:[#allocation2 + $0x8] sm:$0xff] 0.0
    %21 = vst [vmem:[#allocation2 + $0x10] sm:$0xff] 0.0
    %22 = vst [vmem:[#allocation2 + $0x18] sm:$0xff] 0.0
    %23 = vst [vmem:[#allocation2 + $0x20] sm:$0xff] 0.0
    %24 = vst [vmem:[#allocation2 + $0x28] sm:$0xff] 0.0
    %25 = vst [vmem:[#allocation2 + $0x30] sm:$0xff] 0.0
    %26 = vst [vmem:[#allocation2 + $0x38] sm:$0xff] 0.0
    %27 = vst [vmem:[#allocation2 + $0x40] sm:$0xff] 0.0
    %28 = vst [vmem:[#allocation2 + $0x48] sm:$0xff] 0.0
    %29 = vst [vmem:[#allocation2 + $0x50] sm:$0xff] 0.0
    %30 = vst [vmem:[#allocation2 + $0x58] sm:$0xff] 0.0
    %31 = vst [vmem:[#allocation2 + $0x60] sm:$0xff] 0.0
    %32 = vst [vmem:[#allocation2 + $0x68] sm:$0xff] 0.0
    %33 = vst [vmem:[#allocation2 + $0x70] sm:$0xff] 0.0
    %34 = vst [vmem:[#allocation2 + $0x78] sm:$0xff] 0.0
  $region13: #{discriminator_forward.11} parent=0 // pred_fallthru
    _
  %v35 = vld [vmem:[#allocation2] sm:$0xff]
  %v36 = vld [vmem:[#allocation2 + $0x8] sm:$0xff]
  %v37 = vld [vmem:[#allocation2 + $0x10] sm:$0xff]
  %v38 = vld [vmem:[#allocation2 + $0x18] sm:$0xff]
  %v39 = vld [vmem:[#allocation2 + $0x20] sm:$0xff]
  %v40 = vld [vmem:[#allocation2 + $0x28] sm:$0xff]
  %v41 = vld [vmem:[#allocation2 + $0x30] sm:$0xff]
  %v42 = vld [vmem:[#allocation2 + $0x38] sm:$0xff]
  %v43 = vld [vmem:[#allocation2 + $0x40] sm:$0xff]
  %v44 = vld [vmem:[#allocation2 + $0x48] sm:$0xff]
  %v45 = vld [vmem:[#allocation2 + $0x50] sm:$0xff]
  %v46 = vld [vmem:[#allocation2 + $0x58] sm:$0xff]
  %v47 = vld [vmem:[#allocation2 + $0x60] sm:$0xff]
  %v48 = vld [vmem:[#allocation2 + $0x68] sm:$0xff]
  %v49 = vld [vmem:[#allocation2 + $0x70] sm:$0xff]
  %v50 = vld [vmem:[#allocation2 + $0x78] sm:$0xff]
  %v51 = vld [vmem:[%s0] sm:$0xff]
  %v52 = vld [vmem:[%s0 + $0x8] sm:$0xff]
  %v53 = vld [vmem:[%s0 + $0x10] sm:$0xff]
  %v54 = vld [vmem:[%s0 + $0x18] sm:$0xff]
  %v55 = vld [vmem:[%s0 + $0x20] sm:$0xff]
  %v56 = vld [vmem:[%s0 + $0x28] sm:$0xff]
  %v57 = vld [vmem:[%s0 + $0x30] sm:$0xff]
  %v58 = vld [vmem:[%s0 + $0x38] sm:$0xff]
  %v59 = vld [vmem:[%s0 + $0x40] sm:$0xff]
  %v60 = vld [vmem:[%s0 + $0x48] sm:$0xff]
  %v61 = vld [vmem:[%s0 + $0x50] sm:$0xff]
  %v62 = vld [vmem:[%s0 + $0x58] sm:$0xff]
  %v63 = vld [vmem:[%s0 + $0x60] sm:$0xff]
  %v64 = vld [vmem:[%s0 + $0x68] sm:$0xff]
  %v65 = vld [vmem:[%s0 + $0x70] sm:$0xff]
  %v66 = vld [vmem:[%s0 + $0x78] sm:$0xff]
  %v67 = vld [vmem:[%s1] sm:$0xf]
  %v68 = vld [vmem:[%s1 + $0x4] sm:$0xf]
  %v69 = vld [vmem:[%s1 + $0x8] sm:$0xf]
  %v70 = vld [vmem:[%s1 + $0xc] sm:$0xf]
  %v71 = vld [vmem:[%s1 + $0x10] sm:$0xf]
  %v72 = vld [vmem:[%s1 + $0x14] sm:$0xf]
  %v73 = vld [vmem:[%s1 + $0x18] sm:$0xf]
  %v74 = vld [vmem:[%s1 + $0x1c] sm:$0xf]
  %v75 = vld [vmem:[%s1 + $0x20] sm:$0xf]
  %v76 = vld [vmem:[%s1 + $0x24] sm:$0xf]
  %v77 = vld [vmem:[%s1 + $0x28] sm:$0xf]
  %v78 = vld [vmem:[%s1 + $0x2c] sm:$0xf]
  %v79 = vld [vmem:[%s1 + $0x30] sm:$0xf]
  %v80 = vld [vmem:[%s1 + $0x34] sm:$0xf]
  %v81 = vld [vmem:[%s1 + $0x38] sm:$0xf]
  %v82 = vld [vmem:[%s1 + $0x3c] sm:$0xf]
  %v83 = vld [vmem:[%s1 + $0x40] sm:$0xf]
  %v84 = vld [vmem:[%s1 + $0x44] sm:$0xf]
  %v85 = vld [vmem:[%s1 + $0x48] sm:$0xf]
  %v86 = vld [vmem:[%s1 + $0x4c] sm:$0xf]
  %v87 = vld [vmem:[%s1 + $0x50] sm:$0xf]
  %v88 = vld [vmem:[%s1 + $0x54] sm:$0xf]
  %v89 = vld [vmem:[%s1 + $0x58] sm:$0xf]
  %v90 = vld [vmem:[%s1 + $0x5c] sm:$0xf]
  %v91 = vld [vmem:[%s1 + $0x60] sm:$0xf]
  %v92 = vld [vmem:[%s1 + $0x64] sm:$0xf]
  %v93 = vld [vmem:[%s1 + $0x68] sm:$0xf]
  %v94 = vld [vmem:[%s1 + $0x6c] sm:$0xf]
  %v95 = vld [vmem:[%s1 + $0x70] sm:$0xf]
  %v96 = vld [vmem:[%s1 + $0x74] sm:$0xf]
  %v97 = vld [vmem:[%s1 + $0x78] sm:$0xf]
  %v98 = vld [vmem:[%s1 + $0x7c] sm:$0xf]
  %v115 = vunpack.c.l.b16 %v51
  %v116 = vunpack.c.h.b16 %v51
  %v117 = vunpack.c.l.b16 %v52
  %v118 = vunpack.c.h.b16 %v52
  %v119 = vunpack.c.l.b16 %v53
  %v120 = vunpack.c.h.b16 %v53
  %v121 = vunpack.c.l.b16 %v54
  %v122 = vunpack.c.h.b16 %v54
  %v123 = vunpack.c.l.b16 %v55
  %v124 = vunpack.c.h.b16 %v55
  %v125 = vunpack.c.l.b16 %v56
  %v126 = vunpack.c.h.b16 %v56
  %v127 = vunpack.c.l.b16 %v57
  %v128 = vunpack.c.h.b16 %v57
  %v129 = vunpack.c.l.b16 %v58
  %v130 = vunpack.c.h.b16 %v58
  %v131 = vunpack.c.l.b16 %v59
  %v132 = vunpack.c.h.b16 %v59
  %v133 = vunpack.c.l.b16 %v60
  %v134 = vunpack.c.h.b16 %v60
  %v135 = vunpack.c.l.b16 %v61
  %v136 = vunpack.c.h.b16 %v61
  %v137 = vunpack.c.l.b16 %v62
  %v138 = vunpack.c.h.b16 %v62
  %v139 = vunpack.c.l.b16 %v63
  %v140 = vunpack.c.h.b16 %v63
  %v141 = vunpack.c.l.b16 %v64
  %v142 = vunpack.c.h.b16 %v64
  %v143 = vunpack.c.l.b16 %v65
  %v144 = vunpack.c.h.b16 %v65
  %v145 = vunpack.c.l.b16 %v66
  %v146 = vunpack.c.h.b16 %v66
  %v147 = vpack.c.b16 %v117, %v115
  %v148 = vpack.c.b16 %v118, %v116
  %v149 = vpack.c.b16 %v121, %v119
  %v150 = vpack.c.b16 %v122, %v120
  %v151 = vpack.c.b16 %v125, %v123
  %v152 = vpack.c.b16 %v126, %v124
  %v153 = vpack.c.b16 %v129, %v127
  %v154 = vpack.c.b16 %v130, %v128
  %v155 = vpack.c.b16 %v133, %v131
  %v156 = vpack.c.b16 %v134, %v132
  %v157 = vpack.c.b16 %v137, %v135
  %v158 = vpack.c.b16 %v138, %v136
  %v159 = vpack.c.b16 %v141, %v139
  %v160 = vpack.c.b16 %v142, %v140
  %v161 = vpack.c.b16 %v145, %v143
  %v162 = vpack.c.b16 %v146, %v144
  %v211 = vunpack.c.l.b16 %v67
  %v212 = vunpack.c.l.b16 %v68
  %v213 = vunpack.c.l.b16 %v69
  %v214 = vunpack.c.l.b16 %v70
  %v215 = vunpack.c.l.b16 %v71
  %v216 = vunpack.c.l.b16 %v72
  %v217 = vunpack.c.l.b16 %v73
  %v218 = vunpack.c.l.b16 %v74
  %v219 = vunpack.c.l.b16 %v75
  %v220 = vunpack.c.l.b16 %v76
  %v221 = vunpack.c.l.b16 %v77
  %v222 = vunpack.c.l.b16 %v78
  %v223 = vunpack.c.l.b16 %v79
  %v224 = vunpack.c.l.b16 %v80
  %v225 = vunpack.c.l.b16 %v81
  %v226 = vunpack.c.l.b16 %v82
  %v227 = vunpack.c.l.b16 %v83
  %v228 = vunpack.c.l.b16 %v84
  %v229 = vunpack.c.l.b16 %v85
  %v230 = vunpack.c.l.b16 %v86
  %v231 = vunpack.c.l.b16 %v87
  %v232 = vunpack.c.l.b16 %v88
  %v233 = vunpack.c.l.b16 %v89
  %v234 = vunpack.c.l.b16 %v90
  %v235 = vunpack.c.l.b16 %v91
  %v236 = vunpack.c.l.b16 %v92
  %v237 = vunpack.c.l.b16 %v93
  %v238 = vunpack.c.l.b16 %v94
  %v239 = vunpack.c.l.b16 %v95
  %v240 = vunpack.c.l.b16 %v96
  %v241 = vunpack.c.l.b16 %v97
  %v242 = vunpack.c.l.b16 %v98
  %v243 = vpack.c.b16 %v212, %v211
  %v244 = vpack.c.b16 %v214, %v213
  %v245 = vpack.c.b16 %v216, %v215
  %v246 = vpack.c.b16 %v218, %v217
  %v247 = vpack.c.b16 %v220, %v219
  %v248 = vpack.c.b16 %v222, %v221
  %v249 = vpack.c.b16 %v224, %v223
  %v250 = vpack.c.b16 %v226, %v225
  %v251 = vpack.c.b16 %v228, %v227
  %v252 = vpack.c.b16 %v230, %v229
  %v253 = vpack.c.b16 %v232, %v231
  %v254 = vpack.c.b16 %v234, %v233
  %v255 = vpack.c.b16 %v236, %v235
  %v256 = vpack.c.b16 %v238, %v237
  %v257 = vpack.c.b16 %v240, %v239
  %v258 = vpack.c.b16 %v242, %v241
  %275 = vmatprep.subr.bf16.mxu0 0
  %276 = vmatpush1.bf16.msra.mxu0 %v243
  %277 = vmatprep.subr.bf16.mxu0 0
  %278 = vmatpush1.bf16.msra.mxu0 %v244
  %279 = vmatprep.subr.bf16.mxu0 0
  %280 = vmatpush1.bf16.msra.mxu0 %v245
  %281 = vmatprep.subr.bf16.mxu0 0
  %282 = vmatpush1.bf16.msra.mxu0 %v246
  %283 = vmatprep.subr.bf16.mxu0 0
  %284 = vmatpush1.bf16.msra.mxu0 %v247
  %285 = vmatprep.subr.bf16.mxu0 0
  %286 = vmatpush1.bf16.msra.mxu0 %v248
  %287 = vmatprep.subr.bf16.mxu0 0
  %288 = vmatpush1.bf16.msra.mxu0 %v249
  %289 = vmatprep.subr.bf16.mxu0 0
  %290 = vmatpush1.bf16.msra.mxu0 %v250
  %291 = vmatprep.subr.bf16.mxu0 0
  %292 = vmatpush1.bf16.msra.mxu0 %v251
  %293 = vmatprep.subr.bf16.mxu0 0
  %294 = vmatpush1.bf16.msra.mxu0 %v252
  %295 = vmatprep.subr.bf16.mxu0 0
  %296 = vmatpush1.bf16.msra.mxu0 %v253
  %297 = vmatprep.subr.bf16.mxu0 0
  %298 = vmatpush1.bf16.msra.mxu0 %v254
  %299 = vmatprep.subr.bf16.mxu0 0
  %300 = vmatpush1.bf16.msra.mxu0 %v255
  %301 = vmatprep.subr.bf16.mxu0 0
  %302 = vmatpush1.bf16.msra.mxu0 %v256
  %303 = vmatprep.subr.bf16.mxu0 0
  %304 = vmatpush1.bf16.msra.mxu0 %v257
  %305 = vmatprep.subr.bf16.mxu0 0
  %306 = vmatpush1.bf16.msra.mxu0 %v258
  %307 = vmatprep.mubr.bf16.mxu0 %v148
  %308 = vmatmul.mubr.bf16.gmra.mrb[0].mxu0 %v147
  %v309 = vpop.f32.mrb[0].mxu0
  %v310 = vadd.f32 0.0, %v309
  %v311 = vpop.f32.mrb[0].mxu0
  %v312 = vpop.f32.mrb[0].mxu0
  %v313 = vadd.f32 0.0, %v312
  %v314 = vpop.f32.mrb[0].mxu0
  %315 = vmatprep.mubr.bf16.mxu0 %v150
  %316 = vmatmul.mubr.bf16.gmra.mrb[0].mxu0 %v149
  %v317 = vpop.f32.mrb[0].mxu0
  %v318 = vadd.f32 0.0, %v317
  %v319 = vpop.f32.mrb[0].mxu0
  %v320 = vpop.f32.mrb[0].mxu0
  %v321 = vadd.f32 0.0, %v320
  %v322 = vpop.f32.mrb[0].mxu0
  %323 = vmatprep.mubr.bf16.mxu0 %v152
  %324 = vmatmul.mubr.bf16.gmra.mrb[0].mxu0 %v151
  %v325 = vpop.f32.mrb[0].mxu0
  %v326 = vadd.f32 0.0, %v325
  %v327 = vpop.f32.mrb[0].mxu0
  %v328 = vpop.f32.mrb[0].mxu0
  %v329 = vadd.f32 0.0, %v328
  %v330 = vpop.f32.mrb[0].mxu0
  %331 = vmatprep.mubr.bf16.mxu0 %v154
  %332 = vmatmul.mubr.bf16.gmra.mrb[0].mxu0 %v153
  %v333 = vpop.f32.mrb[0].mxu0
  %v334 = vadd.f32 0.0, %v333
  %v335 = vpop.f32.mrb[0].mxu0
  %v336 = vpop.f32.mrb[0].mxu0
  %v337 = vadd.f32 0.0, %v336
  %v338 = vpop.f32.mrb[0].mxu0
  %339 = vmatprep.mubr.bf16.mxu0 %v156
  %340 = vmatmul.mubr.bf16.gmra.mrb[0].mxu0 %v155
  %v341 = vpop.f32.mrb[0].mxu0
  %v342 = vadd.f32 0.0, %v341
  %v343 = vpop.f32.mrb[0].mxu0
  %v344 = vpop.f32.mrb[0].mxu0
  %v345 = vadd.f32 0.0, %v344
  %v346 = vpop.f32.mrb[0].mxu0
  %347 = vmatprep.mubr.bf16.mxu0 %v158
  %348 = vmatmul.mubr.bf16.gmra.mrb[0].mxu0 %v157
  %v349 = vpop.f32.mrb[0].mxu0
  %v350 = vadd.f32 0.0, %v349
  %v351 = vpop.f32.mrb[0].mxu0
  %v352 = vpop.f32.mrb[0].mxu0
  %v353 = vadd.f32 0.0, %v352
  %v354 = vpop.f32.mrb[0].mxu0
  %355 = vmatprep.mubr.bf16.mxu0 %v160
  %356 = vmatmul.mubr.bf16.gmra.mrb[0].mxu0 %v159
  %v357 = vpop.f32.mrb[0].mxu0
  %v358 = vadd.f32 0.0, %v357
  %v359 = vpop.f32.mrb[0].mxu0
  %v360 = vpop.f32.mrb[0].mxu0
  %v361 = vadd.f32 0.0, %v360
  %v362 = vpop.f32.mrb[0].mxu0
  %363 = vmatprep.mubr.bf16.mxu0 %v162
  %364 = vmatmul.mubr.bf16.gmra.mrb[0].mxu0 %v161
  %v365 = vpop.f32.mrb[0].mxu0
  %v366 = vadd.f32 0.0, %v365
  %v367 = vpop.f32.mrb[0].mxu0
  %v368 = vpop.f32.mrb[0].mxu0
  %v369 = vadd.f32 0.0, %v368
  %v370 = vpop.f32.mrb[0].mxu0
  %371 = vdwg.mxu0
  %v372 = vadd.f32 %v35, %v310
  %v373 = vadd.f32 %v36, %v313
  %v374 = vadd.f32 %v37, %v318
  %v375 = vadd.f32 %v38, %v321
  %v376 = vadd.f32 %v39, %v326
  %v377 = vadd.f32 %v40, %v329
  %v378 = vadd.f32 %v41, %v334
  %v379 = vadd.f32 %v42, %v337
  %v380 = vadd.f32 %v43, %v342
  %v381 = vadd.f32 %v44, %v345
  %v382 = vadd.f32 %v45, %v350
  %v383 = vadd.f32 %v46, %v353
  %v384 = vadd.f32 %v47, %v358
  %v385 = vadd.f32 %v48, %v361
  %v386 = vadd.f32 %v49, %v366
  %v387 = vadd.f32 %v50, %v369
  %388 = vst [vmem:[#allocation2] sm:$0xff] %v372
  %389 = vst [vmem:[#allocation2 + $0x8] sm:$0xff] %v373
  %390 = vst [vmem:[#allocation2 + $0x10] sm:$0xff] %v374
  %391 = vst [vmem:[#allocation2 + $0x18] sm:$0xff] %v375
  %392 = vst [vmem:[#allocation2 + $0x20] sm:$0xff] %v376
  %393 = vst [vmem:[#allocation2 + $0x28] sm:$0xff] %v377
  %394 = vst [vmem:[#allocation2 + $0x30] sm:$0xff] %v378
  %395 = vst [vmem:[#allocation2 + $0x38] sm:$0xff] %v379
  %396 = vst [vmem:[#allocation2 + $0x40] sm:$0xff] %v380
  %397 = vst [vmem:[#allocation2 + $0x48] sm:$0xff] %v381
  %398 = vst [vmem:[#allocation2 + $0x50] sm:$0xff] %v382
  %399 = vst [vmem:[#allocation2 + $0x58] sm:$0xff] %v383
  %400 = vst [vmem:[#allocation2 + $0x60] sm:$0xff] %v384
  %401 = vst [vmem:[#allocation2 + $0x68] sm:$0xff] %v385
  %402 = vst [vmem:[#allocation2 + $0x70] sm:$0xff] %v386
  %403 = vst [vmem:[#allocation2 + $0x78] sm:$0xff] %v387
  // Predicated region
  $region14: #{discriminator_forward.11} parent=0 // pred_check
    %p404 = pneg %p15
  $region15: #{discriminator_forward.11} parent=0 // pred_check_branch
    %406 = sbr.rel (%p404) target = $region17
  $region16: #{discriminator_forward.11} parent=0 // pred_region
    %v407 = vld [vmem:[#allocation2] sm:$0xff]
    %v408 = vld [vmem:[#allocation2 + $0x8] sm:$0xff]
    %v409 = vld [vmem:[#allocation2 + $0x10] sm:$0xff]
    %v410 = vld [vmem:[#allocation2 + $0x18] sm:$0xff]
    %v411 = vld [vmem:[#allocation2 + $0x20] sm:$0xff]
    %v412 = vld [vmem:[#allocation2 + $0x28] sm:$0xff]
    %v413 = vld [vmem:[#allocation2 + $0x30] sm:$0xff]
    %v414 = vld [vmem:[#allocation2 + $0x38] sm:$0xff]
    %v415 = vld [vmem:[#allocation2 + $0x40] sm:$0xff]
    %v416 = vld [vmem:[#allocation2 + $0x48] sm:$0xff]
    %v417 = vld [vmem:[#allocation2 + $0x50] sm:$0xff]
    %v418 = vld [vmem:[#allocation2 + $0x58] sm:$0xff]
    %v419 = vld [vmem:[#allocation2 + $0x60] sm:$0xff]
    %v420 = vld [vmem:[#allocation2 + $0x68] sm:$0xff]
    %v421 = vld [vmem:[#allocation2 + $0x70] sm:$0xff]
    %v422 = vld [vmem:[#allocation2 + $0x78] sm:$0xff]
    %423 = vst [vmem:[%s2] sm:$0xff] %v407
    %424 = vst [vmem:[%s2 + $0x8] sm:$0xff] %v408
    %425 = vst [vmem:[%s2 + $0x10] sm:$0xff] %v409
    %426 = vst [vmem:[%s2 + $0x18] sm:$0xff] %v410
    %427 = vst [vmem:[%s2 + $0x20] sm:$0xff] %v411
    %428 = vst [vmem:[%s2 + $0x28] sm:$0xff] %v412
    %429 = vst [vmem:[%s2 + $0x30] sm:$0xff] %v413
    %430 = vst [vmem:[%s2 + $0x38] sm:$0xff] %v414
    %431 = vst [vmem:[%s2 + $0x40] sm:$0xff] %v415
    %432 = vst [vmem:[%s2 + $0x48] sm:$0xff] %v416
    %433 = vst [vmem:[%s2 + $0x50] sm:$0xff] %v417
    %434 = vst [vmem:[%s2 + $0x58] sm:$0xff] %v418
    %435 = vst [vmem:[%s2 + $0x60] sm:$0xff] %v419
    %436 = vst [vmem:[%s2 + $0x68] sm:$0xff] %v420
    %437 = vst [vmem:[%s2 + $0x70] sm:$0xff] %v421
    %438 = vst [vmem:[%s2 + $0x78] sm:$0xff] %v422
    %v439 = vadd.f32 %v407, %v408
    %v440 = vadd.f32 %v439, %v409
    %v441 = vadd.f32 %v440, %v410
    %v442 = vadd.f32 %v441, %v411
    %v443 = vadd.f32 %v442, %v412
    %v444 = vadd.f32 %v443, %v413
    %v445 = vadd.f32 %v444, %v414
    %v446 = vadd.f32 %v445, %v415
    %v447 = vadd.f32 %v446, %v416
    %v448 = vadd.f32 %v447, %v417
    %v449 = vadd.f32 %v448, %v418
    %v450 = vadd.f32 %v449, %v419
    %v451 = vadd.f32 %v450, %v420
    %v452 = vadd.f32 %v451, %v421
    %v453 = vadd.f32 %v452, %v422
    %v454 = vrot.slane %v453, 4
    %v455 = vadd.f32 %v453, %v454
    %v456 = vrot.slane %v455, 2
    %v457 = vadd.f32 %v455, %v456
    %v458 = vrot.slane %v457, 1
    %v459 = vadd.f32 %v457, %v458
    %460 = vst [vmem:[%s3] sm:$0x1] %v459
    %v461 = vmul.f32 %v407, %v407
    %v462 = vmul.f32 %v408, %v408
    %v463 = vmul.f32 %v409, %v409
    %v464 = vmul.f32 %v410, %v410
    %v465 = vmul.f32 %v411, %v411
    %v466 = vmul.f32 %v412, %v412
    %v467 = vmul.f32 %v413, %v413
    %v468 = vmul.f32 %v414, %v414
    %v469 = vmul.f32 %v415, %v415
    %v470 = vmul.f32 %v416, %v416
    %v471 = vmul.f32 %v417, %v417
    %v472 = vmul.f32 %v418, %v418
    %v473 = vmul.f32 %v419, %v419
    %v474 = vmul.f32 %v420, %v420
    %v475 = vmul.f32 %v421, %v421
    %v476 = vmul.f32 %v422, %v422
    %v477 = vadd.f32 %v461, %v462
    %v478 = vadd.f32 %v477, %v463
    %v479 = vadd.f32 %v478, %v464
    %v480 = vadd.f32 %v479, %v465
    %v481 = vadd.f32 %v480, %v466
    %v482 = vadd.f32 %v481, %v467
    %v483 = vadd.f32 %v482, %v468
    %v484 = vadd.f32 %v483, %v469
    %v485 = vadd.f32 %v484, %v470
    %v486 = vadd.f32 %v485, %v471
    %v487 = vadd.f32 %v486, %v472
    %v488 = vadd.f32 %v487, %v473
    %v489 = vadd.f32 %v488, %v474
    %v490 = vadd.f32 %v489, %v475
    %v491 = vadd.f32 %v490, %v476
    %v492 = vrot.slane %v491, 4
    %v493 = vadd.f32 %v491, %v492
    %v494 = vrot.slane %v493, 2
    %v495 = vadd.f32 %v493, %v494
    %v496 = vrot.slane %v495, 1
    %v497 = vadd.f32 %v495, %v496
    %498 = vst [vmem:[%s4] sm:$0x1] %v497
  $region17: #{discriminator_forward.11} parent=0 // pred_fallthru
    _
  // Predicated region
  $region18: #{discriminator_forward.11} parent=0 // pred_check
    _
  $region19: #{discriminator_forward.11} parent=0 // pred_check_branch
    %500 = sbr.rel (0) target = $region21
  $region20: #{discriminator_forward.11} parent=0 // pred_region
    _
  $region21: #{discriminator_forward.11} parent=0 // pred_fallthru
    _
  // Predicated region
  $region22: #{discriminator_forward.11} parent=0 // pred_check
    _
  $region23: #{discriminator_forward.11} parent=0 // pred_check_branch
    %502 = sbr.rel (0) target = $region25
  $region24: #{discriminator_forward.11} parent=0 // pred_region
    _
  $region25: #{discriminator_forward.11} parent=0 // pred_fallthru
    _
  // Predicated region
  $region26: #{discriminator_forward.11} parent=0 // pred_check
    _
  $region27: #{discriminator_forward.11} parent=0 // pred_check_branch
    %504 = sbr.rel (0) target = $region29
  $region28: #{discriminator_forward.11} parent=0 // pred_region
    _
  $region29: #{discriminator_forward.11} parent=0 // pred_fallthru
    _
  // Predicated region
  $region30: #{discriminator_forward.11} parent=0 // pred_check
    _
  $region31: #{discriminator_forward.11} parent=0 // pred_check_branch
    %506 = sbr.rel (0) target = $region33
  $region32: #{discriminator_forward.11} parent=0 // pred_region
    _
  $region33: #{discriminator_forward.11} parent=0 // pred_fallthru
    _
  // Predicated region
  $region34: #{discriminator_forward.11} parent=0 // pred_check
    _
  $region35: #{discriminator_forward.11} parent=0 // pred_check_branch
    %508 = sbr.rel (0) target = $region37
  $region36: #{discriminator_forward.11} parent=0 // pred_region
    _
  $region37: #{discriminator_forward.11} parent=0 // pred_fallthru
    _
  // Predicated region
  $region38: #{discriminator_forward.11} parent=0 // pred_check
    _
  $region39: #{discriminator_forward.11} parent=0 // pred_check_branch
    %510 = sbr.rel (0) target = $region41
  $region40: #{discriminator_forward.11} parent=0 // pred_region
    _
  $region41: #{discriminator_forward.11} parent=0 // pred_fallthru
    _

// kernel: discriminator_forward.14
$region0: #{discriminator_forward.14}
  #allocation0 [shape = 'u32[]', space=smem, size = 0x4, offset = 0x4, fixed_abs, tag = 'smem constant byte address 0x4 - core index']
  #allocation1 [shape = 'u32[144,128]{1,0:T(1,128)}', space=vmem, size = 0x12000, scoped, tag = 'internal scratch']
  %s0 = inlined_call_operand.vmem [shape: f32[32,128], index: 0, kind: input, shape index: {}]
  %s1 = inlined_call_operand.vmem [shape: f32[1,128], index: 1, kind: input, shape index: {}]
  %s2 = inlined_call_operand.vmem [shape: f32[1,128], index: 2, kind: input, shape index: {}]
  %s3 = inlined_call_operand.vmem [shape: bf16[32,128], index: 3, kind: output, shape index: {}]
  %s4 = sld [smem:[#allocation0]]
  $region22: #{discriminator_forward.14} parent=0
    _
  %s6 = ssub.s32 1, %s4
  %s7 = scalar_select 0, %s6, %s4
  // Predicated region
  $region2: #{discriminator_forward.14} parent=0 // pred_check
    _
  $region3: #{discriminator_forward.14} parent=0 // pred_check_branch
    %9 = sbr.rel (0) target = $region5
  $region4: #{discriminator_forward.14} parent=0 // pred_region
    _
  $region5: #{discriminator_forward.14} parent=0 // pred_fallthru
    _
  // Predicated region
  $region6: #{discriminator_forward.14} parent=0 // pred_check
    _
  $region7: #{discriminator_forward.14} parent=0 // pred_check_branch
    %11 = sbr.rel (0) target = $region9
  $region8: #{discriminator_forward.14} parent=0 // pred_region
    _
  $region9: #{discriminator_forward.14} parent=0 // pred_fallthru
    _
  // Predicated region
  $region10: #{discriminator_forward.14} parent=0 // pred_check
    _
  $region11: #{discriminator_forward.14} parent=0 // pred_check_branch
    %13 = sbr.rel (0) target = $region13
  $region12: #{discriminator_forward.14} parent=0 // pred_region
    _
  $region13: #{discriminator_forward.14} parent=0 // pred_fallthru
    _
  %v14 = vld [vmem:[%s0] sm:$0xff]
  %v15 = vld [vmem:[%s0 + $0x8] sm:$0xff]
  %v16 = vld [vmem:[%s0 + $0x10] sm:$0xff]
  %v17 = vld [vmem:[%s0 + $0x18] sm:$0xff]
  %v18 = vld [vmem:[%s1] sm:$0x1]
  %v20 = vlaneseq
  %v21 = vshrl.u32 %v20, 7
  %v22 = vsub.s32 0, %v21
  %v23 = vrot.slane %v18, %v22
  %v25 = vmul.f32 %v14, %v23
  %v26 = vmul.f32 %v15, %v23
  %v27 = vmul.f32 %v16, %v23
  %v28 = vmul.f32 %v17, %v23
  %v29 = vld [vmem:[%s2] sm:$0x1]
  %v31 = vlaneseq
  %v32 = vshrl.u32 %v31, 7
  %v33 = vsub.s32 0, %v32
  %v34 = vrot.slane %v29, %v33
  %v36 = vadd.f32 %v25, %v34
  %v37 = vadd.f32 %v26, %v34
  %v38 = vadd.f32 %v27, %v34
  %v39 = vadd.f32 %v28, %v34
  %vm40 = vcmp.ge.f32.partialorder %v36, 0.0
  %vm41 = vcmp.ge.f32.partialorder %v37, 0.0
  %vm42 = vcmp.ge.f32.partialorder %v38, 0.0
  %vm43 = vcmp.ge.f32.partialorder %v39, 0.0
  %v44 = vmul.f32 %v36, 0.2
  %v45 = vmul.f32 %v37, 0.2
  %v46 = vmul.f32 %v38, 0.2
  %v47 = vmul.f32 %v39, 0.2
  %v48 = vsel %vm40, %v36, %v44
  %v49 = vsel %vm41, %v37, %v45
  %v50 = vsel %vm42, %v38, %v46
  %v51 = vsel %vm43, %v39, %v47
  %v52 = vpack.c.bf16 %v49, %v48
  %v53 = vpack.c.bf16 %v51, %v50
  %v56 = vunpack.c.l.b16 %v52
  %v57 = vunpack.c.h.b16 %v52
  %v58 = vunpack.c.l.b16 %v53
  %v59 = vunpack.c.h.b16 %v53
  %v60 = vpack.c.b16 %v56, %v56
  %v61 = vpack.c.b16 %v57, %v57
  %v62 = vpack.c.b16 %v58, %v58
  %v63 = vpack.c.b16 %v59, %v59
  %68 = vst [vmem:[%s3] sm:$0xf] %v60
  %69 = vst [vmem:[%s3 + $0x4] sm:$0xf] %v61
  %70 = vst [vmem:[%s3 + $0x8] sm:$0xf] %v62
  %71 = vst [vmem:[%s3 + $0xc] sm:$0xf] %v63
  // Predicated region
  $region14: #{discriminator_forward.14} parent=0 // pred_check
    _
  $region15: #{discriminator_forward.14} parent=0 // pred_check_branch
    %73 = sbr.rel (0) target = $region17
  $region16: #{discriminator_forward.14} parent=0 // pred_region
    _
  $region17: #{discriminator_forward.14} parent=0 // pred_fallthru
    _
  // Predicated region
  $region18: #{discriminator_forward.14} parent=0 // pred_check
    _
  $region19: #{discriminator_forward.14} parent=0 // pred_check_branch
    %75 = sbr.rel (0) target = $region21
  $region20: #{discriminator_forward.14} parent=0 // pred_region
    _
  $region21: #{discriminator_forward.14} parent=0 // pred_fallthru
    _

// kernel: discriminator_forward.13
$region0: #{discriminator_forward.13}
  #allocation0 [shape = 'u32[]', space=smem, size = 0x4, offset = 0x4, fixed_abs, tag = 'smem constant byte address 0x4 - core index']
  #allocation1 [shape = 'u32[144,128]{1,0:T(1,128)}', space=vmem, size = 0x12000, scoped, tag = 'internal scratch']
  #allocation2 [shape = 'f32[32,128]{1,0:T(8,128)}', space=vmem, size = 0x4000, scoped, tag = 'scratch operand']
  %s0 = inlined_call_operand.vmem [shape: bf16[32,512], index: 0, kind: input, shape index: {}]
  %s1 = inlined_call_operand.vmem [shape: bf16[512,128], index: 1, kind: input, shape index: {}]
  %s2 = inlined_call_operand.vmem [shape: f32[32,128], index: 2, kind: output, shape index: {0}]
  %s3 = inlined_call_operand.vmem [shape: f32[1,1,128], index: 3, kind: output, shape index: {1}]
  %s4 = inlined_call_operand.vmem [shape: f32[1,1,128], index: 4, kind: output, shape index: {2}]
  %5 = xla_tuple %s2, %s3, %s4
  %s6 = sld [smem:[#allocation0]]
  $region42: #{discriminator_forward.13} parent=0
    _
  %s8 = ssub.s32 1, %s6
  %s9 = scalar_select 0, %s8, %s6
  // Predicated region
  $region2: #{discriminator_forward.13} parent=0 // pred_check
    _
  $region3: #{discriminator_forward.13} parent=0 // pred_check_branch
    %11 = sbr.rel (0) target = $region5
  $region4: #{discriminator_forward.13} parent=0 // pred_region
    _
  $region5: #{discriminator_forward.13} parent=0 // pred_fallthru
    _
  // Predicated region
  $region6: #{discriminator_forward.13} parent=0 // pred_check
    _
  $region7: #{discriminator_forward.13} parent=0 // pred_check_branch
    %13 = sbr.rel (0) target = $region9
  $region8: #{discriminator_forward.13} parent=0 // pred_region
    _
  $region9: #{discriminator_forward.13} parent=0 // pred_fallthru
    _
  %p15 = scmp.eq.s32.totalorder 0, 0
  // Predicated region
  $region10: #{discriminator_forward.13} parent=0 // pred_check
    %p16 = pneg %p15
  $region11: #{discriminator_forward.13} parent=0 // pred_check_branch
    %18 = sbr.rel (%p16) target = $region13
  $region12: #{discriminator_forward.13} parent=0 // pred_region
    %19 = vst [vmem:[#allocation2] sm:$0xff] 0.0
    %20 = vst [vmem:[#allocation2 + $0x8] sm:$0xff] 0.0
    %21 = vst [vmem:[#allocation2 + $0x10] sm:$0xff] 0.0
    %22 = vst [vmem:[#allocation2 + $0x18] sm:$0xff] 0.0
  $region13: #{discriminator_forward.13} parent=0 // pred_fallthru
    _
  %v23 = vld [vmem:[#allocation2] sm:$0xff]
  %v24 = vld [vmem:[#allocation2 + $0x8] sm:$0xff]
  %v25 = vld [vmem:[#allocation2 + $0x10] sm:$0xff]
  %v26 = vld [vmem:[#allocation2 + $0x18] sm:$0xff]
  %v27 = vld [vmem:[%s0] sm:$0xff]
  %v28 = vld [vmem:[%s0 + $0x8] sm:$0xff]
  %v29 = vld [vmem:[%s0 + $0x10] sm:$0xff]
  %v30 = vld [vmem:[%s0 + $0x18] sm:$0xff]
  %v31 = vld [vmem:[%s0 + $0x20] sm:$0xff]
  %v32 = vld [vmem:[%s0 + $0x28] sm:$0xff]
  %v33 = vld [vmem:[%s0 + $0x30] sm:$0xff]
  %v34 = vld [vmem:[%s0 + $0x38] sm:$0xff]
  %v35 = vld [vmem:[%s1] sm:$0xf]
  %v36 = vld [vmem:[%s1 + $0x4] sm:$0xf]
  %v37 = vld [vmem:[%s1 + $0x8] sm:$0xf]
  %v38 = vld [vmem:[%s1 + $0xc] sm:$0xf]
  %v39 = vld [vmem:[%s1 + $0x10] sm:$0xf]
  %v40 = vld [vmem:[%s1 + $0x14] sm:$0xf]
  %v41 = vld [vmem:[%s1 + $0x18] sm:$0xf]
  %v42 = vld [vmem:[%s1 + $0x1c] sm:$0xf]
  %v43 = vld [vmem:[%s1 + $0x20] sm:$0xf]
  %v44 = vld [vmem:[%s1 + $0x24] sm:$0xf]
  %v45 = vld [vmem:[%s1 + $0x28] sm:$0xf]
  %v46 = vld [vmem:[%s1 + $0x2c] sm:$0xf]
  %v47 = vld [vmem:[%s1 + $0x30] sm:$0xf]
  %v48 = vld [vmem:[%s1 + $0x34] sm:$0xf]
  %v49 = vld [vmem:[%s1 + $0x38] sm:$0xf]
  %v50 = vld [vmem:[%s1 + $0x3c] sm:$0xf]
  %v51 = vld [vmem:[%s1 + $0x40] sm:$0xf]
  %v52 = vld [vmem:[%s1 + $0x44] sm:$0xf]
  %v53 = vld [vmem:[%s1 + $0x48] sm:$0xf]
  %v54 = vld [vmem:[%s1 + $0x4c] sm:$0xf]
  %v55 = vld [vmem:[%s1 + $0x50] sm:$0xf]
  %v56 = vld [vmem:[%s1 + $0x54] sm:$0xf]
  %v57 = vld [vmem:[%s1 + $0x58] sm:$0xf]
  %v58 = vld [vmem:[%s1 + $0x5c] sm:$0xf]
  %v59 = vld [vmem:[%s1 + $0x60] sm:$0xf]
  %v60 = vld [vmem:[%s1 + $0x64] sm:$0xf]
  %v61 = vld [vmem:[%s1 + $0x68] sm:$0xf]
  %v62 = vld [vmem:[%s1 + $0x6c] sm:$0xf]
  %v63 = vld [vmem:[%s1 + $0x70] sm:$0xf]
  %v64 = vld [vmem:[%s1 + $0x74] sm:$0xf]
  %v65 = vld [vmem:[%s1 + $0x78] sm:$0xf]
  %v66 = vld [vmem:[%s1 + $0x7c] sm:$0xf]
  %v67 = vld [vmem:[%s1 + $0x80] sm:$0xf]
  %v68 = vld [vmem:[%s1 + $0x84] sm:$0xf]
  %v69 = vld [vmem:[%s1 + $0x88] sm:$0xf]
  %v70 = vld [vmem:[%s1 + $0x8c] sm:$0xf]
  %v71 = vld [vmem:[%s1 + $0x90] sm:$0xf]
  %v72 = vld [vmem:[%s1 + $0x94] sm:$0xf]
  %v73 = vld [vmem:[%s1 + $0x98] sm:$0xf]
  %v74 = vld [vmem:[%s1 + $0x9c] sm:$0xf]
  %v75 = vld [vmem:[%s1 + $0xa0] sm:$0xf]
  %v76 = vld [vmem:[%s1 + $0xa4] sm:$0xf]
  %v77 = vld [vmem:[%s1 + $0xa8] sm:$0xf]
  %v78 = vld [vmem:[%s1 + $0xac] sm:$0xf]
  %v79 = vld [vmem:[%s1 + $0xb0] sm:$0xf]
  %v80 = vld [vmem:[%s1 + $0xb4] sm:$0xf]
  %v81 = vld [vmem:[%s1 + $0xb8] sm:$0xf]
  %v82 = vld [vmem:[%s1 + $0xbc] sm:$0xf]
  %v83 = vld [vmem:[%s1 + $0xc0] sm:$0xf]
  %v84 = vld [vmem:[%s1 + $0xc4] sm:$0xf]
  %v85 = vld [vmem:[%s1 + $0xc8] sm:$0xf]
  %v86 = vld [vmem:[%s1 + $0xcc] sm:$0xf]
  %v87 = vld [vmem:[%s1 + $0xd0] sm:$0xf]
  %v88 = vld [vmem:[%s1 + $0xd4] sm:$0xf]
  %v89 = vld [vmem:[%s1 + $0xd8] sm:$0xf]
  %v90 = vld [vmem:[%s1 + $0xdc] sm:$0xf]
  %v91 = vld [vmem:[%s1 + $0xe0] sm:$0xf]
  %v92 = vld [vmem:[%s1 + $0xe4] sm:$0xf]
  %v93 = vld [vmem:[%s1 + $0xe8] sm:$0xf]
  %v94 = vld [vmem:[%s1 + $0xec] sm:$0xf]
  %v95 = vld [vmem:[%s1 + $0xf0] sm:$0xf]
  %v96 = vld [vmem:[%s1 + $0xf4] sm:$0xf]
  %v97 = vld [vmem:[%s1 + $0xf8] sm:$0xf]
  %v98 = vld [vmem:[%s1 + $0xfc] sm:$0xf]
  %v107 = vunpack.c.l.b16 %v27
  %v108 = vunpack.c.h.b16 %v27
  %v109 = vunpack.c.l.b16 %v28
  %v110 = vunpack.c.h.b16 %v28
  %v111 = vunpack.c.l.b16 %v29
  %v112 = vunpack.c.h.b16 %v29
  %v113 = vunpack.c.l.b16 %v30
  %v114 = vunpack.c.h.b16 %v30
  %v115 = vunpack.c.l.b16 %v31
  %v116 = vunpack.c.h.b16 %v31
  %v117 = vunpack.c.l.b16 %v32
  %v118 = vunpack.c.h.b16 %v32
  %v119 = vunpack.c.l.b16 %v33
  %v120 = vunpack.c.h.b16 %v33
  %v121 = vunpack.c.l.b16 %v34
  %v122 = vunpack.c.h.b16 %v34
  %v123 = vpack.c.b16 %v111, %v107
  %v124 = vpack.c.b16 %v112, %v108
  %v125 = vpack.c.b16 %v113, %v109
  %v126 = vpack.c.b16 %v114, %v110
  %v127 = vpack.c.b16 %v119, %v115
  %v128 = vpack.c.b16 %v120, %v116
  %v129 = vpack.c.b16 %v121, %v117
  %v130 = vpack.c.b16 %v122, %v118
  %v203 = vunpack.c.l.b16 %v35
  %v204 = vunpack.c.l.b16 %v36
  %v205 = vunpack.c.l.b16 %v37
  %v206 = vunpack.c.l.b16 %v38
  %v207 = vunpack.c.l.b16 %v39
  %v208 = vunpack.c.l.b16 %v40
  %v209 = vunpack.c.l.b16 %v41
  %v210 = vunpack.c.l.b16 %v42
  %v211 = vunpack.c.l.b16 %v43
  %v212 = vunpack.c.l.b16 %v44
  %v213 = vunpack.c.l.b16 %v45
  %v214 = vunpack.c.l.b16 %v46
  %v215 = vunpack.c.l.b16 %v47
  %v216 = vunpack.c.l.b16 %v48
  %v217 = vunpack.c.l.b16 %v49
  %v218 = vunpack.c.l.b16 %v50
  %v219 = vunpack.c.l.b16 %v51
  %v220 = vunpack.c.l.b16 %v52
  %v221 = vunpack.c.l.b16 %v53
  %v222 = vunpack.c.l.b16 %v54
  %v223 = vunpack.c.l.b16 %v55
  %v224 = vunpack.c.l.b16 %v56
  %v225 = vunpack.c.l.b16 %v57
  %v226 = vunpack.c.l.b16 %v58
  %v227 = vunpack.c.l.b16 %v59
  %v228 = vunpack.c.l.b16 %v60
  %v229 = vunpack.c.l.b16 %v61
  %v230 = vunpack.c.l.b16 %v62
  %v231 = vunpack.c.l.b16 %v63
  %v232 = vunpack.c.l.b16 %v64
  %v233 = vunpack.c.l.b16 %v65
  %v234 = vunpack.c.l.b16 %v66
  %v235 = vunpack.c.l.b16 %v67
  %v236 = vunpack.c.l.b16 %v68
  %v237 = vunpack.c.l.b16 %v69
  %v238 = vunpack.c.l.b16 %v70
  %v239 = vunpack.c.l.b16 %v71
  %v240 = vunpack.c.l.b16 %v72
  %v241 = vunpack.c.l.b16 %v73
  %v242 = vunpack.c.l.b16 %v74
  %v243 = vunpack.c.l.b16 %v75
  %v244 = vunpack.c.l.b16 %v76
  %v245 = vunpack.c.l.b16 %v77
  %v246 = vunpack.c.l.b16 %v78
  %v247 = vunpack.c.l.b16 %v79
  %v248 = vunpack.c.l.b16 %v80
  %v249 = vunpack.c.l.b16 %v81
  %v250 = vunpack.c.l.b16 %v82
  %v251 = vunpack.c.l.b16 %v83
  %v252 = vunpack.c.l.b16 %v84
  %v253 = vunpack.c.l.b16 %v85
  %v254 = vunpack.c.l.b16 %v86
  %v255 = vunpack.c.l.b16 %v87
  %v256 = vunpack.c.l.b16 %v88
  %v257 = vunpack.c.l.b16 %v89
  %v258 = vunpack.c.l.b16 %v90
  %v259 = vunpack.c.l.b16 %v91
  %v260 = vunpack.c.l.b16 %v92
  %v261 = vunpack.c.l.b16 %v93
  %v262 = vunpack.c.l.b16 %v94
  %v263 = vunpack.c.l.b16 %v95
  %v264 = vunpack.c.l.b16 %v96
  %v265 = vunpack.c.l.b16 %v97
  %v266 = vunpack.c.l.b16 %v98
  %v267 = vpack.c.b16 %v204, %v203
  %v268 = vpack.c.b16 %v206, %v205
  %v269 = vpack.c.b16 %v208, %v207
  %v270 = vpack.c.b16 %v210, %v209
  %v271 = vpack.c.b16 %v212, %v211
  %v272 = vpack.c.b16 %v214, %v213
  %v273 = vpack.c.b16 %v216, %v215
  %v274 = vpack.c.b16 %v218, %v217
  %v275 = vpack.c.b16 %v220, %v219
  %v276 = vpack.c.b16 %v222, %v221
  %v277 = vpack.c.b16 %v224, %v223
  %v278 = vpack.c.b16 %v226, %v225
  %v279 = vpack.c.b16 %v228, %v227
  %v280 = vpack.c.b16 %v230, %v229
  %v281 = vpack.c.b16 %v232, %v231
  %v282 = vpack.c.b16 %v234, %v233
  %v283 = vpack.c.b16 %v236, %v235
  %v284 = vpack.c.b16 %v238, %v237
  %v285 = vpack.c.b16 %v240, %v239
  %v286 = vpack.c.b16 %v242, %v241
  %v287 = vpack.c.b16 %v244, %v243
  %v288 = vpack.c.b16 %v246, %v245
  %v289 = vpack.c.b16 %v248, %v247
  %v290 = vpack.c.b16 %v250, %v249
  %v291 = vpack.c.b16 %v252, %v251
  %v292 = vpack.c.b16 %v254, %v253
  %v293 = vpack.c.b16 %v256, %v255
  %v294 = vpack.c.b16 %v258, %v257
  %v295 = vpack.c.b16 %v260, %v259
  %v296 = vpack.c.b16 %v262, %v261
  %v297 = vpack.c.b16 %v264, %v263
  %v298 = vpack.c.b16 %v266, %v265
  %331 = vmatprep.subr.bf16.mxu0 0
  %332 = vmatpush1.bf16.msra.mxu0 %v267
  %333 = vmatprep.subr.bf16.mxu0 0
  %334 = vmatpush1.bf16.msra.mxu0 %v268
  %335 = vmatprep.subr.bf16.mxu0 0
  %336 = vmatpush1.bf16.msra.mxu0 %v269
  %337 = vmatprep.subr.bf16.mxu0 0
  %338 = vmatpush1.bf16.msra.mxu0 %v270
  %339 = vmatprep.subr.bf16.mxu0 0
  %340 = vmatpush1.bf16.msra.mxu0 %v271
  %341 = vmatprep.subr.bf16.mxu0 0
  %342 = vmatpush1.bf16.msra.mxu0 %v272
  %343 = vmatprep.subr.bf16.mxu0 0
  %344 = vmatpush1.bf16.msra.mxu0 %v273
  %345 = vmatprep.subr.bf16.mxu0 0
  %346 = vmatpush1.bf16.msra.mxu0 %v274
  %347 = vmatprep.subr.bf16.mxu0 0
  %348 = vmatpush1.bf16.msra.mxu0 %v275
  %349 = vmatprep.subr.bf16.mxu0 0
  %350 = vmatpush1.bf16.msra.mxu0 %v276
  %351 = vmatprep.subr.bf16.mxu0 0
  %352 = vmatpush1.bf16.msra.mxu0 %v277
  %353 = vmatprep.subr.bf16.mxu0 0
  %354 = vmatpush1.bf16.msra.mxu0 %v278
  %355 = vmatprep.subr.bf16.mxu0 0
  %356 = vmatpush1.bf16.msra.mxu0 %v279
  %357 = vmatprep.subr.bf16.mxu0 0
  %358 = vmatpush1.bf16.msra.mxu0 %v280
  %359 = vmatprep.subr.bf16.mxu0 0
  %360 = vmatpush1.bf16.msra.mxu0 %v281
  %361 = vmatprep.subr.bf16.mxu0 0
  %362 = vmatpush1.bf16.msra.mxu0 %v282
  %363 = vmatprep.mubr.bf16.mxu0 %v124
  %364 = vmatmul.mubr.bf16.gmra.mrb[0].mxu0 %v123
  %v365 = vpop.f32.mrb[0].mxu0
  %v366 = vadd.f32 0.0, %v365
  %v367 = vpop.f32.mrb[0].mxu0
  %v368 = vpop.f32.mrb[0].mxu0
  %v369 = vadd.f32 0.0, %v368
  %v370 = vpop.f32.mrb[0].mxu0
  %371 = vmatprep.mubr.bf16.mxu0 %v128
  %372 = vmatmul.mubr.bf16.gmra.mrb[0].mxu0 %v127
  %v373 = vpop.f32.mrb[0].mxu0
  %v374 = vadd.f32 0.0, %v373
  %v375 = vpop.f32.mrb[0].mxu0
  %v376 = vpop.f32.mrb[0].mxu0
  %v377 = vadd.f32 0.0, %v376
  %v378 = vpop.f32.mrb[0].mxu0
  %379 = vdwg.mxu0
  %380 = vmatprep.subr.bf16.mxu0 0
  %381 = vmatpush1.bf16.msra.mxu0 %v283
  %382 = vmatprep.subr.bf16.mxu0 0
  %383 = vmatpush1.bf16.msra.mxu0 %v284
  %384 = vmatprep.subr.bf16.mxu0 0
  %385 = vmatpush1.bf16.msra.mxu0 %v285
  %386 = vmatprep.subr.bf16.mxu0 0
  %387 = vmatpush1.bf16.msra.mxu0 %v286
  %388 = vmatprep.subr.bf16.mxu0 0
  %389 = vmatpush1.bf16.msra.mxu0 %v287
  %390 = vmatprep.subr.bf16.mxu0 0
  %391 = vmatpush1.bf16.msra.mxu0 %v288
  %392 = vmatprep.subr.bf16.mxu0 0
  %393 = vmatpush1.bf16.msra.mxu0 %v289
  %394 = vmatprep.subr.bf16.mxu0 0
  %395 = vmatpush1.bf16.msra.mxu0 %v290
  %396 = vmatprep.subr.bf16.mxu0 0
  %397 = vmatpush1.bf16.msra.mxu0 %v291
  %398 = vmatprep.subr.bf16.mxu0 0
  %399 = vmatpush1.bf16.msra.mxu0 %v292
  %400 = vmatprep.subr.bf16.mxu0 0
  %401 = vmatpush1.bf16.msra.mxu0 %v293
  %402 = vmatprep.subr.bf16.mxu0 0
  %403 = vmatpush1.bf16.msra.mxu0 %v294
  %404 = vmatprep.subr.bf16.mxu0 0
  %405 = vmatpush1.bf16.msra.mxu0 %v295
  %406 = vmatprep.subr.bf16.mxu0 0
  %407 = vmatpush1.bf16.msra.mxu0 %v296
  %408 = vmatprep.subr.bf16.mxu0 0
  %409 = vmatpush1.bf16.msra.mxu0 %v297
  %410 = vmatprep.subr.bf16.mxu0 0
  %411 = vmatpush1.bf16.msra.mxu0 %v298
  %412 = vmatprep.mubr.bf16.mxu0 %v126
  %413 = vmatmul.mubr.bf16.gmra.mrb[0].mxu0 %v125
  %v414 = vpop.f32.mrb[0].mxu0
  %v415 = vadd.f32 %v366, %v414
  %v416 = vpop.f32.mrb[0].mxu0
  %v417 = vpop.f32.mrb[0].mxu0
  %v418 = vadd.f32 %v369, %v417
  %v419 = vpop.f32.mrb[0].mxu0
  %420 = vmatprep.mubr.bf16.mxu0 %v130
  %421 = vmatmul.mubr.bf16.gmra.mrb[0].mxu0 %v129
  %v422 = vpop.f32.mrb[0].mxu0
  %v423 = vadd.f32 %v374, %v422
  %v424 = vpop.f32.mrb[0].mxu0
  %v425 = vpop.f32.mrb[0].mxu0
  %v426 = vadd.f32 %v377, %v425
  %v427 = vpop.f32.mrb[0].mxu0
  %428 = vdwg.mxu0
  %v429 = vadd.f32 %v23, %v415
  %v430 = vadd.f32 %v24, %v418
  %v431 = vadd.f32 %v25, %v423
  %v432 = vadd.f32 %v26, %v426
  %433 = vst [vmem:[#allocation2] sm:$0xff] %v429
  %434 = vst [vmem:[#allocation2 + $0x8] sm:$0xff] %v430
  %435 = vst [vmem:[#allocation2 + $0x10] sm:$0xff] %v431
  %436 = vst [vmem:[#allocation2 + $0x18] sm:$0xff] %v432
  // Predicated region
  $region14: #{discriminator_forward.13} parent=0 // pred_check
    %p437 = pneg %p15
  $region15: #{discriminator_forward.13} parent=0 // pred_check_branch
    %439 = sbr.rel (%p437) target = $region17
  $region16: #{discriminator_forward.13} parent=0 // pred_region
    %v440 = vld [vmem:[#allocation2] sm:$0xff]
    %v441 = vld [vmem:[#allocation2 + $0x8] sm:$0xff]
    %v442 = vld [vmem:[#allocation2 + $0x10] sm:$0xff]
    %v443 = vld [vmem:[#allocation2 + $0x18] sm:$0xff]
    %444 = vst [vmem:[%s2] sm:$0xff] %v440
    %445 = vst [vmem:[%s2 + $0x8] sm:$0xff] %v441
    %446 = vst [vmem:[%s2 + $0x10] sm:$0xff] %v442
    %447 = vst [vmem:[%s2 + $0x18] sm:$0xff] %v443
    %v448 = vadd.f32 %v440, %v441
    %v449 = vadd.f32 %v448, %v442
    %v450 = vadd.f32 %v449, %v443
    %v451 = vrot.slane %v450, 4
    %v452 = vadd.f32 %v450, %v451
    %v453 = vrot.slane %v452, 2
    %v454 = vadd.f32 %v452, %v453
    %v455 = vrot.slane %v454, 1
    %v456 = vadd.f32 %v454, %v455
    %457 = vst [vmem:[%s3] sm:$0x1] %v456
    %v458 = vmul.f32 %v440, %v440
    %v459 = vmul.f32 %v441, %v441
    %v460 = vmul.f32 %v442, %v442
    %v461 = vmul.f32 %v443, %v443
    %v462 = vadd.f32 %v458, %v459
    %v463 = vadd.f32 %v462, %v460
    %v464 = vadd.f32 %v463, %v461
    %v465 = vrot.slane %v464, 4
    %v466 = vadd.f32 %v464, %v465
    %v467 = vrot.slane %v466, 2
    %v468 = vadd.f32 %v466, %v467
    %v469 = vrot.slane %v468, 1
    %v470 = vadd.f32 %v468, %v469
    %471 = vst [vmem:[%s4] sm:$0x1] %v470
  $region17: #{discriminator_forward.13} parent=0 // pred_fallthru
    _
  // Predicated region
  $region18: #{discriminator_forward.13} parent=0 // pred_check
    _
  $region19: #{discriminator_forward.13} parent=0 // pred_check_branch
    %473 = sbr.rel (0) target = $region21
  $region20: #{discriminator_forward.13} parent=0 // pred_region
    _
  $region21: #{discriminator_forward.13} parent=0 // pred_fallthru
    _
  // Predicated region
  $region22: #{discriminator_forward.13} parent=0 // pred_check
    _
  $region23: #{discriminator_forward.13} parent=0 // pred_check_branch
    %475 = sbr.rel (0) target = $region25
  $region24: #{discriminator_forward.13} parent=0 // pred_region
    _
  $region25: #{discriminator_forward.13} parent=0 // pred_fallthru
    _
  // Predicated region
  $region26: #{discriminator_forward.13} parent=0 // pred_check
    _
  $region27: #{discriminator_forward.13} parent=0 // pred_check_branch
    %477 = sbr.rel (0) target = $region29
  $region28: #{discriminator_forward.13} parent=0 // pred_region
    _
  $region29: #{discriminator_forward.13} parent=0 // pred_fallthru
    _
  // Predicated region
  $region30: #{discriminator_forward.13} parent=0 // pred_check
    _
  $region31: #{discriminator_forward.13} parent=0 // pred_check_branch
    %479 = sbr.rel (0) target = $region33
  $region32: #{discriminator_forward.13} parent=0 // pred_region
    _
  $region33: #{discriminator_forward.13} parent=0 // pred_fallthru
    _
  // Predicated region
  $region34: #{discriminator_forward.13} parent=0 // pred_check
    _
  $region35: #{discriminator_forward.13} parent=0 // pred_check_branch
    %481 = sbr.rel (0) target = $region37
  $region36: #{discriminator_forward.13} parent=0 // pred_region
    _
  $region37: #{discriminator_forward.13} parent=0 // pred_fallthru
    _
  // Predicated region
  $region38: #{discriminator_forward.13} parent=0 // pred_check
    _
  $region39: #{discriminator_forward.13} parent=0 // pred_check_branch
    %483 = sbr.rel (0) target = $region41
  $region40: #{discriminator_forward.13} parent=0 // pred_region
    _
  $region41: #{discriminator_forward.13} parent=0 // pred_fallthru
    _

// kernel: discriminator_forward.15
$region0: #{discriminator_forward.15}
  #allocation0 [shape = 'u32[]', space=smem, size = 0x4, offset = 0x4, fixed_abs, tag = 'smem constant byte address 0x4 - core index']
  #allocation1 [shape = 'u32[144,128]{1,0:T(1,128)}', space=vmem, size = 0x12000, scoped, tag = 'internal scratch']
  #allocation2 [shape = 'f32[16,128]{1,0:T(8,128)}', space=vmem, size = 0x2000, scoped, tag = 'scratch operand']
  %s0 = inlined_call_operand.vmem [shape: bf16[16,1024], index: 0, kind: input, shape index: {}]
  %s1 = inlined_call_operand.vmem [shape: bf16[1024,128], index: 1, kind: input, shape index: {}]
  %s2 = inlined_call_operand.vmem [shape: f32[1,128], index: 2, kind: input, shape index: {}]
  %s3 = inlined_call_operand.vmem [shape: f32[16,128], index: 3, kind: output, shape index: {}]
  %s4 = sld [smem:[#allocation0]]
  $region76: #{discriminator_forward.15} parent=0
    _
  %s6 = ssub.s32 1, %s4
  %s7 = scalar_select 0, %s6, %s4
  $region1: #{discriminator_forward.15} parent=0
    #allocation3 [shape = 'u8[32768]{0}', space=vmem, size = 0x8000, scoped, tag = 'input window, operand 0']
    loop: start=0, step=1, limit=4
    $region2: #{discriminator_forward.15} parent=1 // loop_pre_header
      _
    $region3: #{discriminator_forward.15} parent=1 // loop_header
      %s9 = sphi 0, %s13
      %p10 = scmp.ge.s32.totalorder %s9, 4
      %s16 = sphi 0, %s35
      %s17 = sphi 0, %s31
      %s18 = sphi 0, %s27
      %s19 = sphi 0, %s16
      %s20 = sphi 0, %s17
      %s21 = sphi 0, %s18
      %s22 = sphi 0, %s19
      %s23 = sphi 0, %s20
      %s24 = sphi 0, %s21
      %s40 = sphi 0, %s42
      %s43 = sphi 0, %s40
      %s44 = sphi 0, %s43
      %s60 = sphi 0, %s44
      %s68 = sphi 0, %s70
      %s71 = sphi 0, %s68
      %s72 = sphi 0, %s71
      %s88 = sphi 0, %s72
      %s94 = sphi 0, %s96
      %s97 = sphi 0, %s94
      %s98 = sphi 0, %s97
      %s114 = sphi 0, %s98
      %s122 = sphi 0, %s124
      %s125 = sphi 0, %s122
      %s126 = sphi 0, %s125
      %s142 = sphi 0, %s126
    $region4: #{discriminator_forward.15} parent=1 // loop_header_branch
      %12 = sbr.rel (%p10) target = $region8
    $region5: #{discriminator_forward.15} parent=1 // loop_body
      %s14 = ssub.s32 %s9, 1
      %s15 = ssub.s32 %s9, 2
      %s25 = sadd.s32 1, %s18
      %p26 = scmp.ge.s32.totalorder %s25, 2
      %s27 = scalar_select %p26, 0, %s25
      %s28 = sadd.s32 1, %s17
      %s29 = scalar_select %p26, %s28, %s17
      %p30 = scmp.ge.s32.totalorder %s29, 1
      %s31 = scalar_select %p30, 0, %s29
      %s32 = sadd.s32 1, %s16
      %s33 = scalar_select %p30, %s32, %s16
      %p34 = scmp.ge.s32.totalorder %s33, 1
      %s35 = scalar_select %p34, 0, %s33
      %s36 = ssub.s32 %s16, %s35
      %s37 = ssub.s32 %s18, %s27
      %s38 = sor.u32 %s36, %s37
      %p39 = scmp.eq.s32.totalorder %s38, 0
      %s41 = sadd.s32 %s40, 1
      %s42 = scalar_select %p39, %s40, %s41
      %p45 = pneg %p39
      %p46 = scmp.eq.s32.totalorder %s9, 1
      %p47 = por %p45, %p46
      %p48 = scmp.ne.s32.totalorder %s40, %s43
      %p49 = scmp.eq.s32.totalorder %s9, 0
      %p50 = por %p48, %p49
      %p51 = scmp.ne.s32.totalorder %s40, %s43
      %p52 = scmp.eq.s32.totalorder %s14, 1
      %p53 = por %p51, %p52
      %p54 = scmp.ne.s32.totalorder %s43, %s44
      %p55 = scmp.eq.s32.totalorder %s14, 0
      %p56 = por %p54, %p55
      %p57 = scmp.ne.s32.totalorder %s43, %s44
      %p58 = scmp.eq.s32.totalorder %s15, 1
      %p59 = por %p57, %p58
      %p61 = scmp.ne.s32.totalorder %s44, %s60
      %p62 = scmp.eq.s32.totalorder %s15, 0
      %p63 = por %p61, %p62
      %s64 = ssub.s32 %s18, %s27
      %s65 = ssub.s32 %s17, %s31
      %s66 = sor.u32 %s64, %s65
      %p67 = scmp.eq.s32.totalorder %s66, 0
      %s69 = sadd.s32 %s68, 1
      %s70 = scalar_select %p67, %s68, %s69
      %p73 = pneg %p67
      %p74 = scmp.eq.s32.totalorder %s9, 1
      %p75 = por %p73, %p74
      %p76 = scmp.ne.s32.totalorder %s68, %s71
      %p77 = scmp.eq.s32.totalorder %s9, 0
      %p78 = por %p76, %p77
      %p79 = scmp.ne.s32.totalorder %s68, %s71
      %p80 = scmp.eq.s32.totalorder %s14, 1
      %p81 = por %p79, %p80
      %p82 = scmp.ne.s32.totalorder %s71, %s72
      %p83 = scmp.eq.s32.totalorder %s14, 0
      %p84 = por %p82, %p83
      %p85 = scmp.ne.s32.totalorder %s71, %s72
      %p86 = scmp.eq.s32.totalorder %s15, 1
      %p87 = por %p85, %p86
      %p89 = scmp.ne.s32.totalorder %s72, %s88
      %p90 = scmp.eq.s32.totalorder %s15, 0
      %p91 = por %p89, %p90
      %s92 = ssub.s32 %s17, %s31
      %p93 = scmp.eq.s32.totalorder %s92, 0
      %s95 = sadd.s32 %s94, 1
      %s96 = scalar_select %p93, %s94, %s95
      %p99 = pneg %p93
      %p100 = scmp.eq.s32.totalorder %s9, 1
      %p101 = por %p99, %p100
      %p102 = scmp.ne.s32.totalorder %s94, %s97
      %p103 = scmp.eq.s32.totalorder %s9, 0
      %p104 = por %p102, %p103
      %p105 = scmp.ne.s32.totalorder %s94, %s97
      %p106 = scmp.eq.s32.totalorder %s14, 1
      %p107 = por %p105, %p106
      %p108 = scmp.ne.s32.totalorder %s97, %s98
      %p109 = scmp.eq.s32.totalorder %s14, 0
      %p110 = por %p108, %p109
      %p111 = scmp.ne.s32.totalorder %s97, %s98
      %p112 = scmp.eq.s32.totalorder %s15, 1
      %p113 = por %p111, %p112
      %p115 = scmp.ne.s32.totalorder %s98, %s114
      %p116 = scmp.eq.s32.totalorder %s15, 0
      %p117 = por %p115, %p116
      %s118 = ssub.s32 %s16, %s35
      %s119 = ssub.s32 %s17, %s31
      %s120 = sor.u32 %s118, %s119
      %p121 = scmp.eq.s32.totalorder %s120, 0
      %s123 = sadd.s32 %s122, 1
      %s124 = scalar_select %p121, %s122, %s123
      %p127 = pneg %p121
      %p128 = scmp.eq.s32.totalorder %s9, 1
      %p129 = por %p127, %p128
      %p130 = scmp.ne.s32.totalorder %s122, %s125
      %p131 = scmp.eq.s32.totalorder %s9, 0
      %p132 = por %p130, %p131
      %p133 = scmp.ne.s32.totalorder %s122, %s125
      %p134 = scmp.eq.s32.totalorder %s14, 1
      %p135 = por %p133, %p134
      %p136 = scmp.ne.s32.totalorder %s125, %s126
      %p137 = scmp.eq.s32.totalorder %s14, 0
      %p138 = por %p136, %p137
      %p139 = scmp.ne.s32.totalorder %s125, %s126
      %p140 = scmp.eq.s32.totalorder %s15, 1
      %p141 = por %p139, %p140
      %p143 = scmp.ne.s32.totalorder %s126, %s142
      %p144 = scmp.eq.s32.totalorder %s15, 0
      %p145 = por %p143, %p144
      %p146 = scmp.le.s32.totalorder 1, %s9
      %p147 = scmp.lt.s32.totalorder %s9, 3
      %p148 = pnand %p146, %p147
      %p149 = pneg %p148
      // Predicated region
      $region9: #{discriminator_forward.15} parent=5 // pred_check
        _
      $region10: #{discriminator_forward.15} parent=5 // pred_check_branch
        %151 = sbr.rel (%p148) target = $region12
      $region11: #{discriminator_forward.15} parent=5 // pred_region
        %s152 = ssub.s32 %s9, 1
        // Predicated region
        $region13: #{discriminator_forward.15} parent=11 // pred_check
          %p153 = pneg %p110
        $region14: #{discriminator_forward.15} parent=11 // pred_check_branch
          %155 = sbr.rel (%p153) target = $region16
        $region15: #{discriminator_forward.15} parent=11 // pred_region
          %p156 = scmp.lt.s32.totalorder %s20, 0
          %s157 = scalar_select %p156, %s20, 0
          %s158 = scalar_lea.vmem %s2, %s157
        $region16: #{discriminator_forward.15} parent=11 // pred_fallthru
          _
      $region12: #{discriminator_forward.15} parent=5 // pred_fallthru
        _
      %p159 = scmp.lt.s32.totalorder %s9, 2
      // Predicated region
      $region17: #{discriminator_forward.15} parent=5 // pred_check
        %p160 = pneg %p159
      $region18: #{discriminator_forward.15} parent=5 // pred_check_branch
        %162 = sbr.rel (%p160) target = $region20
      $region19: #{discriminator_forward.15} parent=5 // pred_region
        // Predicated region
        $region21: #{discriminator_forward.15} parent=19 // pred_check
          %p163 = pneg %p50
        $region22: #{discriminator_forward.15} parent=19 // pred_check_branch
          %165 = sbr.rel (%p163) target = $region24
        $region23: #{discriminator_forward.15} parent=19 // pred_region
          %s166 = sand.u32 %s40, 1
          %s167 = sand.u32 %s40, 1
          %s168 = smul.addr %s167, 32
          %s169 = scalar_lea.vmem [#allocation3], %s168
          %s170 = smul.u32 2, %s16
          %s171 = smul.u32 4, %s18
          %s172 = smul.addr %s170, 8
          %s173 = sadd.s32 %s171, %s172
          %s174 = smul.addr %s173, 4
          %s175 = scalar_lea.vmem %s0, %s174
          // Predicated region
          $region25: #{discriminator_forward.15} parent=23 // pred_check
            _
          $region26: #{discriminator_forward.15} parent=23 // pred_check_branch
            %177 = sbr.rel (0) target = $region28
          $region27: #{discriminator_forward.15} parent=23 // pred_region
            // Predicated region
            $region29: #{discriminator_forward.15} parent=27 // pred_check
              _
            $region30: #{discriminator_forward.15} parent=27 // pred_check_branch
              %179 = sbr.rel (0) target = $region32
            $region31: #{discriminator_forward.15} parent=27 // pred_region
              loop: start=0, step=1, limit=1
              $region33: #{discriminator_forward.15} parent=31 // loop_pre_header
                _
              $region34: #{discriminator_forward.15} parent=31 // loop_header
                %s181 = sphi 0, %s185
                %p182 = scmp.ge.s32.totalorder %s181, 1
                %s186 = sphi %s175, %s175
                %s187 = sphi %s169, %s169
              $region35: #{discriminator_forward.15} parent=31 // loop_header_branch
                %184 = sbr.rel (%p182) target = $region39
              $region36: #{discriminator_forward.15} parent=31 // loop_body
                %v188 = vld [vmem:[%s186] sm:$0xff]
                %189 = vst [vmem:[%s187] sm:$0xff] %v188
                %v190 = vld [vmem:[%s186 + $0x8] sm:$0xff]
                %191 = vst [vmem:[%s187 + $0x8] sm:$0xff] %v190
                %v192 = vld [vmem:[%s186 + $0x20] sm:$0xff]
                %193 = vst [vmem:[%s187 + $0x10] sm:$0xff] %v192
                %v194 = vld [vmem:[%s186 + $0x28] sm:$0xff]
                %195 = vst [vmem:[%s187 + $0x18] sm:$0xff] %v194
              $region37: #{discriminator_forward.15} parent=31 // loop_footer
                %s185 = sadd.s32 1, %s181
              $region38: #{discriminator_forward.15} parent=31 // loop_footer_branch
                %180 = sbr.rel target = $region34
              $region39: #{discriminator_forward.15} parent=31 // loop_exit
                _
            $region32: #{discriminator_forward.15} parent=27 // pred_fallthru
              _
            // Predicated region
            $region40: #{discriminator_forward.15} parent=27 // pred_check
              _
            $region41: #{discriminator_forward.15} parent=27 // pred_check_branch
              %197 = sbr.rel target = $region43
            $region42: #{discriminator_forward.15} parent=27 // pred_region
              _
            $region43: #{discriminator_forward.15} parent=27 // pred_fallthru
              _
          $region28: #{discriminator_forward.15} parent=23 // pred_fallthru
            _
          %198 = vnop
        $region24: #{discriminator_forward.15} parent=19 // pred_fallthru
          _
        // Predicated region
        $region44: #{discriminator_forward.15} parent=19 // pred_check
          %p199 = pneg %p78
        $region45: #{discriminator_forward.15} parent=19 // pred_check_branch
          %201 = sbr.rel (%p199) target = $region47
        $region46: #{discriminator_forward.15} parent=19 // pred_region
          %s202 = smul.u32 64, %s18
          %p203 = scmp.lt.s32.totalorder %s202, 127
          %s204 = scalar_select %p203, %s202, 127
          %p205 = scmp.lt.s32.totalorder %s17, 0
          %s206 = scalar_select %p205, %s17, 0
          %s207 = sadd.s32 %s206, %s204
          %s208 = smul.addr %s207, 4
          %s209 = scalar_lea.vmem %s1, %s208
          %s210 = smul.u32 64, %s18
        $region47: #{discriminator_forward.15} parent=19 // pred_fallthru
          _
      $region20: #{discriminator_forward.15} parent=5 // pred_fallthru
        _
      %p211 = scmp.le.s32.totalorder 1, %s9
      %p212 = scmp.lt.s32.totalorder %s9, 3
      %p213 = pnand %p211, %p212
      %p214 = pneg %p213
      // Predicated region
      $region48: #{discriminator_forward.15} parent=5 // pred_check
        _
      $region49: #{discriminator_forward.15} parent=5 // pred_check_branch
        %216 = sbr.rel (%p213) target = $region51
      $region50: #{discriminator_forward.15} parent=5 // pred_region
        %s217 = ssub.s32 %s9, 1
        %s218 = sand.u32 %s43, 1
        %s219 = sand.u32 %s43, 1
        %s220 = smul.addr %s219, 32
        %s221 = scalar_lea.vmem [#allocation3], %s220
        // Predicated region
        $region52: #{discriminator_forward.15} parent=50 // pred_check
          %p222 = pneg %p56
        $region53: #{discriminator_forward.15} parent=50 // pred_check_branch
          %224 = sbr.rel (%p222) target = $region55
        $region54: #{discriminator_forward.15} parent=50 // pred_region
          _
        $region55: #{discriminator_forward.15} parent=50 // pred_fallthru
          _
        %s225 = sand.u32 %s43, 1
        %s226 = sand.u32 %s43, 1
        %s227 = smul.addr %s226, 32
        %s228 = scalar_lea.vmem [#allocation3], %s227
        %p229 = pneg %p56
        %p230 = pneg %p53
        %s231 = smul.u32 64, %s21
        %p232 = scmp.lt.s32.totalorder %s231, 127
        %s233 = scalar_select %p232, %s231, 127
        %p234 = scmp.lt.s32.totalorder %s20, 0
        %s235 = scalar_select %p234, %s20, 0
        %s236 = sadd.s32 %s235, %s233
        %s237 = smul.addr %s236, 4
        %s238 = scalar_lea.vmem %s1, %s237
        %p239 = pneg %p84
        %p240 = pneg %p81
        %p241 = scmp.lt.s32.totalorder %s20, 0
        %s242 = scalar_select %p241, %s20, 0
        %s243 = scalar_lea.vmem %s2, %s242
        %p244 = pneg %p110
        %p245 = pneg %p107
        %p246 = pneg %p138
        %p247 = pneg %p135
        %s248 = smul.u32 2, %s19
        %p249 = scmp.lt.s32.totalorder %s248, 1
        %s250 = scalar_select %p249, %s248, 1
        %p251 = scmp.lt.s32.totalorder %s20, 0
        %s252 = scalar_select %p251, %s20, 0
        %s253 = sadd.s32 %s252, %s250
        %s254 = smul.addr %s253, 8
        %s255 = scalar_lea.vmem %s3, %s254
        %s256 = smul.u32 2, %s19
        %s257 = smul.u32 4, %s21
        %s258 = smul.u32 64, %s21
        %p259 = scmp.lt.s32.totalorder %s258, 127
        %s260 = scalar_select %p259, %s258, 127
        %p261 = scmp.lt.s32.totalorder %s20, 0
        %s262 = scalar_select %p261, %s20, 0
        %s263 = sadd.s32 %s262, %s260
        %s264 = smul.addr %s263, 4
        %s265 = scalar_lea.vmem %s1, %s264
        %s266 = smul.u32 64, %s21
        %p267 = scmp.lt.s32.totalorder %s20, 0
        %s268 = scalar_select %p267, %s20, 0
        %s269 = scalar_lea.vmem %s2, %s268
        %s270 = smul.u32 2, %s19
        %p271 = scmp.lt.s32.totalorder %s270, 1
        %s272 = scalar_select %p271, %s270, 1
        %p273 = scmp.lt.s32.totalorder %s20, 0
        %s274 = scalar_select %p273, %s20, 0
        %s275 = sadd.s32 %s274, %s272
        %s276 = smul.addr %s275, 8
        %s277 = scalar_lea.vmem %s3, %s276
        %s278 = smul.u32 2, %s19
        %p280 = scmp.eq.s32.totalorder %s21, 0
        // Predicated region
        $region56: #{discriminator_forward.15} parent=50 // pred_check
          %p281 = pneg %p280
        $region57: #{discriminator_forward.15} parent=50 // pred_check_branch
          %283 = sbr.rel (%p281) target = $region59
        $region58: #{discriminator_forward.15} parent=50 // pred_region
          %284 = vst [vmem:[#allocation2] sm:$0xff] 0.0
          %285 = vst [vmem:[#allocation2 + $0x8] sm:$0xff] 0.0
        $region59: #{discriminator_forward.15} parent=50 // pred_fallthru
          _
        %v286 = vld [vmem:[#allocation2] sm:$0xff]
        %v287 = vld [vmem:[#allocation2 + $0x8] sm:$0xff]
        %v288 = vld [vmem:[%s221] sm:$0xff]
        %v289 = vld [vmem:[%s221 + $0x8] sm:$0xff]
        %v290 = vld [vmem:[%s221 + $0x10] sm:$0xff]
        %v291 = vld [vmem:[%s221 + $0x18] sm:$0xff]
        %v292 = vld [vmem:[%s265] sm:$0xf]
        %v293 = vld [vmem:[%s265 + $0x4] sm:$0xf]
        %v294 = vld [vmem:[%s265 + $0x8] sm:$0xf]
        %v295 = vld [vmem:[%s265 + $0xc] sm:$0xf]
        %v296 = vld [vmem:[%s265 + $0x10] sm:$0xf]
        %v297 = vld [vmem:[%s265 + $0x14] sm:$0xf]
        %v298 = vld [vmem:[%s265 + $0x18] sm:$0xf]
        %v299 = vld [vmem:[%s265 + $0x1c] sm:$0xf]
        %v300 = vld [vmem:[%s265 + $0x20] sm:$0xf]
        %v301 = vld [vmem:[%s265 + $0x24] sm:$0xf]
        %v302 = vld [vmem:[%s265 + $0x28] sm:$0xf]
        %v303 = vld [vmem:[%s265 + $0x2c] sm:$0xf]
        %v304 = vld [vmem:[%s265 + $0x30] sm:$0xf]
        %v305 = vld [vmem:[%s265 + $0x34] sm:$0xf]
        %v306 = vld [vmem:[%s265 + $0x38] sm:$0xf]
        %v307 = vld [vmem:[%s265 + $0x3c] sm:$0xf]
        %v308 = vld [vmem:[%s265 + $0x40] sm:$0xf]
        %v309 = vld [vmem:[%s265 + $0x44] sm:$0xf]
        %v310 = vld [vmem:[%s265 + $0x48] sm:$0xf]
        %v311 = vld [vmem:[%s265 + $0x4c] sm:$0xf]
        %v312 = vld [vmem:[%s265 + $0x50] sm:$0xf]
        %v313 = vld [vmem:[%s265 + $0x54] sm:$0xf]
        %v314 = vld [vmem:[%s265 + $0x58] sm:$0xf]
        %v315 = vld [vmem:[%s265 + $0x5c] sm:$0xf]
        %v316 = vld [vmem:[%s265 + $0x60] sm:$0xf]
        %v317 = vld [vmem:[%s265 + $0x64] sm:$0xf]
        %v318 = vld [vmem:[%s265 + $0x68] sm:$0xf]
        %v319 = vld [vmem:[%s265 + $0x6c] sm:$0xf]
        %v320 = vld [vmem:[%s265 + $0x70] sm:$0xf]
        %v321 = vld [vmem:[%s265 + $0x74] sm:$0xf]
        %v322 = vld [vmem:[%s265 + $0x78] sm:$0xf]
        %v323 = vld [vmem:[%s265 + $0x7c] sm:$0xf]
        %v324 = vld [vmem:[%s265 + $0x80] sm:$0xf]
        %v325 = vld [vmem:[%s265 + $0x84] sm:$0xf]
        %v326 = vld [vmem:[%s265 + $0x88] sm:$0xf]
        %v327 = vld [vmem:[%s265 + $0x8c] sm:$0xf]
        %v328 = vld [vmem:[%s265 + $0x90] sm:$0xf]
        %v329 = vld [vmem:[%s265 + $0x94] sm:$0xf]
        %v330 = vld [vmem:[%s265 + $0x98] sm:$0xf]
        %v331 = vld [vmem:[%s265 + $0x9c] sm:$0xf]
        %v332 = vld [vmem:[%s265 + $0xa0] sm:$0xf]
        %v333 = vld [vmem:[%s265 + $0xa4] sm:$0xf]
        %v334 = vld [vmem:[%s265 + $0xa8] sm:$0xf]
        %v335 = vld [vmem:[%s265 + $0xac] sm:$0xf]
        %v336 = vld [vmem:[%s265 + $0xb0] sm:$0xf]
        %v337 = vld [vmem:[%s265 + $0xb4] sm:$0xf]
        %v338 = vld [vmem:[%s265 + $0xb8] sm:$0xf]
        %v339 = vld [vmem:[%s265 + $0xbc] sm:$0xf]
        %v340 = vld [vmem:[%s265 + $0xc0] sm:$0xf]
        %v341 = vld [vmem:[%s265 + $0xc4] sm:$0xf]
        %v342 = vld [vmem:[%s265 + $0xc8] sm:$0xf]
        %v343 = vld [vmem:[%s265 + $0xcc] sm:$0xf]
        %v344 = vld [vmem:[%s265 + $0xd0] sm:$0xf]
        %v345 = vld [vmem:[%s265 + $0xd4] sm:$0xf]
        %v346 = vld [vmem:[%s265 + $0xd8] sm:$0xf]
        %v347 = vld [vmem:[%s265 + $0xdc] sm:$0xf]
        %v348 = vld [vmem:[%s265 + $0xe0] sm:$0xf]
        %v349 = vld [vmem:[%s265 + $0xe4] sm:$0xf]
        %v350 = vld [vmem:[%s265 + $0xe8] sm:$0xf]
        %v351 = vld [vmem:[%s265 + $0xec] sm:$0xf]
        %v352 = vld [vmem:[%s265 + $0xf0] sm:$0xf]
        %v353 = vld [vmem:[%s265 + $0xf4] sm:$0xf]
        %v354 = vld [vmem:[%s265 + $0xf8] sm:$0xf]
        %v355 = vld [vmem:[%s265 + $0xfc] sm:$0xf]
        %v360 = vunpack.c.l.b16 %v288
        %v361 = vunpack.c.h.b16 %v288
        %v362 = vunpack.c.l.b16 %v289
        %v363 = vunpack.c.h.b16 %v289
        %v364 = vunpack.c.l.b16 %v290
        %v365 = vunpack.c.h.b16 %v290
        %v366 = vunpack.c.l.b16 %v291
        %v367 = vunpack.c.h.b16 %v291
        %v368 = vpack.c.b16 %v364, %v360
        %v369 = vpack.c.b16 %v365, %v361
        %v370 = vpack.c.b16 %v366, %v362
        %v371 = vpack.c.b16 %v367, %v363
        %v440 = vunpack.c.l.b16 %v292
        %v441 = vunpack.c.l.b16 %v293
        %v442 = vunpack.c.l.b16 %v294
        %v443 = vunpack.c.l.b16 %v295
        %v444 = vunpack.c.l.b16 %v296
        %v445 = vunpack.c.l.b16 %v297
        %v446 = vunpack.c.l.b16 %v298
        %v447 = vunpack.c.l.b16 %v299
        %v448 = vunpack.c.l.b16 %v300
        %v449 = vunpack.c.l.b16 %v301
        %v450 = vunpack.c.l.b16 %v302
        %v451 = vunpack.c.l.b16 %v303
        %v452 = vunpack.c.l.b16 %v304
        %v453 = vunpack.c.l.b16 %v305
        %v454 = vunpack.c.l.b16 %v306
        %v455 = vunpack.c.l.b16 %v307
        %v456 = vunpack.c.l.b16 %v308
        %v457 = vunpack.c.l.b16 %v309
        %v458 = vunpack.c.l.b16 %v310
        %v459 = vunpack.c.l.b16 %v311
        %v460 = vunpack.c.l.b16 %v312
        %v461 = vunpack.c.l.b16 %v313
        %v462 = vunpack.c.l.b16 %v314
        %v463 = vunpack.c.l.b16 %v315
        %v464 = vunpack.c.l.b16 %v316
        %v465 = vunpack.c.l.b16 %v317
        %v466 = vunpack.c.l.b16 %v318
        %v467 = vunpack.c.l.b16 %v319
        %v468 = vunpack.c.l.b16 %v320
        %v469 = vunpack.c.l.b16 %v321
        %v470 = vunpack.c.l.b16 %v322
        %v471 = vunpack.c.l.b16 %v323
        %v472 = vunpack.c.l.b16 %v324
        %v473 = vunpack.c.l.b16 %v325
        %v474 = vunpack.c.l.b16 %v326
        %v475 = vunpack.c.l.b16 %v327
        %v476 = vunpack.c.l.b16 %v328
        %v477 = vunpack.c.l.b16 %v329
        %v478 = vunpack.c.l.b16 %v330
        %v479 = vunpack.c.l.b16 %v331
        %v480 = vunpack.c.l.b16 %v332
        %v481 = vunpack.c.l.b16 %v333
        %v482 = vunpack.c.l.b16 %v334
        %v483 = vunpack.c.l.b16 %v335
        %v484 = vunpack.c.l.b16 %v336
        %v485 = vunpack.c.l.b16 %v337
        %v486 = vunpack.c.l.b16 %v338
        %v487 = vunpack.c.l.b16 %v339
        %v488 = vunpack.c.l.b16 %v340
        %v489 = vunpack.c.l.b16 %v341
        %v490 = vunpack.c.l.b16 %v342
        %v491 = vunpack.c.l.b16 %v343
        %v492 = vunpack.c.l.b16 %v344
        %v493 = vunpack.c.l.b16 %v345
        %v494 = vunpack.c.l.b16 %v346
        %v495 = vunpack.c.l.b16 %v347
        %v496 = vunpack.c.l.b16 %v348
        %v497 = vunpack.c.l.b16 %v349
        %v498 = vunpack.c.l.b16 %v350
        %v499 = vunpack.c.l.b16 %v351
        %v500 = vunpack.c.l.b16 %v352
        %v501 = vunpack.c.l.b16 %v353
        %v502 = vunpack.c.l.b16 %v354
        %v503 = vunpack.c.l.b16 %v355
        %v504 = vpack.c.b16 %v441, %v440
        %v505 = vpack.c.b16 %v443, %v442
        %v506 = vpack.c.b16 %v445, %v444
        %v507 = vpack.c.b16 %v447, %v446
        %v508 = vpack.c.b16 %v449, %v448
        %v509 = vpack.c.b16 %v451, %v450
        %v510 = vpack.c.b16 %v453, %v452
        %v511 = vpack.c.b16 %v455, %v454
        %v512 = vpack.c.b16 %v457, %v456
        %v513 = vpack.c.b16 %v459, %v458
        %v514 = vpack.c.b16 %v461, %v460
        %v515 = vpack.c.b16 %v463, %v462
        %v516 = vpack.c.b16 %v465, %v464
        %v517 = vpack.c.b16 %v467, %v466
        %v518 = vpack.c.b16 %v469, %v468
        %v519 = vpack.c.b16 %v471, %v470
        %v520 = vpack.c.b16 %v473, %v472
        %v521 = vpack.c.b16 %v475, %v474
        %v522 = vpack.c.b16 %v477, %v476
        %v523 = vpack.c.b16 %v479, %v478
        %v524 = vpack.c.b16 %v481, %v480
        %v525 = vpack.c.b16 %v483, %v482
        %v526 = vpack.c.b16 %v485, %v484
        %v527 = vpack.c.b16 %v487, %v486
        %v528 = vpack.c.b16 %v489, %v488
        %v529 = vpack.c.b16 %v491, %v490
        %v530 = vpack.c.b16 %v493, %v492
        %v531 = vpack.c.b16 %v495, %v494
        %v532 = vpack.c.b16 %v497, %v496
        %v533 = vpack.c.b16 %v499, %v498
        %v534 = vpack.c.b16 %v501, %v500
        %v535 = vpack.c.b16 %v503, %v502
        %568 = vmatprep.subr.bf16.mxu0 0
        %569 = vmatpush1.bf16.msra.mxu0 %v504
        %570 = vmatprep.subr.bf16.mxu0 0
        %571 = vmatpush1.bf16.msra.mxu0 %v505
        %572 = vmatprep.subr.bf16.mxu0 0
        %573 = vmatpush1.bf16.msra.mxu0 %v506
        %574 = vmatprep.subr.bf16.mxu0 0
        %575 = vmatpush1.bf16.msra.mxu0 %v507
        %576 = vmatprep.subr.bf16.mxu0 0
        %577 = vmatpush1.bf16.msra.mxu0 %v508
        %578 = vmatprep.subr.bf16.mxu0 0
        %579 = vmatpush1.bf16.msra.mxu0 %v509
        %580 = vmatprep.subr.bf16.mxu0 0
        %581 = vmatpush1.bf16.msra.mxu0 %v510
        %582 = vmatprep.subr.bf16.mxu0 0
        %583 = vmatpush1.bf16.msra.mxu0 %v511
        %584 = vmatprep.subr.bf16.mxu0 0
        %585 = vmatpush1.bf16.msra.mxu0 %v512
        %586 = vmatprep.subr.bf16.mxu0 0
        %587 = vmatpush1.bf16.msra.mxu0 %v513
        %588 = vmatprep.subr.bf16.mxu0 0
        %589 = vmatpush1.bf16.msra.mxu0 %v514
        %590 = vmatprep.subr.bf16.mxu0 0
        %591 = vmatpush1.bf16.msra.mxu0 %v515
        %592 = vmatprep.subr.bf16.mxu0 0
        %593 = vmatpush1.bf16.msra.mxu0 %v516
        %594 = vmatprep.subr.bf16.mxu0 0
        %595 = vmatpush1.bf16.msra.mxu0 %v517
        %596 = vmatprep.subr.bf16.mxu0 0
        %597 = vmatpush1.bf16.msra.mxu0 %v518
        %598 = vmatprep.subr.bf16.mxu0 0
        %599 = vmatpush1.bf16.msra.mxu0 %v519
        %600 = vmatprep.mubr.bf16.mxu0 %v369
        %601 = vmatmul.mubr.bf16.gmra.mrb[0].mxu0 %v368
        %v602 = vpop.f32.mrb[0].mxu0
        %v603 = vadd.f32 0.0, %v602
        %v604 = vpop.f32.mrb[0].mxu0
        %v605 = vpop.f32.mrb[0].mxu0
        %v606 = vadd.f32 0.0, %v605
        %v607 = vpop.f32.mrb[0].mxu0
        %608 = vdwg.mxu0
        %609 = vmatprep.subr.bf16.mxu0 0
        %610 = vmatpush1.bf16.msra.mxu0 %v520
        %611 = vmatprep.subr.bf16.mxu0 0
        %612 = vmatpush1.bf16.msra.mxu0 %v521
        %613 = vmatprep.subr.bf16.mxu0 0
        %614 = vmatpush1.bf16.msra.mxu0 %v522
        %615 = vmatprep.subr.bf16.mxu0 0
        %616 = vmatpush1.bf16.msra.mxu0 %v523
        %617 = vmatprep.subr.bf16.mxu0 0
        %618 = vmatpush1.bf16.msra.mxu0 %v524
        %619 = vmatprep.subr.bf16.mxu0 0
        %620 = vmatpush1.bf16.msra.mxu0 %v525
        %621 = vmatprep.subr.bf16.mxu0 0
        %622 = vmatpush1.bf16.msra.mxu0 %v526
        %623 = vmatprep.subr.bf16.mxu0 0
        %624 = vmatpush1.bf16.msra.mxu0 %v527
        %625 = vmatprep.subr.bf16.mxu0 0
        %626 = vmatpush1.bf16.msra.mxu0 %v528
        %627 = vmatprep.subr.bf16.mxu0 0
        %628 = vmatpush1.bf16.msra.mxu0 %v529
        %629 = vmatprep.subr.bf16.mxu0 0
        %630 = vmatpush1.bf16.msra.mxu0 %v530
        %631 = vmatprep.subr.bf16.mxu0 0
        %632 = vmatpush1.bf16.msra.mxu0 %v531
        %633 = vmatprep.subr.bf16.mxu0 0
        %634 = vmatpush1.bf16.msra.mxu0 %v532
        %635 = vmatprep.subr.bf16.mxu0 0
        %636 = vmatpush1.bf16.msra.mxu0 %v533
        %637 = vmatprep.subr.bf16.mxu0 0
        %638 = vmatpush1.bf16.msra.mxu0 %v534
        %639 = vmatprep.subr.bf16.mxu0 0
        %640 = vmatpush1.bf16.msra.mxu0 %v535
        %641 = vmatprep.mubr.bf16.mxu0 %v371
        %642 = vmatmul.mubr.bf16.gmra.mrb[0].mxu0 %v370
        %v643 = vpop.f32.mrb[0].mxu0
        %v644 = vadd.f32 %v603, %v643
        %v645 = vpop.f32.mrb[0].mxu0
        %v646 = vpop.f32.mrb[0].mxu0
        %v647 = vadd.f32 %v606, %v646
        %v648 = vpop.f32.mrb[0].mxu0
        %649 = vdwg.mxu0
        %v650 = vadd.f32 %v286, %v644
        %v651 = vadd.f32 %v287, %v647
        %652 = vst [vmem:[#allocation2] sm:$0xff] %v650
        %653 = vst [vmem:[#allocation2 + $0x8] sm:$0xff] %v651
        %p654 = scmp.eq.s32.totalorder %s21, 1
        // Predicated region
        $region60: #{discriminator_forward.15} parent=50 // pred_check
          %p655 = pneg %p654
        $region61: #{discriminator_forward.15} parent=50 // pred_check_branch
          %657 = sbr.rel (%p655) target = $region63
        $region62: #{discriminator_forward.15} parent=50 // pred_region
          %v658 = vld [vmem:[#allocation2] sm:$0xff]
          %v659 = vld [vmem:[#allocation2 + $0x8] sm:$0xff]
          %v660 = vld [vmem:[%s269] sm:$0x1]
          %v662 = vlaneseq
          %v663 = vshrl.u32 %v662, 7
          %v664 = vsub.s32 0, %v663
          %v665 = vrot.slane %v660, %v664
          %v667 = vadd.f32 %v658, %v665
          %v668 = vadd.f32 %v659, %v665
          %669 = vst [vmem:[%s277] sm:$0xff] %v667
          %670 = vst [vmem:[%s277 + $0x8] sm:$0xff] %v668
        $region63: #{discriminator_forward.15} parent=50 // pred_fallthru
          _
        %s671 = smul.u32 2, %s19
        %p672 = scmp.lt.s32.totalorder %s671, 1
        %s673 = scalar_select %p672, %s671, 1
        %p674 = scmp.lt.s32.totalorder %s20, 0
        %s675 = scalar_select %p674, %s20, 0
        %s676 = sadd.s32 %s675, %s673
        %s677 = smul.addr %s676, 8
        %s678 = scalar_lea.vmem %s3, %s677
        // Predicated region
        $region64: #{discriminator_forward.15} parent=50 // pred_check
          %p679 = pneg %p135
        $region65: #{discriminator_forward.15} parent=50 // pred_check_branch
          %681 = sbr.rel (%p679) target = $region67
        $region66: #{discriminator_forward.15} parent=50 // pred_region
          %s682 = smul.u32 2, %s19
        $region67: #{discriminator_forward.15} parent=50 // pred_fallthru
          _
        // Predicated region
        $region68: #{discriminator_forward.15} parent=50 // pred_check
          %p683 = pneg %p135
        $region69: #{discriminator_forward.15} parent=50 // pred_check_branch
          %685 = sbr.rel (%p683) target = $region71
        $region70: #{discriminator_forward.15} parent=50 // pred_region
          %s686 = smul.u32 2, %s19
          %p687 = scmp.lt.s32.totalorder %s686, 1
          %s688 = scalar_select %p687, %s686, 1
          %p689 = scmp.lt.s32.totalorder %s20, 0
          %s690 = scalar_select %p689, %s20, 0
          %s691 = sadd.s32 %s690, %s688
          %s692 = smul.addr %s691, 8
          %s693 = scalar_lea.vmem %s3, %s692
        $region71: #{discriminator_forward.15} parent=50 // pred_fallthru
          _
      $region51: #{discriminator_forward.15} parent=5 // pred_fallthru
        _
      %p694 = scmp.le.s32.totalorder 2, %s9
      // Predicated region
      $region72: #{discriminator_forward.15} parent=5 // pred_check
        %p695 = pneg %p694
      $region73: #{discriminator_forward.15} parent=5 // pred_check_branch
        %697 = sbr.rel (%p695) target = $region75
      $region74: #{discriminator_forward.15} parent=5 // pred_region
        %s698 = ssub.s32 %s9, 2
      $region75: #{discriminator_forward.15} parent=5 // pred_fallthru
        _
    $region6: #{discriminator_forward.15} parent=1 // loop_footer
      %s13 = sadd.s32 1, %s9
    $region7: #{discriminator_forward.15} parent=1 // loop_footer_branch
      %8 = sbr.rel target = $region3
    $region8: #{discriminator_forward.15} parent=1 // loop_exit
      _

</llo_original>
